<compile_context>
chip_gen: v7x
topology: tpu7x:2x2x1
jax: 0.10.0
libtpu: 0.0.40
codegen_flags: <defaults>
</compile_context>

<pallas_src>
import jax
import jax.numpy as jnp
import numpy as np
from jax.experimental import pallas as pl
from jax.experimental.pallas import tpu as pltpu


def _time_halo(T, n_layers):
    """Widest causal time shift (< T) used by any layer, rounded to a sublane tile."""
    shifts = [(2 - kt) * (2 ** l) for l in range(n_layers) for kt in (0, 1)]
    alive = [s for s in shifts if 0 < s < T]
    pad = max(alive) if alive else 0
    return ((pad + 7) // 8) * 8          # keeps the interior h store tile-aligned


def _make_tfcm_fused_kernel(B, F, T, Cp, n_layers, pad_t):
    """Fused kernel for the whole TFCM chain. Grid = (layer,), batch merged in-block."""

    def kernel(x_ref, w1_ref, w2_ref, dww_ref, pv_ref, o_ref, h_ref):
        layer = pl.program_id(0)

        # Layer 0: seed the VMEM-resident activation and zero the halo scratch once.
        # (Only the interior of h_ref is overwritten per layer, so the F/T zero halo
        #  written here stays valid for every subsequent layer.)
        @pl.when(layer == 0)
        def _():
            o_ref[...] = x_ref[...]
            h_ref[...] = jnp.zeros_like(h_ref)

        pv = pv_ref[layer]                          # (9, Cp) packed per-channel params
        b1, s1, sh1, a1 = pv[0], pv[1], pv[2], pv[3]
        dwb, s2, sh2, a2, b2 = pv[4], pv[5], pv[6], pv[7], pv[8]
        dww = dww_ref[layer]                        # (9, Cp), row = kf*3 + kt

        # ---- pconv1: 1x1 conv (MXU, bf16 operands / f32 accum) + BN affine + PReLU ----
        xf = o_ref[...].reshape(B * F * T, Cp).astype(jnp.bfloat16)
        h = jnp.dot(xf, w1_ref[layer], preferred_element_type=jnp.float32)
        h = (h + b1[None, :]) * s1[None, :] + sh1[None, :]
        h = jnp.where(h >= 0.0, h, a1[None, :] * h)
        # Stage h into the zero-halo scratch: freq halo of 1 on each side, causal time
        # halo of pad_t.  The interior store is sublane-tile aligned -> unmasked vst.
        h_ref[:, 1:F + 1, pad_t:, :] = h.reshape(B, F, T, Cp)

        def tap(kf, shift):
            # out[f, t] needs h[f + kf - 1, t - shift] with zeros outside the signal:
            # a pure static-offset read from the zero-halo scratch (no RMW stores).
            return h_ref[:, kf:kf + F, pad_t - shift:pad_t - shift + T, :]

        def finish(y):
            # BN2 affine + PReLU + pconv2 (MXU) + residual.  The only ref writes in a
            # layer are the aligned h_ref store above and this final o_ref store.
            y = y * s2[None, None, None, :] + sh2[None, None, None, :]
            y = jnp.where(y >= 0.0, y, a2[None, None, None, :] * y)
            yf = y.reshape(B * F * T, Cp).astype(jnp.bfloat16)
            out = jnp.dot(yf, w2_ref[layer], preferred_element_type=jnp.float32)
            out = out + b2[None, :]
            # Re-read o_ref late (instead of keeping the layer input live across both
            # matmuls) to bound vreg live ranges; the vld is cheap, vst stays minimal.
            o_ref[...] = out.reshape(B, F, T, Cp) + o_ref[...]

        def dw_branch(dila):
            # Causal depthwise (3,3) conv, freq dilation 1, time dilation `dila`:
            #   out[f,t] = sum_{kf,kt} w[kf*3+kt] * h[f + kf - 1, t - (2 - kt)*dila]
            # accumulated entirely in vregs.  `dila` is static per pl.when branch, so
            # taps whose time shift >= T (they only see the causal zero pad) are skipped.
            y = tap(1, 0) * dww[5][None, None, None, :] + dwb[None, None, None, :]
            for kt in range(3):
                shift = (2 - kt) * dila
                if shift >= T:
                    continue                     # reads only the causal zero padding
                for kf in range(3):
                    if kf == 1 and kt == 2:
                        continue                 # center tap used as initializer above
                    w = dww[kf * 3 + kt][None, None, None, :]
                    y = y + tap(kf, shift) * w
            finish(y)

        # Static specialization: one branch per layer (dilation 2**layer).
        for layer_idx in range(n_layers):
            @pl.when(layer == layer_idx)
            def _(dila=2 ** layer_idx):
                dw_branch(dila)

    return kernel


def pack_tfcm_params(layer_params, c_pad=128):
    """Stack per-layer params once and zero-pad the channel dim to `c_pad` lanes."""
    C = layer_params[0]["W1"].shape[0]
    pc = c_pad - C
    pad_mat = lambda w: jnp.pad(w, ((0, pc), (0, pc)))
    pad_vec = lambda v: jnp.pad(v, (0, pc))
    order = ("b1", "s1", "sh1", "a1", "dw_b", "s2", "sh2", "a2", "b2")
    return dict(
        W1=jnp.stack([pad_mat(p["W1"]) for p in layer_params]).astype(jnp.bfloat16),
        W2=jnp.stack([pad_mat(p["W2"]) for p in layer_params]).astype(jnp.bfloat16),
        dww=jnp.stack([jnp.pad(p["dw_w"].reshape(C, 9).T, ((0, 0), (0, pc)))
                       for p in layer_params]),                         # (L, 9, Cp)
        pv=jnp.stack([jnp.stack([pad_vec(p[k]) for k in order])
                      for p in layer_params]),                          # (L, 9, Cp)
    )


@jax.jit
def tfcm_pallas(x_nchw, packed):
    """Full TFCM chain (dilation 2**idx per layer). x_nchw: (B, C, F, T) float32."""
    B, C, F, T = x_nchw.shape
    L, Cp, _ = packed["W1"].shape
    pad_t = _time_halo(T, L)
    # Wrapper-side layout ops kept for API parity with the NCHW PyTorch module; a real
    # model should stay channels-last end-to-end so these XLA kernels disappear.
    x = jnp.transpose(x_nchw, (0, 2, 3, 1))                     # -> (B, F, T, C)
    x = jnp.pad(x, ((0, 0), (0, 0), (0, 0), (0, Cp - C)))       # lane-dense channels
    kernel = _make_tfcm_fused_kernel(B, F, T, Cp, L, pad_t)
    out = pl.pallas_call(
        kernel,
        out_shape=jax.ShapeDtypeStruct((B, F, T, Cp), jnp.float32),
        grid=(L,),
        in_specs=[
            # Activation: fetched once (constant block index across all layer steps).
            pl.BlockSpec((B, F, T, Cp), lambda l: (0, 0, 0, 0)),
            # All-layer weights hoisted into VMEM once; layer slice picked in-kernel.
            pl.BlockSpec((L, Cp, Cp), lambda l: (0, 0, 0)),           # W1 (bf16)
            pl.BlockSpec((L, Cp, Cp), lambda l: (0, 0, 0)),           # W2 (bf16)
            pl.BlockSpec((L, 9, Cp), lambda l: (0, 0, 0)),            # depthwise taps
            pl.BlockSpec((L, 9, Cp), lambda l: (0, 0, 0)),            # per-channel params
        ],
        # Output block resident in VMEM across every layer; written to HBM once.
        out_specs=pl.BlockSpec((B, F, T, Cp), lambda l: (0, 0, 0, 0)),
        scratch_shapes=[pltpu.VMEM((B, F + 2, T + pad_t, Cp), jnp.float32)],  # h halo
        compiler_params=pltpu.CompilerParams(dimension_semantics=("arbitrary",)),
    )(x, packed["W1"], packed["W2"], packed["dww"], packed["pv"])
    return jnp.transpose(out[..., :C], (0, 3, 1, 2))            # -> (B, C, F, T)


# ------------------------- pure-JAX reference ------------------------------
def tfcm_block_ref(x_nchw, p, dila):
    C = x_nchw.shape[1]
    dila_pad = dila * 2
    hi = jax.lax.Precision.HIGHEST
    pc = lambda v: v[None, :, None, None]
    h = jnp.einsum("bcft,cd->bdft", x_nchw, p["W1"], precision=hi) + pc(p["b1"])
    h = h * pc(p["s1"]) + pc(p["sh1"])
    h = jnp.where(h >= 0.0, h, pc(p["a1"]) * h)
    y = jax.lax.conv_general_dilated(
        h, p["dw_w"].reshape(C, 1, 3, 3),
        window_strides=(1, 1),
        padding=((1, 1), (dila_pad, 0)),
        rhs_dilation=(1, dila),
        dimension_numbers=("NCHW", "OIHW", "NCHW"),
        feature_group_count=C,
        precision=hi) + pc(p["dw_b"])
    y = y * pc(p["s2"]) + pc(p["sh2"])
    y = jnp.where(y >= 0.0, y, pc(p["a2"]) * y)
    out = jnp.einsum("bcft,cd->bdft", y, p["W2"], precision=hi) + pc(p["b2"])
    return out + x_nchw


def tfcm_ref(x_nchw, layer_params):
    out = x_nchw
    for idx, p in enumerate(layer_params):
        out = tfcm_block_ref(out, p, 2 ** idx)
    return out


# ------------------------------- main ---------------------------------------
if __name__ == "__main__":
    B, C, F, T = 2, 24, 8, 16     # B x C x F x T (PyTorch convention)
    n_layers = 6                  # dilations 1, 2, 4, 8, 16, 32

    key = jax.random.PRNGKey(0)
    x_nchw = jax.random.normal(key, (B, C, F, T), jnp.float32)

    layer_params = []
    for idx in range(n_layers):
        ks = jax.random.split(jax.random.fold_in(key, idx + 1), 10)
        layer_params.append(dict(
            W1=jax.random.normal(ks[0], (C, C), jnp.float32) * (0.3 / np.sqrt(C)),
            b1=0.05 * jax.random.normal(ks[1], (C,), jnp.float32),
            s1=1.0 + 0.1 * jax.random.normal(ks[2], (C,), jnp.float32),
            sh1=0.05 * jax.random.normal(ks[3], (C,), jnp.float32),
            a1=jnp.full((C,), 0.25, jnp.float32),          # PReLU default slope
            dw_w=jax.random.normal(ks[4], (C, 3, 3), jnp.float32) * (1.0 / 3.0),
            dw_b=0.05 * jax.random.normal(ks[5], (C,), jnp.float32),
            s2=1.0 + 0.1 * jax.random.normal(ks[6], (C,), jnp.float32),
            sh2=0.05 * jax.random.normal(ks[7], (C,), jnp.float32),
            a2=jnp.full((C,), 0.25, jnp.float32),
            W2=jax.random.normal(ks[8], (C, C), jnp.float32) * (0.3 / np.sqrt(C)),
            b2=0.05 * jax.random.normal(ks[9], (C,), jnp.float32),
        ))

    packed = pack_tfcm_params(layer_params, c_pad=128)

    out = jax.block_until_ready(tfcm_pallas(x_nchw, packed))
    ref = jax.block_until_ready(tfcm_ref(x_nchw, layer_params))

    assert out.shape == (B, C, F, T) and out.dtype == jnp.float32
    # Kernel uses single-pass bf16 MXU operands vs the f32 HIGHEST-precision reference;
    # observed deviation across the 6 residually-chained layers is ~1e-3, inside 5e-3.
    np.testing.assert_allclose(np.asarray(out), np.asarray(ref),
                               rtol=5e-3, atol=5e-3)
    print("KERNEL_OK")
</pallas_src>

<mosaic_0001>
module attributes {stable_mosaic.version = 11 : i64} {
  func.func @kernel(%arg0: i32, %arg1: memref<2x8x16x128xf32, #tpu.memory_space<vmem>>, %arg2: memref<6x128x128xbf16, #tpu.memory_space<vmem>>, %arg3: memref<6x128x128xbf16, #tpu.memory_space<vmem>>, %arg4: memref<6x9x128xf32, #tpu.memory_space<vmem>>, %arg5: memref<6x9x128xf32, #tpu.memory_space<vmem>>, %arg6: memref<2x8x16x128xf32, #tpu.memory_space<vmem>>, %arg7: memref<2x10x24x128xf32, #tpu.memory_space<vmem>>) attributes {dimension_semantics = [#tpu.dimension_semantics<arbitrary>], iteration_bounds = array<i64: 6>, scalar_prefetch = 0 : i64, scratch_operands = 1 : i64, tpu.core_type = #tpu.core_type<tc>, window_params = [{pipeline_mode = #tpu.pipeline_mode<synchronous>, transform_indices = @transform_0, window_bounds = array<i64: 2, 8, 16, 128>}, {pipeline_mode = #tpu.pipeline_mode<synchronous>, transform_indices = @transform_1, window_bounds = array<i64: 6, 128, 128>}, {pipeline_mode = #tpu.pipeline_mode<synchronous>, transform_indices = @transform_2, window_bounds = array<i64: 6, 128, 128>}, {pipeline_mode = #tpu.pipeline_mode<synchronous>, transform_indices = @transform_3, window_bounds = array<i64: 6, 9, 128>}, {pipeline_mode = #tpu.pipeline_mode<synchronous>, transform_indices = @transform_4, window_bounds = array<i64: 6, 9, 128>}, {pipeline_mode = #tpu.pipeline_mode<synchronous>, transform_indices = @transform_5, window_bounds = array<i64: 2, 8, 16, 128>}]} {
    %c0_i32 = arith.constant 0 : i32
    %0 = arith.cmpi eq, %arg0, %c0_i32 : i32
    %1 = arith.extui %0 : i1 to i32
    %c0_i32_0 = arith.constant 0 : i32
    %2 = arith.cmpi ne, %1, %c0_i32_0 : i32
    scf.if %2 {
      %c0_20 = arith.constant 0 : index
      %c0_21 = arith.constant 0 : index
      %c0_22 = arith.constant 0 : index
      %c0_23 = arith.constant 0 : index
      %69 = vector.load %arg1[%c0_20, %c0_21, %c0_22, %c0_23] : memref<2x8x16x128xf32, #tpu.memory_space<vmem>>, vector<2x8x16x128xf32>
      %c0_24 = arith.constant 0 : index
      %c0_25 = arith.constant 0 : index
      %c0_26 = arith.constant 0 : index
      %c0_27 = arith.constant 0 : index
      %70 = vector.load %arg6[%c0_24, %c0_25, %c0_26, %c0_27] : memref<2x8x16x128xf32, #tpu.memory_space<vmem>>, vector<2x8x16x128xf32>
      tpu.vector_store %arg6[%c0_24, %c0_25, %c0_26, %c0_27], %69 {strides = array<i32>} : memref<2x8x16x128xf32, #tpu.memory_space<vmem>>, vector<2x8x16x128xf32>,
      %cst_28 = arith.constant 0.000000e+00 : f32
      %71 = vector.broadcast %cst_28 : f32 to vector<2x10x24x128xf32>
      %c0_29 = arith.constant 0 : index
      %c0_30 = arith.constant 0 : index
      %c0_31 = arith.constant 0 : index
      %c0_32 = arith.constant 0 : index
      %72 = vector.load %arg7[%c0_29, %c0_30, %c0_31, %c0_32] : memref<2x10x24x128xf32, #tpu.memory_space<vmem>>, vector<2x10x24x128xf32>
      tpu.vector_store %arg7[%c0_29, %c0_30, %c0_31, %c0_32], %71 {strides = array<i32>} : memref<2x10x24x128xf32, #tpu.memory_space<vmem>>, vector<2x10x24x128xf32>,
    } else {
    }
    %3 = arith.index_cast %arg0 : i32 to index
    %c0 = arith.constant 0 : index
    %c0_1 = arith.constant 0 : index
    %4 = vector.load %arg5[%3, %c0, %c0_1] : memref<6x9x128xf32, #tpu.memory_space<vmem>>, vector<1x9x128xf32>
    %5 = vector.shape_cast %4 : vector<1x9x128xf32> to vector<9x128xf32>
    %6 = vector.extract_strided_slice %5 {offsets = [0, 0], sizes = [1, 128], strides = [1, 1]} : vector<9x128xf32> to vector<1x128xf32>
    %7 = vector.shape_cast %6 : vector<1x128xf32> to vector<128xf32>
    %8 = vector.extract_strided_slice %5 {offsets = [1, 0], sizes = [1, 128], strides = [1, 1]} : vector<9x128xf32> to vector<1x128xf32>
    %9 = vector.shape_cast %8 : vector<1x128xf32> to vector<128xf32>
    %10 = vector.extract_strided_slice %5 {offsets = [2, 0], sizes = [1, 128], strides = [1, 1]} : vector<9x128xf32> to vector<1x128xf32>
    %11 = vector.shape_cast %10 : vector<1x128xf32> to vector<128xf32>
    %12 = vector.extract_strided_slice %5 {offsets = [3, 0], sizes = [1, 128], strides = [1, 1]} : vector<9x128xf32> to vector<1x128xf32>
    %13 = vector.shape_cast %12 : vector<1x128xf32> to vector<128xf32>
    %14 = vector.extract_strided_slice %5 {offsets = [4, 0], sizes = [1, 128], strides = [1, 1]} : vector<9x128xf32> to vector<1x128xf32>
    %15 = vector.shape_cast %14 : vector<1x128xf32> to vector<128xf32>
    %16 = vector.extract_strided_slice %5 {offsets = [5, 0], sizes = [1, 128], strides = [1, 1]} : vector<9x128xf32> to vector<1x128xf32>
    %17 = vector.shape_cast %16 : vector<1x128xf32> to vector<128xf32>
    %18 = vector.extract_strided_slice %5 {offsets = [6, 0], sizes = [1, 128], strides = [1, 1]} : vector<9x128xf32> to vector<1x128xf32>
    %19 = vector.shape_cast %18 : vector<1x128xf32> to vector<128xf32>
    %20 = vector.extract_strided_slice %5 {offsets = [7, 0], sizes = [1, 128], strides = [1, 1]} : vector<9x128xf32> to vector<1x128xf32>
    %21 = vector.shape_cast %20 : vector<1x128xf32> to vector<128xf32>
    %22 = vector.extract_strided_slice %5 {offsets = [8, 0], sizes = [1, 128], strides = [1, 1]} : vector<9x128xf32> to vector<1x128xf32>
    %23 = vector.shape_cast %22 : vector<1x128xf32> to vector<128xf32>
    %24 = arith.index_cast %arg0 : i32 to index
    %c0_2 = arith.constant 0 : index
    %c0_3 = arith.constant 0 : index
    %25 = vector.load %arg4[%24, %c0_2, %c0_3] : memref<6x9x128xf32, #tpu.memory_space<vmem>>, vector<1x9x128xf32>
    %26 = vector.shape_cast %25 : vector<1x9x128xf32> to vector<9x128xf32>
    %c0_4 = arith.constant 0 : index
    %c0_5 = arith.constant 0 : index
    %c0_6 = arith.constant 0 : index
    %c0_7 = arith.constant 0 : index
    %27 = vector.load %arg6[%c0_4, %c0_5, %c0_6, %c0_7] : memref<2x8x16x128xf32, #tpu.memory_space<vmem>>, vector<2x8x16x128xf32>
    %28 = vector.shape_cast %27 : vector<2x8x16x128xf32> to vector<256x128xf32>
    %29 = arith.truncf %28 : vector<256x128xf32> to vector<256x128xbf16>
    %30 = arith.index_cast %arg0 : i32 to index
    %c0_8 = arith.constant 0 : index
    %c0_9 = arith.constant 0 : index
    %31 = vector.load %arg2[%30, %c0_8, %c0_9] : memref<6x128x128xbf16, #tpu.memory_space<vmem>>, vector<1x128x128xbf16>
    %32 = vector.shape_cast %31 : vector<1x128x128xbf16> to vector<128x128xbf16>
    %cst = arith.constant dense<0.000000e+00> : vector<256x128xf32>
    %33 = tpu.matmul %29, %32, %cst {dimension_numbers = #tpu.dot_dimension_numbers<[1], [0], [0], [1], [0, 0, 1, 1], [], []>} : vector<256x128xbf16>, vector<128x128xbf16>, vector<256x128xf32> -> vector<256x128xf32>
    %34 = vector.shape_cast %7 : vector<128xf32> to vector<1x128xf32>
    %35 = vector.broadcast %34 : vector<1x128xf32> to vector<256x128xf32>
    %36 = arith.addf %33, %35 : vector<256x128xf32>
    %37 = vector.shape_cast %9 : vector<128xf32> to vector<1x128xf32>
    %38 = vector.broadcast %37 : vector<1x128xf32> to vector<256x128xf32>
    %39 = arith.mulf %36, %38 : vector<256x128xf32>
    %40 = vector.shape_cast %11 : vector<128xf32> to vector<1x128xf32>
    %41 = vector.broadcast %40 : vector<1x128xf32> to vector<256x128xf32>
    %42 = arith.addf %39, %41 : vector<256x128xf32>
    %cst_10 = arith.constant 0.000000e+00 : f32
    %43 = vector.broadcast %cst_10 : f32 to vector<256x128xf32>
    %44 = arith.cmpf oge, %42, %43 : vector<256x128xf32>
    %45 = vector.shape_cast %13 : vector<128xf32> to vector<1x128xf32>
    %46 = vector.broadcast %45 : vector<1x128xf32> to vector<256x128xf32>
    %47 = arith.mulf %46, %42 : vector<256x128xf32>
    %48 = arith.select %44, %42, %47 : vector<256x128xi1>, vector<256x128xf32>
    %49 = vector.shape_cast %48 : vector<256x128xf32> to vector<2x8x16x128xf32>
    %c0_11 = arith.constant 0 : index
    %c1 = arith.constant 1 : index
    %c8 = arith.constant 8 : index
    %c0_12 = arith.constant 0 : index
    %50 = vector.load %arg7[%c0_11, %c1, %c8, %c0_12] : memref<2x10x24x128xf32, #tpu.memory_space<vmem>>, vector<2x8x16x128xf32>
    tpu.vector_store %arg7[%c0_11, %c1, %c8, %c0_12], %49 {strides = array<i32>} : memref<2x10x24x128xf32, #tpu.memory_space<vmem>>, vector<2x8x16x128xf32>,
    %c0_i32_13 = arith.constant 0 : i32
    %51 = arith.cmpi eq, %arg0, %c0_i32_13 : i32
    %52 = arith.extui %51 : i1 to i32
    %c0_i32_14 = arith.constant 0 : i32
    %53 = arith.cmpi ne, %52, %c0_i32_14 : i32
    scf.if %53 {
      %c0_20 = arith.constant 0 : index
      %c1_21 = arith.constant 1 : index
      %c8_22 = arith.constant 8 : index
      %c0_23 = arith.constant 0 : index
      %69 = vector.load %arg7[%c0_20, %c1_21, %c8_22, %c0_23] : memref<2x10x24x128xf32, #tpu.memory_space<vmem>>, vector<2x8x16x128xf32>
      %70 = vector.extract_strided_slice %26 {offsets = [5, 0], sizes = [1, 128], strides = [1, 1]} : vector<9x128xf32> to vector<1x128xf32>
      %71 = vector.shape_cast %70 : vector<1x128xf32> to vector<128xf32>
      %72 = vector.shape_cast %71 : vector<128xf32> to vector<1x1x1x128xf32>
      %73 = vector.broadcast %72 : vector<1x1x1x128xf32> to vector<2x8x16x128xf32>
      %74 = arith.mulf %69, %73 : vector<2x8x16x128xf32>
      %75 = vector.shape_cast %15 : vector<128xf32> to vector<1x1x1x128xf32>
      %76 = vector.broadcast %75 : vector<1x1x1x128xf32> to vector<2x8x16x128xf32>
      %77 = arith.addf %74, %76 : vector<2x8x16x128xf32>
      %78 = vector.extract_strided_slice %26 {offsets = [0, 0], sizes = [1, 128], strides = [1, 1]} : vector<9x128xf32> to vector<1x128xf32>
      %79 = vector.shape_cast %78 : vector<1x128xf32> to vector<128xf32>
      %80 = vector.shape_cast %79 : vector<128xf32> to vector<1x1x1x128xf32>
      %c0_24 = arith.constant 0 : index
      %c0_25 = arith.constant 0 : index
      %c6 = arith.constant 6 : index
      %c0_26 = arith.constant 0 : index
      %81 = vector.load %arg7[%c0_24, %c0_25, %c6, %c0_26] : memref<2x10x24x128xf32, #tpu.memory_space<vmem>>, vector<2x8x16x128xf32>
      %82 = vector.broadcast %80 : vector<1x1x1x128xf32> to vector<2x8x16x128xf32>
      %83 = arith.mulf %81, %82 : vector<2x8x16x128xf32>
      %84 = arith.addf %77, %83 : vector<2x8x16x128xf32>
      %85 = vector.extract_strided_slice %26 {offsets = [3, 0], sizes = [1, 128], strides = [1, 1]} : vector<9x128xf32> to vector<1x128xf32>
      %86 = vector.shape_cast %85 : vector<1x128xf32> to vector<128xf32>
      %87 = vector.shape_cast %86 : vector<128xf32> to vector<1x1x1x128xf32>
      %c0_27 = arith.constant 0 : index
      %c1_28 = arith.constant 1 : index
      %c6_29 = arith.constant 6 : index
      %c0_30 = arith.constant 0 : index
      %88 = vector.load %arg7[%c0_27, %c1_28, %c6_29, %c0_30] : memref<2x10x24x128xf32, #tpu.memory_space<vmem>>, vector<2x8x16x128xf32>
      %89 = vector.broadcast %87 : vector<1x1x1x128xf32> to vector<2x8x16x128xf32>
      %90 = arith.mulf %88, %89 : vector<2x8x16x128xf32>
      %91 = arith.addf %84, %90 : vector<2x8x16x128xf32>
      %92 = vector.extract_strided_slice %26 {offsets = [6, 0], sizes = [1, 128], strides = [1, 1]} : vector<9x128xf32> to vector<1x128xf32>
      %93 = vector.shape_cast %92 : vector<1x128xf32> to vector<128xf32>
      %94 = vector.shape_cast %93 : vector<128xf32> to vector<1x1x1x128xf32>
      %c0_31 = arith.constant 0 : index
      %c2 = arith.constant 2 : index
      %c6_32 = arith.constant 6 : index
      %c0_33 = arith.constant 0 : index
      %95 = vector.load %arg7[%c0_31, %c2, %c6_32, %c0_33] : memref<2x10x24x128xf32, #tpu.memory_space<vmem>>, vector<2x8x16x128xf32>
      %96 = vector.broadcast %94 : vector<1x1x1x128xf32> to vector<2x8x16x128xf32>
      %97 = arith.mulf %95, %96 : vector<2x8x16x128xf32>
      %98 = arith.addf %91, %97 : vector<2x8x16x128xf32>
      %99 = vector.extract_strided_slice %26 {offsets = [1, 0], sizes = [1, 128], strides = [1, 1]} : vector<9x128xf32> to vector<1x128xf32>
      %100 = vector.shape_cast %99 : vector<1x128xf32> to vector<128xf32>
      %101 = vector.shape_cast %100 : vector<128xf32> to vector<1x1x1x128xf32>
      %c0_34 = arith.constant 0 : index
      %c0_35 = arith.constant 0 : index
      %c7 = arith.constant 7 : index
      %c0_36 = arith.constant 0 : index
      %102 = vector.load %arg7[%c0_34, %c0_35, %c7, %c0_36] : memref<2x10x24x128xf32, #tpu.memory_space<vmem>>, vector<2x8x16x128xf32>
      %103 = vector.broadcast %101 : vector<1x1x1x128xf32> to vector<2x8x16x128xf32>
      %104 = arith.mulf %102, %103 : vector<2x8x16x128xf32>
      %105 = arith.addf %98, %104 : vector<2x8x16x128xf32>
      %106 = vector.extract_strided_slice %26 {offsets = [4, 0], sizes = [1, 128], strides = [1, 1]} : vector<9x128xf32> to vector<1x128xf32>
      %107 = vector.shape_cast %106 : vector<1x128xf32> to vector<128xf32>
      %108 = vector.shape_cast %107 : vector<128xf32> to vector<1x1x1x128xf32>
      %c0_37 = arith.constant 0 : index
      %c1_38 = arith.constant 1 : index
      %c7_39 = arith.constant 7 : index
      %c0_40 = arith.constant 0 : index
      %109 = vector.load %arg7[%c0_37, %c1_38, %c7_39, %c0_40] : memref<2x10x24x128xf32, #tpu.memory_space<vmem>>, vector<2x8x16x128xf32>
      %110 = vector.broadcast %108 : vector<1x1x1x128xf32> to vector<2x8x16x128xf32>
      %111 = arith.mulf %109, %110 : vector<2x8x16x128xf32>
      %112 = arith.addf %105, %111 : vector<2x8x16x128xf32>
      %113 = vector.extract_strided_slice %26 {offsets = [7, 0], sizes = [1, 128], strides = [1, 1]} : vector<9x128xf32> to vector<1x128xf32>
      %114 = vector.shape_cast %113 : vector<1x128xf32> to vector<128xf32>
      %115 = vector.shape_cast %114 : vector<128xf32> to vector<1x1x1x128xf32>
      %c0_41 = arith.constant 0 : index
      %c2_42 = arith.constant 2 : index
      %c7_43 = arith.constant 7 : index
      %c0_44 = arith.constant 0 : index
      %116 = vector.load %arg7[%c0_41, %c2_42, %c7_43, %c0_44] : memref<2x10x24x128xf32, #tpu.memory_space<vmem>>, vector<2x8x16x128xf32>
      %117 = vector.broadcast %115 : vector<1x1x1x128xf32> to vector<2x8x16x128xf32>
      %118 = arith.mulf %116, %117 : vector<2x8x16x128xf32>
      %119 = arith.addf %112, %118 : vector<2x8x16x128xf32>
      %120 = vector.extract_strided_slice %26 {offsets = [2, 0], sizes = [1, 128], strides = [1, 1]} : vector<9x128xf32> to vector<1x128xf32>
      %121 = vector.shape_cast %120 : vector<1x128xf32> to vector<128xf32>
      %122 = vector.shape_cast %121 : vector<128xf32> to vector<1x1x1x128xf32>
      %c0_45 = arith.constant 0 : index
      %c0_46 = arith.constant 0 : index
      %c8_47 = arith.constant 8 : index
      %c0_48 = arith.constant 0 : index
      %123 = vector.load %arg7[%c0_45, %c0_46, %c8_47, %c0_48] : memref<2x10x24x128xf32, #tpu.memory_space<vmem>>, vector<2x8x16x128xf32>
      %124 = vector.broadcast %122 : vector<1x1x1x128xf32> to vector<2x8x16x128xf32>
      %125 = arith.mulf %123, %124 : vector<2x8x16x128xf32>
      %126 = arith.addf %119, %125 : vector<2x8x16x128xf32>
      %127 = vector.extract_strided_slice %26 {offsets = [8, 0], sizes = [1, 128], strides = [1, 1]} : vector<9x128xf32> to vector<1x128xf32>
      %128 = vector.shape_cast %127 : vector<1x128xf32> to vector<128xf32>
      %129 = vector.shape_cast %128 : vector<128xf32> to vector<1x1x1x128xf32>
      %c0_49 = arith.constant 0 : index
      %c2_50 = arith.constant 2 : index
      %c8_51 = arith.constant 8 : index
      %c0_52 = arith.constant 0 : index
      %130 = vector.load %arg7[%c0_49, %c2_50, %c8_51, %c0_52] : memref<2x10x24x128xf32, #tpu.memory_space<vmem>>, vector<2x8x16x128xf32>
      %131 = vector.broadcast %129 : vector<1x1x1x128xf32> to vector<2x8x16x128xf32>
      %132 = arith.mulf %130, %131 : vector<2x8x16x128xf32>
      %133 = arith.addf %126, %132 : vector<2x8x16x128xf32>
      %134 = vector.shape_cast %17 : vector<128xf32> to vector<1x1x1x128xf32>
      %135 = vector.broadcast %134 : vector<1x1x1x128xf32> to vector<2x8x16x128xf32>
      %136 = arith.mulf %133, %135 : vector<2x8x16x128xf32>
      %137 = vector.shape_cast %19 : vector<128xf32> to vector<1x1x1x128xf32>
      %138 = vector.broadcast %137 : vector<1x1x1x128xf32> to vector<2x8x16x128xf32>
      %139 = arith.addf %136, %138 : vector<2x8x16x128xf32>
      %cst_53 = arith.constant 0.000000e+00 : f32
      %140 = vector.broadcast %cst_53 : f32 to vector<2x8x16x128xf32>
      %141 = arith.cmpf oge, %139, %140 : vector<2x8x16x128xf32>
      %142 = vector.shape_cast %21 : vector<128xf32> to vector<1x1x1x128xf32>
      %143 = vector.broadcast %142 : vector<1x1x1x128xf32> to vector<2x8x16x128xf32>
      %144 = arith.mulf %143, %139 : vector<2x8x16x128xf32>
      %145 = arith.select %141, %139, %144 : vector<2x8x16x128xi1>, vector<2x8x16x128xf32>
      %146 = vector.shape_cast %145 : vector<2x8x16x128xf32> to vector<256x128xf32>
      %147 = arith.truncf %146 : vector<256x128xf32> to vector<256x128xbf16>
      %148 = arith.index_cast %arg0 : i32 to index
      %c0_54 = arith.constant 0 : index
      %c0_55 = arith.constant 0 : index
      %149 = vector.load %arg3[%148, %c0_54, %c0_55] : memref<6x128x128xbf16, #tpu.memory_space<vmem>>, vector<1x128x128xbf16>
      %150 = vector.shape_cast %149 : vector<1x128x128xbf16> to vector<128x128xbf16>
      %cst_56 = arith.constant dense<0.000000e+00> : vector<256x128xf32>
      %151 = tpu.matmul %147, %150, %cst_56 {dimension_numbers = #tpu.dot_dimension_numbers<[1], [0], [0], [1], [0, 0, 1, 1], [], []>} : vector<256x128xbf16>, vector<128x128xbf16>, vector<256x128xf32> -> vector<256x128xf32>
      %152 = vector.shape_cast %23 : vector<128xf32> to vector<1x128xf32>
      %153 = vector.broadcast %152 : vector<1x128xf32> to vector<256x128xf32>
      %154 = arith.addf %151, %153 : vector<256x128xf32>
      %155 = vector.shape_cast %154 : vector<256x128xf32> to vector<2x8x16x128xf32>
      %c0_57 = arith.constant 0 : index
      %c0_58 = arith.constant 0 : index
      %c0_59 = arith.constant 0 : index
      %c0_60 = arith.constant 0 : index
      %156 = vector.load %arg6[%c0_57, %c0_58, %c0_59, %c0_60] : memref<2x8x16x128xf32, #tpu.memory_space<vmem>>, vector<2x8x16x128xf32>
      %157 = arith.addf %155, %156 : vector<2x8x16x128xf32>
      %c0_61 = arith.constant 0 : index
      %c0_62 = arith.constant 0 : index
      %c0_63 = arith.constant 0 : index
      %c0_64 = arith.constant 0 : index
      %158 = vector.load %arg6[%c0_61, %c0_62, %c0_63, %c0_64] : memref<2x8x16x128xf32, #tpu.memory_space<vmem>>, vector<2x8x16x128xf32>
      tpu.vector_store %arg6[%c0_61, %c0_62, %c0_63, %c0_64], %157 {strides = array<i32>} : memref<2x8x16x128xf32, #tpu.memory_space<vmem>>, vector<2x8x16x128xf32>,
    } else {
    }
    %c1_i32 = arith.constant 1 : i32
    %54 = arith.cmpi eq, %arg0, %c1_i32 : i32
    %55 = arith.extui %54 : i1 to i32
    %c0_i32_15 = arith.constant 0 : i32
    %56 = arith.cmpi ne, %55, %c0_i32_15 : i32
    scf.if %56 {
      %c0_20 = arith.constant 0 : index
      %c1_21 = arith.constant 1 : index
      %c8_22 = arith.constant 8 : index
      %c0_23 = arith.constant 0 : index
      %69 = vector.load %arg7[%c0_20, %c1_21, %c8_22, %c0_23] : memref<2x10x24x128xf32, #tpu.memory_space<vmem>>, vector<2x8x16x128xf32>
      %70 = vector.extract_strided_slice %26 {offsets = [5, 0], sizes = [1, 128], strides = [1, 1]} : vector<9x128xf32> to vector<1x128xf32>
      %71 = vector.shape_cast %70 : vector<1x128xf32> to vector<128xf32>
      %72 = vector.shape_cast %71 : vector<128xf32> to vector<1x1x1x128xf32>
      %73 = vector.broadcast %72 : vector<1x1x1x128xf32> to vector<2x8x16x128xf32>
      %74 = arith.mulf %69, %73 : vector<2x8x16x128xf32>
      %75 = vector.shape_cast %15 : vector<128xf32> to vector<1x1x1x128xf32>
      %76 = vector.broadcast %75 : vector<1x1x1x128xf32> to vector<2x8x16x128xf32>
      %77 = arith.addf %74, %76 : vector<2x8x16x128xf32>
      %78 = vector.extract_strided_slice %26 {offsets = [0, 0], sizes = [1, 128], strides = [1, 1]} : vector<9x128xf32> to vector<1x128xf32>
      %79 = vector.shape_cast %78 : vector<1x128xf32> to vector<128xf32>
      %80 = vector.shape_cast %79 : vector<128xf32> to vector<1x1x1x128xf32>
      %c0_24 = arith.constant 0 : index
      %c0_25 = arith.constant 0 : index
      %c4 = arith.constant 4 : index
      %c0_26 = arith.constant 0 : index
      %81 = vector.load %arg7[%c0_24, %c0_25, %c4, %c0_26] : memref<2x10x24x128xf32, #tpu.memory_space<vmem>>, vector<2x8x16x128xf32>
      %82 = vector.broadcast %80 : vector<1x1x1x128xf32> to vector<2x8x16x128xf32>
      %83 = arith.mulf %81, %82 : vector<2x8x16x128xf32>
      %84 = arith.addf %77, %83 : vector<2x8x16x128xf32>
      %85 = vector.extract_strided_slice %26 {offsets = [3, 0], sizes = [1, 128], strides = [1, 1]} : vector<9x128xf32> to vector<1x128xf32>
      %86 = vector.shape_cast %85 : vector<1x128xf32> to vector<128xf32>
      %87 = vector.shape_cast %86 : vector<128xf32> to vector<1x1x1x128xf32>
      %c0_27 = arith.constant 0 : index
      %c1_28 = arith.constant 1 : index
      %c4_29 = arith.constant 4 : index
      %c0_30 = arith.constant 0 : index
      %88 = vector.load %arg7[%c0_27, %c1_28, %c4_29, %c0_30] : memref<2x10x24x128xf32, #tpu.memory_space<vmem>>, vector<2x8x16x128xf32>
      %89 = vector.broadcast %87 : vector<1x1x1x128xf32> to vector<2x8x16x128xf32>
      %90 = arith.mulf %88, %89 : vector<2x8x16x128xf32>
      %91 = arith.addf %84, %90 : vector<2x8x16x128xf32>
      %92 = vector.extract_strided_slice %26 {offsets = [6, 0], sizes = [1, 128], strides = [1, 1]} : vector<9x128xf32> to vector<1x128xf32>
      %93 = vector.shape_cast %92 : vector<1x128xf32> to vector<128xf32>
      %94 = vector.shape_cast %93 : vector<128xf32> to vector<1x1x1x128xf32>
      %c0_31 = arith.constant 0 : index
      %c2 = arith.constant 2 : index
      %c4_32 = arith.constant 4 : index
      %c0_33 = arith.constant 0 : index
      %95 = vector.load %arg7[%c0_31, %c2, %c4_32, %c0_33] : memref<2x10x24x128xf32, #tpu.memory_space<vmem>>, vector<2x8x16x128xf32>
      %96 = vector.broadcast %94 : vector<1x1x1x128xf32> to vector<2x8x16x128xf32>
      %97 = arith.mulf %95, %96 : vector<2x8x16x128xf32>
      %98 = arith.addf %91, %97 : vector<2x8x16x128xf32>
      %99 = vector.extract_strided_slice %26 {offsets = [1, 0], sizes = [1, 128], strides = [1, 1]} : vector<9x128xf32> to vector<1x128xf32>
      %100 = vector.shape_cast %99 : vector<1x128xf32> to vector<128xf32>
      %101 = vector.shape_cast %100 : vector<128xf32> to vector<1x1x1x128xf32>
      %c0_34 = arith.constant 0 : index
      %c0_35 = arith.constant 0 : index
      %c6 = arith.constant 6 : index
      %c0_36 = arith.constant 0 : index
      %102 = vector.load %arg7[%c0_34, %c0_35, %c6, %c0_36] : memref<2x10x24x128xf32, #tpu.memory_space<vmem>>, vector<2x8x16x128xf32>
      %103 = vector.broadcast %101 : vector<1x1x1x128xf32> to vector<2x8x16x128xf32>
      %104 = arith.mulf %102, %103 : vector<2x8x16x128xf32>
      %105 = arith.addf %98, %104 : vector<2x8x16x128xf32>
      %106 = vector.extract_strided_slice %26 {offsets = [4, 0], sizes = [1, 128], strides = [1, 1]} : vector<9x128xf32> to vector<1x128xf32>
      %107 = vector.shape_cast %106 : vector<1x128xf32> to vector<128xf32>
      %108 = vector.shape_cast %107 : vector<128xf32> to vector<1x1x1x128xf32>
      %c0_37 = arith.constant 0 : index
      %c1_38 = arith.constant 1 : index
      %c6_39 = arith.constant 6 : index
      %c0_40 = arith.constant 0 : index
      %109 = vector.load %arg7[%c0_37, %c1_38, %c6_39, %c0_40] : memref<2x10x24x128xf32, #tpu.memory_space<vmem>>, vector<2x8x16x128xf32>
      %110 = vector.broadcast %108 : vector<1x1x1x128xf32> to vector<2x8x16x128xf32>
      %111 = arith.mulf %109, %110 : vector<2x8x16x128xf32>
      %112 = arith.addf %105, %111 : vector<2x8x16x128xf32>
      %113 = vector.extract_strided_slice %26 {offsets = [7, 0], sizes = [1, 128], strides = [1, 1]} : vector<9x128xf32> to vector<1x128xf32>
      %114 = vector.shape_cast %113 : vector<1x128xf32> to vector<128xf32>
      %115 = vector.shape_cast %114 : vector<128xf32> to vector<1x1x1x128xf32>
      %c0_41 = arith.constant 0 : index
      %c2_42 = arith.constant 2 : index
      %c6_43 = arith.constant 6 : index
      %c0_44 = arith.constant 0 : index
      %116 = vector.load %arg7[%c0_41, %c2_42, %c6_43, %c0_44] : memref<2x10x24x128xf32, #tpu.memory_space<vmem>>, vector<2x8x16x128xf32>
      %117 = vector.broadcast %115 : vector<1x1x1x128xf32> to vector<2x8x16x128xf32>
      %118 = arith.mulf %116, %117 : vector<2x8x16x128xf32>
      %119 = arith.addf %112, %118 : vector<2x8x16x128xf32>
      %120 = vector.extract_strided_slice %26 {offsets = [2, 0], sizes = [1, 128], strides = [1, 1]} : vector<9x128xf32> to vector<1x128xf32>
      %121 = vector.shape_cast %120 : vector<1x128xf32> to vector<128xf32>
      %122 = vector.shape_cast %121 : vector<128xf32> to vector<1x1x1x128xf32>
      %c0_45 = arith.constant 0 : index
      %c0_46 = arith.constant 0 : index
      %c8_47 = arith.constant 8 : index
      %c0_48 = arith.constant 0 : index
      %123 = vector.load %arg7[%c0_45, %c0_46, %c8_47, %c0_48] : memref<2x10x24x128xf32, #tpu.memory_space<vmem>>, vector<2x8x16x128xf32>
      %124 = vector.broadcast %122 : vector<1x1x1x128xf32> to vector<2x8x16x128xf32>
      %125 = arith.mulf %123, %124 : vector<2x8x16x128xf32>
      %126 = arith.addf %119, %125 : vector<2x8x16x128xf32>
      %127 = vector.extract_strided_slice %26 {offsets = [8, 0], sizes = [1, 128], strides = [1, 1]} : vector<9x128xf32> to vector<1x128xf32>
      %128 = vector.shape_cast %127 : vector<1x128xf32> to vector<128xf32>
      %129 = vector.shape_cast %128 : vector<128xf32> to vector<1x1x1x128xf32>
      %c0_49 = arith.constant 0 : index
      %c2_50 = arith.constant 2 : index
      %c8_51 = arith.constant 8 : index
      %c0_52 = arith.constant 0 : index
      %130 = vector.load %arg7[%c0_49, %c2_50, %c8_51, %c0_52] : memref<2x10x24x128xf32, #tpu.memory_space<vmem>>, vector<2x8x16x128xf32>
      %131 = vector.broadcast %129 : vector<1x1x1x128xf32> to vector<2x8x16x128xf32>
      %132 = arith.mulf %130, %131 : vector<2x8x16x128xf32>
      %133 = arith.addf %126, %132 : vector<2x8x16x128xf32>
      %134 = vector.shape_cast %17 : vector<128xf32> to vector<1x1x1x128xf32>
      %135 = vector.broadcast %134 : vector<1x1x1x128xf32> to vector<2x8x16x128xf32>
      %136 = arith.mulf %133, %135 : vector<2x8x16x128xf32>
      %137 = vector.shape_cast %19 : vector<128xf32> to vector<1x1x1x128xf32>
      %138 = vector.broadcast %137 : vector<1x1x1x128xf32> to vector<2x8x16x128xf32>
      %139 = arith.addf %136, %138 : vector<2x8x16x128xf32>
      %cst_53 = arith.constant 0.000000e+00 : f32
      %140 = vector.broadcast %cst_53 : f32 to vector<2x8x16x128xf32>
      %141 = arith.cmpf oge, %139, %140 : vector<2x8x16x128xf32>
      %142 = vector.shape_cast %21 : vector<128xf32> to vector<1x1x1x128xf32>
      %143 = vector.broadcast %142 : vector<1x1x1x128xf32> to vector<2x8x16x128xf32>
      %144 = arith.mulf %143, %139 : vector<2x8x16x128xf32>
      %145 = arith.select %141, %139, %144 : vector<2x8x16x128xi1>, vector<2x8x16x128xf32>
      %146 = vector.shape_cast %145 : vector<2x8x16x128xf32> to vector<256x128xf32>
      %147 = arith.truncf %146 : vector<256x128xf32> to vector<256x128xbf16>
      %148 = arith.index_cast %arg0 : i32 to index
      %c0_54 = arith.constant 0 : index
      %c0_55 = arith.constant 0 : index
      %149 = vector.load %arg3[%148, %c0_54, %c0_55] : memref<6x128x128xbf16, #tpu.memory_space<vmem>>, vector<1x128x128xbf16>
      %150 = vector.shape_cast %149 : vector<1x128x128xbf16> to vector<128x128xbf16>
      %cst_56 = arith.constant dense<0.000000e+00> : vector<256x128xf32>
      %151 = tpu.matmul %147, %150, %cst_56 {dimension_numbers = #tpu.dot_dimension_numbers<[1], [0], [0], [1], [0, 0, 1, 1], [], []>} : vector<256x128xbf16>, vector<128x128xbf16>, vector<256x128xf32> -> vector<256x128xf32>
      %152 = vector.shape_cast %23 : vector<128xf32> to vector<1x128xf32>
      %153 = vector.broadcast %152 : vector<1x128xf32> to vector<256x128xf32>
      %154 = arith.addf %151, %153 : vector<256x128xf32>
      %155 = vector.shape_cast %154 : vector<256x128xf32> to vector<2x8x16x128xf32>
      %c0_57 = arith.constant 0 : index
      %c0_58 = arith.constant 0 : index
      %c0_59 = arith.constant 0 : index
      %c0_60 = arith.constant 0 : index
      %156 = vector.load %arg6[%c0_57, %c0_58, %c0_59, %c0_60] : memref<2x8x16x128xf32, #tpu.memory_space<vmem>>, vector<2x8x16x128xf32>
      %157 = arith.addf %155, %156 : vector<2x8x16x128xf32>
      %c0_61 = arith.constant 0 : index
      %c0_62 = arith.constant 0 : index
      %c0_63 = arith.constant 0 : index
      %c0_64 = arith.constant 0 : index
      %158 = vector.load %arg6[%c0_61, %c0_62, %c0_63, %c0_64] : memref<2x8x16x128xf32, #tpu.memory_space<vmem>>, vector<2x8x16x128xf32>
      tpu.vector_store %arg6[%c0_61, %c0_62, %c0_63, %c0_64], %157 {strides = array<i32>} : memref<2x8x16x128xf32, #tpu.memory_space<vmem>>, vector<2x8x16x128xf32>,
    } else {
    }
    %c2_i32 = arith.constant 2 : i32
    %57 = arith.cmpi eq, %arg0, %c2_i32 : i32
    %58 = arith.extui %57 : i1 to i32
    %c0_i32_16 = arith.constant 0 : i32
    %59 = arith.cmpi ne, %58, %c0_i32_16 : i32
    scf.if %59 {
      %c0_20 = arith.constant 0 : index
      %c1_21 = arith.constant 1 : index
      %c8_22 = arith.constant 8 : index
      %c0_23 = arith.constant 0 : index
      %69 = vector.load %arg7[%c0_20, %c1_21, %c8_22, %c0_23] : memref<2x10x24x128xf32, #tpu.memory_space<vmem>>, vector<2x8x16x128xf32>
      %70 = vector.extract_strided_slice %26 {offsets = [5, 0], sizes = [1, 128], strides = [1, 1]} : vector<9x128xf32> to vector<1x128xf32>
      %71 = vector.shape_cast %70 : vector<1x128xf32> to vector<128xf32>
      %72 = vector.shape_cast %71 : vector<128xf32> to vector<1x1x1x128xf32>
      %73 = vector.broadcast %72 : vector<1x1x1x128xf32> to vector<2x8x16x128xf32>
      %74 = arith.mulf %69, %73 : vector<2x8x16x128xf32>
      %75 = vector.shape_cast %15 : vector<128xf32> to vector<1x1x1x128xf32>
      %76 = vector.broadcast %75 : vector<1x1x1x128xf32> to vector<2x8x16x128xf32>
      %77 = arith.addf %74, %76 : vector<2x8x16x128xf32>
      %78 = vector.extract_strided_slice %26 {offsets = [0, 0], sizes = [1, 128], strides = [1, 1]} : vector<9x128xf32> to vector<1x128xf32>
      %79 = vector.shape_cast %78 : vector<1x128xf32> to vector<128xf32>
      %80 = vector.shape_cast %79 : vector<128xf32> to vector<1x1x1x128xf32>
      %c0_24 = arith.constant 0 : index
      %c0_25 = arith.constant 0 : index
      %c0_26 = arith.constant 0 : index
      %c0_27 = arith.constant 0 : index
      %81 = vector.load %arg7[%c0_24, %c0_25, %c0_26, %c0_27] : memref<2x10x24x128xf32, #tpu.memory_space<vmem>>, vector<2x8x16x128xf32>
      %82 = vector.broadcast %80 : vector<1x1x1x128xf32> to vector<2x8x16x128xf32>
      %83 = arith.mulf %81, %82 : vector<2x8x16x128xf32>
      %84 = arith.addf %77, %83 : vector<2x8x16x128xf32>
      %85 = vector.extract_strided_slice %26 {offsets = [3, 0], sizes = [1, 128], strides = [1, 1]} : vector<9x128xf32> to vector<1x128xf32>
      %86 = vector.shape_cast %85 : vector<1x128xf32> to vector<128xf32>
      %87 = vector.shape_cast %86 : vector<128xf32> to vector<1x1x1x128xf32>
      %c0_28 = arith.constant 0 : index
      %c1_29 = arith.constant 1 : index
      %c0_30 = arith.constant 0 : index
      %c0_31 = arith.constant 0 : index
      %88 = vector.load %arg7[%c0_28, %c1_29, %c0_30, %c0_31] : memref<2x10x24x128xf32, #tpu.memory_space<vmem>>, vector<2x8x16x128xf32>
      %89 = vector.broadcast %87 : vector<1x1x1x128xf32> to vector<2x8x16x128xf32>
      %90 = arith.mulf %88, %89 : vector<2x8x16x128xf32>
      %91 = arith.addf %84, %90 : vector<2x8x16x128xf32>
      %92 = vector.extract_strided_slice %26 {offsets = [6, 0], sizes = [1, 128], strides = [1, 1]} : vector<9x128xf32> to vector<1x128xf32>
      %93 = vector.shape_cast %92 : vector<1x128xf32> to vector<128xf32>
      %94 = vector.shape_cast %93 : vector<128xf32> to vector<1x1x1x128xf32>
      %c0_32 = arith.constant 0 : index
      %c2 = arith.constant 2 : index
      %c0_33 = arith.constant 0 : index
      %c0_34 = arith.constant 0 : index
      %95 = vector.load %arg7[%c0_32, %c2, %c0_33, %c0_34] : memref<2x10x24x128xf32, #tpu.memory_space<vmem>>, vector<2x8x16x128xf32>
      %96 = vector.broadcast %94 : vector<1x1x1x128xf32> to vector<2x8x16x128xf32>
      %97 = arith.mulf %95, %96 : vector<2x8x16x128xf32>
      %98 = arith.addf %91, %97 : vector<2x8x16x128xf32>
      %99 = vector.extract_strided_slice %26 {offsets = [1, 0], sizes = [1, 128], strides = [1, 1]} : vector<9x128xf32> to vector<1x128xf32>
      %100 = vector.shape_cast %99 : vector<1x128xf32> to vector<128xf32>
      %101 = vector.shape_cast %100 : vector<128xf32> to vector<1x1x1x128xf32>
      %c0_35 = arith.constant 0 : index
      %c0_36 = arith.constant 0 : index
      %c4 = arith.constant 4 : index
      %c0_37 = arith.constant 0 : index
      %102 = vector.load %arg7[%c0_35, %c0_36, %c4, %c0_37] : memref<2x10x24x128xf32, #tpu.memory_space<vmem>>, vector<2x8x16x128xf32>
      %103 = vector.broadcast %101 : vector<1x1x1x128xf32> to vector<2x8x16x128xf32>
      %104 = arith.mulf %102, %103 : vector<2x8x16x128xf32>
      %105 = arith.addf %98, %104 : vector<2x8x16x128xf32>
      %106 = vector.extract_strided_slice %26 {offsets = [4, 0], sizes = [1, 128], strides = [1, 1]} : vector<9x128xf32> to vector<1x128xf32>
      %107 = vector.shape_cast %106 : vector<1x128xf32> to vector<128xf32>
      %108 = vector.shape_cast %107 : vector<128xf32> to vector<1x1x1x128xf32>
      %c0_38 = arith.constant 0 : index
      %c1_39 = arith.constant 1 : index
      %c4_40 = arith.constant 4 : index
      %c0_41 = arith.constant 0 : index
      %109 = vector.load %arg7[%c0_38, %c1_39, %c4_40, %c0_41] : memref<2x10x24x128xf32, #tpu.memory_space<vmem>>, vector<2x8x16x128xf32>
      %110 = vector.broadcast %108 : vector<1x1x1x128xf32> to vector<2x8x16x128xf32>
      %111 = arith.mulf %109, %110 : vector<2x8x16x128xf32>
      %112 = arith.addf %105, %111 : vector<2x8x16x128xf32>
      %113 = vector.extract_strided_slice %26 {offsets = [7, 0], sizes = [1, 128], strides = [1, 1]} : vector<9x128xf32> to vector<1x128xf32>
      %114 = vector.shape_cast %113 : vector<1x128xf32> to vector<128xf32>
      %115 = vector.shape_cast %114 : vector<128xf32> to vector<1x1x1x128xf32>
      %c0_42 = arith.constant 0 : index
      %c2_43 = arith.constant 2 : index
      %c4_44 = arith.constant 4 : index
      %c0_45 = arith.constant 0 : index
      %116 = vector.load %arg7[%c0_42, %c2_43, %c4_44, %c0_45] : memref<2x10x24x128xf32, #tpu.memory_space<vmem>>, vector<2x8x16x128xf32>
      %117 = vector.broadcast %115 : vector<1x1x1x128xf32> to vector<2x8x16x128xf32>
      %118 = arith.mulf %116, %117 : vector<2x8x16x128xf32>
      %119 = arith.addf %112, %118 : vector<2x8x16x128xf32>
      %120 = vector.extract_strided_slice %26 {offsets = [2, 0], sizes = [1, 128], strides = [1, 1]} : vector<9x128xf32> to vector<1x128xf32>
      %121 = vector.shape_cast %120 : vector<1x128xf32> to vector<128xf32>
      %122 = vector.shape_cast %121 : vector<128xf32> to vector<1x1x1x128xf32>
      %c0_46 = arith.constant 0 : index
      %c0_47 = arith.constant 0 : index
      %c8_48 = arith.constant 8 : index
      %c0_49 = arith.constant 0 : index
      %123 = vector.load %arg7[%c0_46, %c0_47, %c8_48, %c0_49] : memref<2x10x24x128xf32, #tpu.memory_space<vmem>>, vector<2x8x16x128xf32>
      %124 = vector.broadcast %122 : vector<1x1x1x128xf32> to vector<2x8x16x128xf32>
      %125 = arith.mulf %123, %124 : vector<2x8x16x128xf32>
      %126 = arith.addf %119, %125 : vector<2x8x16x128xf32>
      %127 = vector.extract_strided_slice %26 {offsets = [8, 0], sizes = [1, 128], strides = [1, 1]} : vector<9x128xf32> to vector<1x128xf32>
      %128 = vector.shape_cast %127 : vector<1x128xf32> to vector<128xf32>
      %129 = vector.shape_cast %128 : vector<128xf32> to vector<1x1x1x128xf32>
      %c0_50 = arith.constant 0 : index
      %c2_51 = arith.constant 2 : index
      %c8_52 = arith.constant 8 : index
      %c0_53 = arith.constant 0 : index
      %130 = vector.load %arg7[%c0_50, %c2_51, %c8_52, %c0_53] : memref<2x10x24x128xf32, #tpu.memory_space<vmem>>, vector<2x8x16x128xf32>
      %131 = vector.broadcast %129 : vector<1x1x1x128xf32> to vector<2x8x16x128xf32>
      %132 = arith.mulf %130, %131 : vector<2x8x16x128xf32>
      %133 = arith.addf %126, %132 : vector<2x8x16x128xf32>
      %134 = vector.shape_cast %17 : vector<128xf32> to vector<1x1x1x128xf32>
      %135 = vector.broadcast %134 : vector<1x1x1x128xf32> to vector<2x8x16x128xf32>
      %136 = arith.mulf %133, %135 : vector<2x8x16x128xf32>
      %137 = vector.shape_cast %19 : vector<128xf32> to vector<1x1x1x128xf32>
      %138 = vector.broadcast %137 : vector<1x1x1x128xf32> to vector<2x8x16x128xf32>
      %139 = arith.addf %136, %138 : vector<2x8x16x128xf32>
      %cst_54 = arith.constant 0.000000e+00 : f32
      %140 = vector.broadcast %cst_54 : f32 to vector<2x8x16x128xf32>
      %141 = arith.cmpf oge, %139, %140 : vector<2x8x16x128xf32>
      %142 = vector.shape_cast %21 : vector<128xf32> to vector<1x1x1x128xf32>
      %143 = vector.broadcast %142 : vector<1x1x1x128xf32> to vector<2x8x16x128xf32>
      %144 = arith.mulf %143, %139 : vector<2x8x16x128xf32>
      %145 = arith.select %141, %139, %144 : vector<2x8x16x128xi1>, vector<2x8x16x128xf32>
      %146 = vector.shape_cast %145 : vector<2x8x16x128xf32> to vector<256x128xf32>
      %147 = arith.truncf %146 : vector<256x128xf32> to vector<256x128xbf16>
      %148 = arith.index_cast %arg0 : i32 to index
      %c0_55 = arith.constant 0 : index
      %c0_56 = arith.constant 0 : index
      %149 = vector.load %arg3[%148, %c0_55, %c0_56] : memref<6x128x128xbf16, #tpu.memory_space<vmem>>, vector<1x128x128xbf16>
      %150 = vector.shape_cast %149 : vector<1x128x128xbf16> to vector<128x128xbf16>
      %cst_57 = arith.constant dense<0.000000e+00> : vector<256x128xf32>
      %151 = tpu.matmul %147, %150, %cst_57 {dimension_numbers = #tpu.dot_dimension_numbers<[1], [0], [0], [1], [0, 0, 1, 1], [], []>} : vector<256x128xbf16>, vector<128x128xbf16>, vector<256x128xf32> -> vector<256x128xf32>
      %152 = vector.shape_cast %23 : vector<128xf32> to vector<1x128xf32>
      %153 = vector.broadcast %152 : vector<1x128xf32> to vector<256x128xf32>
      %154 = arith.addf %151, %153 : vector<256x128xf32>
      %155 = vector.shape_cast %154 : vector<256x128xf32> to vector<2x8x16x128xf32>
      %c0_58 = arith.constant 0 : index
      %c0_59 = arith.constant 0 : index
      %c0_60 = arith.constant 0 : index
      %c0_61 = arith.constant 0 : index
      %156 = vector.load %arg6[%c0_58, %c0_59, %c0_60, %c0_61] : memref<2x8x16x128xf32, #tpu.memory_space<vmem>>, vector<2x8x16x128xf32>
      %157 = arith.addf %155, %156 : vector<2x8x16x128xf32>
      %c0_62 = arith.constant 0 : index
      %c0_63 = arith.constant 0 : index
      %c0_64 = arith.constant 0 : index
      %c0_65 = arith.constant 0 : index
      %158 = vector.load %arg6[%c0_62, %c0_63, %c0_64, %c0_65] : memref<2x8x16x128xf32, #tpu.memory_space<vmem>>, vector<2x8x16x128xf32>
      tpu.vector_store %arg6[%c0_62, %c0_63, %c0_64, %c0_65], %157 {strides = array<i32>} : memref<2x8x16x128xf32, #tpu.memory_space<vmem>>, vector<2x8x16x128xf32>,
    } else {
    }
    %c3_i32 = arith.constant 3 : i32
    %60 = arith.cmpi eq, %arg0, %c3_i32 : i32
    %61 = arith.extui %60 : i1 to i32
    %c0_i32_17 = arith.constant 0 : i32
    %62 = arith.cmpi ne, %61, %c0_i32_17 : i32
    scf.if %62 {
      %c0_20 = arith.constant 0 : index
      %c1_21 = arith.constant 1 : index
      %c8_22 = arith.constant 8 : index
      %c0_23 = arith.constant 0 : index
      %69 = vector.load %arg7[%c0_20, %c1_21, %c8_22, %c0_23] : memref<2x10x24x128xf32, #tpu.memory_space<vmem>>, vector<2x8x16x128xf32>
      %70 = vector.extract_strided_slice %26 {offsets = [5, 0], sizes = [1, 128], strides = [1, 1]} : vector<9x128xf32> to vector<1x128xf32>
      %71 = vector.shape_cast %70 : vector<1x128xf32> to vector<128xf32>
      %72 = vector.shape_cast %71 : vector<128xf32> to vector<1x1x1x128xf32>
      %73 = vector.broadcast %72 : vector<1x1x1x128xf32> to vector<2x8x16x128xf32>
      %74 = arith.mulf %69, %73 : vector<2x8x16x128xf32>
      %75 = vector.shape_cast %15 : vector<128xf32> to vector<1x1x1x128xf32>
      %76 = vector.broadcast %75 : vector<1x1x1x128xf32> to vector<2x8x16x128xf32>
      %77 = arith.addf %74, %76 : vector<2x8x16x128xf32>
      %78 = vector.extract_strided_slice %26 {offsets = [1, 0], sizes = [1, 128], strides = [1, 1]} : vector<9x128xf32> to vector<1x128xf32>
      %79 = vector.shape_cast %78 : vector<1x128xf32> to vector<128xf32>
      %80 = vector.shape_cast %79 : vector<128xf32> to vector<1x1x1x128xf32>
      %c0_24 = arith.constant 0 : index
      %c0_25 = arith.constant 0 : index
      %c0_26 = arith.constant 0 : index
      %c0_27 = arith.constant 0 : index
      %81 = vector.load %arg7[%c0_24, %c0_25, %c0_26, %c0_27] : memref<2x10x24x128xf32, #tpu.memory_space<vmem>>, vector<2x8x16x128xf32>
      %82 = vector.broadcast %80 : vector<1x1x1x128xf32> to vector<2x8x16x128xf32>
      %83 = arith.mulf %81, %82 : vector<2x8x16x128xf32>
      %84 = arith.addf %77, %83 : vector<2x8x16x128xf32>
      %85 = vector.extract_strided_slice %26 {offsets = [4, 0], sizes = [1, 128], strides = [1, 1]} : vector<9x128xf32> to vector<1x128xf32>
      %86 = vector.shape_cast %85 : vector<1x128xf32> to vector<128xf32>
      %87 = vector.shape_cast %86 : vector<128xf32> to vector<1x1x1x128xf32>
      %c0_28 = arith.constant 0 : index
      %c1_29 = arith.constant 1 : index
      %c0_30 = arith.constant 0 : index
      %c0_31 = arith.constant 0 : index
      %88 = vector.load %arg7[%c0_28, %c1_29, %c0_30, %c0_31] : memref<2x10x24x128xf32, #tpu.memory_space<vmem>>, vector<2x8x16x128xf32>
      %89 = vector.broadcast %87 : vector<1x1x1x128xf32> to vector<2x8x16x128xf32>
      %90 = arith.mulf %88, %89 : vector<2x8x16x128xf32>
      %91 = arith.addf %84, %90 : vector<2x8x16x128xf32>
      %92 = vector.extract_strided_slice %26 {offsets = [7, 0], sizes = [1, 128], strides = [1, 1]} : vector<9x128xf32> to vector<1x128xf32>
      %93 = vector.shape_cast %92 : vector<1x128xf32> to vector<128xf32>
      %94 = vector.shape_cast %93 : vector<128xf32> to vector<1x1x1x128xf32>
      %c0_32 = arith.constant 0 : index
      %c2 = arith.constant 2 : index
      %c0_33 = arith.constant 0 : index
      %c0_34 = arith.constant 0 : index
      %95 = vector.load %arg7[%c0_32, %c2, %c0_33, %c0_34] : memref<2x10x24x128xf32, #tpu.memory_space<vmem>>, vector<2x8x16x128xf32>
      %96 = vector.broadcast %94 : vector<1x1x1x128xf32> to vector<2x8x16x128xf32>
      %97 = arith.mulf %95, %96 : vector<2x8x16x128xf32>
      %98 = arith.addf %91, %97 : vector<2x8x16x128xf32>
      %99 = vector.extract_strided_slice %26 {offsets = [2, 0], sizes = [1, 128], strides = [1, 1]} : vector<9x128xf32> to vector<1x128xf32>
      %100 = vector.shape_cast %99 : vector<1x128xf32> to vector<128xf32>
      %101 = vector.shape_cast %100 : vector<128xf32> to vector<1x1x1x128xf32>
      %c0_35 = arith.constant 0 : index
      %c0_36 = arith.constant 0 : index
      %c8_37 = arith.constant 8 : index
      %c0_38 = arith.constant 0 : index
      %102 = vector.load %arg7[%c0_35, %c0_36, %c8_37, %c0_38] : memref<2x10x24x128xf32, #tpu.memory_space<vmem>>, vector<2x8x16x128xf32>
      %103 = vector.broadcast %101 : vector<1x1x1x128xf32> to vector<2x8x16x128xf32>
      %104 = arith.mulf %102, %103 : vector<2x8x16x128xf32>
      %105 = arith.addf %98, %104 : vector<2x8x16x128xf32>
      %106 = vector.extract_strided_slice %26 {offsets = [8, 0], sizes = [1, 128], strides = [1, 1]} : vector<9x128xf32> to vector<1x128xf32>
      %107 = vector.shape_cast %106 : vector<1x128xf32> to vector<128xf32>
      %108 = vector.shape_cast %107 : vector<128xf32> to vector<1x1x1x128xf32>
      %c0_39 = arith.constant 0 : index
      %c2_40 = arith.constant 2 : index
      %c8_41 = arith.constant 8 : index
      %c0_42 = arith.constant 0 : index
      %109 = vector.load %arg7[%c0_39, %c2_40, %c8_41, %c0_42] : memref<2x10x24x128xf32, #tpu.memory_space<vmem>>, vector<2x8x16x128xf32>
      %110 = vector.broadcast %108 : vector<1x1x1x128xf32> to vector<2x8x16x128xf32>
      %111 = arith.mulf %109, %110 : vector<2x8x16x128xf32>
      %112 = arith.addf %105, %111 : vector<2x8x16x128xf32>
      %113 = vector.shape_cast %17 : vector<128xf32> to vector<1x1x1x128xf32>
      %114 = vector.broadcast %113 : vector<1x1x1x128xf32> to vector<2x8x16x128xf32>
      %115 = arith.mulf %112, %114 : vector<2x8x16x128xf32>
      %116 = vector.shape_cast %19 : vector<128xf32> to vector<1x1x1x128xf32>
      %117 = vector.broadcast %116 : vector<1x1x1x128xf32> to vector<2x8x16x128xf32>
      %118 = arith.addf %115, %117 : vector<2x8x16x128xf32>
      %cst_43 = arith.constant 0.000000e+00 : f32
      %119 = vector.broadcast %cst_43 : f32 to vector<2x8x16x128xf32>
      %120 = arith.cmpf oge, %118, %119 : vector<2x8x16x128xf32>
      %121 = vector.shape_cast %21 : vector<128xf32> to vector<1x1x1x128xf32>
      %122 = vector.broadcast %121 : vector<1x1x1x128xf32> to vector<2x8x16x128xf32>
      %123 = arith.mulf %122, %118 : vector<2x8x16x128xf32>
      %124 = arith.select %120, %118, %123 : vector<2x8x16x128xi1>, vector<2x8x16x128xf32>
      %125 = vector.shape_cast %124 : vector<2x8x16x128xf32> to vector<256x128xf32>
      %126 = arith.truncf %125 : vector<256x128xf32> to vector<256x128xbf16>
      %127 = arith.index_cast %arg0 : i32 to index
      %c0_44 = arith.constant 0 : index
      %c0_45 = arith.constant 0 : index
      %128 = vector.load %arg3[%127, %c0_44, %c0_45] : memref<6x128x128xbf16, #tpu.memory_space<vmem>>, vector<1x128x128xbf16>
      %129 = vector.shape_cast %128 : vector<1x128x128xbf16> to vector<128x128xbf16>
      %cst_46 = arith.constant dense<0.000000e+00> : vector<256x128xf32>
      %130 = tpu.matmul %126, %129, %cst_46 {dimension_numbers = #tpu.dot_dimension_numbers<[1], [0], [0], [1], [0, 0, 1, 1], [], []>} : vector<256x128xbf16>, vector<128x128xbf16>, vector<256x128xf32> -> vector<256x128xf32>
      %131 = vector.shape_cast %23 : vector<128xf32> to vector<1x128xf32>
      %132 = vector.broadcast %131 : vector<1x128xf32> to vector<256x128xf32>
      %133 = arith.addf %130, %132 : vector<256x128xf32>
      %134 = vector.shape_cast %133 : vector<256x128xf32> to vector<2x8x16x128xf32>
      %c0_47 = arith.constant 0 : index
      %c0_48 = arith.constant 0 : index
      %c0_49 = arith.constant 0 : index
      %c0_50 = arith.constant 0 : index
      %135 = vector.load %arg6[%c0_47, %c0_48, %c0_49, %c0_50] : memref<2x8x16x128xf32, #tpu.memory_space<vmem>>, vector<2x8x16x128xf32>
      %136 = arith.addf %134, %135 : vector<2x8x16x128xf32>
      %c0_51 = arith.constant 0 : index
      %c0_52 = arith.constant 0 : index
      %c0_53 = arith.constant 0 : index
      %c0_54 = arith.constant 0 : index
      %137 = vector.load %arg6[%c0_51, %c0_52, %c0_53, %c0_54] : memref<2x8x16x128xf32, #tpu.memory_space<vmem>>, vector<2x8x16x128xf32>
      tpu.vector_store %arg6[%c0_51, %c0_52, %c0_53, %c0_54], %136 {strides = array<i32>} : memref<2x8x16x128xf32, #tpu.memory_space<vmem>>, vector<2x8x16x128xf32>,
    } else {
    }
    %c4_i32 = arith.constant 4 : i32
    %63 = arith.cmpi eq, %arg0, %c4_i32 : i32
    %64 = arith.extui %63 : i1 to i32
    %c0_i32_18 = arith.constant 0 : i32
    %65 = arith.cmpi ne, %64, %c0_i32_18 : i32
    scf.if %65 {
      %c0_20 = arith.constant 0 : index
      %c1_21 = arith.constant 1 : index
      %c8_22 = arith.constant 8 : index
      %c0_23 = arith.constant 0 : index
      %69 = vector.load %arg7[%c0_20, %c1_21, %c8_22, %c0_23] : memref<2x10x24x128xf32, #tpu.memory_space<vmem>>, vector<2x8x16x128xf32>
      %70 = vector.extract_strided_slice %26 {offsets = [5, 0], sizes = [1, 128], strides = [1, 1]} : vector<9x128xf32> to vector<1x128xf32>
      %71 = vector.shape_cast %70 : vector<1x128xf32> to vector<128xf32>
      %72 = vector.shape_cast %71 : vector<128xf32> to vector<1x1x1x128xf32>
      %73 = vector.broadcast %72 : vector<1x1x1x128xf32> to vector<2x8x16x128xf32>
      %74 = arith.mulf %69, %73 : vector<2x8x16x128xf32>
      %75 = vector.shape_cast %15 : vector<128xf32> to vector<1x1x1x128xf32>
      %76 = vector.broadcast %75 : vector<1x1x1x128xf32> to vector<2x8x16x128xf32>
      %77 = arith.addf %74, %76 : vector<2x8x16x128xf32>
      %78 = vector.extract_strided_slice %26 {offsets = [2, 0], sizes = [1, 128], strides = [1, 1]} : vector<9x128xf32> to vector<1x128xf32>
      %79 = vector.shape_cast %78 : vector<1x128xf32> to vector<128xf32>
      %80 = vector.shape_cast %79 : vector<128xf32> to vector<1x1x1x128xf32>
      %c0_24 = arith.constant 0 : index
      %c0_25 = arith.constant 0 : index
      %c8_26 = arith.constant 8 : index
      %c0_27 = arith.constant 0 : index
      %81 = vector.load %arg7[%c0_24, %c0_25, %c8_26, %c0_27] : memref<2x10x24x128xf32, #tpu.memory_space<vmem>>, vector<2x8x16x128xf32>
      %82 = vector.broadcast %80 : vector<1x1x1x128xf32> to vector<2x8x16x128xf32>
      %83 = arith.mulf %81, %82 : vector<2x8x16x128xf32>
      %84 = arith.addf %77, %83 : vector<2x8x16x128xf32>
      %85 = vector.extract_strided_slice %26 {offsets = [8, 0], sizes = [1, 128], strides = [1, 1]} : vector<9x128xf32> to vector<1x128xf32>
      %86 = vector.shape_cast %85 : vector<1x128xf32> to vector<128xf32>
      %87 = vector.shape_cast %86 : vector<128xf32> to vector<1x1x1x128xf32>
      %c0_28 = arith.constant 0 : index
      %c2 = arith.constant 2 : index
      %c8_29 = arith.constant 8 : index
      %c0_30 = arith.constant 0 : index
      %88 = vector.load %arg7[%c0_28, %c2, %c8_29, %c0_30] : memref<2x10x24x128xf32, #tpu.memory_space<vmem>>, vector<2x8x16x128xf32>
      %89 = vector.broadcast %87 : vector<1x1x1x128xf32> to vector<2x8x16x128xf32>
      %90 = arith.mulf %88, %89 : vector<2x8x16x128xf32>
      %91 = arith.addf %84, %90 : vector<2x8x16x128xf32>
      %92 = vector.shape_cast %17 : vector<128xf32> to vector<1x1x1x128xf32>
      %93 = vector.broadcast %92 : vector<1x1x1x128xf32> to vector<2x8x16x128xf32>
      %94 = arith.mulf %91, %93 : vector<2x8x16x128xf32>
      %95 = vector.shape_cast %19 : vector<128xf32> to vector<1x1x1x128xf32>
      %96 = vector.broadcast %95 : vector<1x1x1x128xf32> to vector<2x8x16x128xf32>
      %97 = arith.addf %94, %96 : vector<2x8x16x128xf32>
      %cst_31 = arith.constant 0.000000e+00 : f32
      %98 = vector.broadcast %cst_31 : f32 to vector<2x8x16x128xf32>
      %99 = arith.cmpf oge, %97, %98 : vector<2x8x16x128xf32>
      %100 = vector.shape_cast %21 : vector<128xf32> to vector<1x1x1x128xf32>
      %101 = vector.broadcast %100 : vector<1x1x1x128xf32> to vector<2x8x16x128xf32>
      %102 = arith.mulf %101, %97 : vector<2x8x16x128xf32>
      %103 = arith.select %99, %97, %102 : vector<2x8x16x128xi1>, vector<2x8x16x128xf32>
      %104 = vector.shape_cast %103 : vector<2x8x16x128xf32> to vector<256x128xf32>
      %105 = arith.truncf %104 : vector<256x128xf32> to vector<256x128xbf16>
      %106 = arith.index_cast %arg0 : i32 to index
      %c0_32 = arith.constant 0 : index
      %c0_33 = arith.constant 0 : index
      %107 = vector.load %arg3[%106, %c0_32, %c0_33] : memref<6x128x128xbf16, #tpu.memory_space<vmem>>, vector<1x128x128xbf16>
      %108 = vector.shape_cast %107 : vector<1x128x128xbf16> to vector<128x128xbf16>
      %cst_34 = arith.constant dense<0.000000e+00> : vector<256x128xf32>
      %109 = tpu.matmul %105, %108, %cst_34 {dimension_numbers = #tpu.dot_dimension_numbers<[1], [0], [0], [1], [0, 0, 1, 1], [], []>} : vector<256x128xbf16>, vector<128x128xbf16>, vector<256x128xf32> -> vector<256x128xf32>
      %110 = vector.shape_cast %23 : vector<128xf32> to vector<1x128xf32>
      %111 = vector.broadcast %110 : vector<1x128xf32> to vector<256x128xf32>
      %112 = arith.addf %109, %111 : vector<256x128xf32>
      %113 = vector.shape_cast %112 : vector<256x128xf32> to vector<2x8x16x128xf32>
      %c0_35 = arith.constant 0 : index
      %c0_36 = arith.constant 0 : index
      %c0_37 = arith.constant 0 : index
      %c0_38 = arith.constant 0 : index
      %114 = vector.load %arg6[%c0_35, %c0_36, %c0_37, %c0_38] : memref<2x8x16x128xf32, #tpu.memory_space<vmem>>, vector<2x8x16x128xf32>
      %115 = arith.addf %113, %114 : vector<2x8x16x128xf32>
      %c0_39 = arith.constant 0 : index
      %c0_40 = arith.constant 0 : index
      %c0_41 = arith.constant 0 : index
      %c0_42 = arith.constant 0 : index
      %116 = vector.load %arg6[%c0_39, %c0_40, %c0_41, %c0_42] : memref<2x8x16x128xf32, #tpu.memory_space<vmem>>, vector<2x8x16x128xf32>
      tpu.vector_store %arg6[%c0_39, %c0_40, %c0_41, %c0_42], %115 {strides = array<i32>} : memref<2x8x16x128xf32, #tpu.memory_space<vmem>>, vector<2x8x16x128xf32>,
    } else {
    }
    %c5_i32 = arith.constant 5 : i32
    %66 = arith.cmpi eq, %arg0, %c5_i32 : i32
    %67 = arith.extui %66 : i1 to i32
    %c0_i32_19 = arith.constant 0 : i32
    %68 = arith.cmpi ne, %67, %c0_i32_19 : i32
    scf.if %68 {
      %c0_20 = arith.constant 0 : index
      %c1_21 = arith.constant 1 : index
      %c8_22 = arith.constant 8 : index
      %c0_23 = arith.constant 0 : index
      %69 = vector.load %arg7[%c0_20, %c1_21, %c8_22, %c0_23] : memref<2x10x24x128xf32, #tpu.memory_space<vmem>>, vector<2x8x16x128xf32>
      %70 = vector.extract_strided_slice %26 {offsets = [5, 0], sizes = [1, 128], strides = [1, 1]} : vector<9x128xf32> to vector<1x128xf32>
      %71 = vector.shape_cast %70 : vector<1x128xf32> to vector<128xf32>
      %72 = vector.shape_cast %71 : vector<128xf32> to vector<1x1x1x128xf32>
      %73 = vector.broadcast %72 : vector<1x1x1x128xf32> to vector<2x8x16x128xf32>
      %74 = arith.mulf %69, %73 : vector<2x8x16x128xf32>
      %75 = vector.shape_cast %15 : vector<128xf32> to vector<1x1x1x128xf32>
      %76 = vector.broadcast %75 : vector<1x1x1x128xf32> to vector<2x8x16x128xf32>
      %77 = arith.addf %74, %76 : vector<2x8x16x128xf32>
      %78 = vector.extract_strided_slice %26 {offsets = [2, 0], sizes = [1, 128], strides = [1, 1]} : vector<9x128xf32> to vector<1x128xf32>
      %79 = vector.shape_cast %78 : vector<1x128xf32> to vector<128xf32>
      %80 = vector.shape_cast %79 : vector<128xf32> to vector<1x1x1x128xf32>
      %c0_24 = arith.constant 0 : index
      %c0_25 = arith.constant 0 : index
      %c8_26 = arith.constant 8 : index
      %c0_27 = arith.constant 0 : index
      %81 = vector.load %arg7[%c0_24, %c0_25, %c8_26, %c0_27] : memref<2x10x24x128xf32, #tpu.memory_space<vmem>>, vector<2x8x16x128xf32>
      %82 = vector.broadcast %80 : vector<1x1x1x128xf32> to vector<2x8x16x128xf32>
      %83 = arith.mulf %81, %82 : vector<2x8x16x128xf32>
      %84 = arith.addf %77, %83 : vector<2x8x16x128xf32>
      %85 = vector.extract_strided_slice %26 {offsets = [8, 0], sizes = [1, 128], strides = [1, 1]} : vector<9x128xf32> to vector<1x128xf32>
      %86 = vector.shape_cast %85 : vector<1x128xf32> to vector<128xf32>
      %87 = vector.shape_cast %86 : vector<128xf32> to vector<1x1x1x128xf32>
      %c0_28 = arith.constant 0 : index
      %c2 = arith.constant 2 : index
      %c8_29 = arith.constant 8 : index
      %c0_30 = arith.constant 0 : index
      %88 = vector.load %arg7[%c0_28, %c2, %c8_29, %c0_30] : memref<2x10x24x128xf32, #tpu.memory_space<vmem>>, vector<2x8x16x128xf32>
      %89 = vector.broadcast %87 : vector<1x1x1x128xf32> to vector<2x8x16x128xf32>
      %90 = arith.mulf %88, %89 : vector<2x8x16x128xf32>
      %91 = arith.addf %84, %90 : vector<2x8x16x128xf32>
      %92 = vector.shape_cast %17 : vector<128xf32> to vector<1x1x1x128xf32>
      %93 = vector.broadcast %92 : vector<1x1x1x128xf32> to vector<2x8x16x128xf32>
      %94 = arith.mulf %91, %93 : vector<2x8x16x128xf32>
      %95 = vector.shape_cast %19 : vector<128xf32> to vector<1x1x1x128xf32>
      %96 = vector.broadcast %95 : vector<1x1x1x128xf32> to vector<2x8x16x128xf32>
      %97 = arith.addf %94, %96 : vector<2x8x16x128xf32>
      %cst_31 = arith.constant 0.000000e+00 : f32
      %98 = vector.broadcast %cst_31 : f32 to vector<2x8x16x128xf32>
      %99 = arith.cmpf oge, %97, %98 : vector<2x8x16x128xf32>
      %100 = vector.shape_cast %21 : vector<128xf32> to vector<1x1x1x128xf32>
      %101 = vector.broadcast %100 : vector<1x1x1x128xf32> to vector<2x8x16x128xf32>
      %102 = arith.mulf %101, %97 : vector<2x8x16x128xf32>
      %103 = arith.select %99, %97, %102 : vector<2x8x16x128xi1>, vector<2x8x16x128xf32>
      %104 = vector.shape_cast %103 : vector<2x8x16x128xf32> to vector<256x128xf32>
      %105 = arith.truncf %104 : vector<256x128xf32> to vector<256x128xbf16>
      %106 = arith.index_cast %arg0 : i32 to index
      %c0_32 = arith.constant 0 : index
      %c0_33 = arith.constant 0 : index
      %107 = vector.load %arg3[%106, %c0_32, %c0_33] : memref<6x128x128xbf16, #tpu.memory_space<vmem>>, vector<1x128x128xbf16>
      %108 = vector.shape_cast %107 : vector<1x128x128xbf16> to vector<128x128xbf16>
      %cst_34 = arith.constant dense<0.000000e+00> : vector<256x128xf32>
      %109 = tpu.matmul %105, %108, %cst_34 {dimension_numbers = #tpu.dot_dimension_numbers<[1], [0], [0], [1], [0, 0, 1, 1], [], []>} : vector<256x128xbf16>, vector<128x128xbf16>, vector<256x128xf32> -> vector<256x128xf32>
      %110 = vector.shape_cast %23 : vector<128xf32> to vector<1x128xf32>
      %111 = vector.broadcast %110 : vector<1x128xf32> to vector<256x128xf32>
      %112 = arith.addf %109, %111 : vector<256x128xf32>
      %113 = vector.shape_cast %112 : vector<256x128xf32> to vector<2x8x16x128xf32>
      %c0_35 = arith.constant 0 : index
      %c0_36 = arith.constant 0 : index
      %c0_37 = arith.constant 0 : index
      %c0_38 = arith.constant 0 : index
      %114 = vector.load %arg6[%c0_35, %c0_36, %c0_37, %c0_38] : memref<2x8x16x128xf32, #tpu.memory_space<vmem>>, vector<2x8x16x128xf32>
      %115 = arith.addf %113, %114 : vector<2x8x16x128xf32>
      %c0_39 = arith.constant 0 : index
      %c0_40 = arith.constant 0 : index
      %c0_41 = arith.constant 0 : index
      %c0_42 = arith.constant 0 : index
      %116 = vector.load %arg6[%c0_39, %c0_40, %c0_41, %c0_42] : memref<2x8x16x128xf32, #tpu.memory_space<vmem>>, vector<2x8x16x128xf32>
      tpu.vector_store %arg6[%c0_39, %c0_40, %c0_41, %c0_42], %115 {strides = array<i32>} : memref<2x8x16x128xf32, #tpu.memory_space<vmem>>, vector<2x8x16x128xf32>,
    } else {
    }
    return
  }
  func.func @transform_0(%arg0: i32) -> (i32, i32, i32, i32) {
    %c0_i32 = arith.constant 0 : i32
    %c0_i32_0 = arith.constant 0 : i32
    %c0_i32_1 = arith.constant 0 : i32
    %c0_i32_2 = arith.constant 0 : i32
    %c0_i32_3 = arith.constant 0 : i32
    return %c0_i32, %c0_i32_0, %c0_i32_1, %c0_i32_2 : i32, i32, i32, i32
  }
  func.func @transform_1(%arg0: i32) -> (i32, i32, i32) {
    %c0_i32 = arith.constant 0 : i32
    %c0_i32_0 = arith.constant 0 : i32
    %c0_i32_1 = arith.constant 0 : i32
    %c0_i32_2 = arith.constant 0 : i32
    return %c0_i32, %c0_i32_0, %c0_i32_1 : i32, i32, i32
  }
  func.func @transform_2(%arg0: i32) -> (i32, i32, i32) {
    %c0_i32 = arith.constant 0 : i32
    %c0_i32_0 = arith.constant 0 : i32
    %c0_i32_1 = arith.constant 0 : i32
    %c0_i32_2 = arith.constant 0 : i32
    return %c0_i32, %c0_i32_0, %c0_i32_1 : i32, i32, i32
  }
  func.func @transform_3(%arg0: i32) -> (i32, i32, i32) {
    %c0_i32 = arith.constant 0 : i32
    %c0_i32_0 = arith.constant 0 : i32
    %c0_i32_1 = arith.constant 0 : i32
    %c0_i32_2 = arith.constant 0 : i32
    return %c0_i32, %c0_i32_0, %c0_i32_1 : i32, i32, i32
  }
  func.func @transform_4(%arg0: i32) -> (i32, i32, i32) {
    %c0_i32 = arith.constant 0 : i32
    %c0_i32_0 = arith.constant 0 : i32
    %c0_i32_1 = arith.constant 0 : i32
    %c0_i32_2 = arith.constant 0 : i32
    return %c0_i32, %c0_i32_0, %c0_i32_1 : i32, i32, i32
  }
  func.func @transform_5(%arg0: i32) -> (i32, i32, i32, i32) {
    %c0_i32 = arith.constant 0 : i32
    %c0_i32_0 = arith.constant 0 : i32
    %c0_i32_1 = arith.constant 0 : i32
    %c0_i32_2 = arith.constant 0 : i32
    %c0_i32_3 = arith.constant 0 : i32
    return %c0_i32, %c0_i32_0, %c0_i32_1, %c0_i32_2 : i32, i32, i32, i32
  }
}

</mosaic_0001>

<llo_original>
// kernel: tfcm_pallas.1
$region0: #{tfcm_pallas.1}
  #allocation0 [shape = 'u32[]', space=smem, size = 0x4, offset = 0x4, fixed_abs, tag = 'smem constant byte address 0x4 - core index']
  #allocation1 [shape = 'u32[144,128]{1,0:T(1,128)}', space=vmem, size = 0x12000, scoped, tag = 'internal scratch']
  #allocation2 [shape = 'f32[2,10,24,128]{3,2,1,0:T(8,128)}', space=vmem, size = 0x3c000, scoped, tag = 'scratch operand']
  %s0 = inlined_call_operand.vmem [shape: f32[2,8,16,128], index: 0, kind: input, shape index: {}]
  %s1 = inlined_call_operand.vmem [shape: bf16[6,128,128], index: 1, kind: input, shape index: {}]
  %s2 = inlined_call_operand.vmem [shape: bf16[6,128,128], index: 2, kind: input, shape index: {}]
  %s3 = inlined_call_operand.vmem [shape: f32[6,9,128], index: 3, kind: input, shape index: {}]
  %s4 = inlined_call_operand.vmem [shape: f32[6,9,128], index: 4, kind: input, shape index: {}]
  %s5 = inlined_call_operand.vmem [shape: f32[2,8,16,128], index: 5, kind: output, shape index: {}]
  %s6 = sld [smem:[#allocation0]]
  $region81: #{tfcm_pallas.1} parent=0
    _
  %s8 = ssub.s32 1, %s6
  %s9 = scalar_select 0, %s8, %s6
  loop: start=0, step=1, limit=8
  $region2: #{tfcm_pallas.1} parent=0 // loop_pre_header
    _
  $region3: #{tfcm_pallas.1} parent=0 // loop_header
    %s11 = sphi 0, %s15
    %p12 = scmp.ge.s32.totalorder %s11, 8
    %s19 = sphi 0, %s19
    %s21 = sphi 0, %s19
    %s22 = sphi 0, %s21
    %s36 = sphi 0, %s22
    %s40 = sphi 0, %s40
    %s42 = sphi 0, %s40
    %s43 = sphi 0, %s42
    %s57 = sphi 0, %s43
    %s61 = sphi 0, %s61
    %s63 = sphi 0, %s61
    %s64 = sphi 0, %s63
    %s78 = sphi 0, %s64
    %s82 = sphi 0, %s82
    %s84 = sphi 0, %s82
    %s85 = sphi 0, %s84
    %s99 = sphi 0, %s85
    %s103 = sphi 0, %s103
    %s105 = sphi 0, %s103
    %s106 = sphi 0, %s105
    %s120 = sphi 0, %s106
    %s124 = sphi 0, %s124
    %s126 = sphi 0, %s124
    %s127 = sphi 0, %s126
    %s141 = sphi 0, %s127
  $region4: #{tfcm_pallas.1} parent=0 // loop_header_branch
    %14 = sbr.rel (%p12) target = $region8
  $region5: #{tfcm_pallas.1} parent=0 // loop_body
    %s16 = ssub.s32 %s11, 1
    %s17 = ssub.s32 %s11, 2
    %s18 = sadd.s32 %s11, 1
    %s20 = sadd.s32 %s19, 1
    %p23 = scmp.eq.s32.totalorder %s11, 5
    %p24 = scmp.ne.s32.totalorder %s19, %s21
    %p25 = scmp.eq.s32.totalorder %s11, 0
    %p26 = por %p24, %p25
    %p27 = scmp.ne.s32.totalorder %s19, %s21
    %p28 = scmp.eq.s32.totalorder %s16, 5
    %p29 = por %p27, %p28
    %p30 = scmp.ne.s32.totalorder %s21, %s22
    %p31 = scmp.eq.s32.totalorder %s16, 0
    %p32 = por %p30, %p31
    %p33 = scmp.ne.s32.totalorder %s21, %s22
    %p34 = scmp.eq.s32.totalorder %s17, 5
    %p35 = por %p33, %p34
    %p37 = scmp.ne.s32.totalorder %s22, %s36
    %p38 = scmp.eq.s32.totalorder %s17, 0
    %p39 = por %p37, %p38
    %s41 = sadd.s32 %s40, 1
    %p44 = scmp.eq.s32.totalorder %s11, 5
    %p45 = scmp.ne.s32.totalorder %s40, %s42
    %p46 = scmp.eq.s32.totalorder %s11, 0
    %p47 = por %p45, %p46
    %p48 = scmp.ne.s32.totalorder %s40, %s42
    %p49 = scmp.eq.s32.totalorder %s16, 5
    %p50 = por %p48, %p49
    %p51 = scmp.ne.s32.totalorder %s42, %s43
    %p52 = scmp.eq.s32.totalorder %s16, 0
    %p53 = por %p51, %p52
    %p54 = scmp.ne.s32.totalorder %s42, %s43
    %p55 = scmp.eq.s32.totalorder %s17, 5
    %p56 = por %p54, %p55
    %p58 = scmp.ne.s32.totalorder %s43, %s57
    %p59 = scmp.eq.s32.totalorder %s17, 0
    %p60 = por %p58, %p59
    %s62 = sadd.s32 %s61, 1
    %p65 = scmp.eq.s32.totalorder %s11, 5
    %p66 = scmp.ne.s32.totalorder %s61, %s63
    %p67 = scmp.eq.s32.totalorder %s11, 0
    %p68 = por %p66, %p67
    %p69 = scmp.ne.s32.totalorder %s61, %s63
    %p70 = scmp.eq.s32.totalorder %s16, 5
    %p71 = por %p69, %p70
    %p72 = scmp.ne.s32.totalorder %s63, %s64
    %p73 = scmp.eq.s32.totalorder %s16, 0
    %p74 = por %p72, %p73
    %p75 = scmp.ne.s32.totalorder %s63, %s64
    %p76 = scmp.eq.s32.totalorder %s17, 5
    %p77 = por %p75, %p76
    %p79 = scmp.ne.s32.totalorder %s64, %s78
    %p80 = scmp.eq.s32.totalorder %s17, 0
    %p81 = por %p79, %p80
    %s83 = sadd.s32 %s82, 1
    %p86 = scmp.eq.s32.totalorder %s11, 5
    %p87 = scmp.ne.s32.totalorder %s82, %s84
    %p88 = scmp.eq.s32.totalorder %s11, 0
    %p89 = por %p87, %p88
    %p90 = scmp.ne.s32.totalorder %s82, %s84
    %p91 = scmp.eq.s32.totalorder %s16, 5
    %p92 = por %p90, %p91
    %p93 = scmp.ne.s32.totalorder %s84, %s85
    %p94 = scmp.eq.s32.totalorder %s16, 0
    %p95 = por %p93, %p94
    %p96 = scmp.ne.s32.totalorder %s84, %s85
    %p97 = scmp.eq.s32.totalorder %s17, 5
    %p98 = por %p96, %p97
    %p100 = scmp.ne.s32.totalorder %s85, %s99
    %p101 = scmp.eq.s32.totalorder %s17, 0
    %p102 = por %p100, %p101
    %s104 = sadd.s32 %s103, 1
    %p107 = scmp.eq.s32.totalorder %s11, 5
    %p108 = scmp.ne.s32.totalorder %s103, %s105
    %p109 = scmp.eq.s32.totalorder %s11, 0
    %p110 = por %p108, %p109
    %p111 = scmp.ne.s32.totalorder %s103, %s105
    %p112 = scmp.eq.s32.totalorder %s16, 5
    %p113 = por %p111, %p112
    %p114 = scmp.ne.s32.totalorder %s105, %s106
    %p115 = scmp.eq.s32.totalorder %s16, 0
    %p116 = por %p114, %p115
    %p117 = scmp.ne.s32.totalorder %s105, %s106
    %p118 = scmp.eq.s32.totalorder %s17, 5
    %p119 = por %p117, %p118
    %p121 = scmp.ne.s32.totalorder %s106, %s120
    %p122 = scmp.eq.s32.totalorder %s17, 0
    %p123 = por %p121, %p122
    %s125 = sadd.s32 %s124, 1
    %p128 = scmp.eq.s32.totalorder %s11, 5
    %p129 = scmp.ne.s32.totalorder %s124, %s126
    %p130 = scmp.eq.s32.totalorder %s11, 0
    %p131 = por %p129, %p130
    %p132 = scmp.ne.s32.totalorder %s124, %s126
    %p133 = scmp.eq.s32.totalorder %s16, 5
    %p134 = por %p132, %p133
    %p135 = scmp.ne.s32.totalorder %s126, %s127
    %p136 = scmp.eq.s32.totalorder %s16, 0
    %p137 = por %p135, %p136
    %p138 = scmp.ne.s32.totalorder %s126, %s127
    %p139 = scmp.eq.s32.totalorder %s17, 5
    %p140 = por %p138, %p139
    %p142 = scmp.ne.s32.totalorder %s127, %s141
    %p143 = scmp.eq.s32.totalorder %s17, 0
    %p144 = por %p142, %p143
    %p145 = scmp.le.s32.totalorder 1, %s11
    %p146 = scmp.lt.s32.totalorder %s11, 7
    %p147 = pnand %p145, %p146
    %p148 = pneg %p147
    // Predicated region
    $region9: #{tfcm_pallas.1} parent=5 // pred_check
      _
    $region10: #{tfcm_pallas.1} parent=5 // pred_check_branch
      %150 = sbr.rel (%p147) target = $region12
    $region11: #{tfcm_pallas.1} parent=5 // pred_region
      %s151 = ssub.s32 %s11, 1
      // Predicated region
      $region13: #{tfcm_pallas.1} parent=11 // pred_check
        %p152 = pneg %p32
      $region14: #{tfcm_pallas.1} parent=11 // pred_check_branch
        %154 = sbr.rel (%p152) target = $region16
      $region15: #{tfcm_pallas.1} parent=11 // pred_region
        _
      $region16: #{tfcm_pallas.1} parent=11 // pred_fallthru
        _
      // Predicated region
      $region17: #{tfcm_pallas.1} parent=11 // pred_check
        %p155 = pneg %p53
      $region18: #{tfcm_pallas.1} parent=11 // pred_check_branch
        %157 = sbr.rel (%p155) target = $region20
      $region19: #{tfcm_pallas.1} parent=11 // pred_region
        _
      $region20: #{tfcm_pallas.1} parent=11 // pred_fallthru
        _
      // Predicated region
      $region21: #{tfcm_pallas.1} parent=11 // pred_check
        %p158 = pneg %p74
      $region22: #{tfcm_pallas.1} parent=11 // pred_check_branch
        %160 = sbr.rel (%p158) target = $region24
      $region23: #{tfcm_pallas.1} parent=11 // pred_region
        _
      $region24: #{tfcm_pallas.1} parent=11 // pred_fallthru
        _
      // Predicated region
      $region25: #{tfcm_pallas.1} parent=11 // pred_check
        %p161 = pneg %p95
      $region26: #{tfcm_pallas.1} parent=11 // pred_check_branch
        %163 = sbr.rel (%p161) target = $region28
      $region27: #{tfcm_pallas.1} parent=11 // pred_region
        _
      $region28: #{tfcm_pallas.1} parent=11 // pred_fallthru
        _
      // Predicated region
      $region29: #{tfcm_pallas.1} parent=11 // pred_check
        %p164 = pneg %p116
      $region30: #{tfcm_pallas.1} parent=11 // pred_check_branch
        %166 = sbr.rel (%p164) target = $region32
      $region31: #{tfcm_pallas.1} parent=11 // pred_region
        _
      $region32: #{tfcm_pallas.1} parent=11 // pred_fallthru
        _
    $region12: #{tfcm_pallas.1} parent=5 // pred_fallthru
      _
    %p167 = scmp.lt.s32.totalorder %s11, 6
    // Predicated region
    $region33: #{tfcm_pallas.1} parent=5 // pred_check
      %p168 = pneg %p167
    $region34: #{tfcm_pallas.1} parent=5 // pred_check_branch
      %170 = sbr.rel (%p168) target = $region36
    $region35: #{tfcm_pallas.1} parent=5 // pred_region
      _
    $region36: #{tfcm_pallas.1} parent=5 // pred_fallthru
      _
    %p171 = scmp.le.s32.totalorder 1, %s11
    %p172 = scmp.lt.s32.totalorder %s11, 7
    %p173 = pnand %p171, %p172
    %p174 = pneg %p173
    // Predicated region
    $region37: #{tfcm_pallas.1} parent=5 // pred_check
      _
    $region38: #{tfcm_pallas.1} parent=5 // pred_check_branch
      %176 = sbr.rel (%p173) target = $region40
    $region39: #{tfcm_pallas.1} parent=5 // pred_region
      %s177 = ssub.s32 %s11, 1
      %p178 = pneg %p32
      %p179 = pneg %p29
      %p180 = pneg %p53
      %p181 = pneg %p50
      %p182 = pneg %p74
      %p183 = pneg %p71
      %p184 = pneg %p95
      %p185 = pneg %p92
      %p186 = pneg %p116
      %p187 = pneg %p113
      %p188 = pneg %p137
      %p189 = pneg %p134
      %p191 = scmp.eq.s32.totalorder %s16, 0
      // Predicated region
      $region41: #{tfcm_pallas.1} parent=39 // pred_check
        %p192 = pneg %p191
      $region42: #{tfcm_pallas.1} parent=39 // pred_check_branch
        %194 = sbr.rel (%p192) target = $region44
      $region43: #{tfcm_pallas.1} parent=39 // pred_region
        %v195 = vld [vmem:[%s0] sm:$0xff]
        %v196 = vld [vmem:[%s0 + $0x8] sm:$0xff]
        %v197 = vld [vmem:[%s0 + $0x10] sm:$0xff]
        %v198 = vld [vmem:[%s0 + $0x18] sm:$0xff]
        %v199 = vld [vmem:[%s0 + $0x20] sm:$0xff]
        %v200 = vld [vmem:[%s0 + $0x28] sm:$0xff]
        %v201 = vld [vmem:[%s0 + $0x30] sm:$0xff]
        %v202 = vld [vmem:[%s0 + $0x38] sm:$0xff]
        %v203 = vld [vmem:[%s0 + $0x40] sm:$0xff]
        %v204 = vld [vmem:[%s0 + $0x48] sm:$0xff]
        %v205 = vld [vmem:[%s0 + $0x50] sm:$0xff]
        %v206 = vld [vmem:[%s0 + $0x58] sm:$0xff]
        %v207 = vld [vmem:[%s0 + $0x60] sm:$0xff]
        %v208 = vld [vmem:[%s0 + $0x68] sm:$0xff]
        %v209 = vld [vmem:[%s0 + $0x70] sm:$0xff]
        %v210 = vld [vmem:[%s0 + $0x78] sm:$0xff]
        %v211 = vld [vmem:[%s0 + $0x80] sm:$0xff]
        %v212 = vld [vmem:[%s0 + $0x88] sm:$0xff]
        %v213 = vld [vmem:[%s0 + $0x90] sm:$0xff]
        %v214 = vld [vmem:[%s0 + $0x98] sm:$0xff]
        %v215 = vld [vmem:[%s0 + $0xa0] sm:$0xff]
        %v216 = vld [vmem:[%s0 + $0xa8] sm:$0xff]
        %v217 = vld [vmem:[%s0 + $0xb0] sm:$0xff]
        %v218 = vld [vmem:[%s0 + $0xb8] sm:$0xff]
        %v219 = vld [vmem:[%s0 + $0xc0] sm:$0xff]
        %v220 = vld [vmem:[%s0 + $0xc8] sm:$0xff]
        %v221 = vld [vmem:[%s0 + $0xd0] sm:$0xff]
        %v222 = vld [vmem:[%s0 + $0xd8] sm:$0xff]
        %v223 = vld [vmem:[%s0 + $0xe0] sm:$0xff]
        %v224 = vld [vmem:[%s0 + $0xe8] sm:$0xff]
        %v225 = vld [vmem:[%s0 + $0xf0] sm:$0xff]
        %v226 = vld [vmem:[%s0 + $0xf8] sm:$0xff]
        %227 = vst [vmem:[%s5] sm:$0xff] %v195
        %228 = vst [vmem:[%s5 + $0x8] sm:$0xff] %v196
        %229 = vst [vmem:[%s5 + $0x10] sm:$0xff] %v197
        %230 = vst [vmem:[%s5 + $0x18] sm:$0xff] %v198
        %231 = vst [vmem:[%s5 + $0x20] sm:$0xff] %v199
        %232 = vst [vmem:[%s5 + $0x28] sm:$0xff] %v200
        %233 = vst [vmem:[%s5 + $0x30] sm:$0xff] %v201
        %234 = vst [vmem:[%s5 + $0x38] sm:$0xff] %v202
        %235 = vst [vmem:[%s5 + $0x40] sm:$0xff] %v203
        %236 = vst [vmem:[%s5 + $0x48] sm:$0xff] %v204
        %237 = vst [vmem:[%s5 + $0x50] sm:$0xff] %v205
        %238 = vst [vmem:[%s5 + $0x58] sm:$0xff] %v206
        %239 = vst [vmem:[%s5 + $0x60] sm:$0xff] %v207
        %240 = vst [vmem:[%s5 + $0x68] sm:$0xff] %v208
        %241 = vst [vmem:[%s5 + $0x70] sm:$0xff] %v209
        %242 = vst [vmem:[%s5 + $0x78] sm:$0xff] %v210
        %243 = vst [vmem:[%s5 + $0x80] sm:$0xff] %v211
        %244 = vst [vmem:[%s5 + $0x88] sm:$0xff] %v212
        %245 = vst [vmem:[%s5 + $0x90] sm:$0xff] %v213
        %246 = vst [vmem:[%s5 + $0x98] sm:$0xff] %v214
        %247 = vst [vmem:[%s5 + $0xa0] sm:$0xff] %v215
        %248 = vst [vmem:[%s5 + $0xa8] sm:$0xff] %v216
        %249 = vst [vmem:[%s5 + $0xb0] sm:$0xff] %v217
        %250 = vst [vmem:[%s5 + $0xb8] sm:$0xff] %v218
        %251 = vst [vmem:[%s5 + $0xc0] sm:$0xff] %v219
        %252 = vst [vmem:[%s5 + $0xc8] sm:$0xff] %v220
        %253 = vst [vmem:[%s5 + $0xd0] sm:$0xff] %v221
        %254 = vst [vmem:[%s5 + $0xd8] sm:$0xff] %v222
        %255 = vst [vmem:[%s5 + $0xe0] sm:$0xff] %v223
        %256 = vst [vmem:[%s5 + $0xe8] sm:$0xff] %v224
        %257 = vst [vmem:[%s5 + $0xf0] sm:$0xff] %v225
        %258 = vst [vmem:[%s5 + $0xf8] sm:$0xff] %v226
        %259 = vst [vmem:[#allocation2] sm:$0xff] 0.0
        %260 = vst [vmem:[#allocation2 + $0x8] sm:$0xff] 0.0
        %261 = vst [vmem:[#allocation2 + $0x10] sm:$0xff] 0.0
        %262 = vst [vmem:[#allocation2 + $0x18] sm:$0xff] 0.0
        %263 = vst [vmem:[#allocation2 + $0x20] sm:$0xff] 0.0
        %264 = vst [vmem:[#allocation2 + $0x28] sm:$0xff] 0.0
        %265 = vst [vmem:[#allocation2 + $0x30] sm:$0xff] 0.0
        %266 = vst [vmem:[#allocation2 + $0x38] sm:$0xff] 0.0
        %267 = vst [vmem:[#allocation2 + $0x40] sm:$0xff] 0.0
        %268 = vst [vmem:[#allocation2 + $0x48] sm:$0xff] 0.0
        %269 = vst [vmem:[#allocation2 + $0x50] sm:$0xff] 0.0
        %270 = vst [vmem:[#allocation2 + $0x58] sm:$0xff] 0.0
        %271 = vst [vmem:[#allocation2 + $0x60] sm:$0xff] 0.0
        %272 = vst [vmem:[#allocation2 + $0x68] sm:$0xff] 0.0
        %273 = vst [vmem:[#allocation2 + $0x70] sm:$0xff] 0.0
        %274 = vst [vmem:[#allocation2 + $0x78] sm:$0xff] 0.0
        %275 = vst [vmem:[#allocation2 + $0x80] sm:$0xff] 0.0
        %276 = vst [vmem:[#allocation2 + $0x88] sm:$0xff] 0.0
        %277 = vst [vmem:[#allocation2 + $0x90] sm:$0xff] 0.0
        %278 = vst [vmem:[#allocation2 + $0x98] sm:$0xff] 0.0
        %279 = vst [vmem:[#allocation2 + $0xa0] sm:$0xff] 0.0
        %280 = vst [vmem:[#allocation2 + $0xa8] sm:$0xff] 0.0
        %281 = vst [vmem:[#allocation2 + $0xb0] sm:$0xff] 0.0
        %282 = vst [vmem:[#allocation2 + $0xb8] sm:$0xff] 0.0
        %283 = vst [vmem:[#allocation2 + $0xc0] sm:$0xff] 0.0
        %284 = vst [vmem:[#allocation2 + $0xc8] sm:$0xff] 0.0
        %285 = vst [vmem:[#allocation2 + $0xd0] sm:$0xff] 0.0
        %286 = vst [vmem:[#allocation2 + $0xd8] sm:$0xff] 0.0
        %287 = vst [vmem:[#allocation2 + $0xe0] sm:$0xff] 0.0
        %288 = vst [vmem:[#allocation2 + $0xe8] sm:$0xff] 0.0
        %289 = vst [vmem:[#allocation2 + $0xf0] sm:$0xff] 0.0
        %290 = vst [vmem:[#allocation2 + $0xf8] sm:$0xff] 0.0
        %291 = vst [vmem:[#allocation2 + $0x100] sm:$0xff] 0.0
        %292 = vst [vmem:[#allocation2 + $0x108] sm:$0xff] 0.0
        %293 = vst [vmem:[#allocation2 + $0x110] sm:$0xff] 0.0
        %294 = vst [vmem:[#allocation2 + $0x118] sm:$0xff] 0.0
        %295 = vst [vmem:[#allocation2 + $0x120] sm:$0xff] 0.0
        %296 = vst [vmem:[#allocation2 + $0x128] sm:$0xff] 0.0
        %297 = vst [vmem:[#allocation2 + $0x130] sm:$0xff] 0.0
        %298 = vst [vmem:[#allocation2 + $0x138] sm:$0xff] 0.0
        %299 = vst [vmem:[#allocation2 + $0x140] sm:$0xff] 0.0
        %300 = vst [vmem:[#allocation2 + $0x148] sm:$0xff] 0.0
        %301 = vst [vmem:[#allocation2 + $0x150] sm:$0xff] 0.0
        %302 = vst [vmem:[#allocation2 + $0x158] sm:$0xff] 0.0
        %303 = vst [vmem:[#allocation2 + $0x160] sm:$0xff] 0.0
        %304 = vst [vmem:[#allocation2 + $0x168] sm:$0xff] 0.0
        %305 = vst [vmem:[#allocation2 + $0x170] sm:$0xff] 0.0
        %306 = vst [vmem:[#allocation2 + $0x178] sm:$0xff] 0.0
        %307 = vst [vmem:[#allocation2 + $0x180] sm:$0xff] 0.0
        %308 = vst [vmem:[#allocation2 + $0x188] sm:$0xff] 0.0
        %309 = vst [vmem:[#allocation2 + $0x190] sm:$0xff] 0.0
        %310 = vst [vmem:[#allocation2 + $0x198] sm:$0xff] 0.0
        %311 = vst [vmem:[#allocation2 + $0x1a0] sm:$0xff] 0.0
        %312 = vst [vmem:[#allocation2 + $0x1a8] sm:$0xff] 0.0
        %313 = vst [vmem:[#allocation2 + $0x1b0] sm:$0xff] 0.0
        %314 = vst [vmem:[#allocation2 + $0x1b8] sm:$0xff] 0.0
        %315 = vst [vmem:[#allocation2 + $0x1c0] sm:$0xff] 0.0
        %316 = vst [vmem:[#allocation2 + $0x1c8] sm:$0xff] 0.0
        %317 = vst [vmem:[#allocation2 + $0x1d0] sm:$0xff] 0.0
        %318 = vst [vmem:[#allocation2 + $0x1d8] sm:$0xff] 0.0
      $region44: #{tfcm_pallas.1} parent=39 // pred_fallthru
        _
      %s319 = smul.u32 %s16, 16
      %s320 = scalar_lea.vmem %s4, %s319
      %v321 = vld [vmem:[%s320] sm:$0xff]
      %v322 = vld [vmem:[%s320 + $0x8] sm:$0x1]
      %s323 = scalar_lea.vmem %s3, %s319
      %v324 = vld [vmem:[%s323] sm:$0xff]
      %v325 = vld [vmem:[%s323 + $0x8] sm:$0x1]
      %v326 = vld [vmem:[%s5] sm:$0xff]
      %v327 = vld [vmem:[%s5 + $0x8] sm:$0xff]
      %v328 = vld [vmem:[%s5 + $0x10] sm:$0xff]
      %v329 = vld [vmem:[%s5 + $0x18] sm:$0xff]
      %v330 = vld [vmem:[%s5 + $0x20] sm:$0xff]
      %v331 = vld [vmem:[%s5 + $0x28] sm:$0xff]
      %v332 = vld [vmem:[%s5 + $0x30] sm:$0xff]
      %v333 = vld [vmem:[%s5 + $0x38] sm:$0xff]
      %v334 = vld [vmem:[%s5 + $0x40] sm:$0xff]
      %v335 = vld [vmem:[%s5 + $0x48] sm:$0xff]
      %v336 = vld [vmem:[%s5 + $0x50] sm:$0xff]
      %v337 = vld [vmem:[%s5 + $0x58] sm:$0xff]
      %v338 = vld [vmem:[%s5 + $0x60] sm:$0xff]
      %v339 = vld [vmem:[%s5 + $0x68] sm:$0xff]
      %v340 = vld [vmem:[%s5 + $0x70] sm:$0xff]
      %v341 = vld [vmem:[%s5 + $0x78] sm:$0xff]
      %v342 = vld [vmem:[%s5 + $0x80] sm:$0xff]
      %v343 = vld [vmem:[%s5 + $0x88] sm:$0xff]
      %v344 = vld [vmem:[%s5 + $0x90] sm:$0xff]
      %v345 = vld [vmem:[%s5 + $0x98] sm:$0xff]
      %v346 = vld [vmem:[%s5 + $0xa0] sm:$0xff]
      %v347 = vld [vmem:[%s5 + $0xa8] sm:$0xff]
      %v348 = vld [vmem:[%s5 + $0xb0] sm:$0xff]
      %v349 = vld [vmem:[%s5 + $0xb8] sm:$0xff]
      %v350 = vld [vmem:[%s5 + $0xc0] sm:$0xff]
      %v351 = vld [vmem:[%s5 + $0xc8] sm:$0xff]
      %v352 = vld [vmem:[%s5 + $0xd0] sm:$0xff]
      %v353 = vld [vmem:[%s5 + $0xd8] sm:$0xff]
      %v354 = vld [vmem:[%s5 + $0xe0] sm:$0xff]
      %v355 = vld [vmem:[%s5 + $0xe8] sm:$0xff]
      %v356 = vld [vmem:[%s5 + $0xf0] sm:$0xff]
      %v357 = vld [vmem:[%s5 + $0xf8] sm:$0xff]
      %v358 = vpack.c.bf16 %v327, %v326
      %v359 = vpack.c.bf16 %v329, %v328
      %v360 = vpack.c.bf16 %v331, %v330
      %v361 = vpack.c.bf16 %v333, %v332
      %v362 = vpack.c.bf16 %v335, %v334
      %v363 = vpack.c.bf16 %v337, %v336
      %v364 = vpack.c.bf16 %v339, %v338
      %v365 = vpack.c.bf16 %v341, %v340
      %v366 = vpack.c.bf16 %v343, %v342
      %v367 = vpack.c.bf16 %v345, %v344
      %v368 = vpack.c.bf16 %v347, %v346
      %v369 = vpack.c.bf16 %v349, %v348
      %v370 = vpack.c.bf16 %v351, %v350
      %v371 = vpack.c.bf16 %v353, %v352
      %v372 = vpack.c.bf16 %v355, %v354
      %v373 = vpack.c.bf16 %v357, %v356
      %s374 = smul.addr %s319, 4
      %s375 = scalar_lea.vmem %s1, %s374
      %v376 = vld [vmem:[%s375] sm:$0xf]
      %v377 = vld [vmem:[%s375 + $0x4] sm:$0xf]
      %v378 = vld [vmem:[%s375 + $0x8] sm:$0xf]
      %v379 = vld [vmem:[%s375 + $0xc] sm:$0xf]
      %v380 = vld [vmem:[%s375 + $0x10] sm:$0xf]
      %v381 = vld [vmem:[%s375 + $0x14] sm:$0xf]
      %v382 = vld [vmem:[%s375 + $0x18] sm:$0xf]
      %v383 = vld [vmem:[%s375 + $0x1c] sm:$0xf]
      %v384 = vld [vmem:[%s375 + $0x20] sm:$0xf]
      %v385 = vld [vmem:[%s375 + $0x24] sm:$0xf]
      %v386 = vld [vmem:[%s375 + $0x28] sm:$0xf]
      %v387 = vld [vmem:[%s375 + $0x2c] sm:$0xf]
      %v388 = vld [vmem:[%s375 + $0x30] sm:$0xf]
      %v389 = vld [vmem:[%s375 + $0x34] sm:$0xf]
      %v390 = vld [vmem:[%s375 + $0x38] sm:$0xf]
      %v391 = vld [vmem:[%s375 + $0x3c] sm:$0xf]
      %v392 = vlaneseq
      %v393 = vshrl.u32 %v392, 7
      %v394 = vsub.s32 0, %v393
      %v395 = vrot.slane %v321, %v394
      %v412 = vunpack.c.l.b16 %v376
      %v413 = vunpack.c.l.b16 %v377
      %v414 = vunpack.c.l.b16 %v378
      %v415 = vunpack.c.l.b16 %v379
      %v416 = vunpack.c.l.b16 %v380
      %v417 = vunpack.c.l.b16 %v381
      %v418 = vunpack.c.l.b16 %v382
      %v419 = vunpack.c.l.b16 %v383
      %v420 = vunpack.c.l.b16 %v384
      %v421 = vunpack.c.l.b16 %v385
      %v422 = vunpack.c.l.b16 %v386
      %v423 = vunpack.c.l.b16 %v387
      %v424 = vunpack.c.l.b16 %v388
      %v425 = vunpack.c.l.b16 %v389
      %v426 = vunpack.c.l.b16 %v390
      %v427 = vunpack.c.l.b16 %v391
      %v428 = vpack.c.b16 %v413, %v412
      %v429 = vpack.c.b16 %v415, %v414
      %v430 = vpack.c.b16 %v417, %v416
      %v431 = vpack.c.b16 %v419, %v418
      %v432 = vpack.c.b16 %v421, %v420
      %v433 = vpack.c.b16 %v423, %v422
      %v434 = vpack.c.b16 %v425, %v424
      %v435 = vpack.c.b16 %v427, %v426
      %444 = vmatprep.subr.bf16.mxu0 0
      %445 = vmatpush1.bf16.msra.mxu0 %v428
      %446 = vmatprep.subr.bf16.mxu0 0
      %447 = vmatpush1.bf16.msra.mxu0 %v429
      %448 = vmatprep.subr.bf16.mxu0 0
      %449 = vmatpush1.bf16.msra.mxu0 %v430
      %450 = vmatprep.subr.bf16.mxu0 0
      %451 = vmatpush1.bf16.msra.mxu0 %v431
      %452 = vmatprep.subr.bf16.mxu0 0
      %453 = vmatpush1.bf16.msra.mxu0 %v432
      %454 = vmatprep.subr.bf16.mxu0 0
      %455 = vmatpush1.bf16.msra.mxu0 %v433
      %456 = vmatprep.subr.bf16.mxu0 0
      %457 = vmatpush1.bf16.msra.mxu0 %v434
      %458 = vmatprep.subr.bf16.mxu0 0
      %459 = vmatpush1.bf16.msra.mxu0 %v435
      %460 = vmatprep.subr.bf16.mxu0 0
      %461 = vmatpush1.bf16.msra.mxu0 0
      %462 = vmatprep.subr.bf16.mxu0 0
      %463 = vmatpush1.bf16.msra.mxu0 0
      %464 = vmatprep.subr.bf16.mxu0 0
      %465 = vmatpush1.bf16.msra.mxu0 0
      %466 = vmatprep.subr.bf16.mxu0 0
      %467 = vmatpush1.bf16.msra.mxu0 0
      %468 = vmatprep.subr.bf16.mxu0 0
      %469 = vmatpush1.bf16.msra.mxu0 0
      %470 = vmatprep.subr.bf16.mxu0 0
      %471 = vmatpush1.bf16.msra.mxu0 0
      %472 = vmatprep.subr.bf16.mxu0 0
      %473 = vmatpush1.bf16.msra.mxu0 0
      %474 = vmatprep.subr.bf16.mxu0 0
      %475 = vmatpush1.bf16.msra.mxu0 0
      %476 = vmatprep.mubr.bf16.mxu0 0
      %477 = vmatmul.mubr.bf16.gmra.mrb[0].mxu0 %v358
      %v478 = vpop.f32.mrb[0].mxu0
      %v479 = vadd.f32 %v395, %v478
      %v480 = vpop.f32.mrb[0].mxu0
      %v481 = vpop.f32.mrb[0].mxu0
      %v482 = vadd.f32 %v395, %v481
      %v483 = vpop.f32.mrb[0].mxu0
      %484 = vmatprep.mubr.bf16.mxu0 0
      %485 = vmatmul.mubr.bf16.gmra.mrb[0].mxu0 %v359
      %v486 = vpop.f32.mrb[0].mxu0
      %v487 = vadd.f32 %v395, %v486
      %v488 = vpop.f32.mrb[0].mxu0
      %v489 = vpop.f32.mrb[0].mxu0
      %v490 = vadd.f32 %v395, %v489
      %v491 = vpop.f32.mrb[0].mxu0
      %492 = vmatprep.mubr.bf16.mxu0 0
      %493 = vmatmul.mubr.bf16.gmra.mrb[0].mxu0 %v360
      %v494 = vpop.f32.mrb[0].mxu0
      %v495 = vadd.f32 %v395, %v494
      %v496 = vpop.f32.mrb[0].mxu0
      %v497 = vpop.f32.mrb[0].mxu0
      %v498 = vadd.f32 %v395, %v497
      %v499 = vpop.f32.mrb[0].mxu0
      %500 = vmatprep.mubr.bf16.mxu0 0
      %501 = vmatmul.mubr.bf16.gmra.mrb[0].mxu0 %v361
      %v502 = vpop.f32.mrb[0].mxu0
      %v503 = vadd.f32 %v395, %v502
      %v504 = vpop.f32.mrb[0].mxu0
      %v505 = vpop.f32.mrb[0].mxu0
      %v506 = vadd.f32 %v395, %v505
      %v507 = vpop.f32.mrb[0].mxu0
      %508 = vmatprep.mubr.bf16.mxu0 0
      %509 = vmatmul.mubr.bf16.gmra.mrb[0].mxu0 %v362
      %v510 = vpop.f32.mrb[0].mxu0
      %v511 = vadd.f32 %v395, %v510
      %v512 = vpop.f32.mrb[0].mxu0
      %v513 = vpop.f32.mrb[0].mxu0
      %v514 = vadd.f32 %v395, %v513
      %v515 = vpop.f32.mrb[0].mxu0
      %516 = vmatprep.mubr.bf16.mxu0 0
      %517 = vmatmul.mubr.bf16.gmra.mrb[0].mxu0 %v363
      %v518 = vpop.f32.mrb[0].mxu0
      %v519 = vadd.f32 %v395, %v518
      %v520 = vpop.f32.mrb[0].mxu0
      %v521 = vpop.f32.mrb[0].mxu0
      %v522 = vadd.f32 %v395, %v521
      %v523 = vpop.f32.mrb[0].mxu0
      %524 = vmatprep.mubr.bf16.mxu0 0
      %525 = vmatmul.mubr.bf16.gmra.mrb[0].mxu0 %v364
      %v526 = vpop.f32.mrb[0].mxu0
      %v527 = vadd.f32 %v395, %v526
      %v528 = vpop.f32.mrb[0].mxu0
      %v529 = vpop.f32.mrb[0].mxu0
      %v530 = vadd.f32 %v395, %v529
      %v531 = vpop.f32.mrb[0].mxu0
      %532 = vmatprep.mubr.bf16.mxu0 0
      %533 = vmatmul.mubr.bf16.gmra.mrb[0].mxu0 %v365
      %v534 = vpop.f32.mrb[0].mxu0
      %v535 = vadd.f32 %v395, %v534
      %v536 = vpop.f32.mrb[0].mxu0
      %v537 = vpop.f32.mrb[0].mxu0
      %v538 = vadd.f32 %v395, %v537
      %v539 = vpop.f32.mrb[0].mxu0
      %540 = vmatprep.mubr.bf16.mxu0 0
      %541 = vmatmul.mubr.bf16.gmra.mrb[0].mxu0 %v366
      %v542 = vpop.f32.mrb[0].mxu0
      %v543 = vadd.f32 %v395, %v542
      %v544 = vpop.f32.mrb[0].mxu0
      %v545 = vpop.f32.mrb[0].mxu0
      %v546 = vadd.f32 %v395, %v545
      %v547 = vpop.f32.mrb[0].mxu0
      %548 = vmatprep.mubr.bf16.mxu0 0
      %549 = vmatmul.mubr.bf16.gmra.mrb[0].mxu0 %v367
      %v550 = vpop.f32.mrb[0].mxu0
      %v551 = vadd.f32 %v395, %v550
      %v552 = vpop.f32.mrb[0].mxu0
      %v553 = vpop.f32.mrb[0].mxu0
      %v554 = vadd.f32 %v395, %v553
      %v555 = vpop.f32.mrb[0].mxu0
      %556 = vmatprep.mubr.bf16.mxu0 0
      %557 = vmatmul.mubr.bf16.gmra.mrb[0].mxu0 %v368
      %v558 = vpop.f32.mrb[0].mxu0
      %v559 = vadd.f32 %v395, %v558
      %v560 = vpop.f32.mrb[0].mxu0
      %v561 = vpop.f32.mrb[0].mxu0
      %v562 = vadd.f32 %v395, %v561
      %v563 = vpop.f32.mrb[0].mxu0
      %564 = vmatprep.mubr.bf16.mxu0 0
      %565 = vmatmul.mubr.bf16.gmra.mrb[0].mxu0 %v369
      %v566 = vpop.f32.mrb[0].mxu0
      %v567 = vadd.f32 %v395, %v566
      %v568 = vpop.f32.mrb[0].mxu0
      %v569 = vpop.f32.mrb[0].mxu0
      %v570 = vadd.f32 %v395, %v569
      %v571 = vpop.f32.mrb[0].mxu0
      %572 = vmatprep.mubr.bf16.mxu0 0
      %573 = vmatmul.mubr.bf16.gmra.mrb[0].mxu0 %v370
      %v574 = vpop.f32.mrb[0].mxu0
      %v575 = vadd.f32 %v395, %v574
      %v576 = vpop.f32.mrb[0].mxu0
      %v577 = vpop.f32.mrb[0].mxu0
      %v578 = vadd.f32 %v395, %v577
      %v579 = vpop.f32.mrb[0].mxu0
      %580 = vmatprep.mubr.bf16.mxu0 0
      %581 = vmatmul.mubr.bf16.gmra.mrb[0].mxu0 %v371
      %v582 = vpop.f32.mrb[0].mxu0
      %v583 = vadd.f32 %v395, %v582
      %v584 = vpop.f32.mrb[0].mxu0
      %v585 = vpop.f32.mrb[0].mxu0
      %v586 = vadd.f32 %v395, %v585
      %v587 = vpop.f32.mrb[0].mxu0
      %588 = vmatprep.mubr.bf16.mxu0 0
      %589 = vmatmul.mubr.bf16.gmra.mrb[0].mxu0 %v372
      %v590 = vpop.f32.mrb[0].mxu0
      %v591 = vadd.f32 %v395, %v590
      %v592 = vpop.f32.mrb[0].mxu0
      %v593 = vpop.f32.mrb[0].mxu0
      %v594 = vadd.f32 %v395, %v593
      %v595 = vpop.f32.mrb[0].mxu0
      %596 = vmatprep.mubr.bf16.mxu0 0
      %597 = vmatmul.mubr.bf16.gmra.mrb[0].mxu0 %v373
      %v598 = vpop.f32.mrb[0].mxu0
      %v599 = vadd.f32 %v395, %v598
      %v600 = vpop.f32.mrb[0].mxu0
      %v601 = vpop.f32.mrb[0].mxu0
      %v602 = vadd.f32 %v395, %v601
      %v603 = vpop.f32.mrb[0].mxu0
      %604 = vdwg.mxu0
      %v605 = vlaneseq
      %v606 = vshrl.u32 %v605, 7
      %v607 = vsub.s32 1, %v606
      %v608 = vrot.slane %v321, %v607
      %v609 = vmul.f32 %v479, %v608
      %v610 = vmul.f32 %v482, %v608
      %v611 = vmul.f32 %v487, %v608
      %v612 = vmul.f32 %v490, %v608
      %v613 = vmul.f32 %v495, %v608
      %v614 = vmul.f32 %v498, %v608
      %v615 = vmul.f32 %v503, %v608
      %v616 = vmul.f32 %v506, %v608
      %v617 = vmul.f32 %v511, %v608
      %v618 = vmul.f32 %v514, %v608
      %v619 = vmul.f32 %v519, %v608
      %v620 = vmul.f32 %v522, %v608
      %v621 = vmul.f32 %v527, %v608
      %v622 = vmul.f32 %v530, %v608
      %v623 = vmul.f32 %v535, %v608
      %v624 = vmul.f32 %v538, %v608
      %v625 = vmul.f32 %v543, %v608
      %v626 = vmul.f32 %v546, %v608
      %v627 = vmul.f32 %v551, %v608
      %v628 = vmul.f32 %v554, %v608
      %v629 = vmul.f32 %v559, %v608
      %v630 = vmul.f32 %v562, %v608
      %v631 = vmul.f32 %v567, %v608
      %v632 = vmul.f32 %v570, %v608
      %v633 = vmul.f32 %v575, %v608
      %v634 = vmul.f32 %v578, %v608
      %v635 = vmul.f32 %v583, %v608
      %v636 = vmul.f32 %v586, %v608
      %v637 = vmul.f32 %v591, %v608
      %v638 = vmul.f32 %v594, %v608
      %v639 = vmul.f32 %v599, %v608
      %v640 = vmul.f32 %v602, %v608
      %v641 = vlaneseq
      %v642 = vshrl.u32 %v641, 7
      %v643 = vsub.s32 2, %v642
      %v644 = vrot.slane %v321, %v643
      %v645 = vadd.f32 %v609, %v644
      %v646 = vadd.f32 %v610, %v644
      %v647 = vadd.f32 %v611, %v644
      %v648 = vadd.f32 %v612, %v644
      %v649 = vadd.f32 %v613, %v644
      %v650 = vadd.f32 %v614, %v644
      %v651 = vadd.f32 %v615, %v644
      %v652 = vadd.f32 %v616, %v644
      %v653 = vadd.f32 %v617, %v644
      %v654 = vadd.f32 %v618, %v644
      %v655 = vadd.f32 %v619, %v644
      %v656 = vadd.f32 %v620, %v644
      %v657 = vadd.f32 %v621, %v644
      %v658 = vadd.f32 %v622, %v644
      %v659 = vadd.f32 %v623, %v644
      %v660 = vadd.f32 %v624, %v644
      %v661 = vadd.f32 %v625, %v644
      %v662 = vadd.f32 %v626, %v644
      %v663 = vadd.f32 %v627, %v644
      %v664 = vadd.f32 %v628, %v644
      %v665 = vadd.f32 %v629, %v644
      %v666 = vadd.f32 %v630, %v644
      %v667 = vadd.f32 %v631, %v644
      %v668 = vadd.f32 %v632, %v644
      %v669 = vadd.f32 %v633, %v644
      %v670 = vadd.f32 %v634, %v644
      %v671 = vadd.f32 %v635, %v644
      %v672 = vadd.f32 %v636, %v644
      %v673 = vadd.f32 %v637, %v644
      %v674 = vadd.f32 %v638, %v644
      %v675 = vadd.f32 %v639, %v644
      %v676 = vadd.f32 %v640, %v644
      %vm677 = vcmp.ge.f32.partialorder %v645, 0.0
      %vm678 = vcmp.ge.f32.partialorder %v646, 0.0
      %vm679 = vcmp.ge.f32.partialorder %v647, 0.0
      %vm680 = vcmp.ge.f32.partialorder %v648, 0.0
      %vm681 = vcmp.ge.f32.partialorder %v649, 0.0
      %vm682 = vcmp.ge.f32.partialorder %v650, 0.0
      %vm683 = vcmp.ge.f32.partialorder %v651, 0.0
      %vm684 = vcmp.ge.f32.partialorder %v652, 0.0
      %vm685 = vcmp.ge.f32.partialorder %v653, 0.0
      %vm686 = vcmp.ge.f32.partialorder %v654, 0.0
      %vm687 = vcmp.ge.f32.partialorder %v655, 0.0
      %vm688 = vcmp.ge.f32.partialorder %v656, 0.0
      %vm689 = vcmp.ge.f32.partialorder %v657, 0.0
      %vm690 = vcmp.ge.f32.partialorder %v658, 0.0
      %vm691 = vcmp.ge.f32.partialorder %v659, 0.0
      %vm692 = vcmp.ge.f32.partialorder %v660, 0.0
      %vm693 = vcmp.ge.f32.partialorder %v661, 0.0
      %vm694 = vcmp.ge.f32.partialorder %v662, 0.0
      %vm695 = vcmp.ge.f32.partialorder %v663, 0.0
      %vm696 = vcmp.ge.f32.partialorder %v664, 0.0
      %vm697 = vcmp.ge.f32.partialorder %v665, 0.0
      %vm698 = vcmp.ge.f32.partialorder %v666, 0.0
      %vm699 = vcmp.ge.f32.partialorder %v667, 0.0
      %vm700 = vcmp.ge.f32.partialorder %v668, 0.0
      %vm701 = vcmp.ge.f32.partialorder %v669, 0.0
      %vm702 = vcmp.ge.f32.partialorder %v670, 0.0
      %vm703 = vcmp.ge.f32.partialorder %v671, 0.0
      %vm704 = vcmp.ge.f32.partialorder %v672, 0.0
      %vm705 = vcmp.ge.f32.partialorder %v673, 0.0
      %vm706 = vcmp.ge.f32.partialorder %v674, 0.0
      %vm707 = vcmp.ge.f32.partialorder %v675, 0.0
      %vm708 = vcmp.ge.f32.partialorder %v676, 0.0
      %v709 = vlaneseq
      %v710 = vshrl.u32 %v709, 7
      %v711 = vsub.s32 3, %v710
      %v712 = vrot.slane %v321, %v711
      %v713 = vmul.f32 %v712, %v645
      %v714 = vmul.f32 %v712, %v646
      %v715 = vmul.f32 %v712, %v647
      %v716 = vmul.f32 %v712, %v648
      %v717 = vmul.f32 %v712, %v649
      %v718 = vmul.f32 %v712, %v650
      %v719 = vmul.f32 %v712, %v651
      %v720 = vmul.f32 %v712, %v652
      %v721 = vmul.f32 %v712, %v653
      %v722 = vmul.f32 %v712, %v654
      %v723 = vmul.f32 %v712, %v655
      %v724 = vmul.f32 %v712, %v656
      %v725 = vmul.f32 %v712, %v657
      %v726 = vmul.f32 %v712, %v658
      %v727 = vmul.f32 %v712, %v659
      %v728 = vmul.f32 %v712, %v660
      %v729 = vmul.f32 %v712, %v661
      %v730 = vmul.f32 %v712, %v662
      %v731 = vmul.f32 %v712, %v663
      %v732 = vmul.f32 %v712, %v664
      %v733 = vmul.f32 %v712, %v665
      %v734 = vmul.f32 %v712, %v666
      %v735 = vmul.f32 %v712, %v667
      %v736 = vmul.f32 %v712, %v668
      %v737 = vmul.f32 %v712, %v669
      %v738 = vmul.f32 %v712, %v670
      %v739 = vmul.f32 %v712, %v671
      %v740 = vmul.f32 %v712, %v672
      %v741 = vmul.f32 %v712, %v673
      %v742 = vmul.f32 %v712, %v674
      %v743 = vmul.f32 %v712, %v675
      %v744 = vmul.f32 %v712, %v676
      %v745 = vsel %vm677, %v645, %v713
      %v746 = vsel %vm678, %v646, %v714
      %v747 = vsel %vm679, %v647, %v715
      %v748 = vsel %vm680, %v648, %v716
      %v749 = vsel %vm681, %v649, %v717
      %v750 = vsel %vm682, %v650, %v718
      %v751 = vsel %vm683, %v651, %v719
      %v752 = vsel %vm684, %v652, %v720
      %v753 = vsel %vm685, %v653, %v721
      %v754 = vsel %vm686, %v654, %v722
      %v755 = vsel %vm687, %v655, %v723
      %v756 = vsel %vm688, %v656, %v724
      %v757 = vsel %vm689, %v657, %v725
      %v758 = vsel %vm690, %v658, %v726
      %v759 = vsel %vm691, %v659, %v727
      %v760 = vsel %vm692, %v660, %v728
      %v761 = vsel %vm693, %v661, %v729
      %v762 = vsel %vm694, %v662, %v730
      %v763 = vsel %vm695, %v663, %v731
      %v764 = vsel %vm696, %v664, %v732
      %v765 = vsel %vm697, %v665, %v733
      %v766 = vsel %vm698, %v666, %v734
      %v767 = vsel %vm699, %v667, %v735
      %v768 = vsel %vm700, %v668, %v736
      %v769 = vsel %vm701, %v669, %v737
      %v770 = vsel %vm702, %v670, %v738
      %v771 = vsel %vm703, %v671, %v739
      %v772 = vsel %vm704, %v672, %v740
      %v773 = vsel %vm705, %v673, %v741
      %v774 = vsel %vm706, %v674, %v742
      %v775 = vsel %vm707, %v675, %v743
      %v776 = vsel %vm708, %v676, %v744
      %s777 = scalar_lea.vmem [#allocation2], 24
      %778 = vst [vmem:[%s777 + $0x8] sm:$0xff] %v745
      %779 = vst [vmem:[%s777 + $0x10] sm:$0xff] %v746
      %780 = vst [vmem:[%s777 + $0x20] sm:$0xff] %v747
      %781 = vst [vmem:[%s777 + $0x28] sm:$0xff] %v748
      %782 = vst [vmem:[%s777 + $0x38] sm:$0xff] %v749
      %783 = vst [vmem:[%s777 + $0x40] sm:$0xff] %v750
      %784 = vst [vmem:[%s777 + $0x50] sm:$0xff] %v751
      %785 = vst [vmem:[%s777 + $0x58] sm:$0xff] %v752
      %786 = vst [vmem:[%s777 + $0x68] sm:$0xff] %v753
      %787 = vst [vmem:[%s777 + $0x70] sm:$0xff] %v754
      %788 = vst [vmem:[%s777 + $0x80] sm:$0xff] %v755
      %789 = vst [vmem:[%s777 + $0x88] sm:$0xff] %v756
      %790 = vst [vmem:[%s777 + $0x98] sm:$0xff] %v757
      %791 = vst [vmem:[%s777 + $0xa0] sm:$0xff] %v758
      %792 = vst [vmem:[%s777 + $0xb0] sm:$0xff] %v759
      %793 = vst [vmem:[%s777 + $0xb8] sm:$0xff] %v760
      %794 = vst [vmem:[%s777 + $0xf8] sm:$0xff] %v761
      %795 = vst [vmem:[%s777 + $0x100] sm:$0xff] %v762
      %796 = vst [vmem:[%s777 + $0x110] sm:$0xff] %v763
      %797 = vst [vmem:[%s777 + $0x118] sm:$0xff] %v764
      %798 = vst [vmem:[%s777 + $0x128] sm:$0xff] %v765
      %799 = vst [vmem:[%s777 + $0x130] sm:$0xff] %v766
      %800 = vst [vmem:[%s777 + $0x140] sm:$0xff] %v767
      %801 = vst [vmem:[%s777 + $0x148] sm:$0xff] %v768
      %802 = vst [vmem:[%s777 + $0x158] sm:$0xff] %v769
      %803 = vst [vmem:[%s777 + $0x160] sm:$0xff] %v770
      %804 = vst [vmem:[%s777 + $0x170] sm:$0xff] %v771
      %805 = vst [vmem:[%s777 + $0x178] sm:$0xff] %v772
      %806 = vst [vmem:[%s777 + $0x188] sm:$0xff] %v773
      %807 = vst [vmem:[%s777 + $0x190] sm:$0xff] %v774
      %808 = vst [vmem:[%s777 + $0x1a0] sm:$0xff] %v775
      %809 = vst [vmem:[%s777 + $0x1a8] sm:$0xff] %v776
      // Predicated region
      $region45: #{tfcm_pallas.1} parent=39 // pred_check
        %p810 = pneg %p191
      $region46: #{tfcm_pallas.1} parent=39 // pred_check_branch
        %812 = sbr.rel (%p810) target = $region48
      $region47: #{tfcm_pallas.1} parent=39 // pred_region
        %v813 = vld [vmem:[%s777 + $0x8] sm:$0xff]
        %v814 = vld [vmem:[%s777 + $0x10] sm:$0xff]
        %v815 = vld [vmem:[%s777 + $0x20] sm:$0xff]
        %v816 = vld [vmem:[%s777 + $0x28] sm:$0xff]
        %v817 = vld [vmem:[%s777 + $0x38] sm:$0xff]
        %v818 = vld [vmem:[%s777 + $0x40] sm:$0xff]
        %v819 = vld [vmem:[%s777 + $0x50] sm:$0xff]
        %v820 = vld [vmem:[%s777 + $0x58] sm:$0xff]
        %v821 = vld [vmem:[%s777 + $0x68] sm:$0xff]
        %v822 = vld [vmem:[%s777 + $0x70] sm:$0xff]
        %v823 = vld [vmem:[%s777 + $0x80] sm:$0xff]
        %v824 = vld [vmem:[%s777 + $0x88] sm:$0xff]
        %v825 = vld [vmem:[%s777 + $0x98] sm:$0xff]
        %v826 = vld [vmem:[%s777 + $0xa0] sm:$0xff]
        %v827 = vld [vmem:[%s777 + $0xb0] sm:$0xff]
        %v828 = vld [vmem:[%s777 + $0xb8] sm:$0xff]
        %v829 = vld [vmem:[%s777 + $0xf8] sm:$0xff]
        %v830 = vld [vmem:[%s777 + $0x100] sm:$0xff]
        %v831 = vld [vmem:[%s777 + $0x110] sm:$0xff]
        %v832 = vld [vmem:[%s777 + $0x118] sm:$0xff]
        %v833 = vld [vmem:[%s777 + $0x128] sm:$0xff]
        %v834 = vld [vmem:[%s777 + $0x130] sm:$0xff]
        %v835 = vld [vmem:[%s777 + $0x140] sm:$0xff]
        %v836 = vld [vmem:[%s777 + $0x148] sm:$0xff]
        %v837 = vld [vmem:[%s777 + $0x158] sm:$0xff]
        %v838 = vld [vmem:[%s777 + $0x160] sm:$0xff]
        %v839 = vld [vmem:[%s777 + $0x170] sm:$0xff]
        %v840 = vld [vmem:[%s777 + $0x178] sm:$0xff]
        %v841 = vld [vmem:[%s777 + $0x188] sm:$0xff]
        %v842 = vld [vmem:[%s777 + $0x190] sm:$0xff]
        %v843 = vld [vmem:[%s777 + $0x1a0] sm:$0xff]
        %v844 = vld [vmem:[%s777 + $0x1a8] sm:$0xff]
        %v845 = vlaneseq
        %v846 = vshrl.u32 %v845, 7
        %v847 = vsub.s32 5, %v846
        %v848 = vrot.slane %v324, %v847
        %v849 = vmul.f32 %v813, %v848
        %v850 = vmul.f32 %v814, %v848
        %v851 = vmul.f32 %v815, %v848
        %v852 = vmul.f32 %v816, %v848
        %v853 = vmul.f32 %v817, %v848
        %v854 = vmul.f32 %v818, %v848
        %v855 = vmul.f32 %v819, %v848
        %v856 = vmul.f32 %v820, %v848
        %v857 = vmul.f32 %v821, %v848
        %v858 = vmul.f32 %v822, %v848
        %v859 = vmul.f32 %v823, %v848
        %v860 = vmul.f32 %v824, %v848
        %v861 = vmul.f32 %v825, %v848
        %v862 = vmul.f32 %v826, %v848
        %v863 = vmul.f32 %v827, %v848
        %v864 = vmul.f32 %v828, %v848
        %v865 = vmul.f32 %v829, %v848
        %v866 = vmul.f32 %v830, %v848
        %v867 = vmul.f32 %v831, %v848
        %v868 = vmul.f32 %v832, %v848
        %v869 = vmul.f32 %v833, %v848
        %v870 = vmul.f32 %v834, %v848
        %v871 = vmul.f32 %v835, %v848
        %v872 = vmul.f32 %v836, %v848
        %v873 = vmul.f32 %v837, %v848
        %v874 = vmul.f32 %v838, %v848
        %v875 = vmul.f32 %v839, %v848
        %v876 = vmul.f32 %v840, %v848
        %v877 = vmul.f32 %v841, %v848
        %v878 = vmul.f32 %v842, %v848
        %v879 = vmul.f32 %v843, %v848
        %v880 = vmul.f32 %v844, %v848
        %v881 = vlaneseq
        %v882 = vshrl.u32 %v881, 7
        %v883 = vsub.s32 4, %v882
        %v884 = vrot.slane %v321, %v883
        %v885 = vadd.f32 %v849, %v884
        %v886 = vadd.f32 %v850, %v884
        %v887 = vadd.f32 %v851, %v884
        %v888 = vadd.f32 %v852, %v884
        %v889 = vadd.f32 %v853, %v884
        %v890 = vadd.f32 %v854, %v884
        %v891 = vadd.f32 %v855, %v884
        %v892 = vadd.f32 %v856, %v884
        %v893 = vadd.f32 %v857, %v884
        %v894 = vadd.f32 %v858, %v884
        %v895 = vadd.f32 %v859, %v884
        %v896 = vadd.f32 %v860, %v884
        %v897 = vadd.f32 %v861, %v884
        %v898 = vadd.f32 %v862, %v884
        %v899 = vadd.f32 %v863, %v884
        %v900 = vadd.f32 %v864, %v884
        %v901 = vadd.f32 %v865, %v884
        %v902 = vadd.f32 %v866, %v884
        %v903 = vadd.f32 %v867, %v884
        %v904 = vadd.f32 %v868, %v884
        %v905 = vadd.f32 %v869, %v884
        %v906 = vadd.f32 %v870, %v884
        %v907 = vadd.f32 %v871, %v884
        %v908 = vadd.f32 %v872, %v884
        %v909 = vadd.f32 %v873, %v884
        %v910 = vadd.f32 %v874, %v884
        %v911 = vadd.f32 %v875, %v884
        %v912 = vadd.f32 %v876, %v884
        %v913 = vadd.f32 %v877, %v884
        %v914 = vadd.f32 %v878, %v884
        %v915 = vadd.f32 %v879, %v884
        %v916 = vadd.f32 %v880, %v884
        %v917 = vld [vmem:[#allocation2 + $0x6] sm:$0xff]
        %v918 = vld [vmem:[#allocation2 + $0xe] sm:$0xff]
        %v919 = vld [vmem:[#allocation2 + $0x1e] sm:$0xff]
        %v920 = vld [vmem:[#allocation2 + $0x26] sm:$0xff]
        %v921 = vld [vmem:[#allocation2 + $0x36] sm:$0xff]
        %v922 = vld [vmem:[#allocation2 + $0x3e] sm:$0xff]
        %v923 = vld [vmem:[#allocation2 + $0x4e] sm:$0xff]
        %v924 = vld [vmem:[#allocation2 + $0x56] sm:$0xff]
        %v925 = vld [vmem:[#allocation2 + $0x66] sm:$0xff]
        %v926 = vld [vmem:[#allocation2 + $0x6e] sm:$0xff]
        %v927 = vld [vmem:[#allocation2 + $0x7e] sm:$0xff]
        %v928 = vld [vmem:[#allocation2 + $0x86] sm:$0xff]
        %v929 = vld [vmem:[#allocation2 + $0x96] sm:$0xff]
        %v930 = vld [vmem:[#allocation2 + $0x9e] sm:$0xff]
        %v931 = vld [vmem:[#allocation2 + $0xae] sm:$0xff]
        %v932 = vld [vmem:[#allocation2 + $0xb6] sm:$0xff]
        %v933 = vld [vmem:[#allocation2 + $0xf6] sm:$0xff]
        %v934 = vld [vmem:[#allocation2 + $0xfe] sm:$0xff]
        %v935 = vld [vmem:[#allocation2 + $0x10e] sm:$0xff]
        %v936 = vld [vmem:[#allocation2 + $0x116] sm:$0xff]
        %v937 = vld [vmem:[#allocation2 + $0x126] sm:$0xff]
        %v938 = vld [vmem:[#allocation2 + $0x12e] sm:$0xff]
        %v939 = vld [vmem:[#allocation2 + $0x13e] sm:$0xff]
        %v940 = vld [vmem:[#allocation2 + $0x146] sm:$0xff]
        %v941 = vld [vmem:[#allocation2 + $0x156] sm:$0xff]
        %v942 = vld [vmem:[#allocation2 + $0x15e] sm:$0xff]
        %v943 = vld [vmem:[#allocation2 + $0x16e] sm:$0xff]
        %v944 = vld [vmem:[#allocation2 + $0x176] sm:$0xff]
        %v945 = vld [vmem:[#allocation2 + $0x186] sm:$0xff]
        %v946 = vld [vmem:[#allocation2 + $0x18e] sm:$0xff]
        %v947 = vld [vmem:[#allocation2 + $0x19e] sm:$0xff]
        %v948 = vld [vmem:[#allocation2 + $0x1a6] sm:$0xff]
        %v949 = vlaneseq
        %v950 = vshrl.u32 %v949, 7
        %v951 = vsub.s32 0, %v950
        %v952 = vrot.slane %v324, %v951
        %v953 = vmul.f32 %v917, %v952
        %v954 = vmul.f32 %v918, %v952
        %v955 = vmul.f32 %v919, %v952
        %v956 = vmul.f32 %v920, %v952
        %v957 = vmul.f32 %v921, %v952
        %v958 = vmul.f32 %v922, %v952
        %v959 = vmul.f32 %v923, %v952
        %v960 = vmul.f32 %v924, %v952
        %v961 = vmul.f32 %v925, %v952
        %v962 = vmul.f32 %v926, %v952
        %v963 = vmul.f32 %v927, %v952
        %v964 = vmul.f32 %v928, %v952
        %v965 = vmul.f32 %v929, %v952
        %v966 = vmul.f32 %v930, %v952
        %v967 = vmul.f32 %v931, %v952
        %v968 = vmul.f32 %v932, %v952
        %v969 = vmul.f32 %v933, %v952
        %v970 = vmul.f32 %v934, %v952
        %v971 = vmul.f32 %v935, %v952
        %v972 = vmul.f32 %v936, %v952
        %v973 = vmul.f32 %v937, %v952
        %v974 = vmul.f32 %v938, %v952
        %v975 = vmul.f32 %v939, %v952
        %v976 = vmul.f32 %v940, %v952
        %v977 = vmul.f32 %v941, %v952
        %v978 = vmul.f32 %v942, %v952
        %v979 = vmul.f32 %v943, %v952
        %v980 = vmul.f32 %v944, %v952
        %v981 = vmul.f32 %v945, %v952
        %v982 = vmul.f32 %v946, %v952
        %v983 = vmul.f32 %v947, %v952
        %v984 = vmul.f32 %v948, %v952
        %v985 = vadd.f32 %v885, %v953
        %v986 = vadd.f32 %v886, %v954
        %v987 = vadd.f32 %v887, %v955
        %v988 = vadd.f32 %v888, %v956
        %v989 = vadd.f32 %v889, %v957
        %v990 = vadd.f32 %v890, %v958
        %v991 = vadd.f32 %v891, %v959
        %v992 = vadd.f32 %v892, %v960
        %v993 = vadd.f32 %v893, %v961
        %v994 = vadd.f32 %v894, %v962
        %v995 = vadd.f32 %v895, %v963
        %v996 = vadd.f32 %v896, %v964
        %v997 = vadd.f32 %v897, %v965
        %v998 = vadd.f32 %v898, %v966
        %v999 = vadd.f32 %v899, %v967
        %v1000 = vadd.f32 %v900, %v968
        %v1001 = vadd.f32 %v901, %v969
        %v1002 = vadd.f32 %v902, %v970
        %v1003 = vadd.f32 %v903, %v971
        %v1004 = vadd.f32 %v904, %v972
        %v1005 = vadd.f32 %v905, %v973
        %v1006 = vadd.f32 %v906, %v974
        %v1007 = vadd.f32 %v907, %v975
        %v1008 = vadd.f32 %v908, %v976
        %v1009 = vadd.f32 %v909, %v977
        %v1010 = vadd.f32 %v910, %v978
        %v1011 = vadd.f32 %v911, %v979
        %v1012 = vadd.f32 %v912, %v980
        %v1013 = vadd.f32 %v913, %v981
        %v1014 = vadd.f32 %v914, %v982
        %v1015 = vadd.f32 %v915, %v983
        %v1016 = vadd.f32 %v916, %v984
        %v1017 = vld [vmem:[%s777 + $0x6] sm:$0xff]
        %v1018 = vld [vmem:[%s777 + $0xe] sm:$0xff]
        %v1019 = vld [vmem:[%s777 + $0x1e] sm:$0xff]
        %v1020 = vld [vmem:[%s777 + $0x26] sm:$0xff]
        %v1021 = vld [vmem:[%s777 + $0x36] sm:$0xff]
        %v1022 = vld [vmem:[%s777 + $0x3e] sm:$0xff]
        %v1023 = vld [vmem:[%s777 + $0x4e] sm:$0xff]
        %v1024 = vld [vmem:[%s777 + $0x56] sm:$0xff]
        %v1025 = vld [vmem:[%s777 + $0x66] sm:$0xff]
        %v1026 = vld [vmem:[%s777 + $0x6e] sm:$0xff]
        %v1027 = vld [vmem:[%s777 + $0x7e] sm:$0xff]
        %v1028 = vld [vmem:[%s777 + $0x86] sm:$0xff]
        %v1029 = vld [vmem:[%s777 + $0x96] sm:$0xff]
        %v1030 = vld [vmem:[%s777 + $0x9e] sm:$0xff]
        %v1031 = vld [vmem:[%s777 + $0xae] sm:$0xff]
        %v1032 = vld [vmem:[%s777 + $0xb6] sm:$0xff]
        %v1033 = vld [vmem:[%s777 + $0xf6] sm:$0xff]
        %v1034 = vld [vmem:[%s777 + $0xfe] sm:$0xff]
        %v1035 = vld [vmem:[%s777 + $0x10e] sm:$0xff]
        %v1036 = vld [vmem:[%s777 + $0x116] sm:$0xff]
        %v1037 = vld [vmem:[%s777 + $0x126] sm:$0xff]
        %v1038 = vld [vmem:[%s777 + $0x12e] sm:$0xff]
        %v1039 = vld [vmem:[%s777 + $0x13e] sm:$0xff]
        %v1040 = vld [vmem:[%s777 + $0x146] sm:$0xff]
        %v1041 = vld [vmem:[%s777 + $0x156] sm:$0xff]
        %v1042 = vld [vmem:[%s777 + $0x15e] sm:$0xff]
        %v1043 = vld [vmem:[%s777 + $0x16e] sm:$0xff]
        %v1044 = vld [vmem:[%s777 + $0x176] sm:$0xff]
        %v1045 = vld [vmem:[%s777 + $0x186] sm:$0xff]
        %v1046 = vld [vmem:[%s777 + $0x18e] sm:$0xff]
        %v1047 = vld [vmem:[%s777 + $0x19e] sm:$0xff]
        %v1048 = vld [vmem:[%s777 + $0x1a6] sm:$0xff]
        %v1049 = vlaneseq
        %v1050 = vshrl.u32 %v1049, 7
        %v1051 = vsub.s32 3, %v1050
        %v1052 = vrot.slane %v324, %v1051
        %v1053 = vmul.f32 %v1017, %v1052
        %v1054 = vmul.f32 %v1018, %v1052
        %v1055 = vmul.f32 %v1019, %v1052
        %v1056 = vmul.f32 %v1020, %v1052
        %v1057 = vmul.f32 %v1021, %v1052
        %v1058 = vmul.f32 %v1022, %v1052
        %v1059 = vmul.f32 %v1023, %v1052
        %v1060 = vmul.f32 %v1024, %v1052
        %v1061 = vmul.f32 %v1025, %v1052
        %v1062 = vmul.f32 %v1026, %v1052
        %v1063 = vmul.f32 %v1027, %v1052
        %v1064 = vmul.f32 %v1028, %v1052
        %v1065 = vmul.f32 %v1029, %v1052
        %v1066 = vmul.f32 %v1030, %v1052
        %v1067 = vmul.f32 %v1031, %v1052
        %v1068 = vmul.f32 %v1032, %v1052
        %v1069 = vmul.f32 %v1033, %v1052
        %v1070 = vmul.f32 %v1034, %v1052
        %v1071 = vmul.f32 %v1035, %v1052
        %v1072 = vmul.f32 %v1036, %v1052
        %v1073 = vmul.f32 %v1037, %v1052
        %v1074 = vmul.f32 %v1038, %v1052
        %v1075 = vmul.f32 %v1039, %v1052
        %v1076 = vmul.f32 %v1040, %v1052
        %v1077 = vmul.f32 %v1041, %v1052
        %v1078 = vmul.f32 %v1042, %v1052
        %v1079 = vmul.f32 %v1043, %v1052
        %v1080 = vmul.f32 %v1044, %v1052
        %v1081 = vmul.f32 %v1045, %v1052
        %v1082 = vmul.f32 %v1046, %v1052
        %v1083 = vmul.f32 %v1047, %v1052
        %v1084 = vmul.f32 %v1048, %v1052
        %v1085 = vadd.f32 %v985, %v1053
        %v1086 = vadd.f32 %v986, %v1054
        %v1087 = vadd.f32 %v987, %v1055
        %v1088 = vadd.f32 %v988, %v1056
        %v1089 = vadd.f32 %v989, %v1057
        %v1090 = vadd.f32 %v990, %v1058
        %v1091 = vadd.f32 %v991, %v1059
        %v1092 = vadd.f32 %v992, %v1060
        %v1093 = vadd.f32 %v993, %v1061
        %v1094 = vadd.f32 %v994, %v1062
        %v1095 = vadd.f32 %v995, %v1063
        %v1096 = vadd.f32 %v996, %v1064
        %v1097 = vadd.f32 %v997, %v1065
        %v1098 = vadd.f32 %v998, %v1066
        %v1099 = vadd.f32 %v999, %v1067
        %v1100 = vadd.f32 %v1000, %v1068
        %v1101 = vadd.f32 %v1001, %v1069
        %v1102 = vadd.f32 %v1002, %v1070
        %v1103 = vadd.f32 %v1003, %v1071
        %v1104 = vadd.f32 %v1004, %v1072
        %v1105 = vadd.f32 %v1005, %v1073
        %v1106 = vadd.f32 %v1006, %v1074
        %v1107 = vadd.f32 %v1007, %v1075
        %v1108 = vadd.f32 %v1008, %v1076
        %v1109 = vadd.f32 %v1009, %v1077
        %v1110 = vadd.f32 %v1010, %v1078
        %v1111 = vadd.f32 %v1011, %v1079
        %v1112 = vadd.f32 %v1012, %v1080
        %v1113 = vadd.f32 %v1013, %v1081
        %v1114 = vadd.f32 %v1014, %v1082
        %v1115 = vadd.f32 %v1015, %v1083
        %v1116 = vadd.f32 %v1016, %v1084
        %s1117 = scalar_lea.vmem [#allocation2], 48
        %v1118 = vld [vmem:[%s1117 + $0x6] sm:$0xff]
        %v1119 = vld [vmem:[%s1117 + $0xe] sm:$0xff]
        %v1120 = vld [vmem:[%s1117 + $0x1e] sm:$0xff]
        %v1121 = vld [vmem:[%s1117 + $0x26] sm:$0xff]
        %v1122 = vld [vmem:[%s1117 + $0x36] sm:$0xff]
        %v1123 = vld [vmem:[%s1117 + $0x3e] sm:$0xff]
        %v1124 = vld [vmem:[%s1117 + $0x4e] sm:$0xff]
        %v1125 = vld [vmem:[%s1117 + $0x56] sm:$0xff]
        %v1126 = vld [vmem:[%s1117 + $0x66] sm:$0xff]
        %v1127 = vld [vmem:[%s1117 + $0x6e] sm:$0xff]
        %v1128 = vld [vmem:[%s1117 + $0x7e] sm:$0xff]
        %v1129 = vld [vmem:[%s1117 + $0x86] sm:$0xff]
        %v1130 = vld [vmem:[%s1117 + $0x96] sm:$0xff]
        %v1131 = vld [vmem:[%s1117 + $0x9e] sm:$0xff]
        %v1132 = vld [vmem:[%s1117 + $0xae] sm:$0xff]
        %v1133 = vld [vmem:[%s1117 + $0xb6] sm:$0xff]
        %v1134 = vld [vmem:[%s1117 + $0xf6] sm:$0xff]
        %v1135 = vld [vmem:[%s1117 + $0xfe] sm:$0xff]
        %v1136 = vld [vmem:[%s1117 + $0x10e] sm:$0xff]
        %v1137 = vld [vmem:[%s1117 + $0x116] sm:$0xff]
        %v1138 = vld [vmem:[%s1117 + $0x126] sm:$0xff]
        %v1139 = vld [vmem:[%s1117 + $0x12e] sm:$0xff]
        %v1140 = vld [vmem:[%s1117 + $0x13e] sm:$0xff]
        %v1141 = vld [vmem:[%s1117 + $0x146] sm:$0xff]
        %v1142 = vld [vmem:[%s1117 + $0x156] sm:$0xff]
        %v1143 = vld [vmem:[%s1117 + $0x15e] sm:$0xff]
        %v1144 = vld [vmem:[%s1117 + $0x16e] sm:$0xff]
        %v1145 = vld [vmem:[%s1117 + $0x176] sm:$0xff]
        %v1146 = vld [vmem:[%s1117 + $0x186] sm:$0xff]
        %v1147 = vld [vmem:[%s1117 + $0x18e] sm:$0xff]
        %v1148 = vld [vmem:[%s1117 + $0x19e] sm:$0xff]
        %v1149 = vld [vmem:[%s1117 + $0x1a6] sm:$0xff]
        %v1150 = vlaneseq
        %v1151 = vshrl.u32 %v1150, 7
        %v1152 = vsub.s32 6, %v1151
        %v1153 = vrot.slane %v324, %v1152
        %v1154 = vmul.f32 %v1118, %v1153
        %v1155 = vmul.f32 %v1119, %v1153
        %v1156 = vmul.f32 %v1120, %v1153
        %v1157 = vmul.f32 %v1121, %v1153
        %v1158 = vmul.f32 %v1122, %v1153
        %v1159 = vmul.f32 %v1123, %v1153
        %v1160 = vmul.f32 %v1124, %v1153
        %v1161 = vmul.f32 %v1125, %v1153
        %v1162 = vmul.f32 %v1126, %v1153
        %v1163 = vmul.f32 %v1127, %v1153
        %v1164 = vmul.f32 %v1128, %v1153
        %v1165 = vmul.f32 %v1129, %v1153
        %v1166 = vmul.f32 %v1130, %v1153
        %v1167 = vmul.f32 %v1131, %v1153
        %v1168 = vmul.f32 %v1132, %v1153
        %v1169 = vmul.f32 %v1133, %v1153
        %v1170 = vmul.f32 %v1134, %v1153
        %v1171 = vmul.f32 %v1135, %v1153
        %v1172 = vmul.f32 %v1136, %v1153
        %v1173 = vmul.f32 %v1137, %v1153
        %v1174 = vmul.f32 %v1138, %v1153
        %v1175 = vmul.f32 %v1139, %v1153
        %v1176 = vmul.f32 %v1140, %v1153
        %v1177 = vmul.f32 %v1141, %v1153
        %v1178 = vmul.f32 %v1142, %v1153
        %v1179 = vmul.f32 %v1143, %v1153
        %v1180 = vmul.f32 %v1144, %v1153
        %v1181 = vmul.f32 %v1145, %v1153
        %v1182 = vmul.f32 %v1146, %v1153
        %v1183 = vmul.f32 %v1147, %v1153
        %v1184 = vmul.f32 %v1148, %v1153
        %v1185 = vmul.f32 %v1149, %v1153
        %v1186 = vadd.f32 %v1085, %v1154
        %v1187 = vadd.f32 %v1086, %v1155
        %v1188 = vadd.f32 %v1087, %v1156
        %v1189 = vadd.f32 %v1088, %v1157
        %v1190 = vadd.f32 %v1089, %v1158
        %v1191 = vadd.f32 %v1090, %v1159
        %v1192 = vadd.f32 %v1091, %v1160
        %v1193 = vadd.f32 %v1092, %v1161
        %v1194 = vadd.f32 %v1093, %v1162
        %v1195 = vadd.f32 %v1094, %v1163
        %v1196 = vadd.f32 %v1095, %v1164
        %v1197 = vadd.f32 %v1096, %v1165
        %v1198 = vadd.f32 %v1097, %v1166
        %v1199 = vadd.f32 %v1098, %v1167
        %v1200 = vadd.f32 %v1099, %v1168
        %v1201 = vadd.f32 %v1100, %v1169
        %v1202 = vadd.f32 %v1101, %v1170
        %v1203 = vadd.f32 %v1102, %v1171
        %v1204 = vadd.f32 %v1103, %v1172
        %v1205 = vadd.f32 %v1104, %v1173
        %v1206 = vadd.f32 %v1105, %v1174
        %v1207 = vadd.f32 %v1106, %v1175
        %v1208 = vadd.f32 %v1107, %v1176
        %v1209 = vadd.f32 %v1108, %v1177
        %v1210 = vadd.f32 %v1109, %v1178
        %v1211 = vadd.f32 %v1110, %v1179
        %v1212 = vadd.f32 %v1111, %v1180
        %v1213 = vadd.f32 %v1112, %v1181
        %v1214 = vadd.f32 %v1113, %v1182
        %v1215 = vadd.f32 %v1114, %v1183
        %v1216 = vadd.f32 %v1115, %v1184
        %v1217 = vadd.f32 %v1116, %v1185
        %v1218 = vld [vmem:[#allocation2 + $0x7] sm:$0xff]
        %v1219 = vld [vmem:[#allocation2 + $0xf] sm:$0xff]
        %v1220 = vld [vmem:[#allocation2 + $0x1f] sm:$0xff]
        %v1221 = vld [vmem:[#allocation2 + $0x27] sm:$0xff]
        %v1222 = vld [vmem:[#allocation2 + $0x37] sm:$0xff]
        %v1223 = vld [vmem:[#allocation2 + $0x3f] sm:$0xff]
        %v1224 = vld [vmem:[#allocation2 + $0x4f] sm:$0xff]
        %v1225 = vld [vmem:[#allocation2 + $0x57] sm:$0xff]
        %v1226 = vld [vmem:[#allocation2 + $0x67] sm:$0xff]
        %v1227 = vld [vmem:[#allocation2 + $0x6f] sm:$0xff]
        %v1228 = vld [vmem:[#allocation2 + $0x7f] sm:$0xff]
        %v1229 = vld [vmem:[#allocation2 + $0x87] sm:$0xff]
        %v1230 = vld [vmem:[#allocation2 + $0x97] sm:$0xff]
        %v1231 = vld [vmem:[#allocation2 + $0x9f] sm:$0xff]
        %v1232 = vld [vmem:[#allocation2 + $0xaf] sm:$0xff]
        %v1233 = vld [vmem:[#allocation2 + $0xb7] sm:$0xff]
        %v1234 = vld [vmem:[#allocation2 + $0xf7] sm:$0xff]
        %v1235 = vld [vmem:[#allocation2 + $0xff] sm:$0xff]
        %v1236 = vld [vmem:[#allocation2 + $0x10f] sm:$0xff]
        %v1237 = vld [vmem:[#allocation2 + $0x117] sm:$0xff]
        %v1238 = vld [vmem:[#allocation2 + $0x127] sm:$0xff]
        %v1239 = vld [vmem:[#allocation2 + $0x12f] sm:$0xff]
        %v1240 = vld [vmem:[#allocation2 + $0x13f] sm:$0xff]
        %v1241 = vld [vmem:[#allocation2 + $0x147] sm:$0xff]
        %v1242 = vld [vmem:[#allocation2 + $0x157] sm:$0xff]
        %v1243 = vld [vmem:[#allocation2 + $0x15f] sm:$0xff]
        %v1244 = vld [vmem:[#allocation2 + $0x16f] sm:$0xff]
        %v1245 = vld [vmem:[#allocation2 + $0x177] sm:$0xff]
        %v1246 = vld [vmem:[#allocation2 + $0x187] sm:$0xff]
        %v1247 = vld [vmem:[#allocation2 + $0x18f] sm:$0xff]
        %v1248 = vld [vmem:[#allocation2 + $0x19f] sm:$0xff]
        %v1249 = vld [vmem:[#allocation2 + $0x1a7] sm:$0xff]
        %v1250 = vlaneseq
        %v1251 = vshrl.u32 %v1250, 7
        %v1252 = vsub.s32 1, %v1251
        %v1253 = vrot.slane %v324, %v1252
        %v1254 = vmul.f32 %v1218, %v1253
        %v1255 = vmul.f32 %v1219, %v1253
        %v1256 = vmul.f32 %v1220, %v1253
        %v1257 = vmul.f32 %v1221, %v1253
        %v1258 = vmul.f32 %v1222, %v1253
        %v1259 = vmul.f32 %v1223, %v1253
        %v1260 = vmul.f32 %v1224, %v1253
        %v1261 = vmul.f32 %v1225, %v1253
        %v1262 = vmul.f32 %v1226, %v1253
        %v1263 = vmul.f32 %v1227, %v1253
        %v1264 = vmul.f32 %v1228, %v1253
        %v1265 = vmul.f32 %v1229, %v1253
        %v1266 = vmul.f32 %v1230, %v1253
        %v1267 = vmul.f32 %v1231, %v1253
        %v1268 = vmul.f32 %v1232, %v1253
        %v1269 = vmul.f32 %v1233, %v1253
        %v1270 = vmul.f32 %v1234, %v1253
        %v1271 = vmul.f32 %v1235, %v1253
        %v1272 = vmul.f32 %v1236, %v1253
        %v1273 = vmul.f32 %v1237, %v1253
        %v1274 = vmul.f32 %v1238, %v1253
        %v1275 = vmul.f32 %v1239, %v1253
        %v1276 = vmul.f32 %v1240, %v1253
        %v1277 = vmul.f32 %v1241, %v1253
        %v1278 = vmul.f32 %v1242, %v1253
        %v1279 = vmul.f32 %v1243, %v1253
        %v1280 = vmul.f32 %v1244, %v1253
        %v1281 = vmul.f32 %v1245, %v1253
        %v1282 = vmul.f32 %v1246, %v1253
        %v1283 = vmul.f32 %v1247, %v1253
        %v1284 = vmul.f32 %v1248, %v1253
        %v1285 = vmul.f32 %v1249, %v1253
        %v1286 = vadd.f32 %v1186, %v1254
        %v1287 = vadd.f32 %v1187, %v1255
        %v1288 = vadd.f32 %v1188, %v1256
        %v1289 = vadd.f32 %v1189, %v1257
        %v1290 = vadd.f32 %v1190, %v1258
        %v1291 = vadd.f32 %v1191, %v1259
        %v1292 = vadd.f32 %v1192, %v1260
        %v1293 = vadd.f32 %v1193, %v1261
        %v1294 = vadd.f32 %v1194, %v1262
        %v1295 = vadd.f32 %v1195, %v1263
        %v1296 = vadd.f32 %v1196, %v1264
        %v1297 = vadd.f32 %v1197, %v1265
        %v1298 = vadd.f32 %v1198, %v1266
        %v1299 = vadd.f32 %v1199, %v1267
        %v1300 = vadd.f32 %v1200, %v1268
        %v1301 = vadd.f32 %v1201, %v1269
        %v1302 = vadd.f32 %v1202, %v1270
        %v1303 = vadd.f32 %v1203, %v1271
        %v1304 = vadd.f32 %v1204, %v1272
        %v1305 = vadd.f32 %v1205, %v1273
        %v1306 = vadd.f32 %v1206, %v1274
        %v1307 = vadd.f32 %v1207, %v1275
        %v1308 = vadd.f32 %v1208, %v1276
        %v1309 = vadd.f32 %v1209, %v1277
        %v1310 = vadd.f32 %v1210, %v1278
        %v1311 = vadd.f32 %v1211, %v1279
        %v1312 = vadd.f32 %v1212, %v1280
        %v1313 = vadd.f32 %v1213, %v1281
        %v1314 = vadd.f32 %v1214, %v1282
        %v1315 = vadd.f32 %v1215, %v1283
        %v1316 = vadd.f32 %v1216, %v1284
        %v1317 = vadd.f32 %v1217, %v1285
        %v1318 = vld [vmem:[%s777 + $0x7] sm:$0xff]
        %v1319 = vld [vmem:[%s777 + $0xf] sm:$0xff]
        %v1320 = vld [vmem:[%s777 + $0x1f] sm:$0xff]
        %v1321 = vld [vmem:[%s777 + $0x27] sm:$0xff]
        %v1322 = vld [vmem:[%s777 + $0x37] sm:$0xff]
        %v1323 = vld [vmem:[%s777 + $0x3f] sm:$0xff]
        %v1324 = vld [vmem:[%s777 + $0x4f] sm:$0xff]
        %v1325 = vld [vmem:[%s777 + $0x57] sm:$0xff]
        %v1326 = vld [vmem:[%s777 + $0x67] sm:$0xff]
        %v1327 = vld [vmem:[%s777 + $0x6f] sm:$0xff]
        %v1328 = vld [vmem:[%s777 + $0x7f] sm:$0xff]
        %v1329 = vld [vmem:[%s777 + $0x87] sm:$0xff]
        %v1330 = vld [vmem:[%s777 + $0x97] sm:$0xff]
        %v1331 = vld [vmem:[%s777 + $0x9f] sm:$0xff]
        %v1332 = vld [vmem:[%s777 + $0xaf] sm:$0xff]
        %v1333 = vld [vmem:[%s777 + $0xb7] sm:$0xff]
        %v1334 = vld [vmem:[%s777 + $0xf7] sm:$0xff]
        %v1335 = vld [vmem:[%s777 + $0xff] sm:$0xff]
        %v1336 = vld [vmem:[%s777 + $0x10f] sm:$0xff]
        %v1337 = vld [vmem:[%s777 + $0x117] sm:$0xff]
        %v1338 = vld [vmem:[%s777 + $0x127] sm:$0xff]
        %v1339 = vld [vmem:[%s777 + $0x12f] sm:$0xff]
        %v1340 = vld [vmem:[%s777 + $0x13f] sm:$0xff]
        %v1341 = vld [vmem:[%s777 + $0x147] sm:$0xff]
        %v1342 = vld [vmem:[%s777 + $0x157] sm:$0xff]
        %v1343 = vld [vmem:[%s777 + $0x15f] sm:$0xff]
        %v1344 = vld [vmem:[%s777 + $0x16f] sm:$0xff]
        %v1345 = vld [vmem:[%s777 + $0x177] sm:$0xff]
        %v1346 = vld [vmem:[%s777 + $0x187] sm:$0xff]
        %v1347 = vld [vmem:[%s777 + $0x18f] sm:$0xff]
        %v1348 = vld [vmem:[%s777 + $0x19f] sm:$0xff]
        %v1349 = vld [vmem:[%s777 + $0x1a7] sm:$0xff]
        %v1350 = vlaneseq
        %v1351 = vshrl.u32 %v1350, 7
        %v1352 = vsub.s32 4, %v1351
        %v1353 = vrot.slane %v324, %v1352
        %v1354 = vmul.f32 %v1318, %v1353
        %v1355 = vmul.f32 %v1319, %v1353
        %v1356 = vmul.f32 %v1320, %v1353
        %v1357 = vmul.f32 %v1321, %v1353
        %v1358 = vmul.f32 %v1322, %v1353
        %v1359 = vmul.f32 %v1323, %v1353
        %v1360 = vmul.f32 %v1324, %v1353
        %v1361 = vmul.f32 %v1325, %v1353
        %v1362 = vmul.f32 %v1326, %v1353
        %v1363 = vmul.f32 %v1327, %v1353
        %v1364 = vmul.f32 %v1328, %v1353
        %v1365 = vmul.f32 %v1329, %v1353
        %v1366 = vmul.f32 %v1330, %v1353
        %v1367 = vmul.f32 %v1331, %v1353
        %v1368 = vmul.f32 %v1332, %v1353
        %v1369 = vmul.f32 %v1333, %v1353
        %v1370 = vmul.f32 %v1334, %v1353
        %v1371 = vmul.f32 %v1335, %v1353
        %v1372 = vmul.f32 %v1336, %v1353
        %v1373 = vmul.f32 %v1337, %v1353
        %v1374 = vmul.f32 %v1338, %v1353
        %v1375 = vmul.f32 %v1339, %v1353
        %v1376 = vmul.f32 %v1340, %v1353
        %v1377 = vmul.f32 %v1341, %v1353
        %v1378 = vmul.f32 %v1342, %v1353
        %v1379 = vmul.f32 %v1343, %v1353
        %v1380 = vmul.f32 %v1344, %v1353
        %v1381 = vmul.f32 %v1345, %v1353
        %v1382 = vmul.f32 %v1346, %v1353
        %v1383 = vmul.f32 %v1347, %v1353
        %v1384 = vmul.f32 %v1348, %v1353
        %v1385 = vmul.f32 %v1349, %v1353
        %v1386 = vadd.f32 %v1286, %v1354
        %v1387 = vadd.f32 %v1287, %v1355
        %v1388 = vadd.f32 %v1288, %v1356
        %v1389 = vadd.f32 %v1289, %v1357
        %v1390 = vadd.f32 %v1290, %v1358
        %v1391 = vadd.f32 %v1291, %v1359
        %v1392 = vadd.f32 %v1292, %v1360
        %v1393 = vadd.f32 %v1293, %v1361
        %v1394 = vadd.f32 %v1294, %v1362
        %v1395 = vadd.f32 %v1295, %v1363
        %v1396 = vadd.f32 %v1296, %v1364
        %v1397 = vadd.f32 %v1297, %v1365
        %v1398 = vadd.f32 %v1298, %v1366
        %v1399 = vadd.f32 %v1299, %v1367
        %v1400 = vadd.f32 %v1300, %v1368
        %v1401 = vadd.f32 %v1301, %v1369
        %v1402 = vadd.f32 %v1302, %v1370
        %v1403 = vadd.f32 %v1303, %v1371
        %v1404 = vadd.f32 %v1304, %v1372
        %v1405 = vadd.f32 %v1305, %v1373
        %v1406 = vadd.f32 %v1306, %v1374
        %v1407 = vadd.f32 %v1307, %v1375
        %v1408 = vadd.f32 %v1308, %v1376
        %v1409 = vadd.f32 %v1309, %v1377
        %v1410 = vadd.f32 %v1310, %v1378
        %v1411 = vadd.f32 %v1311, %v1379
        %v1412 = vadd.f32 %v1312, %v1380
        %v1413 = vadd.f32 %v1313, %v1381
        %v1414 = vadd.f32 %v1314, %v1382
        %v1415 = vadd.f32 %v1315, %v1383
        %v1416 = vadd.f32 %v1316, %v1384
        %v1417 = vadd.f32 %v1317, %v1385
        %v1418 = vld [vmem:[%s1117 + $0x7] sm:$0xff]
        %v1419 = vld [vmem:[%s1117 + $0xf] sm:$0xff]
        %v1420 = vld [vmem:[%s1117 + $0x1f] sm:$0xff]
        %v1421 = vld [vmem:[%s1117 + $0x27] sm:$0xff]
        %v1422 = vld [vmem:[%s1117 + $0x37] sm:$0xff]
        %v1423 = vld [vmem:[%s1117 + $0x3f] sm:$0xff]
        %v1424 = vld [vmem:[%s1117 + $0x4f] sm:$0xff]
        %v1425 = vld [vmem:[%s1117 + $0x57] sm:$0xff]
        %v1426 = vld [vmem:[%s1117 + $0x67] sm:$0xff]
        %v1427 = vld [vmem:[%s1117 + $0x6f] sm:$0xff]
        %v1428 = vld [vmem:[%s1117 + $0x7f] sm:$0xff]
        %v1429 = vld [vmem:[%s1117 + $0x87] sm:$0xff]
        %v1430 = vld [vmem:[%s1117 + $0x97] sm:$0xff]
        %v1431 = vld [vmem:[%s1117 + $0x9f] sm:$0xff]
        %v1432 = vld [vmem:[%s1117 + $0xaf] sm:$0xff]
        %v1433 = vld [vmem:[%s1117 + $0xb7] sm:$0xff]
        %v1434 = vld [vmem:[%s1117 + $0xf7] sm:$0xff]
        %v1435 = vld [vmem:[%s1117 + $0xff] sm:$0xff]
        %v1436 = vld [vmem:[%s1117 + $0x10f] sm:$0xff]
        %v1437 = vld [vmem:[%s1117 + $0x117] sm:$0xff]
        %v1438 = vld [vmem:[%s1117 + $0x127] sm:$0xff]
        %v1439 = vld [vmem:[%s1117 + $0x12f] sm:$0xff]
        %v1440 = vld [vmem:[%s1117 + $0x13f] sm:$0xff]
        %v1441 = vld [vmem:[%s1117 + $0x147] sm:$0xff]
        %v1442 = vld [vmem:[%s1117 + $0x157] sm:$0xff]
        %v1443 = vld [vmem:[%s1117 + $0x15f] sm:$0xff]
        %v1444 = vld [vmem:[%s1117 + $0x16f] sm:$0xff]
        %v1445 = vld [vmem:[%s1117 + $0x177] sm:$0xff]
        %v1446 = vld [vmem:[%s1117 + $0x187] sm:$0xff]
        %v1447 = vld [vmem:[%s1117 + $0x18f] sm:$0xff]
        %v1448 = vld [vmem:[%s1117 + $0x19f] sm:$0xff]
        %v1449 = vld [vmem:[%s1117 + $0x1a7] sm:$0xff]
        %v1450 = vlaneseq
        %v1451 = vshrl.u32 %v1450, 7
        %v1452 = vsub.s32 7, %v1451
        %v1453 = vrot.slane %v324, %v1452
        %v1454 = vmul.f32 %v1418, %v1453
        %v1455 = vmul.f32 %v1419, %v1453
        %v1456 = vmul.f32 %v1420, %v1453
        %v1457 = vmul.f32 %v1421, %v1453
        %v1458 = vmul.f32 %v1422, %v1453
        %v1459 = vmul.f32 %v1423, %v1453
        %v1460 = vmul.f32 %v1424, %v1453
        %v1461 = vmul.f32 %v1425, %v1453
        %v1462 = vmul.f32 %v1426, %v1453
        %v1463 = vmul.f32 %v1427, %v1453
        %v1464 = vmul.f32 %v1428, %v1453
        %v1465 = vmul.f32 %v1429, %v1453
        %v1466 = vmul.f32 %v1430, %v1453
        %v1467 = vmul.f32 %v1431, %v1453
        %v1468 = vmul.f32 %v1432, %v1453
        %v1469 = vmul.f32 %v1433, %v1453
        %v1470 = vmul.f32 %v1434, %v1453
        %v1471 = vmul.f32 %v1435, %v1453
        %v1472 = vmul.f32 %v1436, %v1453
        %v1473 = vmul.f32 %v1437, %v1453
        %v1474 = vmul.f32 %v1438, %v1453
        %v1475 = vmul.f32 %v1439, %v1453
        %v1476 = vmul.f32 %v1440, %v1453
        %v1477 = vmul.f32 %v1441, %v1453
        %v1478 = vmul.f32 %v1442, %v1453
        %v1479 = vmul.f32 %v1443, %v1453
        %v1480 = vmul.f32 %v1444, %v1453
        %v1481 = vmul.f32 %v1445, %v1453
        %v1482 = vmul.f32 %v1446, %v1453
        %v1483 = vmul.f32 %v1447, %v1453
        %v1484 = vmul.f32 %v1448, %v1453
        %v1485 = vmul.f32 %v1449, %v1453
        %v1486 = vadd.f32 %v1386, %v1454
        %v1487 = vadd.f32 %v1387, %v1455
        %v1488 = vadd.f32 %v1388, %v1456
        %v1489 = vadd.f32 %v1389, %v1457
        %v1490 = vadd.f32 %v1390, %v1458
        %v1491 = vadd.f32 %v1391, %v1459
        %v1492 = vadd.f32 %v1392, %v1460
        %v1493 = vadd.f32 %v1393, %v1461
        %v1494 = vadd.f32 %v1394, %v1462
        %v1495 = vadd.f32 %v1395, %v1463
        %v1496 = vadd.f32 %v1396, %v1464
        %v1497 = vadd.f32 %v1397, %v1465
        %v1498 = vadd.f32 %v1398, %v1466
        %v1499 = vadd.f32 %v1399, %v1467
        %v1500 = vadd.f32 %v1400, %v1468
        %v1501 = vadd.f32 %v1401, %v1469
        %v1502 = vadd.f32 %v1402, %v1470
        %v1503 = vadd.f32 %v1403, %v1471
        %v1504 = vadd.f32 %v1404, %v1472
        %v1505 = vadd.f32 %v1405, %v1473
        %v1506 = vadd.f32 %v1406, %v1474
        %v1507 = vadd.f32 %v1407, %v1475
        %v1508 = vadd.f32 %v1408, %v1476
        %v1509 = vadd.f32 %v1409, %v1477
        %v1510 = vadd.f32 %v1410, %v1478
        %v1511 = vadd.f32 %v1411, %v1479
        %v1512 = vadd.f32 %v1412, %v1480
        %v1513 = vadd.f32 %v1413, %v1481
        %v1514 = vadd.f32 %v1414, %v1482
        %v1515 = vadd.f32 %v1415, %v1483
        %v1516 = vadd.f32 %v1416, %v1484
        %v1517 = vadd.f32 %v1417, %v1485
        %v1518 = vld [vmem:[#allocation2 + $0x8] sm:$0xff]
        %v1519 = vld [vmem:[#allocation2 + $0x10] sm:$0xff]
        %v1520 = vld [vmem:[#allocation2 + $0x20] sm:$0xff]
        %v1521 = vld [vmem:[#allocation2 + $0x28] sm:$0xff]
        %v1522 = vld [vmem:[#allocation2 + $0x38] sm:$0xff]
        %v1523 = vld [vmem:[#allocation2 + $0x40] sm:$0xff]
        %v1524 = vld [vmem:[#allocation2 + $0x50] sm:$0xff]
        %v1525 = vld [vmem:[#allocation2 + $0x58] sm:$0xff]
        %v1526 = vld [vmem:[#allocation2 + $0x68] sm:$0xff]
        %v1527 = vld [vmem:[#allocation2 + $0x70] sm:$0xff]
        %v1528 = vld [vmem:[#allocation2 + $0x80] sm:$0xff]
        %v1529 = vld [vmem:[#allocation2 + $0x88] sm:$0xff]
        %v1530 = vld [vmem:[#allocation2 + $0x98] sm:$0xff]
        %v1531 = vld [vmem:[#allocation2 + $0xa0] sm:$0xff]
        %v1532 = vld [vmem:[#allocation2 + $0xb0] sm:$0xff]
        %v1533 = vld [vmem:[#allocation2 + $0xb8] sm:$0xff]
        %v1534 = vld [vmem:[#allocation2 + $0xf8] sm:$0xff]
        %v1535 = vld [vmem:[#allocation2 + $0x100] sm:$0xff]
        %v1536 = vld [vmem:[#allocation2 + $0x110] sm:$0xff]
        %v1537 = vld [vmem:[#allocation2 + $0x118] sm:$0xff]
        %v1538 = vld [vmem:[#allocation2 + $0x128] sm:$0xff]
        %v1539 = vld [vmem:[#allocation2 + $0x130] sm:$0xff]
        %v1540 = vld [vmem:[#allocation2 + $0x140] sm:$0xff]
        %v1541 = vld [vmem:[#allocation2 + $0x148] sm:$0xff]
        %v1542 = vld [vmem:[#allocation2 + $0x158] sm:$0xff]
        %v1543 = vld [vmem:[#allocation2 + $0x160] sm:$0xff]
        %v1544 = vld [vmem:[#allocation2 + $0x170] sm:$0xff]
        %v1545 = vld [vmem:[#allocation2 + $0x178] sm:$0xff]
        %v1546 = vld [vmem:[#allocation2 + $0x188] sm:$0xff]
        %v1547 = vld [vmem:[#allocation2 + $0x190] sm:$0xff]
        %v1548 = vld [vmem:[#allocation2 + $0x1a0] sm:$0xff]
        %v1549 = vld [vmem:[#allocation2 + $0x1a8] sm:$0xff]
        %v1550 = vlaneseq
        %v1551 = vshrl.u32 %v1550, 7
        %v1552 = vsub.s32 2, %v1551
        %v1553 = vrot.slane %v324, %v1552
        %v1554 = vmul.f32 %v1518, %v1553
        %v1555 = vmul.f32 %v1519, %v1553
        %v1556 = vmul.f32 %v1520, %v1553
        %v1557 = vmul.f32 %v1521, %v1553
        %v1558 = vmul.f32 %v1522, %v1553
        %v1559 = vmul.f32 %v1523, %v1553
        %v1560 = vmul.f32 %v1524, %v1553
        %v1561 = vmul.f32 %v1525, %v1553
        %v1562 = vmul.f32 %v1526, %v1553
        %v1563 = vmul.f32 %v1527, %v1553
        %v1564 = vmul.f32 %v1528, %v1553
        %v1565 = vmul.f32 %v1529, %v1553
        %v1566 = vmul.f32 %v1530, %v1553
        %v1567 = vmul.f32 %v1531, %v1553
        %v1568 = vmul.f32 %v1532, %v1553
        %v1569 = vmul.f32 %v1533, %v1553
        %v1570 = vmul.f32 %v1534, %v1553
        %v1571 = vmul.f32 %v1535, %v1553
        %v1572 = vmul.f32 %v1536, %v1553
        %v1573 = vmul.f32 %v1537, %v1553
        %v1574 = vmul.f32 %v1538, %v1553
        %v1575 = vmul.f32 %v1539, %v1553
        %v1576 = vmul.f32 %v1540, %v1553
        %v1577 = vmul.f32 %v1541, %v1553
        %v1578 = vmul.f32 %v1542, %v1553
        %v1579 = vmul.f32 %v1543, %v1553
        %v1580 = vmul.f32 %v1544, %v1553
        %v1581 = vmul.f32 %v1545, %v1553
        %v1582 = vmul.f32 %v1546, %v1553
        %v1583 = vmul.f32 %v1547, %v1553
        %v1584 = vmul.f32 %v1548, %v1553
        %v1585 = vmul.f32 %v1549, %v1553
        %v1586 = vadd.f32 %v1486, %v1554
        %v1587 = vadd.f32 %v1487, %v1555
        %v1588 = vadd.f32 %v1488, %v1556
        %v1589 = vadd.f32 %v1489, %v1557
        %v1590 = vadd.f32 %v1490, %v1558
        %v1591 = vadd.f32 %v1491, %v1559
        %v1592 = vadd.f32 %v1492, %v1560
        %v1593 = vadd.f32 %v1493, %v1561
        %v1594 = vadd.f32 %v1494, %v1562
        %v1595 = vadd.f32 %v1495, %v1563
        %v1596 = vadd.f32 %v1496, %v1564
        %v1597 = vadd.f32 %v1497, %v1565
        %v1598 = vadd.f32 %v1498, %v1566
        %v1599 = vadd.f32 %v1499, %v1567
        %v1600 = vadd.f32 %v1500, %v1568
        %v1601 = vadd.f32 %v1501, %v1569
        %v1602 = vadd.f32 %v1502, %v1570
        %v1603 = vadd.f32 %v1503, %v1571
        %v1604 = vadd.f32 %v1504, %v1572
        %v1605 = vadd.f32 %v1505, %v1573
        %v1606 = vadd.f32 %v1506, %v1574
        %v1607 = vadd.f32 %v1507, %v1575
        %v1608 = vadd.f32 %v1508, %v1576
        %v1609 = vadd.f32 %v1509, %v1577
        %v1610 = vadd.f32 %v1510, %v1578
        %v1611 = vadd.f32 %v1511, %v1579
        %v1612 = vadd.f32 %v1512, %v1580
        %v1613 = vadd.f32 %v1513, %v1581
        %v1614 = vadd.f32 %v1514, %v1582
        %v1615 = vadd.f32 %v1515, %v1583
        %v1616 = vadd.f32 %v1516, %v1584
        %v1617 = vadd.f32 %v1517, %v1585
        %v1618 = vld [vmem:[%s1117 + $0x8] sm:$0xff]
        %v1619 = vld [vmem:[%s1117 + $0x10] sm:$0xff]
        %v1620 = vld [vmem:[%s1117 + $0x20] sm:$0xff]
        %v1621 = vld [vmem:[%s1117 + $0x28] sm:$0xff]
        %v1622 = vld [vmem:[%s1117 + $0x38] sm:$0xff]
        %v1623 = vld [vmem:[%s1117 + $0x40] sm:$0xff]
        %v1624 = vld [vmem:[%s1117 + $0x50] sm:$0xff]
        %v1625 = vld [vmem:[%s1117 + $0x58] sm:$0xff]
        %v1626 = vld [vmem:[%s1117 + $0x68] sm:$0xff]
        %v1627 = vld [vmem:[%s1117 + $0x70] sm:$0xff]
        %v1628 = vld [vmem:[%s1117 + $0x80] sm:$0xff]
        %v1629 = vld [vmem:[%s1117 + $0x88] sm:$0xff]
        %v1630 = vld [vmem:[%s1117 + $0x98] sm:$0xff]
        %v1631 = vld [vmem:[%s1117 + $0xa0] sm:$0xff]
        %v1632 = vld [vmem:[%s1117 + $0xb0] sm:$0xff]
        %v1633 = vld [vmem:[%s1117 + $0xb8] sm:$0xff]
        %v1634 = vld [vmem:[%s1117 + $0xf8] sm:$0xff]
        %v1635 = vld [vmem:[%s1117 + $0x100] sm:$0xff]
        %v1636 = vld [vmem:[%s1117 + $0x110] sm:$0xff]
        %v1637 = vld [vmem:[%s1117 + $0x118] sm:$0xff]
        %v1638 = vld [vmem:[%s1117 + $0x128] sm:$0xff]
        %v1639 = vld [vmem:[%s1117 + $0x130] sm:$0xff]
        %v1640 = vld [vmem:[%s1117 + $0x140] sm:$0xff]
        %v1641 = vld [vmem:[%s1117 + $0x148] sm:$0xff]
        %v1642 = vld [vmem:[%s1117 + $0x158] sm:$0xff]
        %v1643 = vld [vmem:[%s1117 + $0x160] sm:$0xff]
        %v1644 = vld [vmem:[%s1117 + $0x170] sm:$0xff]
        %v1645 = vld [vmem:[%s1117 + $0x178] sm:$0xff]
        %v1646 = vld [vmem:[%s1117 + $0x188] sm:$0xff]
        %v1647 = vld [vmem:[%s1117 + $0x190] sm:$0xff]
        %v1648 = vld [vmem:[%s1117 + $0x1a0] sm:$0xff]
        %v1649 = vld [vmem:[%s1117 + $0x1a8] sm:$0xff]
        %v1650 = vlaneseq
        %v1651 = vshrl.u32 %v1650, 7
        %v1652 = vsub.s32 0, %v1651
        %v1653 = vrot.slane %v325, %v1652
        %v1654 = vmul.f32 %v1618, %v1653
        %v1655 = vmul.f32 %v1619, %v1653
        %v1656 = vmul.f32 %v1620, %v1653
        %v1657 = vmul.f32 %v1621, %v1653
        %v1658 = vmul.f32 %v1622, %v1653
        %v1659 = vmul.f32 %v1623, %v1653
        %v1660 = vmul.f32 %v1624, %v1653
        %v1661 = vmul.f32 %v1625, %v1653
        %v1662 = vmul.f32 %v1626, %v1653
        %v1663 = vmul.f32 %v1627, %v1653
        %v1664 = vmul.f32 %v1628, %v1653
        %v1665 = vmul.f32 %v1629, %v1653
        %v1666 = vmul.f32 %v1630, %v1653
        %v1667 = vmul.f32 %v1631, %v1653
        %v1668 = vmul.f32 %v1632, %v1653
        %v1669 = vmul.f32 %v1633, %v1653
        %v1670 = vmul.f32 %v1634, %v1653
        %v1671 = vmul.f32 %v1635, %v1653
        %v1672 = vmul.f32 %v1636, %v1653
        %v1673 = vmul.f32 %v1637, %v1653
        %v1674 = vmul.f32 %v1638, %v1653
        %v1675 = vmul.f32 %v1639, %v1653
        %v1676 = vmul.f32 %v1640, %v1653
        %v1677 = vmul.f32 %v1641, %v1653
        %v1678 = vmul.f32 %v1642, %v1653
        %v1679 = vmul.f32 %v1643, %v1653
        %v1680 = vmul.f32 %v1644, %v1653
        %v1681 = vmul.f32 %v1645, %v1653
        %v1682 = vmul.f32 %v1646, %v1653
        %v1683 = vmul.f32 %v1647, %v1653
        %v1684 = vmul.f32 %v1648, %v1653
        %v1685 = vmul.f32 %v1649, %v1653
        %v1686 = vadd.f32 %v1586, %v1654
        %v1687 = vadd.f32 %v1587, %v1655
        %v1688 = vadd.f32 %v1588, %v1656
        %v1689 = vadd.f32 %v1589, %v1657
        %v1690 = vadd.f32 %v1590, %v1658
        %v1691 = vadd.f32 %v1591, %v1659
        %v1692 = vadd.f32 %v1592, %v1660
        %v1693 = vadd.f32 %v1593, %v1661
        %v1694 = vadd.f32 %v1594, %v1662
        %v1695 = vadd.f32 %v1595, %v1663
        %v1696 = vadd.f32 %v1596, %v1664
        %v1697 = vadd.f32 %v1597, %v1665
        %v1698 = vadd.f32 %v1598, %v1666
        %v1699 = vadd.f32 %v1599, %v1667
        %v1700 = vadd.f32 %v1600, %v1668
        %v1701 = vadd.f32 %v1601, %v1669
        %v1702 = vadd.f32 %v1602, %v1670
        %v1703 = vadd.f32 %v1603, %v1671
        %v1704 = vadd.f32 %v1604, %v1672
        %v1705 = vadd.f32 %v1605, %v1673
        %v1706 = vadd.f32 %v1606, %v1674
        %v1707 = vadd.f32 %v1607, %v1675
        %v1708 = vadd.f32 %v1608, %v1676
        %v1709 = vadd.f32 %v1609, %v1677
        %v1710 = vadd.f32 %v1610, %v1678
        %v1711 = vadd.f32 %v1611, %v1679
        %v1712 = vadd.f32 %v1612, %v1680
        %v1713 = vadd.f32 %v1613, %v1681
        %v1714 = vadd.f32 %v1614, %v1682
        %v1715 = vadd.f32 %v1615, %v1683
        %v1716 = vadd.f32 %v1616, %v1684
        %v1717 = vadd.f32 %v1617, %v1685
        %v1718 = vlaneseq
        %v1719 = vshrl.u32 %v1718, 7
        %v1720 = vsub.s32 5, %v1719
        %v1721 = vrot.slane %v321, %v1720
        %v1722 = vmul.f32 %v1686, %v1721
        %v1723 = vmul.f32 %v1687, %v1721
        %v1724 = vmul.f32 %v1688, %v1721
        %v1725 = vmul.f32 %v1689, %v1721
        %v1726 = vmul.f32 %v1690, %v1721
        %v1727 = vmul.f32 %v1691, %v1721
        %v1728 = vmul.f32 %v1692, %v1721
        %v1729 = vmul.f32 %v1693, %v1721
        %v1730 = vmul.f32 %v1694, %v1721
        %v1731 = vmul.f32 %v1695, %v1721
        %v1732 = vmul.f32 %v1696, %v1721
        %v1733 = vmul.f32 %v1697, %v1721
        %v1734 = vmul.f32 %v1698, %v1721
        %v1735 = vmul.f32 %v1699, %v1721
        %v1736 = vmul.f32 %v1700, %v1721
        %v1737 = vmul.f32 %v1701, %v1721
        %v1738 = vmul.f32 %v1702, %v1721
        %v1739 = vmul.f32 %v1703, %v1721
        %v1740 = vmul.f32 %v1704, %v1721
        %v1741 = vmul.f32 %v1705, %v1721
        %v1742 = vmul.f32 %v1706, %v1721
        %v1743 = vmul.f32 %v1707, %v1721
        %v1744 = vmul.f32 %v1708, %v1721
        %v1745 = vmul.f32 %v1709, %v1721
        %v1746 = vmul.f32 %v1710, %v1721
        %v1747 = vmul.f32 %v1711, %v1721
        %v1748 = vmul.f32 %v1712, %v1721
        %v1749 = vmul.f32 %v1713, %v1721
        %v1750 = vmul.f32 %v1714, %v1721
        %v1751 = vmul.f32 %v1715, %v1721
        %v1752 = vmul.f32 %v1716, %v1721
        %v1753 = vmul.f32 %v1717, %v1721
        %v1754 = vlaneseq
        %v1755 = vshrl.u32 %v1754, 7
        %v1756 = vsub.s32 6, %v1755
        %v1757 = vrot.slane %v321, %v1756
        %v1758 = vadd.f32 %v1722, %v1757
        %v1759 = vadd.f32 %v1723, %v1757
        %v1760 = vadd.f32 %v1724, %v1757
        %v1761 = vadd.f32 %v1725, %v1757
        %v1762 = vadd.f32 %v1726, %v1757
        %v1763 = vadd.f32 %v1727, %v1757
        %v1764 = vadd.f32 %v1728, %v1757
        %v1765 = vadd.f32 %v1729, %v1757
        %v1766 = vadd.f32 %v1730, %v1757
        %v1767 = vadd.f32 %v1731, %v1757
        %v1768 = vadd.f32 %v1732, %v1757
        %v1769 = vadd.f32 %v1733, %v1757
        %v1770 = vadd.f32 %v1734, %v1757
        %v1771 = vadd.f32 %v1735, %v1757
        %v1772 = vadd.f32 %v1736, %v1757
        %v1773 = vadd.f32 %v1737, %v1757
        %v1774 = vadd.f32 %v1738, %v1757
        %v1775 = vadd.f32 %v1739, %v1757
        %v1776 = vadd.f32 %v1740, %v1757
        %v1777 = vadd.f32 %v1741, %v1757
        %v1778 = vadd.f32 %v1742, %v1757
        %v1779 = vadd.f32 %v1743, %v1757
        %v1780 = vadd.f32 %v1744, %v1757
        %v1781 = vadd.f32 %v1745, %v1757
        %v1782 = vadd.f32 %v1746, %v1757
        %v1783 = vadd.f32 %v1747, %v1757
        %v1784 = vadd.f32 %v1748, %v1757
        %v1785 = vadd.f32 %v1749, %v1757
        %v1786 = vadd.f32 %v1750, %v1757
        %v1787 = vadd.f32 %v1751, %v1757
        %v1788 = vadd.f32 %v1752, %v1757
        %v1789 = vadd.f32 %v1753, %v1757
        %vm1790 = vcmp.ge.f32.partialorder %v1758, 0.0
        %vm1791 = vcmp.ge.f32.partialorder %v1759, 0.0
        %vm1792 = vcmp.ge.f32.partialorder %v1760, 0.0
        %vm1793 = vcmp.ge.f32.partialorder %v1761, 0.0
        %vm1794 = vcmp.ge.f32.partialorder %v1762, 0.0
        %vm1795 = vcmp.ge.f32.partialorder %v1763, 0.0
        %vm1796 = vcmp.ge.f32.partialorder %v1764, 0.0
        %vm1797 = vcmp.ge.f32.partialorder %v1765, 0.0
        %vm1798 = vcmp.ge.f32.partialorder %v1766, 0.0
        %vm1799 = vcmp.ge.f32.partialorder %v1767, 0.0
        %vm1800 = vcmp.ge.f32.partialorder %v1768, 0.0
        %vm1801 = vcmp.ge.f32.partialorder %v1769, 0.0
        %vm1802 = vcmp.ge.f32.partialorder %v1770, 0.0
        %vm1803 = vcmp.ge.f32.partialorder %v1771, 0.0
        %vm1804 = vcmp.ge.f32.partialorder %v1772, 0.0
        %vm1805 = vcmp.ge.f32.partialorder %v1773, 0.0
        %vm1806 = vcmp.ge.f32.partialorder %v1774, 0.0
        %vm1807 = vcmp.ge.f32.partialorder %v1775, 0.0
        %vm1808 = vcmp.ge.f32.partialorder %v1776, 0.0
        %vm1809 = vcmp.ge.f32.partialorder %v1777, 0.0
        %vm1810 = vcmp.ge.f32.partialorder %v1778, 0.0
        %vm1811 = vcmp.ge.f32.partialorder %v1779, 0.0
        %vm1812 = vcmp.ge.f32.partialorder %v1780, 0.0
        %vm1813 = vcmp.ge.f32.partialorder %v1781, 0.0
        %vm1814 = vcmp.ge.f32.partialorder %v1782, 0.0
        %vm1815 = vcmp.ge.f32.partialorder %v1783, 0.0
        %vm1816 = vcmp.ge.f32.partialorder %v1784, 0.0
        %vm1817 = vcmp.ge.f32.partialorder %v1785, 0.0
        %vm1818 = vcmp.ge.f32.partialorder %v1786, 0.0
        %vm1819 = vcmp.ge.f32.partialorder %v1787, 0.0
        %vm1820 = vcmp.ge.f32.partialorder %v1788, 0.0
        %vm1821 = vcmp.ge.f32.partialorder %v1789, 0.0
        %v1822 = vlaneseq
        %v1823 = vshrl.u32 %v1822, 7
        %v1824 = vsub.s32 7, %v1823
        %v1825 = vrot.slane %v321, %v1824
        %v1826 = vmul.f32 %v1825, %v1758
        %v1827 = vmul.f32 %v1825, %v1759
        %v1828 = vmul.f32 %v1825, %v1760
        %v1829 = vmul.f32 %v1825, %v1761
        %v1830 = vmul.f32 %v1825, %v1762
        %v1831 = vmul.f32 %v1825, %v1763
        %v1832 = vmul.f32 %v1825, %v1764
        %v1833 = vmul.f32 %v1825, %v1765
        %v1834 = vmul.f32 %v1825, %v1766
        %v1835 = vmul.f32 %v1825, %v1767
        %v1836 = vmul.f32 %v1825, %v1768
        %v1837 = vmul.f32 %v1825, %v1769
        %v1838 = vmul.f32 %v1825, %v1770
        %v1839 = vmul.f32 %v1825, %v1771
        %v1840 = vmul.f32 %v1825, %v1772
        %v1841 = vmul.f32 %v1825, %v1773
        %v1842 = vmul.f32 %v1825, %v1774
        %v1843 = vmul.f32 %v1825, %v1775
        %v1844 = vmul.f32 %v1825, %v1776
        %v1845 = vmul.f32 %v1825, %v1777
        %v1846 = vmul.f32 %v1825, %v1778
        %v1847 = vmul.f32 %v1825, %v1779
        %v1848 = vmul.f32 %v1825, %v1780
        %v1849 = vmul.f32 %v1825, %v1781
        %v1850 = vmul.f32 %v1825, %v1782
        %v1851 = vmul.f32 %v1825, %v1783
        %v1852 = vmul.f32 %v1825, %v1784
        %v1853 = vmul.f32 %v1825, %v1785
        %v1854 = vmul.f32 %v1825, %v1786
        %v1855 = vmul.f32 %v1825, %v1787
        %v1856 = vmul.f32 %v1825, %v1788
        %v1857 = vmul.f32 %v1825, %v1789
        %v1858 = vsel %vm1790, %v1758, %v1826
        %v1859 = vsel %vm1791, %v1759, %v1827
        %v1860 = vsel %vm1792, %v1760, %v1828
        %v1861 = vsel %vm1793, %v1761, %v1829
        %v1862 = vsel %vm1794, %v1762, %v1830
        %v1863 = vsel %vm1795, %v1763, %v1831
        %v1864 = vsel %vm1796, %v1764, %v1832
        %v1865 = vsel %vm1797, %v1765, %v1833
        %v1866 = vsel %vm1798, %v1766, %v1834
        %v1867 = vsel %vm1799, %v1767, %v1835
        %v1868 = vsel %vm1800, %v1768, %v1836
        %v1869 = vsel %vm1801, %v1769, %v1837
        %v1870 = vsel %vm1802, %v1770, %v1838
        %v1871 = vsel %vm1803, %v1771, %v1839
        %v1872 = vsel %vm1804, %v1772, %v1840
        %v1873 = vsel %vm1805, %v1773, %v1841
        %v1874 = vsel %vm1806, %v1774, %v1842
        %v1875 = vsel %vm1807, %v1775, %v1843
        %v1876 = vsel %vm1808, %v1776, %v1844
        %v1877 = vsel %vm1809, %v1777, %v1845
        %v1878 = vsel %vm1810, %v1778, %v1846
        %v1879 = vsel %vm1811, %v1779, %v1847
        %v1880 = vsel %vm1812, %v1780, %v1848
        %v1881 = vsel %vm1813, %v1781, %v1849
        %v1882 = vsel %vm1814, %v1782, %v1850
        %v1883 = vsel %vm1815, %v1783, %v1851
        %v1884 = vsel %vm1816, %v1784, %v1852
        %v1885 = vsel %vm1817, %v1785, %v1853
        %v1886 = vsel %vm1818, %v1786, %v1854
        %v1887 = vsel %vm1819, %v1787, %v1855
        %v1888 = vsel %vm1820, %v1788, %v1856
        %v1889 = vsel %vm1821, %v1789, %v1857
        %v1890 = vpack.c.bf16 %v1859, %v1858
        %v1891 = vpack.c.bf16 %v1861, %v1860
        %v1892 = vpack.c.bf16 %v1863, %v1862
        %v1893 = vpack.c.bf16 %v1865, %v1864
        %v1894 = vpack.c.bf16 %v1867, %v1866
        %v1895 = vpack.c.bf16 %v1869, %v1868
        %v1896 = vpack.c.bf16 %v1871, %v1870
        %v1897 = vpack.c.bf16 %v1873, %v1872
        %v1898 = vpack.c.bf16 %v1875, %v1874
        %v1899 = vpack.c.bf16 %v1877, %v1876
        %v1900 = vpack.c.bf16 %v1879, %v1878
        %v1901 = vpack.c.bf16 %v1881, %v1880
        %v1902 = vpack.c.bf16 %v1883, %v1882
        %v1903 = vpack.c.bf16 %v1885, %v1884
        %v1904 = vpack.c.bf16 %v1887, %v1886
        %v1905 = vpack.c.bf16 %v1889, %v1888
        %s1906 = smul.addr %s319, 4
        %s1907 = scalar_lea.vmem %s2, %s1906
        %v1908 = vld [vmem:[%s1907] sm:$0xf]
        %v1909 = vld [vmem:[%s1907 + $0x4] sm:$0xf]
        %v1910 = vld [vmem:[%s1907 + $0x8] sm:$0xf]
        %v1911 = vld [vmem:[%s1907 + $0xc] sm:$0xf]
        %v1912 = vld [vmem:[%s1907 + $0x10] sm:$0xf]
        %v1913 = vld [vmem:[%s1907 + $0x14] sm:$0xf]
        %v1914 = vld [vmem:[%s1907 + $0x18] sm:$0xf]
        %v1915 = vld [vmem:[%s1907 + $0x1c] sm:$0xf]
        %v1916 = vld [vmem:[%s1907 + $0x20] sm:$0xf]
        %v1917 = vld [vmem:[%s1907 + $0x24] sm:$0xf]
        %v1918 = vld [vmem:[%s1907 + $0x28] sm:$0xf]
        %v1919 = vld [vmem:[%s1907 + $0x2c] sm:$0xf]
        %v1920 = vld [vmem:[%s1907 + $0x30] sm:$0xf]
        %v1921 = vld [vmem:[%s1907 + $0x34] sm:$0xf]
        %v1922 = vld [vmem:[%s1907 + $0x38] sm:$0xf]
        %v1923 = vld [vmem:[%s1907 + $0x3c] sm:$0xf]
        %v1924 = vlaneseq
        %v1925 = vshrl.u32 %v1924, 7
        %v1926 = vsub.s32 0, %v1925
        %v1927 = vrot.slane %v322, %v1926
        %v1944 = vunpack.c.l.b16 %v1908
        %v1945 = vunpack.c.l.b16 %v1909
        %v1946 = vunpack.c.l.b16 %v1910
        %v1947 = vunpack.c.l.b16 %v1911
        %v1948 = vunpack.c.l.b16 %v1912
        %v1949 = vunpack.c.l.b16 %v1913
        %v1950 = vunpack.c.l.b16 %v1914
        %v1951 = vunpack.c.l.b16 %v1915
        %v1952 = vunpack.c.l.b16 %v1916
        %v1953 = vunpack.c.l.b16 %v1917
        %v1954 = vunpack.c.l.b16 %v1918
        %v1955 = vunpack.c.l.b16 %v1919
        %v1956 = vunpack.c.l.b16 %v1920
        %v1957 = vunpack.c.l.b16 %v1921
        %v1958 = vunpack.c.l.b16 %v1922
        %v1959 = vunpack.c.l.b16 %v1923
        %v1960 = vpack.c.b16 %v1945, %v1944
        %v1961 = vpack.c.b16 %v1947, %v1946
        %v1962 = vpack.c.b16 %v1949, %v1948
        %v1963 = vpack.c.b16 %v1951, %v1950
        %v1964 = vpack.c.b16 %v1953, %v1952
        %v1965 = vpack.c.b16 %v1955, %v1954
        %v1966 = vpack.c.b16 %v1957, %v1956
        %v1967 = vpack.c.b16 %v1959, %v1958
        %1976 = vmatprep.subr.bf16.mxu0 0
        %1977 = vmatpush1.bf16.msra.mxu0 %v1960
        %1978 = vmatprep.subr.bf16.mxu0 0
        %1979 = vmatpush1.bf16.msra.mxu0 %v1961
        %1980 = vmatprep.subr.bf16.mxu0 0
        %1981 = vmatpush1.bf16.msra.mxu0 %v1962
        %1982 = vmatprep.subr.bf16.mxu0 0
        %1983 = vmatpush1.bf16.msra.mxu0 %v1963
        %1984 = vmatprep.subr.bf16.mxu0 0
        %1985 = vmatpush1.bf16.msra.mxu0 %v1964
        %1986 = vmatprep.subr.bf16.mxu0 0
        %1987 = vmatpush1.bf16.msra.mxu0 %v1965
        %1988 = vmatprep.subr.bf16.mxu0 0
        %1989 = vmatpush1.bf16.msra.mxu0 %v1966
        %1990 = vmatprep.subr.bf16.mxu0 0
        %1991 = vmatpush1.bf16.msra.mxu0 %v1967
        %1992 = vmatprep.subr.bf16.mxu0 0
        %1993 = vmatpush1.bf16.msra.mxu0 0
        %1994 = vmatprep.subr.bf16.mxu0 0
        %1995 = vmatpush1.bf16.msra.mxu0 0
        %1996 = vmatprep.subr.bf16.mxu0 0
        %1997 = vmatpush1.bf16.msra.mxu0 0
        %1998 = vmatprep.subr.bf16.mxu0 0
        %1999 = vmatpush1.bf16.msra.mxu0 0
        %2000 = vmatprep.subr.bf16.mxu0 0
        %2001 = vmatpush1.bf16.msra.mxu0 0
        %2002 = vmatprep.subr.bf16.mxu0 0
        %2003 = vmatpush1.bf16.msra.mxu0 0
        %2004 = vmatprep.subr.bf16.mxu0 0
        %2005 = vmatpush1.bf16.msra.mxu0 0
        %2006 = vmatprep.subr.bf16.mxu0 0
        %2007 = vmatpush1.bf16.msra.mxu0 0
        %2008 = vmatprep.mubr.bf16.mxu0 0
        %2009 = vmatmul.mubr.bf16.gmra.mrb[0].mxu0 %v1890
        %v2010 = vpop.f32.mrb[0].mxu0
        %v2011 = vadd.f32 %v1927, %v2010
        %v2012 = vpop.f32.mrb[0].mxu0
        %v2013 = vpop.f32.mrb[0].mxu0
        %v2014 = vadd.f32 %v1927, %v2013
        %v2015 = vpop.f32.mrb[0].mxu0
        %2016 = vmatprep.mubr.bf16.mxu0 0
        %2017 = vmatmul.mubr.bf16.gmra.mrb[0].mxu0 %v1891
        %v2018 = vpop.f32.mrb[0].mxu0
        %v2019 = vadd.f32 %v1927, %v2018
        %v2020 = vpop.f32.mrb[0].mxu0
        %v2021 = vpop.f32.mrb[0].mxu0
        %v2022 = vadd.f32 %v1927, %v2021
        %v2023 = vpop.f32.mrb[0].mxu0
        %2024 = vmatprep.mubr.bf16.mxu0 0
        %2025 = vmatmul.mubr.bf16.gmra.mrb[0].mxu0 %v1892
        %v2026 = vpop.f32.mrb[0].mxu0
        %v2027 = vadd.f32 %v1927, %v2026
        %v2028 = vpop.f32.mrb[0].mxu0
        %v2029 = vpop.f32.mrb[0].mxu0
        %v2030 = vadd.f32 %v1927, %v2029
        %v2031 = vpop.f32.mrb[0].mxu0
        %2032 = vmatprep.mubr.bf16.mxu0 0
        %2033 = vmatmul.mubr.bf16.gmra.mrb[0].mxu0 %v1893
        %v2034 = vpop.f32.mrb[0].mxu0
        %v2035 = vadd.f32 %v1927, %v2034
        %v2036 = vpop.f32.mrb[0].mxu0
        %v2037 = vpop.f32.mrb[0].mxu0
        %v2038 = vadd.f32 %v1927, %v2037
        %v2039 = vpop.f32.mrb[0].mxu0
        %2040 = vmatprep.mubr.bf16.mxu0 0
        %2041 = vmatmul.mubr.bf16.gmra.mrb[0].mxu0 %v1894
        %v2042 = vpop.f32.mrb[0].mxu0
        %v2043 = vadd.f32 %v1927, %v2042
        %v2044 = vpop.f32.mrb[0].mxu0
        %v2045 = vpop.f32.mrb[0].mxu0
        %v2046 = vadd.f32 %v1927, %v2045
        %v2047 = vpop.f32.mrb[0].mxu0
        %2048 = vmatprep.mubr.bf16.mxu0 0
        %2049 = vmatmul.mubr.bf16.gmra.mrb[0].mxu0 %v1895
        %v2050 = vpop.f32.mrb[0].mxu0
        %v2051 = vadd.f32 %v1927, %v2050
        %v2052 = vpop.f32.mrb[0].mxu0
        %v2053 = vpop.f32.mrb[0].mxu0
        %v2054 = vadd.f32 %v1927, %v2053
        %v2055 = vpop.f32.mrb[0].mxu0
        %2056 = vmatprep.mubr.bf16.mxu0 0
        %2057 = vmatmul.mubr.bf16.gmra.mrb[0].mxu0 %v1896
        %v2058 = vpop.f32.mrb[0].mxu0
        %v2059 = vadd.f32 %v1927, %v2058
        %v2060 = vpop.f32.mrb[0].mxu0
        %v2061 = vpop.f32.mrb[0].mxu0
        %v2062 = vadd.f32 %v1927, %v2061
        %v2063 = vpop.f32.mrb[0].mxu0
        %2064 = vmatprep.mubr.bf16.mxu0 0
        %2065 = vmatmul.mubr.bf16.gmra.mrb[0].mxu0 %v1897
        %v2066 = vpop.f32.mrb[0].mxu0
        %v2067 = vadd.f32 %v1927, %v2066
        %v2068 = vpop.f32.mrb[0].mxu0
        %v2069 = vpop.f32.mrb[0].mxu0
        %v2070 = vadd.f32 %v1927, %v2069
        %v2071 = vpop.f32.mrb[0].mxu0
        %2072 = vmatprep.mubr.bf16.mxu0 0
        %2073 = vmatmul.mubr.bf16.gmra.mrb[0].mxu0 %v1898
        %v2074 = vpop.f32.mrb[0].mxu0
        %v2075 = vadd.f32 %v1927, %v2074
        %v2076 = vpop.f32.mrb[0].mxu0
        %v2077 = vpop.f32.mrb[0].mxu0
        %v2078 = vadd.f32 %v1927, %v2077
        %v2079 = vpop.f32.mrb[0].mxu0
        %2080 = vmatprep.mubr.bf16.mxu0 0
        %2081 = vmatmul.mubr.bf16.gmra.mrb[0].mxu0 %v1899
        %v2082 = vpop.f32.mrb[0].mxu0
        %v2083 = vadd.f32 %v1927, %v2082
        %v2084 = vpop.f32.mrb[0].mxu0
        %v2085 = vpop.f32.mrb[0].mxu0
        %v2086 = vadd.f32 %v1927, %v2085
        %v2087 = vpop.f32.mrb[0].mxu0
        %2088 = vmatprep.mubr.bf16.mxu0 0
        %2089 = vmatmul.mubr.bf16.gmra.mrb[0].mxu0 %v1900
        %v2090 = vpop.f32.mrb[0].mxu0
        %v2091 = vadd.f32 %v1927, %v2090
        %v2092 = vpop.f32.mrb[0].mxu0
        %v2093 = vpop.f32.mrb[0].mxu0
        %v2094 = vadd.f32 %v1927, %v2093
        %v2095 = vpop.f32.mrb[0].mxu0
        %2096 = vmatprep.mubr.bf16.mxu0 0
        %2097 = vmatmul.mubr.bf16.gmra.mrb[0].mxu0 %v1901
        %v2098 = vpop.f32.mrb[0].mxu0
        %v2099 = vadd.f32 %v1927, %v2098
        %v2100 = vpop.f32.mrb[0].mxu0
        %v2101 = vpop.f32.mrb[0].mxu0
        %v2102 = vadd.f32 %v1927, %v2101
        %v2103 = vpop.f32.mrb[0].mxu0
        %2104 = vmatprep.mubr.bf16.mxu0 0
        %2105 = vmatmul.mubr.bf16.gmra.mrb[0].mxu0 %v1902
        %v2106 = vpop.f32.mrb[0].mxu0
        %v2107 = vadd.f32 %v1927, %v2106
        %v2108 = vpop.f32.mrb[0].mxu0
        %v2109 = vpop.f32.mrb[0].mxu0
        %v2110 = vadd.f32 %v1927, %v2109
        %v2111 = vpop.f32.mrb[0].mxu0
        %2112 = vmatprep.mubr.bf16.mxu0 0
        %2113 = vmatmul.mubr.bf16.gmra.mrb[0].mxu0 %v1903
        %v2114 = vpop.f32.mrb[0].mxu0
        %v2115 = vadd.f32 %v1927, %v2114
        %v2116 = vpop.f32.mrb[0].mxu0
        %v2117 = vpop.f32.mrb[0].mxu0
        %v2118 = vadd.f32 %v1927, %v2117
        %v2119 = vpop.f32.mrb[0].mxu0
        %2120 = vmatprep.mubr.bf16.mxu0 0
        %2121 = vmatmul.mubr.bf16.gmra.mrb[0].mxu0 %v1904
        %v2122 = vpop.f32.mrb[0].mxu0
        %v2123 = vadd.f32 %v1927, %v2122
        %v2124 = vpop.f32.mrb[0].mxu0
        %v2125 = vpop.f32.mrb[0].mxu0
        %v2126 = vadd.f32 %v1927, %v2125
        %v2127 = vpop.f32.mrb[0].mxu0
        %2128 = vmatprep.mubr.bf16.mxu0 0
        %2129 = vmatmul.mubr.bf16.gmra.mrb[0].mxu0 %v1905
        %v2130 = vpop.f32.mrb[0].mxu0
        %v2131 = vadd.f32 %v1927, %v2130
        %v2132 = vpop.f32.mrb[0].mxu0
        %v2133 = vpop.f32.mrb[0].mxu0
        %v2134 = vadd.f32 %v1927, %v2133
        %v2135 = vpop.f32.mrb[0].mxu0
        %2136 = vdwg.mxu0
        %v2137 = vld [vmem:[%s5] sm:$0xff]
        %v2138 = vld [vmem:[%s5 + $0x8] sm:$0xff]
        %v2139 = vld [vmem:[%s5 + $0x10] sm:$0xff]
        %v2140 = vld [vmem:[%s5 + $0x18] sm:$0xff]
        %v2141 = vld [vmem:[%s5 + $0x20] sm:$0xff]
        %v2142 = vld [vmem:[%s5 + $0x28] sm:$0xff]
        %v2143 = vld [vmem:[%s5 + $0x30] sm:$0xff]
        %v2144 = vld [vmem:[%s5 + $0x38] sm:$0xff]
        %v2145 = vld [vmem:[%s5 + $0x40] sm:$0xff]
        %v2146 = vld [vmem:[%s5 + $0x48] sm:$0xff]
        %v2147 = vld [vmem:[%s5 + $0x50] sm:$0xff]
        %v2148 = vld [vmem:[%s5 + $0x58] sm:$0xff]
        %v2149 = vld [vmem:[%s5 + $0x60] sm:$0xff]
        %v2150 = vld [vmem:[%s5 + $0x68] sm:$0xff]
        %v2151 = vld [vmem:[%s5 + $0x70] sm:$0xff]
        %v2152 = vld [vmem:[%s5 + $0x78] sm:$0xff]
        %v2153 = vld [vmem:[%s5 + $0x80] sm:$0xff]
        %v2154 = vld [vmem:[%s5 + $0x88] sm:$0xff]
        %v2155 = vld [vmem:[%s5 + $0x90] sm:$0xff]
        %v2156 = vld [vmem:[%s5 + $0x98] sm:$0xff]
        %v2157 = vld [vmem:[%s5 + $0xa0] sm:$0xff]
        %v2158 = vld [vmem:[%s5 + $0xa8] sm:$0xff]
        %v2159 = vld [vmem:[%s5 + $0xb0] sm:$0xff]
        %v2160 = vld [vmem:[%s5 + $0xb8] sm:$0xff]
        %v2161 = vld [vmem:[%s5 + $0xc0] sm:$0xff]
        %v2162 = vld [vmem:[%s5 + $0xc8] sm:$0xff]
        %v2163 = vld [vmem:[%s5 + $0xd0] sm:$0xff]
        %v2164 = vld [vmem:[%s5 + $0xd8] sm:$0xff]
        %v2165 = vld [vmem:[%s5 + $0xe0] sm:$0xff]
        %v2166 = vld [vmem:[%s5 + $0xe8] sm:$0xff]
        %v2167 = vld [vmem:[%s5 + $0xf0] sm:$0xff]
        %v2168 = vld [vmem:[%s5 + $0xf8] sm:$0xff]
        %v2169 = vadd.f32 %v2011, %v2137
        %v2170 = vadd.f32 %v2014, %v2138
        %v2171 = vadd.f32 %v2019, %v2139
        %v2172 = vadd.f32 %v2022, %v2140
        %v2173 = vadd.f32 %v2027, %v2141
        %v2174 = vadd.f32 %v2030, %v2142
        %v2175 = vadd.f32 %v2035, %v2143
        %v2176 = vadd.f32 %v2038, %v2144
        %v2177 = vadd.f32 %v2043, %v2145
        %v2178 = vadd.f32 %v2046, %v2146
        %v2179 = vadd.f32 %v2051, %v2147
        %v2180 = vadd.f32 %v2054, %v2148
        %v2181 = vadd.f32 %v2059, %v2149
        %v2182 = vadd.f32 %v2062, %v2150
        %v2183 = vadd.f32 %v2067, %v2151
        %v2184 = vadd.f32 %v2070, %v2152
        %v2185 = vadd.f32 %v2075, %v2153
        %v2186 = vadd.f32 %v2078, %v2154
        %v2187 = vadd.f32 %v2083, %v2155
        %v2188 = vadd.f32 %v2086, %v2156
        %v2189 = vadd.f32 %v2091, %v2157
        %v2190 = vadd.f32 %v2094, %v2158
        %v2191 = vadd.f32 %v2099, %v2159
        %v2192 = vadd.f32 %v2102, %v2160
        %v2193 = vadd.f32 %v2107, %v2161
        %v2194 = vadd.f32 %v2110, %v2162
        %v2195 = vadd.f32 %v2115, %v2163
        %v2196 = vadd.f32 %v2118, %v2164
        %v2197 = vadd.f32 %v2123, %v2165
        %v2198 = vadd.f32 %v2126, %v2166
        %v2199 = vadd.f32 %v2131, %v2167
        %v2200 = vadd.f32 %v2134, %v2168
        %2201 = vst [vmem:[%s5] sm:$0xff] %v2169
        %2202 = vst [vmem:[%s5 + $0x8] sm:$0xff] %v2170
        %2203 = vst [vmem:[%s5 + $0x10] sm:$0xff] %v2171
        %2204 = vst [vmem:[%s5 + $0x18] sm:$0xff] %v2172
        %2205 = vst [vmem:[%s5 + $0x20] sm:$0xff] %v2173
        %2206 = vst [vmem:[%s5 + $0x28] sm:$0xff] %v2174
        %2207 = vst [vmem:[%s5 + $0x30] sm:$0xff] %v2175
        %2208 = vst [vmem:[%s5 + $0x38] sm:$0xff] %v2176
        %2209 = vst [vmem:[%s5 + $0x40] sm:$0xff] %v2177
        %2210 = vst [vmem:[%s5 + $0x48] sm:$0xff] %v2178
        %2211 = vst [vmem:[%s5 + $0x50] sm:$0xff] %v2179
        %2212 = vst [vmem:[%s5 + $0x58] sm:$0xff] %v2180
        %2213 = vst [vmem:[%s5 + $0x60] sm:$0xff] %v2181
        %2214 = vst [vmem:[%s5 + $0x68] sm:$0xff] %v2182
        %2215 = vst [vmem:[%s5 + $0x70] sm:$0xff] %v2183
        %2216 = vst [vmem:[%s5 + $0x78] sm:$0xff] %v2184
        %2217 = vst [vmem:[%s5 + $0x80] sm:$0xff] %v2185
        %2218 = vst [vmem:[%s5 + $0x88] sm:$0xff] %v2186
        %2219 = vst [vmem:[%s5 + $0x90] sm:$0xff] %v2187
        %2220 = vst [vmem:[%s5 + $0x98] sm:$0xff] %v2188
        %2221 = vst [vmem:[%s5 + $0xa0] sm:$0xff] %v2189
        %2222 = vst [vmem:[%s5 + $0xa8] sm:$0xff] %v2190
        %2223 = vst [vmem:[%s5 + $0xb0] sm:$0xff] %v2191
        %2224 = vst [vmem:[%s5 + $0xb8] sm:$0xff] %v2192
        %2225 = vst [vmem:[%s5 + $0xc0] sm:$0xff] %v2193
        %2226 = vst [vmem:[%s5 + $0xc8] sm:$0xff] %v2194
        %2227 = vst [vmem:[%s5 + $0xd0] sm:$0xff] %v2195
        %2228 = vst [vmem:[%s5 + $0xd8] sm:$0xff] %v2196
        %2229 = vst [vmem:[%s5 + $0xe0] sm:$0xff] %v2197
        %2230 = vst [vmem:[%s5 + $0xe8] sm:$0xff] %v2198
        %2231 = vst [vmem:[%s5 + $0xf0] sm:$0xff] %v2199
        %2232 = vst [vmem:[%s5 + $0xf8] sm:$0xff] %v2200
      $region48: #{tfcm_pallas.1} parent=39 // pred_fallthru
        _
      %p2233 = scmp.eq.s32.totalorder %s16, 1
      // Predicated region
      $region49: #{tfcm_pallas.1} parent=39 // pred_check
        %p2234 = pneg %p2233
      $region50: #{tfcm_pallas.1} parent=39 // pred_check_branch
        %2236 = sbr.rel (%p2234) target = $region52
      $region51: #{tfcm_pallas.1} parent=39 // pred_region
        %v2237 = vld [vmem:[%s777 + $0x8] sm:$0xff]
        %v2238 = vld [vmem:[%s777 + $0x10] sm:$0xff]
        %v2239 = vld [vmem:[%s777 + $0x20] sm:$0xff]
        %v2240 = vld [vmem:[%s777 + $0x28] sm:$0xff]
        %v2241 = vld [vmem:[%s777 + $0x38] sm:$0xff]
        %v2242 = vld [vmem:[%s777 + $0x40] sm:$0xff]
        %v2243 = vld [vmem:[%s777 + $0x50] sm:$0xff]
        %v2244 = vld [vmem:[%s777 + $0x58] sm:$0xff]
        %v2245 = vld [vmem:[%s777 + $0x68] sm:$0xff]
        %v2246 = vld [vmem:[%s777 + $0x70] sm:$0xff]
        %v2247 = vld [vmem:[%s777 + $0x80] sm:$0xff]
        %v2248 = vld [vmem:[%s777 + $0x88] sm:$0xff]
        %v2249 = vld [vmem:[%s777 + $0x98] sm:$0xff]
        %v2250 = vld [vmem:[%s777 + $0xa0] sm:$0xff]
        %v2251 = vld [vmem:[%s777 + $0xb0] sm:$0xff]
        %v2252 = vld [vmem:[%s777 + $0xb8] sm:$0xff]
        %v2253 = vld [vmem:[%s777 + $0xf8] sm:$0xff]
        %v2254 = vld [vmem:[%s777 + $0x100] sm:$0xff]
        %v2255 = vld [vmem:[%s777 + $0x110] sm:$0xff]
        %v2256 = vld [vmem:[%s777 + $0x118] sm:$0xff]
        %v2257 = vld [vmem:[%s777 + $0x128] sm:$0xff]
        %v2258 = vld [vmem:[%s777 + $0x130] sm:$0xff]
        %v2259 = vld [vmem:[%s777 + $0x140] sm:$0xff]
        %v2260 = vld [vmem:[%s777 + $0x148] sm:$0xff]
        %v2261 = vld [vmem:[%s777 + $0x158] sm:$0xff]
        %v2262 = vld [vmem:[%s777 + $0x160] sm:$0xff]
        %v2263 = vld [vmem:[%s777 + $0x170] sm:$0xff]
        %v2264 = vld [vmem:[%s777 + $0x178] sm:$0xff]
        %v2265 = vld [vmem:[%s777 + $0x188] sm:$0xff]
        %v2266 = vld [vmem:[%s777 + $0x190] sm:$0xff]
        %v2267 = vld [vmem:[%s777 + $0x1a0] sm:$0xff]
        %v2268 = vld [vmem:[%s777 + $0x1a8] sm:$0xff]
        %v2269 = vlaneseq
        %v2270 = vshrl.u32 %v2269, 7
        %v2271 = vsub.s32 5, %v2270
        %v2272 = vrot.slane %v324, %v2271
        %v2273 = vmul.f32 %v2237, %v2272
        %v2274 = vmul.f32 %v2238, %v2272
        %v2275 = vmul.f32 %v2239, %v2272
        %v2276 = vmul.f32 %v2240, %v2272
        %v2277 = vmul.f32 %v2241, %v2272
        %v2278 = vmul.f32 %v2242, %v2272
        %v2279 = vmul.f32 %v2243, %v2272
        %v2280 = vmul.f32 %v2244, %v2272
        %v2281 = vmul.f32 %v2245, %v2272
        %v2282 = vmul.f32 %v2246, %v2272
        %v2283 = vmul.f32 %v2247, %v2272
        %v2284 = vmul.f32 %v2248, %v2272
        %v2285 = vmul.f32 %v2249, %v2272
        %v2286 = vmul.f32 %v2250, %v2272
        %v2287 = vmul.f32 %v2251, %v2272
        %v2288 = vmul.f32 %v2252, %v2272
        %v2289 = vmul.f32 %v2253, %v2272
        %v2290 = vmul.f32 %v2254, %v2272
        %v2291 = vmul.f32 %v2255, %v2272
        %v2292 = vmul.f32 %v2256, %v2272
        %v2293 = vmul.f32 %v2257, %v2272
        %v2294 = vmul.f32 %v2258, %v2272
        %v2295 = vmul.f32 %v2259, %v2272
        %v2296 = vmul.f32 %v2260, %v2272
        %v2297 = vmul.f32 %v2261, %v2272
        %v2298 = vmul.f32 %v2262, %v2272
        %v2299 = vmul.f32 %v2263, %v2272
        %v2300 = vmul.f32 %v2264, %v2272
        %v2301 = vmul.f32 %v2265, %v2272
        %v2302 = vmul.f32 %v2266, %v2272
        %v2303 = vmul.f32 %v2267, %v2272
        %v2304 = vmul.f32 %v2268, %v2272
        %v2305 = vlaneseq
        %v2306 = vshrl.u32 %v2305, 7
        %v2307 = vsub.s32 4, %v2306
        %v2308 = vrot.slane %v321, %v2307
        %v2309 = vadd.f32 %v2273, %v2308
        %v2310 = vadd.f32 %v2274, %v2308
        %v2311 = vadd.f32 %v2275, %v2308
        %v2312 = vadd.f32 %v2276, %v2308
        %v2313 = vadd.f32 %v2277, %v2308
        %v2314 = vadd.f32 %v2278, %v2308
        %v2315 = vadd.f32 %v2279, %v2308
        %v2316 = vadd.f32 %v2280, %v2308
        %v2317 = vadd.f32 %v2281, %v2308
        %v2318 = vadd.f32 %v2282, %v2308
        %v2319 = vadd.f32 %v2283, %v2308
        %v2320 = vadd.f32 %v2284, %v2308
        %v2321 = vadd.f32 %v2285, %v2308
        %v2322 = vadd.f32 %v2286, %v2308
        %v2323 = vadd.f32 %v2287, %v2308
        %v2324 = vadd.f32 %v2288, %v2308
        %v2325 = vadd.f32 %v2289, %v2308
        %v2326 = vadd.f32 %v2290, %v2308
        %v2327 = vadd.f32 %v2291, %v2308
        %v2328 = vadd.f32 %v2292, %v2308
        %v2329 = vadd.f32 %v2293, %v2308
        %v2330 = vadd.f32 %v2294, %v2308
        %v2331 = vadd.f32 %v2295, %v2308
        %v2332 = vadd.f32 %v2296, %v2308
        %v2333 = vadd.f32 %v2297, %v2308
        %v2334 = vadd.f32 %v2298, %v2308
        %v2335 = vadd.f32 %v2299, %v2308
        %v2336 = vadd.f32 %v2300, %v2308
        %v2337 = vadd.f32 %v2301, %v2308
        %v2338 = vadd.f32 %v2302, %v2308
        %v2339 = vadd.f32 %v2303, %v2308
        %v2340 = vadd.f32 %v2304, %v2308
        %v2341 = vld [vmem:[#allocation2 + $0x4] sm:$0xff]
        %v2342 = vld [vmem:[#allocation2 + $0xc] sm:$0xff]
        %v2343 = vld [vmem:[#allocation2 + $0x1c] sm:$0xff]
        %v2344 = vld [vmem:[#allocation2 + $0x24] sm:$0xff]
        %v2345 = vld [vmem:[#allocation2 + $0x34] sm:$0xff]
        %v2346 = vld [vmem:[#allocation2 + $0x3c] sm:$0xff]
        %v2347 = vld [vmem:[#allocation2 + $0x4c] sm:$0xff]
        %v2348 = vld [vmem:[#allocation2 + $0x54] sm:$0xff]
        %v2349 = vld [vmem:[#allocation2 + $0x64] sm:$0xff]
        %v2350 = vld [vmem:[#allocation2 + $0x6c] sm:$0xff]
        %v2351 = vld [vmem:[#allocation2 + $0x7c] sm:$0xff]
        %v2352 = vld [vmem:[#allocation2 + $0x84] sm:$0xff]
        %v2353 = vld [vmem:[#allocation2 + $0x94] sm:$0xff]
        %v2354 = vld [vmem:[#allocation2 + $0x9c] sm:$0xff]
        %v2355 = vld [vmem:[#allocation2 + $0xac] sm:$0xff]
        %v2356 = vld [vmem:[#allocation2 + $0xb4] sm:$0xff]
        %v2357 = vld [vmem:[#allocation2 + $0xf4] sm:$0xff]
        %v2358 = vld [vmem:[#allocation2 + $0xfc] sm:$0xff]
        %v2359 = vld [vmem:[#allocation2 + $0x10c] sm:$0xff]
        %v2360 = vld [vmem:[#allocation2 + $0x114] sm:$0xff]
        %v2361 = vld [vmem:[#allocation2 + $0x124] sm:$0xff]
        %v2362 = vld [vmem:[#allocation2 + $0x12c] sm:$0xff]
        %v2363 = vld [vmem:[#allocation2 + $0x13c] sm:$0xff]
        %v2364 = vld [vmem:[#allocation2 + $0x144] sm:$0xff]
        %v2365 = vld [vmem:[#allocation2 + $0x154] sm:$0xff]
        %v2366 = vld [vmem:[#allocation2 + $0x15c] sm:$0xff]
        %v2367 = vld [vmem:[#allocation2 + $0x16c] sm:$0xff]
        %v2368 = vld [vmem:[#allocation2 + $0x174] sm:$0xff]
        %v2369 = vld [vmem:[#allocation2 + $0x184] sm:$0xff]
        %v2370 = vld [vmem:[#allocation2 + $0x18c] sm:$0xff]
        %v2371 = vld [vmem:[#allocation2 + $0x19c] sm:$0xff]
        %v2372 = vld [vmem:[#allocation2 + $0x1a4] sm:$0xff]
        %v2373 = vlaneseq
        %v2374 = vshrl.u32 %v2373, 7
        %v2375 = vsub.s32 0, %v2374
        %v2376 = vrot.slane %v324, %v2375
        %v2377 = vmul.f32 %v2341, %v2376
        %v2378 = vmul.f32 %v2342, %v2376
        %v2379 = vmul.f32 %v2343, %v2376
        %v2380 = vmul.f32 %v2344, %v2376
        %v2381 = vmul.f32 %v2345, %v2376
        %v2382 = vmul.f32 %v2346, %v2376
        %v2383 = vmul.f32 %v2347, %v2376
        %v2384 = vmul.f32 %v2348, %v2376
        %v2385 = vmul.f32 %v2349, %v2376
        %v2386 = vmul.f32 %v2350, %v2376
        %v2387 = vmul.f32 %v2351, %v2376
        %v2388 = vmul.f32 %v2352, %v2376
        %v2389 = vmul.f32 %v2353, %v2376
        %v2390 = vmul.f32 %v2354, %v2376
        %v2391 = vmul.f32 %v2355, %v2376
        %v2392 = vmul.f32 %v2356, %v2376
        %v2393 = vmul.f32 %v2357, %v2376
        %v2394 = vmul.f32 %v2358, %v2376
        %v2395 = vmul.f32 %v2359, %v2376
        %v2396 = vmul.f32 %v2360, %v2376
        %v2397 = vmul.f32 %v2361, %v2376
        %v2398 = vmul.f32 %v2362, %v2376
        %v2399 = vmul.f32 %v2363, %v2376
        %v2400 = vmul.f32 %v2364, %v2376
        %v2401 = vmul.f32 %v2365, %v2376
        %v2402 = vmul.f32 %v2366, %v2376
        %v2403 = vmul.f32 %v2367, %v2376
        %v2404 = vmul.f32 %v2368, %v2376
        %v2405 = vmul.f32 %v2369, %v2376
        %v2406 = vmul.f32 %v2370, %v2376
        %v2407 = vmul.f32 %v2371, %v2376
        %v2408 = vmul.f32 %v2372, %v2376
        %v2409 = vadd.f32 %v2309, %v2377
        %v2410 = vadd.f32 %v2310, %v2378
        %v2411 = vadd.f32 %v2311, %v2379
        %v2412 = vadd.f32 %v2312, %v2380
        %v2413 = vadd.f32 %v2313, %v2381
        %v2414 = vadd.f32 %v2314, %v2382
        %v2415 = vadd.f32 %v2315, %v2383
        %v2416 = vadd.f32 %v2316, %v2384
        %v2417 = vadd.f32 %v2317, %v2385
        %v2418 = vadd.f32 %v2318, %v2386
        %v2419 = vadd.f32 %v2319, %v2387
        %v2420 = vadd.f32 %v2320, %v2388
        %v2421 = vadd.f32 %v2321, %v2389
        %v2422 = vadd.f32 %v2322, %v2390
        %v2423 = vadd.f32 %v2323, %v2391
        %v2424 = vadd.f32 %v2324, %v2392
        %v2425 = vadd.f32 %v2325, %v2393
        %v2426 = vadd.f32 %v2326, %v2394
        %v2427 = vadd.f32 %v2327, %v2395
        %v2428 = vadd.f32 %v2328, %v2396
        %v2429 = vadd.f32 %v2329, %v2397
        %v2430 = vadd.f32 %v2330, %v2398
        %v2431 = vadd.f32 %v2331, %v2399
        %v2432 = vadd.f32 %v2332, %v2400
        %v2433 = vadd.f32 %v2333, %v2401
        %v2434 = vadd.f32 %v2334, %v2402
        %v2435 = vadd.f32 %v2335, %v2403
        %v2436 = vadd.f32 %v2336, %v2404
        %v2437 = vadd.f32 %v2337, %v2405
        %v2438 = vadd.f32 %v2338, %v2406
        %v2439 = vadd.f32 %v2339, %v2407
        %v2440 = vadd.f32 %v2340, %v2408
        %v2441 = vld [vmem:[%s777 + $0x4] sm:$0xff]
        %v2442 = vld [vmem:[%s777 + $0xc] sm:$0xff]
        %v2443 = vld [vmem:[%s777 + $0x1c] sm:$0xff]
        %v2444 = vld [vmem:[%s777 + $0x24] sm:$0xff]
        %v2445 = vld [vmem:[%s777 + $0x34] sm:$0xff]
        %v2446 = vld [vmem:[%s777 + $0x3c] sm:$0xff]
        %v2447 = vld [vmem:[%s777 + $0x4c] sm:$0xff]
        %v2448 = vld [vmem:[%s777 + $0x54] sm:$0xff]
        %v2449 = vld [vmem:[%s777 + $0x64] sm:$0xff]
        %v2450 = vld [vmem:[%s777 + $0x6c] sm:$0xff]
        %v2451 = vld [vmem:[%s777 + $0x7c] sm:$0xff]
        %v2452 = vld [vmem:[%s777 + $0x84] sm:$0xff]
        %v2453 = vld [vmem:[%s777 + $0x94] sm:$0xff]
        %v2454 = vld [vmem:[%s777 + $0x9c] sm:$0xff]
        %v2455 = vld [vmem:[%s777 + $0xac] sm:$0xff]
        %v2456 = vld [vmem:[%s777 + $0xb4] sm:$0xff]
        %v2457 = vld [vmem:[%s777 + $0xf4] sm:$0xff]
        %v2458 = vld [vmem:[%s777 + $0xfc] sm:$0xff]
        %v2459 = vld [vmem:[%s777 + $0x10c] sm:$0xff]
        %v2460 = vld [vmem:[%s777 + $0x114] sm:$0xff]
        %v2461 = vld [vmem:[%s777 + $0x124] sm:$0xff]
        %v2462 = vld [vmem:[%s777 + $0x12c] sm:$0xff]
        %v2463 = vld [vmem:[%s777 + $0x13c] sm:$0xff]
        %v2464 = vld [vmem:[%s777 + $0x144] sm:$0xff]
        %v2465 = vld [vmem:[%s777 + $0x154] sm:$0xff]
        %v2466 = vld [vmem:[%s777 + $0x15c] sm:$0xff]
        %v2467 = vld [vmem:[%s777 + $0x16c] sm:$0xff]
        %v2468 = vld [vmem:[%s777 + $0x174] sm:$0xff]
        %v2469 = vld [vmem:[%s777 + $0x184] sm:$0xff]
        %v2470 = vld [vmem:[%s777 + $0x18c] sm:$0xff]
        %v2471 = vld [vmem:[%s777 + $0x19c] sm:$0xff]
        %v2472 = vld [vmem:[%s777 + $0x1a4] sm:$0xff]
        %v2473 = vlaneseq
        %v2474 = vshrl.u32 %v2473, 7
        %v2475 = vsub.s32 3, %v2474
        %v2476 = vrot.slane %v324, %v2475
        %v2477 = vmul.f32 %v2441, %v2476
        %v2478 = vmul.f32 %v2442, %v2476
        %v2479 = vmul.f32 %v2443, %v2476
        %v2480 = vmul.f32 %v2444, %v2476
        %v2481 = vmul.f32 %v2445, %v2476
        %v2482 = vmul.f32 %v2446, %v2476
        %v2483 = vmul.f32 %v2447, %v2476
        %v2484 = vmul.f32 %v2448, %v2476
        %v2485 = vmul.f32 %v2449, %v2476
        %v2486 = vmul.f32 %v2450, %v2476
        %v2487 = vmul.f32 %v2451, %v2476
        %v2488 = vmul.f32 %v2452, %v2476
        %v2489 = vmul.f32 %v2453, %v2476
        %v2490 = vmul.f32 %v2454, %v2476
        %v2491 = vmul.f32 %v2455, %v2476
        %v2492 = vmul.f32 %v2456, %v2476
        %v2493 = vmul.f32 %v2457, %v2476
        %v2494 = vmul.f32 %v2458, %v2476
        %v2495 = vmul.f32 %v2459, %v2476
        %v2496 = vmul.f32 %v2460, %v2476
        %v2497 = vmul.f32 %v2461, %v2476
        %v2498 = vmul.f32 %v2462, %v2476
        %v2499 = vmul.f32 %v2463, %v2476
        %v2500 = vmul.f32 %v2464, %v2476
        %v2501 = vmul.f32 %v2465, %v2476
        %v2502 = vmul.f32 %v2466, %v2476
        %v2503 = vmul.f32 %v2467, %v2476
        %v2504 = vmul.f32 %v2468, %v2476
        %v2505 = vmul.f32 %v2469, %v2476
        %v2506 = vmul.f32 %v2470, %v2476
        %v2507 = vmul.f32 %v2471, %v2476
        %v2508 = vmul.f32 %v2472, %v2476
        %v2509 = vadd.f32 %v2409, %v2477
        %v2510 = vadd.f32 %v2410, %v2478
        %v2511 = vadd.f32 %v2411, %v2479
        %v2512 = vadd.f32 %v2412, %v2480
        %v2513 = vadd.f32 %v2413, %v2481
        %v2514 = vadd.f32 %v2414, %v2482
        %v2515 = vadd.f32 %v2415, %v2483
        %v2516 = vadd.f32 %v2416, %v2484
        %v2517 = vadd.f32 %v2417, %v2485
        %v2518 = vadd.f32 %v2418, %v2486
        %v2519 = vadd.f32 %v2419, %v2487
        %v2520 = vadd.f32 %v2420, %v2488
        %v2521 = vadd.f32 %v2421, %v2489
        %v2522 = vadd.f32 %v2422, %v2490
        %v2523 = vadd.f32 %v2423, %v2491
        %v2524 = vadd.f32 %v2424, %v2492
        %v2525 = vadd.f32 %v2425, %v2493
        %v2526 = vadd.f32 %v2426, %v2494
        %v2527 = vadd.f32 %v2427, %v2495
        %v2528 = vadd.f32 %v2428, %v2496
        %v2529 = vadd.f32 %v2429, %v2497
        %v2530 = vadd.f32 %v2430, %v2498
        %v2531 = vadd.f32 %v2431, %v2499
        %v2532 = vadd.f32 %v2432, %v2500
        %v2533 = vadd.f32 %v2433, %v2501
        %v2534 = vadd.f32 %v2434, %v2502
        %v2535 = vadd.f32 %v2435, %v2503
        %v2536 = vadd.f32 %v2436, %v2504
        %v2537 = vadd.f32 %v2437, %v2505
        %v2538 = vadd.f32 %v2438, %v2506
        %v2539 = vadd.f32 %v2439, %v2507
        %v2540 = vadd.f32 %v2440, %v2508
        %s2541 = scalar_lea.vmem [#allocation2], 48
        %v2542 = vld [vmem:[%s2541 + $0x4] sm:$0xff]
        %v2543 = vld [vmem:[%s2541 + $0xc] sm:$0xff]
        %v2544 = vld [vmem:[%s2541 + $0x1c] sm:$0xff]
        %v2545 = vld [vmem:[%s2541 + $0x24] sm:$0xff]
        %v2546 = vld [vmem:[%s2541 + $0x34] sm:$0xff]
        %v2547 = vld [vmem:[%s2541 + $0x3c] sm:$0xff]
        %v2548 = vld [vmem:[%s2541 + $0x4c] sm:$0xff]
        %v2549 = vld [vmem:[%s2541 + $0x54] sm:$0xff]
        %v2550 = vld [vmem:[%s2541 + $0x64] sm:$0xff]
        %v2551 = vld [vmem:[%s2541 + $0x6c] sm:$0xff]
        %v2552 = vld [vmem:[%s2541 + $0x7c] sm:$0xff]
        %v2553 = vld [vmem:[%s2541 + $0x84] sm:$0xff]
        %v2554 = vld [vmem:[%s2541 + $0x94] sm:$0xff]
        %v2555 = vld [vmem:[%s2541 + $0x9c] sm:$0xff]
        %v2556 = vld [vmem:[%s2541 + $0xac] sm:$0xff]
        %v2557 = vld [vmem:[%s2541 + $0xb4] sm:$0xff]
        %v2558 = vld [vmem:[%s2541 + $0xf4] sm:$0xff]
        %v2559 = vld [vmem:[%s2541 + $0xfc] sm:$0xff]
        %v2560 = vld [vmem:[%s2541 + $0x10c] sm:$0xff]
        %v2561 = vld [vmem:[%s2541 + $0x114] sm:$0xff]
        %v2562 = vld [vmem:[%s2541 + $0x124] sm:$0xff]
        %v2563 = vld [vmem:[%s2541 + $0x12c] sm:$0xff]
        %v2564 = vld [vmem:[%s2541 + $0x13c] sm:$0xff]
        %v2565 = vld [vmem:[%s2541 + $0x144] sm:$0xff]
        %v2566 = vld [vmem:[%s2541 + $0x154] sm:$0xff]
        %v2567 = vld [vmem:[%s2541 + $0x15c] sm:$0xff]
        %v2568 = vld [vmem:[%s2541 + $0x16c] sm:$0xff]
        %v2569 = vld [vmem:[%s2541 + $0x174] sm:$0xff]
        %v2570 = vld [vmem:[%s2541 + $0x184] sm:$0xff]
        %v2571 = vld [vmem:[%s2541 + $0x18c] sm:$0xff]
        %v2572 = vld [vmem:[%s2541 + $0x19c] sm:$0xff]
        %v2573 = vld [vmem:[%s2541 + $0x1a4] sm:$0xff]
        %v2574 = vlaneseq
        %v2575 = vshrl.u32 %v2574, 7
        %v2576 = vsub.s32 6, %v2575
        %v2577 = vrot.slane %v324, %v2576
        %v2578 = vmul.f32 %v2542, %v2577
        %v2579 = vmul.f32 %v2543, %v2577
        %v2580 = vmul.f32 %v2544, %v2577
        %v2581 = vmul.f32 %v2545, %v2577
        %v2582 = vmul.f32 %v2546, %v2577
        %v2583 = vmul.f32 %v2547, %v2577
        %v2584 = vmul.f32 %v2548, %v2577
        %v2585 = vmul.f32 %v2549, %v2577
        %v2586 = vmul.f32 %v2550, %v2577
        %v2587 = vmul.f32 %v2551, %v2577
        %v2588 = vmul.f32 %v2552, %v2577
        %v2589 = vmul.f32 %v2553, %v2577
        %v2590 = vmul.f32 %v2554, %v2577
        %v2591 = vmul.f32 %v2555, %v2577
        %v2592 = vmul.f32 %v2556, %v2577
        %v2593 = vmul.f32 %v2557, %v2577
        %v2594 = vmul.f32 %v2558, %v2577
        %v2595 = vmul.f32 %v2559, %v2577
        %v2596 = vmul.f32 %v2560, %v2577
        %v2597 = vmul.f32 %v2561, %v2577
        %v2598 = vmul.f32 %v2562, %v2577
        %v2599 = vmul.f32 %v2563, %v2577
        %v2600 = vmul.f32 %v2564, %v2577
        %v2601 = vmul.f32 %v2565, %v2577
        %v2602 = vmul.f32 %v2566, %v2577
        %v2603 = vmul.f32 %v2567, %v2577
        %v2604 = vmul.f32 %v2568, %v2577
        %v2605 = vmul.f32 %v2569, %v2577
        %v2606 = vmul.f32 %v2570, %v2577
        %v2607 = vmul.f32 %v2571, %v2577
        %v2608 = vmul.f32 %v2572, %v2577
        %v2609 = vmul.f32 %v2573, %v2577
        %v2610 = vadd.f32 %v2509, %v2578
        %v2611 = vadd.f32 %v2510, %v2579
        %v2612 = vadd.f32 %v2511, %v2580
        %v2613 = vadd.f32 %v2512, %v2581
        %v2614 = vadd.f32 %v2513, %v2582
        %v2615 = vadd.f32 %v2514, %v2583
        %v2616 = vadd.f32 %v2515, %v2584
        %v2617 = vadd.f32 %v2516, %v2585
        %v2618 = vadd.f32 %v2517, %v2586
        %v2619 = vadd.f32 %v2518, %v2587
        %v2620 = vadd.f32 %v2519, %v2588
        %v2621 = vadd.f32 %v2520, %v2589
        %v2622 = vadd.f32 %v2521, %v2590
        %v2623 = vadd.f32 %v2522, %v2591
        %v2624 = vadd.f32 %v2523, %v2592
        %v2625 = vadd.f32 %v2524, %v2593
        %v2626 = vadd.f32 %v2525, %v2594
        %v2627 = vadd.f32 %v2526, %v2595
        %v2628 = vadd.f32 %v2527, %v2596
        %v2629 = vadd.f32 %v2528, %v2597
        %v2630 = vadd.f32 %v2529, %v2598
        %v2631 = vadd.f32 %v2530, %v2599
        %v2632 = vadd.f32 %v2531, %v2600
        %v2633 = vadd.f32 %v2532, %v2601
        %v2634 = vadd.f32 %v2533, %v2602
        %v2635 = vadd.f32 %v2534, %v2603
        %v2636 = vadd.f32 %v2535, %v2604
        %v2637 = vadd.f32 %v2536, %v2605
        %v2638 = vadd.f32 %v2537, %v2606
        %v2639 = vadd.f32 %v2538, %v2607
        %v2640 = vadd.f32 %v2539, %v2608
        %v2641 = vadd.f32 %v2540, %v2609
        %v2642 = vld [vmem:[#allocation2 + $0x6] sm:$0xff]
        %v2643 = vld [vmem:[#allocation2 + $0xe] sm:$0xff]
        %v2644 = vld [vmem:[#allocation2 + $0x1e] sm:$0xff]
        %v2645 = vld [vmem:[#allocation2 + $0x26] sm:$0xff]
        %v2646 = vld [vmem:[#allocation2 + $0x36] sm:$0xff]
        %v2647 = vld [vmem:[#allocation2 + $0x3e] sm:$0xff]
        %v2648 = vld [vmem:[#allocation2 + $0x4e] sm:$0xff]
        %v2649 = vld [vmem:[#allocation2 + $0x56] sm:$0xff]
        %v2650 = vld [vmem:[#allocation2 + $0x66] sm:$0xff]
        %v2651 = vld [vmem:[#allocation2 + $0x6e] sm:$0xff]
        %v2652 = vld [vmem:[#allocation2 + $0x7e] sm:$0xff]
        %v2653 = vld [vmem:[#allocation2 + $0x86] sm:$0xff]
        %v2654 = vld [vmem:[#allocation2 + $0x96] sm:$0xff]
        %v2655 = vld [vmem:[#allocation2 + $0x9e] sm:$0xff]
        %v2656 = vld [vmem:[#allocation2 + $0xae] sm:$0xff]
        %v2657 = vld [vmem:[#allocation2 + $0xb6] sm:$0xff]
        %v2658 = vld [vmem:[#allocation2 + $0xf6] sm:$0xff]
        %v2659 = vld [vmem:[#allocation2 + $0xfe] sm:$0xff]
        %v2660 = vld [vmem:[#allocation2 + $0x10e] sm:$0xff]
        %v2661 = vld [vmem:[#allocation2 + $0x116] sm:$0xff]
        %v2662 = vld [vmem:[#allocation2 + $0x126] sm:$0xff]
        %v2663 = vld [vmem:[#allocation2 + $0x12e] sm:$0xff]
        %v2664 = vld [vmem:[#allocation2 + $0x13e] sm:$0xff]
        %v2665 = vld [vmem:[#allocation2 + $0x146] sm:$0xff]
        %v2666 = vld [vmem:[#allocation2 + $0x156] sm:$0xff]
        %v2667 = vld [vmem:[#allocation2 + $0x15e] sm:$0xff]
        %v2668 = vld [vmem:[#allocation2 + $0x16e] sm:$0xff]
        %v2669 = vld [vmem:[#allocation2 + $0x176] sm:$0xff]
        %v2670 = vld [vmem:[#allocation2 + $0x186] sm:$0xff]
        %v2671 = vld [vmem:[#allocation2 + $0x18e] sm:$0xff]
        %v2672 = vld [vmem:[#allocation2 + $0x19e] sm:$0xff]
        %v2673 = vld [vmem:[#allocation2 + $0x1a6] sm:$0xff]
        %v2674 = vlaneseq
        %v2675 = vshrl.u32 %v2674, 7
        %v2676 = vsub.s32 1, %v2675
        %v2677 = vrot.slane %v324, %v2676
        %v2678 = vmul.f32 %v2642, %v2677
        %v2679 = vmul.f32 %v2643, %v2677
        %v2680 = vmul.f32 %v2644, %v2677
        %v2681 = vmul.f32 %v2645, %v2677
        %v2682 = vmul.f32 %v2646, %v2677
        %v2683 = vmul.f32 %v2647, %v2677
        %v2684 = vmul.f32 %v2648, %v2677
        %v2685 = vmul.f32 %v2649, %v2677
        %v2686 = vmul.f32 %v2650, %v2677
        %v2687 = vmul.f32 %v2651, %v2677
        %v2688 = vmul.f32 %v2652, %v2677
        %v2689 = vmul.f32 %v2653, %v2677
        %v2690 = vmul.f32 %v2654, %v2677
        %v2691 = vmul.f32 %v2655, %v2677
        %v2692 = vmul.f32 %v2656, %v2677
        %v2693 = vmul.f32 %v2657, %v2677
        %v2694 = vmul.f32 %v2658, %v2677
        %v2695 = vmul.f32 %v2659, %v2677
        %v2696 = vmul.f32 %v2660, %v2677
        %v2697 = vmul.f32 %v2661, %v2677
        %v2698 = vmul.f32 %v2662, %v2677
        %v2699 = vmul.f32 %v2663, %v2677
        %v2700 = vmul.f32 %v2664, %v2677
        %v2701 = vmul.f32 %v2665, %v2677
        %v2702 = vmul.f32 %v2666, %v2677
        %v2703 = vmul.f32 %v2667, %v2677
        %v2704 = vmul.f32 %v2668, %v2677
        %v2705 = vmul.f32 %v2669, %v2677
        %v2706 = vmul.f32 %v2670, %v2677
        %v2707 = vmul.f32 %v2671, %v2677
        %v2708 = vmul.f32 %v2672, %v2677
        %v2709 = vmul.f32 %v2673, %v2677
        %v2710 = vadd.f32 %v2610, %v2678
        %v2711 = vadd.f32 %v2611, %v2679
        %v2712 = vadd.f32 %v2612, %v2680
        %v2713 = vadd.f32 %v2613, %v2681
        %v2714 = vadd.f32 %v2614, %v2682
        %v2715 = vadd.f32 %v2615, %v2683
        %v2716 = vadd.f32 %v2616, %v2684
        %v2717 = vadd.f32 %v2617, %v2685
        %v2718 = vadd.f32 %v2618, %v2686
        %v2719 = vadd.f32 %v2619, %v2687
        %v2720 = vadd.f32 %v2620, %v2688
        %v2721 = vadd.f32 %v2621, %v2689
        %v2722 = vadd.f32 %v2622, %v2690
        %v2723 = vadd.f32 %v2623, %v2691
        %v2724 = vadd.f32 %v2624, %v2692
        %v2725 = vadd.f32 %v2625, %v2693
        %v2726 = vadd.f32 %v2626, %v2694
        %v2727 = vadd.f32 %v2627, %v2695
        %v2728 = vadd.f32 %v2628, %v2696
        %v2729 = vadd.f32 %v2629, %v2697
        %v2730 = vadd.f32 %v2630, %v2698
        %v2731 = vadd.f32 %v2631, %v2699
        %v2732 = vadd.f32 %v2632, %v2700
        %v2733 = vadd.f32 %v2633, %v2701
        %v2734 = vadd.f32 %v2634, %v2702
        %v2735 = vadd.f32 %v2635, %v2703
        %v2736 = vadd.f32 %v2636, %v2704
        %v2737 = vadd.f32 %v2637, %v2705
        %v2738 = vadd.f32 %v2638, %v2706
        %v2739 = vadd.f32 %v2639, %v2707
        %v2740 = vadd.f32 %v2640, %v2708
        %v2741 = vadd.f32 %v2641, %v2709
        %v2742 = vld [vmem:[%s777 + $0x6] sm:$0xff]
        %v2743 = vld [vmem:[%s777 + $0xe] sm:$0xff]
        %v2744 = vld [vmem:[%s777 + $0x1e] sm:$0xff]
        %v2745 = vld [vmem:[%s777 + $0x26] sm:$0xff]
        %v2746 = vld [vmem:[%s777 + $0x36] sm:$0xff]
        %v2747 = vld [vmem:[%s777 + $0x3e] sm:$0xff]
        %v2748 = vld [vmem:[%s777 + $0x4e] sm:$0xff]
        %v2749 = vld [vmem:[%s777 + $0x56] sm:$0xff]
        %v2750 = vld [vmem:[%s777 + $0x66] sm:$0xff]
        %v2751 = vld [vmem:[%s777 + $0x6e] sm:$0xff]
        %v2752 = vld [vmem:[%s777 + $0x7e] sm:$0xff]
        %v2753 = vld [vmem:[%s777 + $0x86] sm:$0xff]
        %v2754 = vld [vmem:[%s777 + $0x96] sm:$0xff]
        %v2755 = vld [vmem:[%s777 + $0x9e] sm:$0xff]
        %v2756 = vld [vmem:[%s777 + $0xae] sm:$0xff]
        %v2757 = vld [vmem:[%s777 + $0xb6] sm:$0xff]
        %v2758 = vld [vmem:[%s777 + $0xf6] sm:$0xff]
        %v2759 = vld [vmem:[%s777 + $0xfe] sm:$0xff]
        %v2760 = vld [vmem:[%s777 + $0x10e] sm:$0xff]
        %v2761 = vld [vmem:[%s777 + $0x116] sm:$0xff]
        %v2762 = vld [vmem:[%s777 + $0x126] sm:$0xff]
        %v2763 = vld [vmem:[%s777 + $0x12e] sm:$0xff]
        %v2764 = vld [vmem:[%s777 + $0x13e] sm:$0xff]
        %v2765 = vld [vmem:[%s777 + $0x146] sm:$0xff]
        %v2766 = vld [vmem:[%s777 + $0x156] sm:$0xff]
        %v2767 = vld [vmem:[%s777 + $0x15e] sm:$0xff]
        %v2768 = vld [vmem:[%s777 + $0x16e] sm:$0xff]
        %v2769 = vld [vmem:[%s777 + $0x176] sm:$0xff]
        %v2770 = vld [vmem:[%s777 + $0x186] sm:$0xff]
        %v2771 = vld [vmem:[%s777 + $0x18e] sm:$0xff]
        %v2772 = vld [vmem:[%s777 + $0x19e] sm:$0xff]
        %v2773 = vld [vmem:[%s777 + $0x1a6] sm:$0xff]
        %v2774 = vlaneseq
        %v2775 = vshrl.u32 %v2774, 7
        %v2776 = vsub.s32 4, %v2775
        %v2777 = vrot.slane %v324, %v2776
        %v2778 = vmul.f32 %v2742, %v2777
        %v2779 = vmul.f32 %v2743, %v2777
        %v2780 = vmul.f32 %v2744, %v2777
        %v2781 = vmul.f32 %v2745, %v2777
        %v2782 = vmul.f32 %v2746, %v2777
        %v2783 = vmul.f32 %v2747, %v2777
        %v2784 = vmul.f32 %v2748, %v2777
        %v2785 = vmul.f32 %v2749, %v2777
        %v2786 = vmul.f32 %v2750, %v2777
        %v2787 = vmul.f32 %v2751, %v2777
        %v2788 = vmul.f32 %v2752, %v2777
        %v2789 = vmul.f32 %v2753, %v2777
        %v2790 = vmul.f32 %v2754, %v2777
        %v2791 = vmul.f32 %v2755, %v2777
        %v2792 = vmul.f32 %v2756, %v2777
        %v2793 = vmul.f32 %v2757, %v2777
        %v2794 = vmul.f32 %v2758, %v2777
        %v2795 = vmul.f32 %v2759, %v2777
        %v2796 = vmul.f32 %v2760, %v2777
        %v2797 = vmul.f32 %v2761, %v2777
        %v2798 = vmul.f32 %v2762, %v2777
        %v2799 = vmul.f32 %v2763, %v2777
        %v2800 = vmul.f32 %v2764, %v2777
        %v2801 = vmul.f32 %v2765, %v2777
        %v2802 = vmul.f32 %v2766, %v2777
        %v2803 = vmul.f32 %v2767, %v2777
        %v2804 = vmul.f32 %v2768, %v2777
        %v2805 = vmul.f32 %v2769, %v2777
        %v2806 = vmul.f32 %v2770, %v2777
        %v2807 = vmul.f32 %v2771, %v2777
        %v2808 = vmul.f32 %v2772, %v2777
        %v2809 = vmul.f32 %v2773, %v2777
        %v2810 = vadd.f32 %v2710, %v2778
        %v2811 = vadd.f32 %v2711, %v2779
        %v2812 = vadd.f32 %v2712, %v2780
        %v2813 = vadd.f32 %v2713, %v2781
        %v2814 = vadd.f32 %v2714, %v2782
        %v2815 = vadd.f32 %v2715, %v2783
        %v2816 = vadd.f32 %v2716, %v2784
        %v2817 = vadd.f32 %v2717, %v2785
        %v2818 = vadd.f32 %v2718, %v2786
        %v2819 = vadd.f32 %v2719, %v2787
        %v2820 = vadd.f32 %v2720, %v2788
        %v2821 = vadd.f32 %v2721, %v2789
        %v2822 = vadd.f32 %v2722, %v2790
        %v2823 = vadd.f32 %v2723, %v2791
        %v2824 = vadd.f32 %v2724, %v2792
        %v2825 = vadd.f32 %v2725, %v2793
        %v2826 = vadd.f32 %v2726, %v2794
        %v2827 = vadd.f32 %v2727, %v2795
        %v2828 = vadd.f32 %v2728, %v2796
        %v2829 = vadd.f32 %v2729, %v2797
        %v2830 = vadd.f32 %v2730, %v2798
        %v2831 = vadd.f32 %v2731, %v2799
        %v2832 = vadd.f32 %v2732, %v2800
        %v2833 = vadd.f32 %v2733, %v2801
        %v2834 = vadd.f32 %v2734, %v2802
        %v2835 = vadd.f32 %v2735, %v2803
        %v2836 = vadd.f32 %v2736, %v2804
        %v2837 = vadd.f32 %v2737, %v2805
        %v2838 = vadd.f32 %v2738, %v2806
        %v2839 = vadd.f32 %v2739, %v2807
        %v2840 = vadd.f32 %v2740, %v2808
        %v2841 = vadd.f32 %v2741, %v2809
        %v2842 = vld [vmem:[%s2541 + $0x6] sm:$0xff]
        %v2843 = vld [vmem:[%s2541 + $0xe] sm:$0xff]
        %v2844 = vld [vmem:[%s2541 + $0x1e] sm:$0xff]
        %v2845 = vld [vmem:[%s2541 + $0x26] sm:$0xff]
        %v2846 = vld [vmem:[%s2541 + $0x36] sm:$0xff]
        %v2847 = vld [vmem:[%s2541 + $0x3e] sm:$0xff]
        %v2848 = vld [vmem:[%s2541 + $0x4e] sm:$0xff]
        %v2849 = vld [vmem:[%s2541 + $0x56] sm:$0xff]
        %v2850 = vld [vmem:[%s2541 + $0x66] sm:$0xff]
        %v2851 = vld [vmem:[%s2541 + $0x6e] sm:$0xff]
        %v2852 = vld [vmem:[%s2541 + $0x7e] sm:$0xff]
        %v2853 = vld [vmem:[%s2541 + $0x86] sm:$0xff]
        %v2854 = vld [vmem:[%s2541 + $0x96] sm:$0xff]
        %v2855 = vld [vmem:[%s2541 + $0x9e] sm:$0xff]
        %v2856 = vld [vmem:[%s2541 + $0xae] sm:$0xff]
        %v2857 = vld [vmem:[%s2541 + $0xb6] sm:$0xff]
        %v2858 = vld [vmem:[%s2541 + $0xf6] sm:$0xff]
        %v2859 = vld [vmem:[%s2541 + $0xfe] sm:$0xff]
        %v2860 = vld [vmem:[%s2541 + $0x10e] sm:$0xff]
        %v2861 = vld [vmem:[%s2541 + $0x116] sm:$0xff]
        %v2862 = vld [vmem:[%s2541 + $0x126] sm:$0xff]
        %v2863 = vld [vmem:[%s2541 + $0x12e] sm:$0xff]
        %v2864 = vld [vmem:[%s2541 + $0x13e] sm:$0xff]
        %v2865 = vld [vmem:[%s2541 + $0x146] sm:$0xff]
        %v2866 = vld [vmem:[%s2541 + $0x156] sm:$0xff]
        %v2867 = vld [vmem:[%s2541 + $0x15e] sm:$0xff]
        %v2868 = vld [vmem:[%s2541 + $0x16e] sm:$0xff]
        %v2869 = vld [vmem:[%s2541 + $0x176] sm:$0xff]
        %v2870 = vld [vmem:[%s2541 + $0x186] sm:$0xff]
        %v2871 = vld [vmem:[%s2541 + $0x18e] sm:$0xff]
        %v2872 = vld [vmem:[%s2541 + $0x19e] sm:$0xff]
        %v2873 = vld [vmem:[%s2541 + $0x1a6] sm:$0xff]
        %v2874 = vlaneseq
        %v2875 = vshrl.u32 %v2874, 7
        %v2876 = vsub.s32 7, %v2875
        %v2877 = vrot.slane %v324, %v2876
        %v2878 = vmul.f32 %v2842, %v2877
        %v2879 = vmul.f32 %v2843, %v2877
        %v2880 = vmul.f32 %v2844, %v2877
        %v2881 = vmul.f32 %v2845, %v2877
        %v2882 = vmul.f32 %v2846, %v2877
        %v2883 = vmul.f32 %v2847, %v2877
        %v2884 = vmul.f32 %v2848, %v2877
        %v2885 = vmul.f32 %v2849, %v2877
        %v2886 = vmul.f32 %v2850, %v2877
        %v2887 = vmul.f32 %v2851, %v2877
        %v2888 = vmul.f32 %v2852, %v2877
        %v2889 = vmul.f32 %v2853, %v2877
        %v2890 = vmul.f32 %v2854, %v2877
        %v2891 = vmul.f32 %v2855, %v2877
        %v2892 = vmul.f32 %v2856, %v2877
        %v2893 = vmul.f32 %v2857, %v2877
        %v2894 = vmul.f32 %v2858, %v2877
        %v2895 = vmul.f32 %v2859, %v2877
        %v2896 = vmul.f32 %v2860, %v2877
        %v2897 = vmul.f32 %v2861, %v2877
        %v2898 = vmul.f32 %v2862, %v2877
        %v2899 = vmul.f32 %v2863, %v2877
        %v2900 = vmul.f32 %v2864, %v2877
        %v2901 = vmul.f32 %v2865, %v2877
        %v2902 = vmul.f32 %v2866, %v2877
        %v2903 = vmul.f32 %v2867, %v2877
        %v2904 = vmul.f32 %v2868, %v2877
        %v2905 = vmul.f32 %v2869, %v2877
        %v2906 = vmul.f32 %v2870, %v2877
        %v2907 = vmul.f32 %v2871, %v2877
        %v2908 = vmul.f32 %v2872, %v2877
        %v2909 = vmul.f32 %v2873, %v2877
        %v2910 = vadd.f32 %v2810, %v2878
        %v2911 = vadd.f32 %v2811, %v2879
        %v2912 = vadd.f32 %v2812, %v2880
        %v2913 = vadd.f32 %v2813, %v2881
        %v2914 = vadd.f32 %v2814, %v2882
        %v2915 = vadd.f32 %v2815, %v2883
        %v2916 = vadd.f32 %v2816, %v2884
        %v2917 = vadd.f32 %v2817, %v2885
        %v2918 = vadd.f32 %v2818, %v2886
        %v2919 = vadd.f32 %v2819, %v2887
        %v2920 = vadd.f32 %v2820, %v2888
        %v2921 = vadd.f32 %v2821, %v2889
        %v2922 = vadd.f32 %v2822, %v2890
        %v2923 = vadd.f32 %v2823, %v2891
        %v2924 = vadd.f32 %v2824, %v2892
        %v2925 = vadd.f32 %v2825, %v2893
        %v2926 = vadd.f32 %v2826, %v2894
        %v2927 = vadd.f32 %v2827, %v2895
        %v2928 = vadd.f32 %v2828, %v2896
        %v2929 = vadd.f32 %v2829, %v2897
        %v2930 = vadd.f32 %v2830, %v2898
        %v2931 = vadd.f32 %v2831, %v2899
        %v2932 = vadd.f32 %v2832, %v2900
        %v2933 = vadd.f32 %v2833, %v2901
        %v2934 = vadd.f32 %v2834, %v2902
        %v2935 = vadd.f32 %v2835, %v2903
        %v2936 = vadd.f32 %v2836, %v2904
        %v2937 = vadd.f32 %v2837, %v2905
        %v2938 = vadd.f32 %v2838, %v2906
        %v2939 = vadd.f32 %v2839, %v2907
        %v2940 = vadd.f32 %v2840, %v2908
        %v2941 = vadd.f32 %v2841, %v2909
        %v2942 = vld [vmem:[#allocation2 + $0x8] sm:$0xff]
        %v2943 = vld [vmem:[#allocation2 + $0x10] sm:$0xff]
        %v2944 = vld [vmem:[#allocation2 + $0x20] sm:$0xff]
        %v2945 = vld [vmem:[#allocation2 + $0x28] sm:$0xff]
        %v2946 = vld [vmem:[#allocation2 + $0x38] sm:$0xff]
        %v2947 = vld [vmem:[#allocation2 + $0x40] sm:$0xff]
        %v2948 = vld [vmem:[#allocation2 + $0x50] sm:$0xff]
        %v2949 = vld [vmem:[#allocation2 + $0x58] sm:$0xff]
        %v2950 = vld [vmem:[#allocation2 + $0x68] sm:$0xff]
        %v2951 = vld [vmem:[#allocation2 + $0x70] sm:$0xff]
        %v2952 = vld [vmem:[#allocation2 + $0x80] sm:$0xff]
        %v2953 = vld [vmem:[#allocation2 + $0x88] sm:$0xff]
        %v2954 = vld [vmem:[#allocation2 + $0x98] sm:$0xff]
        %v2955 = vld [vmem:[#allocation2 + $0xa0] sm:$0xff]
        %v2956 = vld [vmem:[#allocation2 + $0xb0] sm:$0xff]
        %v2957 = vld [vmem:[#allocation2 + $0xb8] sm:$0xff]
        %v2958 = vld [vmem:[#allocation2 + $0xf8] sm:$0xff]
        %v2959 = vld [vmem:[#allocation2 + $0x100] sm:$0xff]
        %v2960 = vld [vmem:[#allocation2 + $0x110] sm:$0xff]
        %v2961 = vld [vmem:[#allocation2 + $0x118] sm:$0xff]
        %v2962 = vld [vmem:[#allocation2 + $0x128] sm:$0xff]
        %v2963 = vld [vmem:[#allocation2 + $0x130] sm:$0xff]
        %v2964 = vld [vmem:[#allocation2 + $0x140] sm:$0xff]
        %v2965 = vld [vmem:[#allocation2 + $0x148] sm:$0xff]
        %v2966 = vld [vmem:[#allocation2 + $0x158] sm:$0xff]
        %v2967 = vld [vmem:[#allocation2 + $0x160] sm:$0xff]
        %v2968 = vld [vmem:[#allocation2 + $0x170] sm:$0xff]
        %v2969 = vld [vmem:[#allocation2 + $0x178] sm:$0xff]
        %v2970 = vld [vmem:[#allocation2 + $0x188] sm:$0xff]
        %v2971 = vld [vmem:[#allocation2 + $0x190] sm:$0xff]
        %v2972 = vld [vmem:[#allocation2 + $0x1a0] sm:$0xff]
        %v2973 = vld [vmem:[#allocation2 + $0x1a8] sm:$0xff]
        %v2974 = vlaneseq
        %v2975 = vshrl.u32 %v2974, 7
        %v2976 = vsub.s32 2, %v2975
        %v2977 = vrot.slane %v324, %v2976
        %v2978 = vmul.f32 %v2942, %v2977
        %v2979 = vmul.f32 %v2943, %v2977
        %v2980 = vmul.f32 %v2944, %v2977
        %v2981 = vmul.f32 %v2945, %v2977
        %v2982 = vmul.f32 %v2946, %v2977
        %v2983 = vmul.f32 %v2947, %v2977
        %v2984 = vmul.f32 %v2948, %v2977
        %v2985 = vmul.f32 %v2949, %v2977
        %v2986 = vmul.f32 %v2950, %v2977
        %v2987 = vmul.f32 %v2951, %v2977
        %v2988 = vmul.f32 %v2952, %v2977
        %v2989 = vmul.f32 %v2953, %v2977
        %v2990 = vmul.f32 %v2954, %v2977
        %v2991 = vmul.f32 %v2955, %v2977
        %v2992 = vmul.f32 %v2956, %v2977
        %v2993 = vmul.f32 %v2957, %v2977
        %v2994 = vmul.f32 %v2958, %v2977
        %v2995 = vmul.f32 %v2959, %v2977
        %v2996 = vmul.f32 %v2960, %v2977
        %v2997 = vmul.f32 %v2961, %v2977
        %v2998 = vmul.f32 %v2962, %v2977
        %v2999 = vmul.f32 %v2963, %v2977
        %v3000 = vmul.f32 %v2964, %v2977
        %v3001 = vmul.f32 %v2965, %v2977
        %v3002 = vmul.f32 %v2966, %v2977
        %v3003 = vmul.f32 %v2967, %v2977
        %v3004 = vmul.f32 %v2968, %v2977
        %v3005 = vmul.f32 %v2969, %v2977
        %v3006 = vmul.f32 %v2970, %v2977
        %v3007 = vmul.f32 %v2971, %v2977
        %v3008 = vmul.f32 %v2972, %v2977
        %v3009 = vmul.f32 %v2973, %v2977
        %v3010 = vadd.f32 %v2910, %v2978
        %v3011 = vadd.f32 %v2911, %v2979
        %v3012 = vadd.f32 %v2912, %v2980
        %v3013 = vadd.f32 %v2913, %v2981
        %v3014 = vadd.f32 %v2914, %v2982
        %v3015 = vadd.f32 %v2915, %v2983
        %v3016 = vadd.f32 %v2916, %v2984
        %v3017 = vadd.f32 %v2917, %v2985
        %v3018 = vadd.f32 %v2918, %v2986
        %v3019 = vadd.f32 %v2919, %v2987
        %v3020 = vadd.f32 %v2920, %v2988
        %v3021 = vadd.f32 %v2921, %v2989
        %v3022 = vadd.f32 %v2922, %v2990
        %v3023 = vadd.f32 %v2923, %v2991
        %v3024 = vadd.f32 %v2924, %v2992
        %v3025 = vadd.f32 %v2925, %v2993
        %v3026 = vadd.f32 %v2926, %v2994
        %v3027 = vadd.f32 %v2927, %v2995
        %v3028 = vadd.f32 %v2928, %v2996
        %v3029 = vadd.f32 %v2929, %v2997
        %v3030 = vadd.f32 %v2930, %v2998
        %v3031 = vadd.f32 %v2931, %v2999
        %v3032 = vadd.f32 %v2932, %v3000
        %v3033 = vadd.f32 %v2933, %v3001
        %v3034 = vadd.f32 %v2934, %v3002
        %v3035 = vadd.f32 %v2935, %v3003
        %v3036 = vadd.f32 %v2936, %v3004
        %v3037 = vadd.f32 %v2937, %v3005
        %v3038 = vadd.f32 %v2938, %v3006
        %v3039 = vadd.f32 %v2939, %v3007
        %v3040 = vadd.f32 %v2940, %v3008
        %v3041 = vadd.f32 %v2941, %v3009
        %v3042 = vld [vmem:[%s2541 + $0x8] sm:$0xff]
        %v3043 = vld [vmem:[%s2541 + $0x10] sm:$0xff]
        %v3044 = vld [vmem:[%s2541 + $0x20] sm:$0xff]
        %v3045 = vld [vmem:[%s2541 + $0x28] sm:$0xff]
        %v3046 = vld [vmem:[%s2541 + $0x38] sm:$0xff]
        %v3047 = vld [vmem:[%s2541 + $0x40] sm:$0xff]
        %v3048 = vld [vmem:[%s2541 + $0x50] sm:$0xff]
        %v3049 = vld [vmem:[%s2541 + $0x58] sm:$0xff]
        %v3050 = vld [vmem:[%s2541 + $0x68] sm:$0xff]
        %v3051 = vld [vmem:[%s2541 + $0x70] sm:$0xff]
        %v3052 = vld [vmem:[%s2541 + $0x80] sm:$0xff]
        %v3053 = vld [vmem:[%s2541 + $0x88] sm:$0xff]
        %v3054 = vld [vmem:[%s2541 + $0x98] sm:$0xff]
        %v3055 = vld [vmem:[%s2541 + $0xa0] sm:$0xff]
        %v3056 = vld [vmem:[%s2541 + $0xb0] sm:$0xff]
        %v3057 = vld [vmem:[%s2541 + $0xb8] sm:$0xff]
        %v3058 = vld [vmem:[%s2541 + $0xf8] sm:$0xff]
        %v3059 = vld [vmem:[%s2541 + $0x100] sm:$0xff]
        %v3060 = vld [vmem:[%s2541 + $0x110] sm:$0xff]
        %v3061 = vld [vmem:[%s2541 + $0x118] sm:$0xff]
        %v3062 = vld [vmem:[%s2541 + $0x128] sm:$0xff]
        %v3063 = vld [vmem:[%s2541 + $0x130] sm:$0xff]
        %v3064 = vld [vmem:[%s2541 + $0x140] sm:$0xff]
        %v3065 = vld [vmem:[%s2541 + $0x148] sm:$0xff]
        %v3066 = vld [vmem:[%s2541 + $0x158] sm:$0xff]
        %v3067 = vld [vmem:[%s2541 + $0x160] sm:$0xff]
        %v3068 = vld [vmem:[%s2541 + $0x170] sm:$0xff]
        %v3069 = vld [vmem:[%s2541 + $0x178] sm:$0xff]
        %v3070 = vld [vmem:[%s2541 + $0x188] sm:$0xff]
        %v3071 = vld [vmem:[%s2541 + $0x190] sm:$0xff]
        %v3072 = vld [vmem:[%s2541 + $0x1a0] sm:$0xff]
        %v3073 = vld [vmem:[%s2541 + $0x1a8] sm:$0xff]
        %v3074 = vlaneseq
        %v3075 = vshrl.u32 %v3074, 7
        %v3076 = vsub.s32 0, %v3075
        %v3077 = vrot.slane %v325, %v3076
        %v3078 = vmul.f32 %v3042, %v3077
        %v3079 = vmul.f32 %v3043, %v3077
        %v3080 = vmul.f32 %v3044, %v3077
        %v3081 = vmul.f32 %v3045, %v3077
        %v3082 = vmul.f32 %v3046, %v3077
        %v3083 = vmul.f32 %v3047, %v3077
        %v3084 = vmul.f32 %v3048, %v3077
        %v3085 = vmul.f32 %v3049, %v3077
        %v3086 = vmul.f32 %v3050, %v3077
        %v3087 = vmul.f32 %v3051, %v3077
        %v3088 = vmul.f32 %v3052, %v3077
        %v3089 = vmul.f32 %v3053, %v3077
        %v3090 = vmul.f32 %v3054, %v3077
        %v3091 = vmul.f32 %v3055, %v3077
        %v3092 = vmul.f32 %v3056, %v3077
        %v3093 = vmul.f32 %v3057, %v3077
        %v3094 = vmul.f32 %v3058, %v3077
        %v3095 = vmul.f32 %v3059, %v3077
        %v3096 = vmul.f32 %v3060, %v3077
        %v3097 = vmul.f32 %v3061, %v3077
        %v3098 = vmul.f32 %v3062, %v3077
        %v3099 = vmul.f32 %v3063, %v3077
        %v3100 = vmul.f32 %v3064, %v3077
        %v3101 = vmul.f32 %v3065, %v3077
        %v3102 = vmul.f32 %v3066, %v3077
        %v3103 = vmul.f32 %v3067, %v3077
        %v3104 = vmul.f32 %v3068, %v3077
        %v3105 = vmul.f32 %v3069, %v3077
        %v3106 = vmul.f32 %v3070, %v3077
        %v3107 = vmul.f32 %v3071, %v3077
        %v3108 = vmul.f32 %v3072, %v3077
        %v3109 = vmul.f32 %v3073, %v3077
        %v3110 = vadd.f32 %v3010, %v3078
        %v3111 = vadd.f32 %v3011, %v3079
        %v3112 = vadd.f32 %v3012, %v3080
        %v3113 = vadd.f32 %v3013, %v3081
        %v3114 = vadd.f32 %v3014, %v3082
        %v3115 = vadd.f32 %v3015, %v3083
        %v3116 = vadd.f32 %v3016, %v3084
        %v3117 = vadd.f32 %v3017, %v3085
        %v3118 = vadd.f32 %v3018, %v3086
        %v3119 = vadd.f32 %v3019, %v3087
        %v3120 = vadd.f32 %v3020, %v3088
        %v3121 = vadd.f32 %v3021, %v3089
        %v3122 = vadd.f32 %v3022, %v3090
        %v3123 = vadd.f32 %v3023, %v3091
        %v3124 = vadd.f32 %v3024, %v3092
        %v3125 = vadd.f32 %v3025, %v3093
        %v3126 = vadd.f32 %v3026, %v3094
        %v3127 = vadd.f32 %v3027, %v3095
        %v3128 = vadd.f32 %v3028, %v3096
        %v3129 = vadd.f32 %v3029, %v3097
        %v3130 = vadd.f32 %v3030, %v3098
        %v3131 = vadd.f32 %v3031, %v3099
        %v3132 = vadd.f32 %v3032, %v3100
        %v3133 = vadd.f32 %v3033, %v3101
        %v3134 = vadd.f32 %v3034, %v3102
        %v3135 = vadd.f32 %v3035, %v3103
        %v3136 = vadd.f32 %v3036, %v3104
        %v3137 = vadd.f32 %v3037, %v3105
        %v3138 = vadd.f32 %v3038, %v3106
        %v3139 = vadd.f32 %v3039, %v3107
        %v3140 = vadd.f32 %v3040, %v3108
        %v3141 = vadd.f32 %v3041, %v3109
        %v3142 = vlaneseq
        %v3143 = vshrl.u32 %v3142, 7
        %v3144 = vsub.s32 5, %v3143
        %v3145 = vrot.slane %v321, %v3144
        %v3146 = vmul.f32 %v3110, %v3145
        %v3147 = vmul.f32 %v3111, %v3145
        %v3148 = vmul.f32 %v3112, %v3145
        %v3149 = vmul.f32 %v3113, %v3145
        %v3150 = vmul.f32 %v3114, %v3145
        %v3151 = vmul.f32 %v3115, %v3145
        %v3152 = vmul.f32 %v3116, %v3145
        %v3153 = vmul.f32 %v3117, %v3145
        %v3154 = vmul.f32 %v3118, %v3145
        %v3155 = vmul.f32 %v3119, %v3145
        %v3156 = vmul.f32 %v3120, %v3145
        %v3157 = vmul.f32 %v3121, %v3145
        %v3158 = vmul.f32 %v3122, %v3145
        %v3159 = vmul.f32 %v3123, %v3145
        %v3160 = vmul.f32 %v3124, %v3145
        %v3161 = vmul.f32 %v3125, %v3145
        %v3162 = vmul.f32 %v3126, %v3145
        %v3163 = vmul.f32 %v3127, %v3145
        %v3164 = vmul.f32 %v3128, %v3145
        %v3165 = vmul.f32 %v3129, %v3145
        %v3166 = vmul.f32 %v3130, %v3145
        %v3167 = vmul.f32 %v3131, %v3145
        %v3168 = vmul.f32 %v3132, %v3145
        %v3169 = vmul.f32 %v3133, %v3145
        %v3170 = vmul.f32 %v3134, %v3145
        %v3171 = vmul.f32 %v3135, %v3145
        %v3172 = vmul.f32 %v3136, %v3145
        %v3173 = vmul.f32 %v3137, %v3145
        %v3174 = vmul.f32 %v3138, %v3145
        %v3175 = vmul.f32 %v3139, %v3145
        %v3176 = vmul.f32 %v3140, %v3145
        %v3177 = vmul.f32 %v3141, %v3145
        %v3178 = vlaneseq
        %v3179 = vshrl.u32 %v3178, 7
        %v3180 = vsub.s32 6, %v3179
        %v3181 = vrot.slane %v321, %v3180
        %v3182 = vadd.f32 %v3146, %v3181
        %v3183 = vadd.f32 %v3147, %v3181
        %v3184 = vadd.f32 %v3148, %v3181
        %v3185 = vadd.f32 %v3149, %v3181
        %v3186 = vadd.f32 %v3150, %v3181
        %v3187 = vadd.f32 %v3151, %v3181
        %v3188 = vadd.f32 %v3152, %v3181
        %v3189 = vadd.f32 %v3153, %v3181
        %v3190 = vadd.f32 %v3154, %v3181
        %v3191 = vadd.f32 %v3155, %v3181
        %v3192 = vadd.f32 %v3156, %v3181
        %v3193 = vadd.f32 %v3157, %v3181
        %v3194 = vadd.f32 %v3158, %v3181
        %v3195 = vadd.f32 %v3159, %v3181
        %v3196 = vadd.f32 %v3160, %v3181
        %v3197 = vadd.f32 %v3161, %v3181
        %v3198 = vadd.f32 %v3162, %v3181
        %v3199 = vadd.f32 %v3163, %v3181
        %v3200 = vadd.f32 %v3164, %v3181
        %v3201 = vadd.f32 %v3165, %v3181
        %v3202 = vadd.f32 %v3166, %v3181
        %v3203 = vadd.f32 %v3167, %v3181
        %v3204 = vadd.f32 %v3168, %v3181
        %v3205 = vadd.f32 %v3169, %v3181
        %v3206 = vadd.f32 %v3170, %v3181
        %v3207 = vadd.f32 %v3171, %v3181
        %v3208 = vadd.f32 %v3172, %v3181
        %v3209 = vadd.f32 %v3173, %v3181
        %v3210 = vadd.f32 %v3174, %v3181
        %v3211 = vadd.f32 %v3175, %v3181
        %v3212 = vadd.f32 %v3176, %v3181
        %v3213 = vadd.f32 %v3177, %v3181
        %vm3214 = vcmp.ge.f32.partialorder %v3182, 0.0
        %vm3215 = vcmp.ge.f32.partialorder %v3183, 0.0
        %vm3216 = vcmp.ge.f32.partialorder %v3184, 0.0
        %vm3217 = vcmp.ge.f32.partialorder %v3185, 0.0
        %vm3218 = vcmp.ge.f32.partialorder %v3186, 0.0
        %vm3219 = vcmp.ge.f32.partialorder %v3187, 0.0
        %vm3220 = vcmp.ge.f32.partialorder %v3188, 0.0
        %vm3221 = vcmp.ge.f32.partialorder %v3189, 0.0
        %vm3222 = vcmp.ge.f32.partialorder %v3190, 0.0
        %vm3223 = vcmp.ge.f32.partialorder %v3191, 0.0
        %vm3224 = vcmp.ge.f32.partialorder %v3192, 0.0
        %vm3225 = vcmp.ge.f32.partialorder %v3193, 0.0
        %vm3226 = vcmp.ge.f32.partialorder %v3194, 0.0
        %vm3227 = vcmp.ge.f32.partialorder %v3195, 0.0
        %vm3228 = vcmp.ge.f32.partialorder %v3196, 0.0
        %vm3229 = vcmp.ge.f32.partialorder %v3197, 0.0
        %vm3230 = vcmp.ge.f32.partialorder %v3198, 0.0
        %vm3231 = vcmp.ge.f32.partialorder %v3199, 0.0
        %vm3232 = vcmp.ge.f32.partialorder %v3200, 0.0
        %vm3233 = vcmp.ge.f32.partialorder %v3201, 0.0
        %vm3234 = vcmp.ge.f32.partialorder %v3202, 0.0
        %vm3235 = vcmp.ge.f32.partialorder %v3203, 0.0
        %vm3236 = vcmp.ge.f32.partialorder %v3204, 0.0
        %vm3237 = vcmp.ge.f32.partialorder %v3205, 0.0
        %vm3238 = vcmp.ge.f32.partialorder %v3206, 0.0
        %vm3239 = vcmp.ge.f32.partialorder %v3207, 0.0
        %vm3240 = vcmp.ge.f32.partialorder %v3208, 0.0
        %vm3241 = vcmp.ge.f32.partialorder %v3209, 0.0
        %vm3242 = vcmp.ge.f32.partialorder %v3210, 0.0
        %vm3243 = vcmp.ge.f32.partialorder %v3211, 0.0
        %vm3244 = vcmp.ge.f32.partialorder %v3212, 0.0
        %vm3245 = vcmp.ge.f32.partialorder %v3213, 0.0
        %v3246 = vlaneseq
        %v3247 = vshrl.u32 %v3246, 7
        %v3248 = vsub.s32 7, %v3247
        %v3249 = vrot.slane %v321, %v3248
        %v3250 = vmul.f32 %v3249, %v3182
        %v3251 = vmul.f32 %v3249, %v3183
        %v3252 = vmul.f32 %v3249, %v3184
        %v3253 = vmul.f32 %v3249, %v3185
        %v3254 = vmul.f32 %v3249, %v3186
        %v3255 = vmul.f32 %v3249, %v3187
        %v3256 = vmul.f32 %v3249, %v3188
        %v3257 = vmul.f32 %v3249, %v3189
        %v3258 = vmul.f32 %v3249, %v3190
        %v3259 = vmul.f32 %v3249, %v3191
        %v3260 = vmul.f32 %v3249, %v3192
        %v3261 = vmul.f32 %v3249, %v3193
        %v3262 = vmul.f32 %v3249, %v3194
        %v3263 = vmul.f32 %v3249, %v3195
        %v3264 = vmul.f32 %v3249, %v3196
        %v3265 = vmul.f32 %v3249, %v3197
        %v3266 = vmul.f32 %v3249, %v3198
        %v3267 = vmul.f32 %v3249, %v3199
        %v3268 = vmul.f32 %v3249, %v3200
        %v3269 = vmul.f32 %v3249, %v3201
        %v3270 = vmul.f32 %v3249, %v3202
        %v3271 = vmul.f32 %v3249, %v3203
        %v3272 = vmul.f32 %v3249, %v3204
        %v3273 = vmul.f32 %v3249, %v3205
        %v3274 = vmul.f32 %v3249, %v3206
        %v3275 = vmul.f32 %v3249, %v3207
        %v3276 = vmul.f32 %v3249, %v3208
        %v3277 = vmul.f32 %v3249, %v3209
        %v3278 = vmul.f32 %v3249, %v3210
        %v3279 = vmul.f32 %v3249, %v3211
        %v3280 = vmul.f32 %v3249, %v3212
        %v3281 = vmul.f32 %v3249, %v3213
        %v3282 = vsel %vm3214, %v3182, %v3250
        %v3283 = vsel %vm3215, %v3183, %v3251
        %v3284 = vsel %vm3216, %v3184, %v3252
        %v3285 = vsel %vm3217, %v3185, %v3253
        %v3286 = vsel %vm3218, %v3186, %v3254
        %v3287 = vsel %vm3219, %v3187, %v3255
        %v3288 = vsel %vm3220, %v3188, %v3256
        %v3289 = vsel %vm3221, %v3189, %v3257
        %v3290 = vsel %vm3222, %v3190, %v3258
        %v3291 = vsel %vm3223, %v3191, %v3259
        %v3292 = vsel %vm3224, %v3192, %v3260
        %v3293 = vsel %vm3225, %v3193, %v3261
        %v3294 = vsel %vm3226, %v3194, %v3262
        %v3295 = vsel %vm3227, %v3195, %v3263
        %v3296 = vsel %vm3228, %v3196, %v3264
        %v3297 = vsel %vm3229, %v3197, %v3265
        %v3298 = vsel %vm3230, %v3198, %v3266
        %v3299 = vsel %vm3231, %v3199, %v3267
        %v3300 = vsel %vm3232, %v3200, %v3268
        %v3301 = vsel %vm3233, %v3201, %v3269
        %v3302 = vsel %vm3234, %v3202, %v3270
        %v3303 = vsel %vm3235, %v3203, %v3271
        %v3304 = vsel %vm3236, %v3204, %v3272
        %v3305 = vsel %vm3237, %v3205, %v3273
        %v3306 = vsel %vm3238, %v3206, %v3274
        %v3307 = vsel %vm3239, %v3207, %v3275
        %v3308 = vsel %vm3240, %v3208, %v3276
        %v3309 = vsel %vm3241, %v3209, %v3277
        %v3310 = vsel %vm3242, %v3210, %v3278
        %v3311 = vsel %vm3243, %v3211, %v3279
        %v3312 = vsel %vm3244, %v3212, %v3280
        %v3313 = vsel %vm3245, %v3213, %v3281
        %v3314 = vpack.c.bf16 %v3283, %v3282
        %v3315 = vpack.c.bf16 %v3285, %v3284
        %v3316 = vpack.c.bf16 %v3287, %v3286
        %v3317 = vpack.c.bf16 %v3289, %v3288
        %v3318 = vpack.c.bf16 %v3291, %v3290
        %v3319 = vpack.c.bf16 %v3293, %v3292
        %v3320 = vpack.c.bf16 %v3295, %v3294
        %v3321 = vpack.c.bf16 %v3297, %v3296
        %v3322 = vpack.c.bf16 %v3299, %v3298
        %v3323 = vpack.c.bf16 %v3301, %v3300
        %v3324 = vpack.c.bf16 %v3303, %v3302
        %v3325 = vpack.c.bf16 %v3305, %v3304
        %v3326 = vpack.c.bf16 %v3307, %v3306
        %v3327 = vpack.c.bf16 %v3309, %v3308
        %v3328 = vpack.c.bf16 %v3311, %v3310
        %v3329 = vpack.c.bf16 %v3313, %v3312
        %s3330 = smul.addr %s319, 4
        %s3331 = scalar_lea.vmem %s2, %s3330
        %v3332 = vld [vmem:[%s3331] sm:$0xf]
        %v3333 = vld [vmem:[%s3331 + $0x4] sm:$0xf]
        %v3334 = vld [vmem:[%s3331 + $0x8] sm:$0xf]
        %v3335 = vld [vmem:[%s3331 + $0xc] sm:$0xf]
        %v3336 = vld [vmem:[%s3331 + $0x10] sm:$0xf]
        %v3337 = vld [vmem:[%s3331 + $0x14] sm:$0xf]
        %v3338 = vld [vmem:[%s3331 + $0x18] sm:$0xf]
        %v3339 = vld [vmem:[%s3331 + $0x1c] sm:$0xf]
        %v3340 = vld [vmem:[%s3331 + $0x20] sm:$0xf]
        %v3341 = vld [vmem:[%s3331 + $0x24] sm:$0xf]
        %v3342 = vld [vmem:[%s3331 + $0x28] sm:$0xf]
        %v3343 = vld [vmem:[%s3331 + $0x2c] sm:$0xf]
        %v3344 = vld [vmem:[%s3331 + $0x30] sm:$0xf]
        %v3345 = vld [vmem:[%s3331 + $0x34] sm:$0xf]
        %v3346 = vld [vmem:[%s3331 + $0x38] sm:$0xf]
        %v3347 = vld [vmem:[%s3331 + $0x3c] sm:$0xf]
        %v3348 = vlaneseq
        %v3349 = vshrl.u32 %v3348, 7
        %v3350 = vsub.s32 0, %v3349
        %v3351 = vrot.slane %v322, %v3350
        %v3368 = vunpack.c.l.b16 %v3332
        %v3369 = vunpack.c.l.b16 %v3333
        %v3370 = vunpack.c.l.b16 %v3334
        %v3371 = vunpack.c.l.b16 %v3335
        %v3372 = vunpack.c.l.b16 %v3336
        %v3373 = vunpack.c.l.b16 %v3337
        %v3374 = vunpack.c.l.b16 %v3338
        %v3375 = vunpack.c.l.b16 %v3339
        %v3376 = vunpack.c.l.b16 %v3340
        %v3377 = vunpack.c.l.b16 %v3341
        %v3378 = vunpack.c.l.b16 %v3342
        %v3379 = vunpack.c.l.b16 %v3343
        %v3380 = vunpack.c.l.b16 %v3344
        %v3381 = vunpack.c.l.b16 %v3345
        %v3382 = vunpack.c.l.b16 %v3346
        %v3383 = vunpack.c.l.b16 %v3347
        %v3384 = vpack.c.b16 %v3369, %v3368
        %v3385 = vpack.c.b16 %v3371, %v3370
        %v3386 = vpack.c.b16 %v3373, %v3372
        %v3387 = vpack.c.b16 %v3375, %v3374
        %v3388 = vpack.c.b16 %v3377, %v3376
        %v3389 = vpack.c.b16 %v3379, %v3378
        %v3390 = vpack.c.b16 %v3381, %v3380
        %v3391 = vpack.c.b16 %v3383, %v3382
        %3400 = vmatprep.subr.bf16.mxu0 0
        %3401 = vmatpush1.bf16.msra.mxu0 %v3384
        %3402 = vmatprep.subr.bf16.mxu0 0
        %3403 = vmatpush1.bf16.msra.mxu0 %v3385
        %3404 = vmatprep.subr.bf16.mxu0 0
        %3405 = vmatpush1.bf16.msra.mxu0 %v3386
        %3406 = vmatprep.subr.bf16.mxu0 0
        %3407 = vmatpush1.bf16.msra.mxu0 %v3387
        %3408 = vmatprep.subr.bf16.mxu0 0
        %3409 = vmatpush1.bf16.msra.mxu0 %v3388
        %3410 = vmatprep.subr.bf16.mxu0 0
        %3411 = vmatpush1.bf16.msra.mxu0 %v3389
        %3412 = vmatprep.subr.bf16.mxu0 0
        %3413 = vmatpush1.bf16.msra.mxu0 %v3390
        %3414 = vmatprep.subr.bf16.mxu0 0
        %3415 = vmatpush1.bf16.msra.mxu0 %v3391
        %3416 = vmatprep.subr.bf16.mxu0 0
        %3417 = vmatpush1.bf16.msra.mxu0 0
        %3418 = vmatprep.subr.bf16.mxu0 0
        %3419 = vmatpush1.bf16.msra.mxu0 0
        %3420 = vmatprep.subr.bf16.mxu0 0
        %3421 = vmatpush1.bf16.msra.mxu0 0
        %3422 = vmatprep.subr.bf16.mxu0 0
        %3423 = vmatpush1.bf16.msra.mxu0 0
        %3424 = vmatprep.subr.bf16.mxu0 0
        %3425 = vmatpush1.bf16.msra.mxu0 0
        %3426 = vmatprep.subr.bf16.mxu0 0
        %3427 = vmatpush1.bf16.msra.mxu0 0
        %3428 = vmatprep.subr.bf16.mxu0 0
        %3429 = vmatpush1.bf16.msra.mxu0 0
        %3430 = vmatprep.subr.bf16.mxu0 0
        %3431 = vmatpush1.bf16.msra.mxu0 0
        %3432 = vmatprep.mubr.bf16.mxu0 0
        %3433 = vmatmul.mubr.bf16.gmra.mrb[0].mxu0 %v3314
        %v3434 = vpop.f32.mrb[0].mxu0
        %v3435 = vadd.f32 %v3351, %v3434
        %v3436 = vpop.f32.mrb[0].mxu0
        %v3437 = vpop.f32.mrb[0].mxu0
        %v3438 = vadd.f32 %v3351, %v3437
        %v3439 = vpop.f32.mrb[0].mxu0
        %3440 = vmatprep.mubr.bf16.mxu0 0
        %3441 = vmatmul.mubr.bf16.gmra.mrb[0].mxu0 %v3315
        %v3442 = vpop.f32.mrb[0].mxu0
        %v3443 = vadd.f32 %v3351, %v3442
        %v3444 = vpop.f32.mrb[0].mxu0
        %v3445 = vpop.f32.mrb[0].mxu0
        %v3446 = vadd.f32 %v3351, %v3445
        %v3447 = vpop.f32.mrb[0].mxu0
        %3448 = vmatprep.mubr.bf16.mxu0 0
        %3449 = vmatmul.mubr.bf16.gmra.mrb[0].mxu0 %v3316
        %v3450 = vpop.f32.mrb[0].mxu0
        %v3451 = vadd.f32 %v3351, %v3450
        %v3452 = vpop.f32.mrb[0].mxu0
        %v3453 = vpop.f32.mrb[0].mxu0
        %v3454 = vadd.f32 %v3351, %v3453
        %v3455 = vpop.f32.mrb[0].mxu0
        %3456 = vmatprep.mubr.bf16.mxu0 0
        %3457 = vmatmul.mubr.bf16.gmra.mrb[0].mxu0 %v3317
        %v3458 = vpop.f32.mrb[0].mxu0
        %v3459 = vadd.f32 %v3351, %v3458
        %v3460 = vpop.f32.mrb[0].mxu0
        %v3461 = vpop.f32.mrb[0].mxu0
        %v3462 = vadd.f32 %v3351, %v3461
        %v3463 = vpop.f32.mrb[0].mxu0
        %3464 = vmatprep.mubr.bf16.mxu0 0
        %3465 = vmatmul.mubr.bf16.gmra.mrb[0].mxu0 %v3318
        %v3466 = vpop.f32.mrb[0].mxu0
        %v3467 = vadd.f32 %v3351, %v3466
        %v3468 = vpop.f32.mrb[0].mxu0
        %v3469 = vpop.f32.mrb[0].mxu0
        %v3470 = vadd.f32 %v3351, %v3469
        %v3471 = vpop.f32.mrb[0].mxu0
        %3472 = vmatprep.mubr.bf16.mxu0 0
        %3473 = vmatmul.mubr.bf16.gmra.mrb[0].mxu0 %v3319
        %v3474 = vpop.f32.mrb[0].mxu0
        %v3475 = vadd.f32 %v3351, %v3474
        %v3476 = vpop.f32.mrb[0].mxu0
        %v3477 = vpop.f32.mrb[0].mxu0
        %v3478 = vadd.f32 %v3351, %v3477
        %v3479 = vpop.f32.mrb[0].mxu0
        %3480 = vmatprep.mubr.bf16.mxu0 0
        %3481 = vmatmul.mubr.bf16.gmra.mrb[0].mxu0 %v3320
        %v3482 = vpop.f32.mrb[0].mxu0
        %v3483 = vadd.f32 %v3351, %v3482
        %v3484 = vpop.f32.mrb[0].mxu0
        %v3485 = vpop.f32.mrb[0].mxu0
        %v3486 = vadd.f32 %v3351, %v3485
        %v3487 = vpop.f32.mrb[0].mxu0
        %3488 = vmatprep.mubr.bf16.mxu0 0
        %3489 = vmatmul.mubr.bf16.gmra.mrb[0].mxu0 %v3321
        %v3490 = vpop.f32.mrb[0].mxu0
        %v3491 = vadd.f32 %v3351, %v3490
        %v3492 = vpop.f32.mrb[0].mxu0
        %v3493 = vpop.f32.mrb[0].mxu0
        %v3494 = vadd.f32 %v3351, %v3493
        %v3495 = vpop.f32.mrb[0].mxu0
        %3496 = vmatprep.mubr.bf16.mxu0 0
        %3497 = vmatmul.mubr.bf16.gmra.mrb[0].mxu0 %v3322
        %v3498 = vpop.f32.mrb[0].mxu0
        %v3499 = vadd.f32 %v3351, %v3498
        %v3500 = vpop.f32.mrb[0].mxu0
        %v3501 = vpop.f32.mrb[0].mxu0
        %v3502 = vadd.f32 %v3351, %v3501
        %v3503 = vpop.f32.mrb[0].mxu0
        %3504 = vmatprep.mubr.bf16.mxu0 0
        %3505 = vmatmul.mubr.bf16.gmra.mrb[0].mxu0 %v3323
        %v3506 = vpop.f32.mrb[0].mxu0
        %v3507 = vadd.f32 %v3351, %v3506
        %v3508 = vpop.f32.mrb[0].mxu0
        %v3509 = vpop.f32.mrb[0].mxu0
        %v3510 = vadd.f32 %v3351, %v3509
        %v3511 = vpop.f32.mrb[0].mxu0
        %3512 = vmatprep.mubr.bf16.mxu0 0
        %3513 = vmatmul.mubr.bf16.gmra.mrb[0].mxu0 %v3324
        %v3514 = vpop.f32.mrb[0].mxu0
        %v3515 = vadd.f32 %v3351, %v3514
        %v3516 = vpop.f32.mrb[0].mxu0
        %v3517 = vpop.f32.mrb[0].mxu0
        %v3518 = vadd.f32 %v3351, %v3517
        %v3519 = vpop.f32.mrb[0].mxu0
        %3520 = vmatprep.mubr.bf16.mxu0 0
        %3521 = vmatmul.mubr.bf16.gmra.mrb[0].mxu0 %v3325
        %v3522 = vpop.f32.mrb[0].mxu0
        %v3523 = vadd.f32 %v3351, %v3522
        %v3524 = vpop.f32.mrb[0].mxu0
        %v3525 = vpop.f32.mrb[0].mxu0
        %v3526 = vadd.f32 %v3351, %v3525
        %v3527 = vpop.f32.mrb[0].mxu0
        %3528 = vmatprep.mubr.bf16.mxu0 0
        %3529 = vmatmul.mubr.bf16.gmra.mrb[0].mxu0 %v3326
        %v3530 = vpop.f32.mrb[0].mxu0
        %v3531 = vadd.f32 %v3351, %v3530
        %v3532 = vpop.f32.mrb[0].mxu0
        %v3533 = vpop.f32.mrb[0].mxu0
        %v3534 = vadd.f32 %v3351, %v3533
        %v3535 = vpop.f32.mrb[0].mxu0
        %3536 = vmatprep.mubr.bf16.mxu0 0
        %3537 = vmatmul.mubr.bf16.gmra.mrb[0].mxu0 %v3327
        %v3538 = vpop.f32.mrb[0].mxu0
        %v3539 = vadd.f32 %v3351, %v3538
        %v3540 = vpop.f32.mrb[0].mxu0
        %v3541 = vpop.f32.mrb[0].mxu0
        %v3542 = vadd.f32 %v3351, %v3541
        %v3543 = vpop.f32.mrb[0].mxu0
        %3544 = vmatprep.mubr.bf16.mxu0 0
        %3545 = vmatmul.mubr.bf16.gmra.mrb[0].mxu0 %v3328
        %v3546 = vpop.f32.mrb[0].mxu0
        %v3547 = vadd.f32 %v3351, %v3546
        %v3548 = vpop.f32.mrb[0].mxu0
        %v3549 = vpop.f32.mrb[0].mxu0
        %v3550 = vadd.f32 %v3351, %v3549
        %v3551 = vpop.f32.mrb[0].mxu0
        %3552 = vmatprep.mubr.bf16.mxu0 0
        %3553 = vmatmul.mubr.bf16.gmra.mrb[0].mxu0 %v3329
        %v3554 = vpop.f32.mrb[0].mxu0
        %v3555 = vadd.f32 %v3351, %v3554
        %v3556 = vpop.f32.mrb[0].mxu0
        %v3557 = vpop.f32.mrb[0].mxu0
        %v3558 = vadd.f32 %v3351, %v3557
        %v3559 = vpop.f32.mrb[0].mxu0
        %3560 = vdwg.mxu0
        %v3561 = vld [vmem:[%s5] sm:$0xff]
        %v3562 = vld [vmem:[%s5 + $0x8] sm:$0xff]
        %v3563 = vld [vmem:[%s5 + $0x10] sm:$0xff]
        %v3564 = vld [vmem:[%s5 + $0x18] sm:$0xff]
        %v3565 = vld [vmem:[%s5 + $0x20] sm:$0xff]
        %v3566 = vld [vmem:[%s5 + $0x28] sm:$0xff]
        %v3567 = vld [vmem:[%s5 + $0x30] sm:$0xff]
        %v3568 = vld [vmem:[%s5 + $0x38] sm:$0xff]
        %v3569 = vld [vmem:[%s5 + $0x40] sm:$0xff]
        %v3570 = vld [vmem:[%s5 + $0x48] sm:$0xff]
        %v3571 = vld [vmem:[%s5 + $0x50] sm:$0xff]
        %v3572 = vld [vmem:[%s5 + $0x58] sm:$0xff]
        %v3573 = vld [vmem:[%s5 + $0x60] sm:$0xff]
        %v3574 = vld [vmem:[%s5 + $0x68] sm:$0xff]
        %v3575 = vld [vmem:[%s5 + $0x70] sm:$0xff]
        %v3576 = vld [vmem:[%s5 + $0x78] sm:$0xff]
        %v3577 = vld [vmem:[%s5 + $0x80] sm:$0xff]
        %v3578 = vld [vmem:[%s5 + $0x88] sm:$0xff]
        %v3579 = vld [vmem:[%s5 + $0x90] sm:$0xff]
        %v3580 = vld [vmem:[%s5 + $0x98] sm:$0xff]
        %v3581 = vld [vmem:[%s5 + $0xa0] sm:$0xff]
        %v3582 = vld [vmem:[%s5 + $0xa8] sm:$0xff]
        %v3583 = vld [vmem:[%s5 + $0xb0] sm:$0xff]
        %v3584 = vld [vmem:[%s5 + $0xb8] sm:$0xff]
        %v3585 = vld [vmem:[%s5 + $0xc0] sm:$0xff]
        %v3586 = vld [vmem:[%s5 + $0xc8] sm:$0xff]
        %v3587 = vld [vmem:[%s5 + $0xd0] sm:$0xff]
        %v3588 = vld [vmem:[%s5 + $0xd8] sm:$0xff]
        %v3589 = vld [vmem:[%s5 + $0xe0] sm:$0xff]
        %v3590 = vld [vmem:[%s5 + $0xe8] sm:$0xff]
        %v3591 = vld [vmem:[%s5 + $0xf0] sm:$0xff]
        %v3592 = vld [vmem:[%s5 + $0xf8] sm:$0xff]
        %v3593 = vadd.f32 %v3435, %v3561
        %v3594 = vadd.f32 %v3438, %v3562
        %v3595 = vadd.f32 %v3443, %v3563
        %v3596 = vadd.f32 %v3446, %v3564
        %v3597 = vadd.f32 %v3451, %v3565
        %v3598 = vadd.f32 %v3454, %v3566
        %v3599 = vadd.f32 %v3459, %v3567
        %v3600 = vadd.f32 %v3462, %v3568
        %v3601 = vadd.f32 %v3467, %v3569
        %v3602 = vadd.f32 %v3470, %v3570
        %v3603 = vadd.f32 %v3475, %v3571
        %v3604 = vadd.f32 %v3478, %v3572
        %v3605 = vadd.f32 %v3483, %v3573
        %v3606 = vadd.f32 %v3486, %v3574
        %v3607 = vadd.f32 %v3491, %v3575
        %v3608 = vadd.f32 %v3494, %v3576
        %v3609 = vadd.f32 %v3499, %v3577
        %v3610 = vadd.f32 %v3502, %v3578
        %v3611 = vadd.f32 %v3507, %v3579
        %v3612 = vadd.f32 %v3510, %v3580
        %v3613 = vadd.f32 %v3515, %v3581
        %v3614 = vadd.f32 %v3518, %v3582
        %v3615 = vadd.f32 %v3523, %v3583
        %v3616 = vadd.f32 %v3526, %v3584
        %v3617 = vadd.f32 %v3531, %v3585
        %v3618 = vadd.f32 %v3534, %v3586
        %v3619 = vadd.f32 %v3539, %v3587
        %v3620 = vadd.f32 %v3542, %v3588
        %v3621 = vadd.f32 %v3547, %v3589
        %v3622 = vadd.f32 %v3550, %v3590
        %v3623 = vadd.f32 %v3555, %v3591
        %v3624 = vadd.f32 %v3558, %v3592
        %3625 = vst [vmem:[%s5] sm:$0xff] %v3593
        %3626 = vst [vmem:[%s5 + $0x8] sm:$0xff] %v3594
        %3627 = vst [vmem:[%s5 + $0x10] sm:$0xff] %v3595
        %3628 = vst [vmem:[%s5 + $0x18] sm:$0xff] %v3596
        %3629 = vst [vmem:[%s5 + $0x20] sm:$0xff] %v3597
        %3630 = vst [vmem:[%s5 + $0x28] sm:$0xff] %v3598
        %3631 = vst [vmem:[%s5 + $0x30] sm:$0xff] %v3599
        %3632 = vst [vmem:[%s5 + $0x38] sm:$0xff] %v3600
        %3633 = vst [vmem:[%s5 + $0x40] sm:$0xff] %v3601
        %3634 = vst [vmem:[%s5 + $0x48] sm:$0xff] %v3602
        %3635 = vst [vmem:[%s5 + $0x50] sm:$0xff] %v3603
        %3636 = vst [vmem:[%s5 + $0x58] sm:$0xff] %v3604
        %3637 = vst [vmem:[%s5 + $0x60] sm:$0xff] %v3605
        %3638 = vst [vmem:[%s5 + $0x68] sm:$0xff] %v3606
        %3639 = vst [vmem:[%s5 + $0x70] sm:$0xff] %v3607
        %3640 = vst [vmem:[%s5 + $0x78] sm:$0xff] %v3608
        %3641 = vst [vmem:[%s5 + $0x80] sm:$0xff] %v3609
        %3642 = vst [vmem:[%s5 + $0x88] sm:$0xff] %v3610
        %3643 = vst [vmem:[%s5 + $0x90] sm:$0xff] %v3611
        %3644 = vst [vmem:[%s5 + $0x98] sm:$0xff] %v3612
        %3645 = vst [vmem:[%s5 + $0xa0] sm:$0xff] %v3613
        %3646 = vst [vmem:[%s5 + $0xa8] sm:$0xff] %v3614
        %3647 = vst [vmem:[%s5 + $0xb0] sm:$0xff] %v3615
        %3648 = vst [vmem:[%s5 + $0xb8] sm:$0xff] %v3616
        %3649 = vst [vmem:[%s5 + $0xc0] sm:$0xff] %v3617
        %3650 = vst [vmem:[%s5 + $0xc8] sm:$0xff] %v3618
        %3651 = vst [vmem:[%s5 + $0xd0] sm:$0xff] %v3619
        %3652 = vst [vmem:[%s5 + $0xd8] sm:$0xff] %v3620
        %3653 = vst [vmem:[%s5 + $0xe0] sm:$0xff] %v3621
        %3654 = vst [vmem:[%s5 + $0xe8] sm:$0xff] %v3622
        %3655 = vst [vmem:[%s5 + $0xf0] sm:$0xff] %v3623
        %3656 = vst [vmem:[%s5 + $0xf8] sm:$0xff] %v3624
      $region52: #{tfcm_pallas.1} parent=39 // pred_fallthru
        _
      %p3657 = scmp.eq.s32.totalorder %s16, 2
      // Predicated region
      $region53: #{tfcm_pallas.1} parent=39 // pred_check
        %p3658 = pneg %p3657
      $region54: #{tfcm_pallas.1} parent=39 // pred_check_branch
        %3660 = sbr.rel (%p3658) target = $region56
      $region55: #{tfcm_pallas.1} parent=39 // pred_region
        %v3661 = vld [vmem:[%s777 + $0x8] sm:$0xff]
        %v3662 = vld [vmem:[%s777 + $0x10] sm:$0xff]
        %v3663 = vld [vmem:[%s777 + $0x20] sm:$0xff]
        %v3664 = vld [vmem:[%s777 + $0x28] sm:$0xff]
        %v3665 = vld [vmem:[%s777 + $0x38] sm:$0xff]
        %v3666 = vld [vmem:[%s777 + $0x40] sm:$0xff]
        %v3667 = vld [vmem:[%s777 + $0x50] sm:$0xff]
        %v3668 = vld [vmem:[%s777 + $0x58] sm:$0xff]
        %v3669 = vld [vmem:[%s777 + $0x68] sm:$0xff]
        %v3670 = vld [vmem:[%s777 + $0x70] sm:$0xff]
        %v3671 = vld [vmem:[%s777 + $0x80] sm:$0xff]
        %v3672 = vld [vmem:[%s777 + $0x88] sm:$0xff]
        %v3673 = vld [vmem:[%s777 + $0x98] sm:$0xff]
        %v3674 = vld [vmem:[%s777 + $0xa0] sm:$0xff]
        %v3675 = vld [vmem:[%s777 + $0xb0] sm:$0xff]
        %v3676 = vld [vmem:[%s777 + $0xb8] sm:$0xff]
        %v3677 = vld [vmem:[%s777 + $0xf8] sm:$0xff]
        %v3678 = vld [vmem:[%s777 + $0x100] sm:$0xff]
        %v3679 = vld [vmem:[%s777 + $0x110] sm:$0xff]
        %v3680 = vld [vmem:[%s777 + $0x118] sm:$0xff]
        %v3681 = vld [vmem:[%s777 + $0x128] sm:$0xff]
        %v3682 = vld [vmem:[%s777 + $0x130] sm:$0xff]
        %v3683 = vld [vmem:[%s777 + $0x140] sm:$0xff]
        %v3684 = vld [vmem:[%s777 + $0x148] sm:$0xff]
        %v3685 = vld [vmem:[%s777 + $0x158] sm:$0xff]
        %v3686 = vld [vmem:[%s777 + $0x160] sm:$0xff]
        %v3687 = vld [vmem:[%s777 + $0x170] sm:$0xff]
        %v3688 = vld [vmem:[%s777 + $0x178] sm:$0xff]
        %v3689 = vld [vmem:[%s777 + $0x188] sm:$0xff]
        %v3690 = vld [vmem:[%s777 + $0x190] sm:$0xff]
        %v3691 = vld [vmem:[%s777 + $0x1a0] sm:$0xff]
        %v3692 = vld [vmem:[%s777 + $0x1a8] sm:$0xff]
        %v3693 = vlaneseq
        %v3694 = vshrl.u32 %v3693, 7
        %v3695 = vsub.s32 5, %v3694
        %v3696 = vrot.slane %v324, %v3695
        %v3697 = vmul.f32 %v3661, %v3696
        %v3698 = vmul.f32 %v3662, %v3696
        %v3699 = vmul.f32 %v3663, %v3696
        %v3700 = vmul.f32 %v3664, %v3696
        %v3701 = vmul.f32 %v3665, %v3696
        %v3702 = vmul.f32 %v3666, %v3696
        %v3703 = vmul.f32 %v3667, %v3696
        %v3704 = vmul.f32 %v3668, %v3696
        %v3705 = vmul.f32 %v3669, %v3696
        %v3706 = vmul.f32 %v3670, %v3696
        %v3707 = vmul.f32 %v3671, %v3696
        %v3708 = vmul.f32 %v3672, %v3696
        %v3709 = vmul.f32 %v3673, %v3696
        %v3710 = vmul.f32 %v3674, %v3696
        %v3711 = vmul.f32 %v3675, %v3696
        %v3712 = vmul.f32 %v3676, %v3696
        %v3713 = vmul.f32 %v3677, %v3696
        %v3714 = vmul.f32 %v3678, %v3696
        %v3715 = vmul.f32 %v3679, %v3696
        %v3716 = vmul.f32 %v3680, %v3696
        %v3717 = vmul.f32 %v3681, %v3696
        %v3718 = vmul.f32 %v3682, %v3696
        %v3719 = vmul.f32 %v3683, %v3696
        %v3720 = vmul.f32 %v3684, %v3696
        %v3721 = vmul.f32 %v3685, %v3696
        %v3722 = vmul.f32 %v3686, %v3696
        %v3723 = vmul.f32 %v3687, %v3696
        %v3724 = vmul.f32 %v3688, %v3696
        %v3725 = vmul.f32 %v3689, %v3696
        %v3726 = vmul.f32 %v3690, %v3696
        %v3727 = vmul.f32 %v3691, %v3696
        %v3728 = vmul.f32 %v3692, %v3696
        %v3729 = vlaneseq
        %v3730 = vshrl.u32 %v3729, 7
        %v3731 = vsub.s32 4, %v3730
        %v3732 = vrot.slane %v321, %v3731
        %v3733 = vadd.f32 %v3697, %v3732
        %v3734 = vadd.f32 %v3698, %v3732
        %v3735 = vadd.f32 %v3699, %v3732
        %v3736 = vadd.f32 %v3700, %v3732
        %v3737 = vadd.f32 %v3701, %v3732
        %v3738 = vadd.f32 %v3702, %v3732
        %v3739 = vadd.f32 %v3703, %v3732
        %v3740 = vadd.f32 %v3704, %v3732
        %v3741 = vadd.f32 %v3705, %v3732
        %v3742 = vadd.f32 %v3706, %v3732
        %v3743 = vadd.f32 %v3707, %v3732
        %v3744 = vadd.f32 %v3708, %v3732
        %v3745 = vadd.f32 %v3709, %v3732
        %v3746 = vadd.f32 %v3710, %v3732
        %v3747 = vadd.f32 %v3711, %v3732
        %v3748 = vadd.f32 %v3712, %v3732
        %v3749 = vadd.f32 %v3713, %v3732
        %v3750 = vadd.f32 %v3714, %v3732
        %v3751 = vadd.f32 %v3715, %v3732
        %v3752 = vadd.f32 %v3716, %v3732
        %v3753 = vadd.f32 %v3717, %v3732
        %v3754 = vadd.f32 %v3718, %v3732
        %v3755 = vadd.f32 %v3719, %v3732
        %v3756 = vadd.f32 %v3720, %v3732
        %v3757 = vadd.f32 %v3721, %v3732
        %v3758 = vadd.f32 %v3722, %v3732
        %v3759 = vadd.f32 %v3723, %v3732
        %v3760 = vadd.f32 %v3724, %v3732
        %v3761 = vadd.f32 %v3725, %v3732
        %v3762 = vadd.f32 %v3726, %v3732
        %v3763 = vadd.f32 %v3727, %v3732
        %v3764 = vadd.f32 %v3728, %v3732
        %v3765 = vld [vmem:[#allocation2] sm:$0xff]
        %v3766 = vld [vmem:[#allocation2 + $0x8] sm:$0xff]
        %v3767 = vld [vmem:[#allocation2 + $0x18] sm:$0xff]
        %v3768 = vld [vmem:[#allocation2 + $0x20] sm:$0xff]
        %v3769 = vld [vmem:[#allocation2 + $0x30] sm:$0xff]
        %v3770 = vld [vmem:[#allocation2 + $0x38] sm:$0xff]
        %v3771 = vld [vmem:[#allocation2 + $0x48] sm:$0xff]
        %v3772 = vld [vmem:[#allocation2 + $0x50] sm:$0xff]
        %v3773 = vld [vmem:[#allocation2 + $0x60] sm:$0xff]
        %v3774 = vld [vmem:[#allocation2 + $0x68] sm:$0xff]
        %v3775 = vld [vmem:[#allocation2 + $0x78] sm:$0xff]
        %v3776 = vld [vmem:[#allocation2 + $0x80] sm:$0xff]
        %v3777 = vld [vmem:[#allocation2 + $0x90] sm:$0xff]
        %v3778 = vld [vmem:[#allocation2 + $0x98] sm:$0xff]
        %v3779 = vld [vmem:[#allocation2 + $0xa8] sm:$0xff]
        %v3780 = vld [vmem:[#allocation2 + $0xb0] sm:$0xff]
        %v3781 = vld [vmem:[#allocation2 + $0xf0] sm:$0xff]
        %v3782 = vld [vmem:[#allocation2 + $0xf8] sm:$0xff]
        %v3783 = vld [vmem:[#allocation2 + $0x108] sm:$0xff]
        %v3784 = vld [vmem:[#allocation2 + $0x110] sm:$0xff]
        %v3785 = vld [vmem:[#allocation2 + $0x120] sm:$0xff]
        %v3786 = vld [vmem:[#allocation2 + $0x128] sm:$0xff]
        %v3787 = vld [vmem:[#allocation2 + $0x138] sm:$0xff]
        %v3788 = vld [vmem:[#allocation2 + $0x140] sm:$0xff]
        %v3789 = vld [vmem:[#allocation2 + $0x150] sm:$0xff]
        %v3790 = vld [vmem:[#allocation2 + $0x158] sm:$0xff]
        %v3791 = vld [vmem:[#allocation2 + $0x168] sm:$0xff]
        %v3792 = vld [vmem:[#allocation2 + $0x170] sm:$0xff]
        %v3793 = vld [vmem:[#allocation2 + $0x180] sm:$0xff]
        %v3794 = vld [vmem:[#allocation2 + $0x188] sm:$0xff]
        %v3795 = vld [vmem:[#allocation2 + $0x198] sm:$0xff]
        %v3796 = vld [vmem:[#allocation2 + $0x1a0] sm:$0xff]
        %v3797 = vlaneseq
        %v3798 = vshrl.u32 %v3797, 7
        %v3799 = vsub.s32 0, %v3798
        %v3800 = vrot.slane %v324, %v3799
        %v3801 = vmul.f32 %v3765, %v3800
        %v3802 = vmul.f32 %v3766, %v3800
        %v3803 = vmul.f32 %v3767, %v3800
        %v3804 = vmul.f32 %v3768, %v3800
        %v3805 = vmul.f32 %v3769, %v3800
        %v3806 = vmul.f32 %v3770, %v3800
        %v3807 = vmul.f32 %v3771, %v3800
        %v3808 = vmul.f32 %v3772, %v3800
        %v3809 = vmul.f32 %v3773, %v3800
        %v3810 = vmul.f32 %v3774, %v3800
        %v3811 = vmul.f32 %v3775, %v3800
        %v3812 = vmul.f32 %v3776, %v3800
        %v3813 = vmul.f32 %v3777, %v3800
        %v3814 = vmul.f32 %v3778, %v3800
        %v3815 = vmul.f32 %v3779, %v3800
        %v3816 = vmul.f32 %v3780, %v3800
        %v3817 = vmul.f32 %v3781, %v3800
        %v3818 = vmul.f32 %v3782, %v3800
        %v3819 = vmul.f32 %v3783, %v3800
        %v3820 = vmul.f32 %v3784, %v3800
        %v3821 = vmul.f32 %v3785, %v3800
        %v3822 = vmul.f32 %v3786, %v3800
        %v3823 = vmul.f32 %v3787, %v3800
        %v3824 = vmul.f32 %v3788, %v3800
        %v3825 = vmul.f32 %v3789, %v3800
        %v3826 = vmul.f32 %v3790, %v3800
        %v3827 = vmul.f32 %v3791, %v3800
        %v3828 = vmul.f32 %v3792, %v3800
        %v3829 = vmul.f32 %v3793, %v3800
        %v3830 = vmul.f32 %v3794, %v3800
        %v3831 = vmul.f32 %v3795, %v3800
        %v3832 = vmul.f32 %v3796, %v3800
        %v3833 = vadd.f32 %v3733, %v3801
        %v3834 = vadd.f32 %v3734, %v3802
        %v3835 = vadd.f32 %v3735, %v3803
        %v3836 = vadd.f32 %v3736, %v3804
        %v3837 = vadd.f32 %v3737, %v3805
        %v3838 = vadd.f32 %v3738, %v3806
        %v3839 = vadd.f32 %v3739, %v3807
        %v3840 = vadd.f32 %v3740, %v3808
        %v3841 = vadd.f32 %v3741, %v3809
        %v3842 = vadd.f32 %v3742, %v3810
        %v3843 = vadd.f32 %v3743, %v3811
        %v3844 = vadd.f32 %v3744, %v3812
        %v3845 = vadd.f32 %v3745, %v3813
        %v3846 = vadd.f32 %v3746, %v3814
        %v3847 = vadd.f32 %v3747, %v3815
        %v3848 = vadd.f32 %v3748, %v3816
        %v3849 = vadd.f32 %v3749, %v3817
        %v3850 = vadd.f32 %v3750, %v3818
        %v3851 = vadd.f32 %v3751, %v3819
        %v3852 = vadd.f32 %v3752, %v3820
        %v3853 = vadd.f32 %v3753, %v3821
        %v3854 = vadd.f32 %v3754, %v3822
        %v3855 = vadd.f32 %v3755, %v3823
        %v3856 = vadd.f32 %v3756, %v3824
        %v3857 = vadd.f32 %v3757, %v3825
        %v3858 = vadd.f32 %v3758, %v3826
        %v3859 = vadd.f32 %v3759, %v3827
        %v3860 = vadd.f32 %v3760, %v3828
        %v3861 = vadd.f32 %v3761, %v3829
        %v3862 = vadd.f32 %v3762, %v3830
        %v3863 = vadd.f32 %v3763, %v3831
        %v3864 = vadd.f32 %v3764, %v3832
        %v3865 = vld [vmem:[%s777] sm:$0xff]
        %v3866 = vld [vmem:[%s777 + $0x18] sm:$0xff]
        %v3867 = vld [vmem:[%s777 + $0x30] sm:$0xff]
        %v3868 = vld [vmem:[%s777 + $0x48] sm:$0xff]
        %v3869 = vld [vmem:[%s777 + $0x60] sm:$0xff]
        %v3870 = vld [vmem:[%s777 + $0x78] sm:$0xff]
        %v3871 = vld [vmem:[%s777 + $0x90] sm:$0xff]
        %v3872 = vld [vmem:[%s777 + $0xa8] sm:$0xff]
        %v3873 = vld [vmem:[%s777 + $0xf0] sm:$0xff]
        %v3874 = vld [vmem:[%s777 + $0x108] sm:$0xff]
        %v3875 = vld [vmem:[%s777 + $0x120] sm:$0xff]
        %v3876 = vld [vmem:[%s777 + $0x138] sm:$0xff]
        %v3877 = vld [vmem:[%s777 + $0x150] sm:$0xff]
        %v3878 = vld [vmem:[%s777 + $0x168] sm:$0xff]
        %v3879 = vld [vmem:[%s777 + $0x180] sm:$0xff]
        %v3880 = vld [vmem:[%s777 + $0x198] sm:$0xff]
        %v3881 = vlaneseq
        %v3882 = vshrl.u32 %v3881, 7
        %v3883 = vsub.s32 3, %v3882
        %v3884 = vrot.slane %v324, %v3883
        %v3885 = vmul.f32 %v3865, %v3884
        %v3886 = vmul.f32 %v3661, %v3884
        %v3887 = vmul.f32 %v3866, %v3884
        %v3888 = vmul.f32 %v3663, %v3884
        %v3889 = vmul.f32 %v3867, %v3884
        %v3890 = vmul.f32 %v3665, %v3884
        %v3891 = vmul.f32 %v3868, %v3884
        %v3892 = vmul.f32 %v3667, %v3884
        %v3893 = vmul.f32 %v3869, %v3884
        %v3894 = vmul.f32 %v3669, %v3884
        %v3895 = vmul.f32 %v3870, %v3884
        %v3896 = vmul.f32 %v3671, %v3884
        %v3897 = vmul.f32 %v3871, %v3884
        %v3898 = vmul.f32 %v3673, %v3884
        %v3899 = vmul.f32 %v3872, %v3884
        %v3900 = vmul.f32 %v3675, %v3884
        %v3901 = vmul.f32 %v3873, %v3884
        %v3902 = vmul.f32 %v3677, %v3884
        %v3903 = vmul.f32 %v3874, %v3884
        %v3904 = vmul.f32 %v3679, %v3884
        %v3905 = vmul.f32 %v3875, %v3884
        %v3906 = vmul.f32 %v3681, %v3884
        %v3907 = vmul.f32 %v3876, %v3884
        %v3908 = vmul.f32 %v3683, %v3884
        %v3909 = vmul.f32 %v3877, %v3884
        %v3910 = vmul.f32 %v3685, %v3884
        %v3911 = vmul.f32 %v3878, %v3884
        %v3912 = vmul.f32 %v3687, %v3884
        %v3913 = vmul.f32 %v3879, %v3884
        %v3914 = vmul.f32 %v3689, %v3884
        %v3915 = vmul.f32 %v3880, %v3884
        %v3916 = vmul.f32 %v3691, %v3884
        %v3917 = vadd.f32 %v3833, %v3885
        %v3918 = vadd.f32 %v3834, %v3886
        %v3919 = vadd.f32 %v3835, %v3887
        %v3920 = vadd.f32 %v3836, %v3888
        %v3921 = vadd.f32 %v3837, %v3889
        %v3922 = vadd.f32 %v3838, %v3890
        %v3923 = vadd.f32 %v3839, %v3891
        %v3924 = vadd.f32 %v3840, %v3892
        %v3925 = vadd.f32 %v3841, %v3893
        %v3926 = vadd.f32 %v3842, %v3894
        %v3927 = vadd.f32 %v3843, %v3895
        %v3928 = vadd.f32 %v3844, %v3896
        %v3929 = vadd.f32 %v3845, %v3897
        %v3930 = vadd.f32 %v3846, %v3898
        %v3931 = vadd.f32 %v3847, %v3899
        %v3932 = vadd.f32 %v3848, %v3900
        %v3933 = vadd.f32 %v3849, %v3901
        %v3934 = vadd.f32 %v3850, %v3902
        %v3935 = vadd.f32 %v3851, %v3903
        %v3936 = vadd.f32 %v3852, %v3904
        %v3937 = vadd.f32 %v3853, %v3905
        %v3938 = vadd.f32 %v3854, %v3906
        %v3939 = vadd.f32 %v3855, %v3907
        %v3940 = vadd.f32 %v3856, %v3908
        %v3941 = vadd.f32 %v3857, %v3909
        %v3942 = vadd.f32 %v3858, %v3910
        %v3943 = vadd.f32 %v3859, %v3911
        %v3944 = vadd.f32 %v3860, %v3912
        %v3945 = vadd.f32 %v3861, %v3913
        %v3946 = vadd.f32 %v3862, %v3914
        %v3947 = vadd.f32 %v3863, %v3915
        %v3948 = vadd.f32 %v3864, %v3916
        %s3949 = scalar_lea.vmem [#allocation2], 48
        %v3950 = vld [vmem:[%s3949] sm:$0xff]
        %v3951 = vld [vmem:[%s3949 + $0x8] sm:$0xff]
        %v3952 = vld [vmem:[%s3949 + $0x18] sm:$0xff]
        %v3953 = vld [vmem:[%s3949 + $0x20] sm:$0xff]
        %v3954 = vld [vmem:[%s3949 + $0x30] sm:$0xff]
        %v3955 = vld [vmem:[%s3949 + $0x38] sm:$0xff]
        %v3956 = vld [vmem:[%s3949 + $0x48] sm:$0xff]
        %v3957 = vld [vmem:[%s3949 + $0x50] sm:$0xff]
        %v3958 = vld [vmem:[%s3949 + $0x60] sm:$0xff]
        %v3959 = vld [vmem:[%s3949 + $0x68] sm:$0xff]
        %v3960 = vld [vmem:[%s3949 + $0x78] sm:$0xff]
        %v3961 = vld [vmem:[%s3949 + $0x80] sm:$0xff]
        %v3962 = vld [vmem:[%s3949 + $0x90] sm:$0xff]
        %v3963 = vld [vmem:[%s3949 + $0x98] sm:$0xff]
        %v3964 = vld [vmem:[%s3949 + $0xa8] sm:$0xff]
        %v3965 = vld [vmem:[%s3949 + $0xb0] sm:$0xff]
        %v3966 = vld [vmem:[%s3949 + $0xf0] sm:$0xff]
        %v3967 = vld [vmem:[%s3949 + $0xf8] sm:$0xff]
        %v3968 = vld [vmem:[%s3949 + $0x108] sm:$0xff]
        %v3969 = vld [vmem:[%s3949 + $0x110] sm:$0xff]
        %v3970 = vld [vmem:[%s3949 + $0x120] sm:$0xff]
        %v3971 = vld [vmem:[%s3949 + $0x128] sm:$0xff]
        %v3972 = vld [vmem:[%s3949 + $0x138] sm:$0xff]
        %v3973 = vld [vmem:[%s3949 + $0x140] sm:$0xff]
        %v3974 = vld [vmem:[%s3949 + $0x150] sm:$0xff]
        %v3975 = vld [vmem:[%s3949 + $0x158] sm:$0xff]
        %v3976 = vld [vmem:[%s3949 + $0x168] sm:$0xff]
        %v3977 = vld [vmem:[%s3949 + $0x170] sm:$0xff]
        %v3978 = vld [vmem:[%s3949 + $0x180] sm:$0xff]
        %v3979 = vld [vmem:[%s3949 + $0x188] sm:$0xff]
        %v3980 = vld [vmem:[%s3949 + $0x198] sm:$0xff]
        %v3981 = vld [vmem:[%s3949 + $0x1a0] sm:$0xff]
        %v3982 = vlaneseq
        %v3983 = vshrl.u32 %v3982, 7
        %v3984 = vsub.s32 6, %v3983
        %v3985 = vrot.slane %v324, %v3984
        %v3986 = vmul.f32 %v3950, %v3985
        %v3987 = vmul.f32 %v3951, %v3985
        %v3988 = vmul.f32 %v3952, %v3985
        %v3989 = vmul.f32 %v3953, %v3985
        %v3990 = vmul.f32 %v3954, %v3985
        %v3991 = vmul.f32 %v3955, %v3985
        %v3992 = vmul.f32 %v3956, %v3985
        %v3993 = vmul.f32 %v3957, %v3985
        %v3994 = vmul.f32 %v3958, %v3985
        %v3995 = vmul.f32 %v3959, %v3985
        %v3996 = vmul.f32 %v3960, %v3985
        %v3997 = vmul.f32 %v3961, %v3985
        %v3998 = vmul.f32 %v3962, %v3985
        %v3999 = vmul.f32 %v3963, %v3985
        %v4000 = vmul.f32 %v3964, %v3985
        %v4001 = vmul.f32 %v3965, %v3985
        %v4002 = vmul.f32 %v3966, %v3985
        %v4003 = vmul.f32 %v3967, %v3985
        %v4004 = vmul.f32 %v3968, %v3985
        %v4005 = vmul.f32 %v3969, %v3985
        %v4006 = vmul.f32 %v3970, %v3985
        %v4007 = vmul.f32 %v3971, %v3985
        %v4008 = vmul.f32 %v3972, %v3985
        %v4009 = vmul.f32 %v3973, %v3985
        %v4010 = vmul.f32 %v3974, %v3985
        %v4011 = vmul.f32 %v3975, %v3985
        %v4012 = vmul.f32 %v3976, %v3985
        %v4013 = vmul.f32 %v3977, %v3985
        %v4014 = vmul.f32 %v3978, %v3985
        %v4015 = vmul.f32 %v3979, %v3985
        %v4016 = vmul.f32 %v3980, %v3985
        %v4017 = vmul.f32 %v3981, %v3985
        %v4018 = vadd.f32 %v3917, %v3986
        %v4019 = vadd.f32 %v3918, %v3987
        %v4020 = vadd.f32 %v3919, %v3988
        %v4021 = vadd.f32 %v3920, %v3989
        %v4022 = vadd.f32 %v3921, %v3990
        %v4023 = vadd.f32 %v3922, %v3991
        %v4024 = vadd.f32 %v3923, %v3992
        %v4025 = vadd.f32 %v3924, %v3993
        %v4026 = vadd.f32 %v3925, %v3994
        %v4027 = vadd.f32 %v3926, %v3995
        %v4028 = vadd.f32 %v3927, %v3996
        %v4029 = vadd.f32 %v3928, %v3997
        %v4030 = vadd.f32 %v3929, %v3998
        %v4031 = vadd.f32 %v3930, %v3999
        %v4032 = vadd.f32 %v3931, %v4000
        %v4033 = vadd.f32 %v3932, %v4001
        %v4034 = vadd.f32 %v3933, %v4002
        %v4035 = vadd.f32 %v3934, %v4003
        %v4036 = vadd.f32 %v3935, %v4004
        %v4037 = vadd.f32 %v3936, %v4005
        %v4038 = vadd.f32 %v3937, %v4006
        %v4039 = vadd.f32 %v3938, %v4007
        %v4040 = vadd.f32 %v3939, %v4008
        %v4041 = vadd.f32 %v3940, %v4009
        %v4042 = vadd.f32 %v3941, %v4010
        %v4043 = vadd.f32 %v3942, %v4011
        %v4044 = vadd.f32 %v3943, %v4012
        %v4045 = vadd.f32 %v3944, %v4013
        %v4046 = vadd.f32 %v3945, %v4014
        %v4047 = vadd.f32 %v3946, %v4015
        %v4048 = vadd.f32 %v3947, %v4016
        %v4049 = vadd.f32 %v3948, %v4017
        %v4050 = vld [vmem:[#allocation2 + $0x4] sm:$0xff]
        %v4051 = vld [vmem:[#allocation2 + $0xc] sm:$0xff]
        %v4052 = vld [vmem:[#allocation2 + $0x1c] sm:$0xff]
        %v4053 = vld [vmem:[#allocation2 + $0x24] sm:$0xff]
        %v4054 = vld [vmem:[#allocation2 + $0x34] sm:$0xff]
        %v4055 = vld [vmem:[#allocation2 + $0x3c] sm:$0xff]
        %v4056 = vld [vmem:[#allocation2 + $0x4c] sm:$0xff]
        %v4057 = vld [vmem:[#allocation2 + $0x54] sm:$0xff]
        %v4058 = vld [vmem:[#allocation2 + $0x64] sm:$0xff]
        %v4059 = vld [vmem:[#allocation2 + $0x6c] sm:$0xff]
        %v4060 = vld [vmem:[#allocation2 + $0x7c] sm:$0xff]
        %v4061 = vld [vmem:[#allocation2 + $0x84] sm:$0xff]
        %v4062 = vld [vmem:[#allocation2 + $0x94] sm:$0xff]
        %v4063 = vld [vmem:[#allocation2 + $0x9c] sm:$0xff]
        %v4064 = vld [vmem:[#allocation2 + $0xac] sm:$0xff]
        %v4065 = vld [vmem:[#allocation2 + $0xb4] sm:$0xff]
        %v4066 = vld [vmem:[#allocation2 + $0xf4] sm:$0xff]
        %v4067 = vld [vmem:[#allocation2 + $0xfc] sm:$0xff]
        %v4068 = vld [vmem:[#allocation2 + $0x10c] sm:$0xff]
        %v4069 = vld [vmem:[#allocation2 + $0x114] sm:$0xff]
        %v4070 = vld [vmem:[#allocation2 + $0x124] sm:$0xff]
        %v4071 = vld [vmem:[#allocation2 + $0x12c] sm:$0xff]
        %v4072 = vld [vmem:[#allocation2 + $0x13c] sm:$0xff]
        %v4073 = vld [vmem:[#allocation2 + $0x144] sm:$0xff]
        %v4074 = vld [vmem:[#allocation2 + $0x154] sm:$0xff]
        %v4075 = vld [vmem:[#allocation2 + $0x15c] sm:$0xff]
        %v4076 = vld [vmem:[#allocation2 + $0x16c] sm:$0xff]
        %v4077 = vld [vmem:[#allocation2 + $0x174] sm:$0xff]
        %v4078 = vld [vmem:[#allocation2 + $0x184] sm:$0xff]
        %v4079 = vld [vmem:[#allocation2 + $0x18c] sm:$0xff]
        %v4080 = vld [vmem:[#allocation2 + $0x19c] sm:$0xff]
        %v4081 = vld [vmem:[#allocation2 + $0x1a4] sm:$0xff]
        %v4082 = vlaneseq
        %v4083 = vshrl.u32 %v4082, 7
        %v4084 = vsub.s32 1, %v4083
        %v4085 = vrot.slane %v324, %v4084
        %v4086 = vmul.f32 %v4050, %v4085
        %v4087 = vmul.f32 %v4051, %v4085
        %v4088 = vmul.f32 %v4052, %v4085
        %v4089 = vmul.f32 %v4053, %v4085
        %v4090 = vmul.f32 %v4054, %v4085
        %v4091 = vmul.f32 %v4055, %v4085
        %v4092 = vmul.f32 %v4056, %v4085
        %v4093 = vmul.f32 %v4057, %v4085
        %v4094 = vmul.f32 %v4058, %v4085
        %v4095 = vmul.f32 %v4059, %v4085
        %v4096 = vmul.f32 %v4060, %v4085
        %v4097 = vmul.f32 %v4061, %v4085
        %v4098 = vmul.f32 %v4062, %v4085
        %v4099 = vmul.f32 %v4063, %v4085
        %v4100 = vmul.f32 %v4064, %v4085
        %v4101 = vmul.f32 %v4065, %v4085
        %v4102 = vmul.f32 %v4066, %v4085
        %v4103 = vmul.f32 %v4067, %v4085
        %v4104 = vmul.f32 %v4068, %v4085
        %v4105 = vmul.f32 %v4069, %v4085
        %v4106 = vmul.f32 %v4070, %v4085
        %v4107 = vmul.f32 %v4071, %v4085
        %v4108 = vmul.f32 %v4072, %v4085
        %v4109 = vmul.f32 %v4073, %v4085
        %v4110 = vmul.f32 %v4074, %v4085
        %v4111 = vmul.f32 %v4075, %v4085
        %v4112 = vmul.f32 %v4076, %v4085
        %v4113 = vmul.f32 %v4077, %v4085
        %v4114 = vmul.f32 %v4078, %v4085
        %v4115 = vmul.f32 %v4079, %v4085
        %v4116 = vmul.f32 %v4080, %v4085
        %v4117 = vmul.f32 %v4081, %v4085
        %v4118 = vadd.f32 %v4018, %v4086
        %v4119 = vadd.f32 %v4019, %v4087
        %v4120 = vadd.f32 %v4020, %v4088
        %v4121 = vadd.f32 %v4021, %v4089
        %v4122 = vadd.f32 %v4022, %v4090
        %v4123 = vadd.f32 %v4023, %v4091
        %v4124 = vadd.f32 %v4024, %v4092
        %v4125 = vadd.f32 %v4025, %v4093
        %v4126 = vadd.f32 %v4026, %v4094
        %v4127 = vadd.f32 %v4027, %v4095
        %v4128 = vadd.f32 %v4028, %v4096
        %v4129 = vadd.f32 %v4029, %v4097
        %v4130 = vadd.f32 %v4030, %v4098
        %v4131 = vadd.f32 %v4031, %v4099
        %v4132 = vadd.f32 %v4032, %v4100
        %v4133 = vadd.f32 %v4033, %v4101
        %v4134 = vadd.f32 %v4034, %v4102
        %v4135 = vadd.f32 %v4035, %v4103
        %v4136 = vadd.f32 %v4036, %v4104
        %v4137 = vadd.f32 %v4037, %v4105
        %v4138 = vadd.f32 %v4038, %v4106
        %v4139 = vadd.f32 %v4039, %v4107
        %v4140 = vadd.f32 %v4040, %v4108
        %v4141 = vadd.f32 %v4041, %v4109
        %v4142 = vadd.f32 %v4042, %v4110
        %v4143 = vadd.f32 %v4043, %v4111
        %v4144 = vadd.f32 %v4044, %v4112
        %v4145 = vadd.f32 %v4045, %v4113
        %v4146 = vadd.f32 %v4046, %v4114
        %v4147 = vadd.f32 %v4047, %v4115
        %v4148 = vadd.f32 %v4048, %v4116
        %v4149 = vadd.f32 %v4049, %v4117
        %v4150 = vld [vmem:[%s777 + $0x4] sm:$0xff]
        %v4151 = vld [vmem:[%s777 + $0xc] sm:$0xff]
        %v4152 = vld [vmem:[%s777 + $0x1c] sm:$0xff]
        %v4153 = vld [vmem:[%s777 + $0x24] sm:$0xff]
        %v4154 = vld [vmem:[%s777 + $0x34] sm:$0xff]
        %v4155 = vld [vmem:[%s777 + $0x3c] sm:$0xff]
        %v4156 = vld [vmem:[%s777 + $0x4c] sm:$0xff]
        %v4157 = vld [vmem:[%s777 + $0x54] sm:$0xff]
        %v4158 = vld [vmem:[%s777 + $0x64] sm:$0xff]
        %v4159 = vld [vmem:[%s777 + $0x6c] sm:$0xff]
        %v4160 = vld [vmem:[%s777 + $0x7c] sm:$0xff]
        %v4161 = vld [vmem:[%s777 + $0x84] sm:$0xff]
        %v4162 = vld [vmem:[%s777 + $0x94] sm:$0xff]
        %v4163 = vld [vmem:[%s777 + $0x9c] sm:$0xff]
        %v4164 = vld [vmem:[%s777 + $0xac] sm:$0xff]
        %v4165 = vld [vmem:[%s777 + $0xb4] sm:$0xff]
        %v4166 = vld [vmem:[%s777 + $0xf4] sm:$0xff]
        %v4167 = vld [vmem:[%s777 + $0xfc] sm:$0xff]
        %v4168 = vld [vmem:[%s777 + $0x10c] sm:$0xff]
        %v4169 = vld [vmem:[%s777 + $0x114] sm:$0xff]
        %v4170 = vld [vmem:[%s777 + $0x124] sm:$0xff]
        %v4171 = vld [vmem:[%s777 + $0x12c] sm:$0xff]
        %v4172 = vld [vmem:[%s777 + $0x13c] sm:$0xff]
        %v4173 = vld [vmem:[%s777 + $0x144] sm:$0xff]
        %v4174 = vld [vmem:[%s777 + $0x154] sm:$0xff]
        %v4175 = vld [vmem:[%s777 + $0x15c] sm:$0xff]
        %v4176 = vld [vmem:[%s777 + $0x16c] sm:$0xff]
        %v4177 = vld [vmem:[%s777 + $0x174] sm:$0xff]
        %v4178 = vld [vmem:[%s777 + $0x184] sm:$0xff]
        %v4179 = vld [vmem:[%s777 + $0x18c] sm:$0xff]
        %v4180 = vld [vmem:[%s777 + $0x19c] sm:$0xff]
        %v4181 = vld [vmem:[%s777 + $0x1a4] sm:$0xff]
        %v4182 = vlaneseq
        %v4183 = vshrl.u32 %v4182, 7
        %v4184 = vsub.s32 4, %v4183
        %v4185 = vrot.slane %v324, %v4184
        %v4186 = vmul.f32 %v4150, %v4185
        %v4187 = vmul.f32 %v4151, %v4185
        %v4188 = vmul.f32 %v4152, %v4185
        %v4189 = vmul.f32 %v4153, %v4185
        %v4190 = vmul.f32 %v4154, %v4185
        %v4191 = vmul.f32 %v4155, %v4185
        %v4192 = vmul.f32 %v4156, %v4185
        %v4193 = vmul.f32 %v4157, %v4185
        %v4194 = vmul.f32 %v4158, %v4185
        %v4195 = vmul.f32 %v4159, %v4185
        %v4196 = vmul.f32 %v4160, %v4185
        %v4197 = vmul.f32 %v4161, %v4185
        %v4198 = vmul.f32 %v4162, %v4185
        %v4199 = vmul.f32 %v4163, %v4185
        %v4200 = vmul.f32 %v4164, %v4185
        %v4201 = vmul.f32 %v4165, %v4185
        %v4202 = vmul.f32 %v4166, %v4185
        %v4203 = vmul.f32 %v4167, %v4185
        %v4204 = vmul.f32 %v4168, %v4185
        %v4205 = vmul.f32 %v4169, %v4185
        %v4206 = vmul.f32 %v4170, %v4185
        %v4207 = vmul.f32 %v4171, %v4185
        %v4208 = vmul.f32 %v4172, %v4185
        %v4209 = vmul.f32 %v4173, %v4185
        %v4210 = vmul.f32 %v4174, %v4185
        %v4211 = vmul.f32 %v4175, %v4185
        %v4212 = vmul.f32 %v4176, %v4185
        %v4213 = vmul.f32 %v4177, %v4185
        %v4214 = vmul.f32 %v4178, %v4185
        %v4215 = vmul.f32 %v4179, %v4185
        %v4216 = vmul.f32 %v4180, %v4185
        %v4217 = vmul.f32 %v4181, %v4185
        %v4218 = vadd.f32 %v4118, %v4186
        %v4219 = vadd.f32 %v4119, %v4187
        %v4220 = vadd.f32 %v4120, %v4188
        %v4221 = vadd.f32 %v4121, %v4189
        %v4222 = vadd.f32 %v4122, %v4190
        %v4223 = vadd.f32 %v4123, %v4191
        %v4224 = vadd.f32 %v4124, %v4192
        %v4225 = vadd.f32 %v4125, %v4193
        %v4226 = vadd.f32 %v4126, %v4194
        %v4227 = vadd.f32 %v4127, %v4195
        %v4228 = vadd.f32 %v4128, %v4196
        %v4229 = vadd.f32 %v4129, %v4197
        %v4230 = vadd.f32 %v4130, %v4198
        %v4231 = vadd.f32 %v4131, %v4199
        %v4232 = vadd.f32 %v4132, %v4200
        %v4233 = vadd.f32 %v4133, %v4201
        %v4234 = vadd.f32 %v4134, %v4202
        %v4235 = vadd.f32 %v4135, %v4203
        %v4236 = vadd.f32 %v4136, %v4204
        %v4237 = vadd.f32 %v4137, %v4205
        %v4238 = vadd.f32 %v4138, %v4206
        %v4239 = vadd.f32 %v4139, %v4207
        %v4240 = vadd.f32 %v4140, %v4208
        %v4241 = vadd.f32 %v4141, %v4209
        %v4242 = vadd.f32 %v4142, %v4210
        %v4243 = vadd.f32 %v4143, %v4211
        %v4244 = vadd.f32 %v4144, %v4212
        %v4245 = vadd.f32 %v4145, %v4213
        %v4246 = vadd.f32 %v4146, %v4214
        %v4247 = vadd.f32 %v4147, %v4215
        %v4248 = vadd.f32 %v4148, %v4216
        %v4249 = vadd.f32 %v4149, %v4217
        %v4250 = vld [vmem:[%s3949 + $0x4] sm:$0xff]
        %v4251 = vld [vmem:[%s3949 + $0xc] sm:$0xff]
        %v4252 = vld [vmem:[%s3949 + $0x1c] sm:$0xff]
        %v4253 = vld [vmem:[%s3949 + $0x24] sm:$0xff]
        %v4254 = vld [vmem:[%s3949 + $0x34] sm:$0xff]
        %v4255 = vld [vmem:[%s3949 + $0x3c] sm:$0xff]
        %v4256 = vld [vmem:[%s3949 + $0x4c] sm:$0xff]
        %v4257 = vld [vmem:[%s3949 + $0x54] sm:$0xff]
        %v4258 = vld [vmem:[%s3949 + $0x64] sm:$0xff]
        %v4259 = vld [vmem:[%s3949 + $0x6c] sm:$0xff]
        %v4260 = vld [vmem:[%s3949 + $0x7c] sm:$0xff]
        %v4261 = vld [vmem:[%s3949 + $0x84] sm:$0xff]
        %v4262 = vld [vmem:[%s3949 + $0x94] sm:$0xff]
        %v4263 = vld [vmem:[%s3949 + $0x9c] sm:$0xff]
        %v4264 = vld [vmem:[%s3949 + $0xac] sm:$0xff]
        %v4265 = vld [vmem:[%s3949 + $0xb4] sm:$0xff]
        %v4266 = vld [vmem:[%s3949 + $0xf4] sm:$0xff]
        %v4267 = vld [vmem:[%s3949 + $0xfc] sm:$0xff]
        %v4268 = vld [vmem:[%s3949 + $0x10c] sm:$0xff]
        %v4269 = vld [vmem:[%s3949 + $0x114] sm:$0xff]
        %v4270 = vld [vmem:[%s3949 + $0x124] sm:$0xff]
        %v4271 = vld [vmem:[%s3949 + $0x12c] sm:$0xff]
        %v4272 = vld [vmem:[%s3949 + $0x13c] sm:$0xff]
        %v4273 = vld [vmem:[%s3949 + $0x144] sm:$0xff]
        %v4274 = vld [vmem:[%s3949 + $0x154] sm:$0xff]
        %v4275 = vld [vmem:[%s3949 + $0x15c] sm:$0xff]
        %v4276 = vld [vmem:[%s3949 + $0x16c] sm:$0xff]
        %v4277 = vld [vmem:[%s3949 + $0x174] sm:$0xff]
        %v4278 = vld [vmem:[%s3949 + $0x184] sm:$0xff]
        %v4279 = vld [vmem:[%s3949 + $0x18c] sm:$0xff]
        %v4280 = vld [vmem:[%s3949 + $0x19c] sm:$0xff]
        %v4281 = vld [vmem:[%s3949 + $0x1a4] sm:$0xff]
        %v4282 = vlaneseq
        %v4283 = vshrl.u32 %v4282, 7
        %v4284 = vsub.s32 7, %v4283
        %v4285 = vrot.slane %v324, %v4284
        %v4286 = vmul.f32 %v4250, %v4285
        %v4287 = vmul.f32 %v4251, %v4285
        %v4288 = vmul.f32 %v4252, %v4285
        %v4289 = vmul.f32 %v4253, %v4285
        %v4290 = vmul.f32 %v4254, %v4285
        %v4291 = vmul.f32 %v4255, %v4285
        %v4292 = vmul.f32 %v4256, %v4285
        %v4293 = vmul.f32 %v4257, %v4285
        %v4294 = vmul.f32 %v4258, %v4285
        %v4295 = vmul.f32 %v4259, %v4285
        %v4296 = vmul.f32 %v4260, %v4285
        %v4297 = vmul.f32 %v4261, %v4285
        %v4298 = vmul.f32 %v4262, %v4285
        %v4299 = vmul.f32 %v4263, %v4285
        %v4300 = vmul.f32 %v4264, %v4285
        %v4301 = vmul.f32 %v4265, %v4285
        %v4302 = vmul.f32 %v4266, %v4285
        %v4303 = vmul.f32 %v4267, %v4285
        %v4304 = vmul.f32 %v4268, %v4285
        %v4305 = vmul.f32 %v4269, %v4285
        %v4306 = vmul.f32 %v4270, %v4285
        %v4307 = vmul.f32 %v4271, %v4285
        %v4308 = vmul.f32 %v4272, %v4285
        %v4309 = vmul.f32 %v4273, %v4285
        %v4310 = vmul.f32 %v4274, %v4285
        %v4311 = vmul.f32 %v4275, %v4285
        %v4312 = vmul.f32 %v4276, %v4285
        %v4313 = vmul.f32 %v4277, %v4285
        %v4314 = vmul.f32 %v4278, %v4285
        %v4315 = vmul.f32 %v4279, %v4285
        %v4316 = vmul.f32 %v4280, %v4285
        %v4317 = vmul.f32 %v4281, %v4285
        %v4318 = vadd.f32 %v4218, %v4286
        %v4319 = vadd.f32 %v4219, %v4287
        %v4320 = vadd.f32 %v4220, %v4288
        %v4321 = vadd.f32 %v4221, %v4289
        %v4322 = vadd.f32 %v4222, %v4290
        %v4323 = vadd.f32 %v4223, %v4291
        %v4324 = vadd.f32 %v4224, %v4292
        %v4325 = vadd.f32 %v4225, %v4293
        %v4326 = vadd.f32 %v4226, %v4294
        %v4327 = vadd.f32 %v4227, %v4295
        %v4328 = vadd.f32 %v4228, %v4296
        %v4329 = vadd.f32 %v4229, %v4297
        %v4330 = vadd.f32 %v4230, %v4298
        %v4331 = vadd.f32 %v4231, %v4299
        %v4332 = vadd.f32 %v4232, %v4300
        %v4333 = vadd.f32 %v4233, %v4301
        %v4334 = vadd.f32 %v4234, %v4302
        %v4335 = vadd.f32 %v4235, %v4303
        %v4336 = vadd.f32 %v4236, %v4304
        %v4337 = vadd.f32 %v4237, %v4305
        %v4338 = vadd.f32 %v4238, %v4306
        %v4339 = vadd.f32 %v4239, %v4307
        %v4340 = vadd.f32 %v4240, %v4308
        %v4341 = vadd.f32 %v4241, %v4309
        %v4342 = vadd.f32 %v4242, %v4310
        %v4343 = vadd.f32 %v4243, %v4311
        %v4344 = vadd.f32 %v4244, %v4312
        %v4345 = vadd.f32 %v4245, %v4313
        %v4346 = vadd.f32 %v4246, %v4314
        %v4347 = vadd.f32 %v4247, %v4315
        %v4348 = vadd.f32 %v4248, %v4316
        %v4349 = vadd.f32 %v4249, %v4317
        %v4350 = vld [vmem:[#allocation2 + $0x10] sm:$0xff]
        %v4351 = vld [vmem:[#allocation2 + $0x28] sm:$0xff]
        %v4352 = vld [vmem:[#allocation2 + $0x40] sm:$0xff]
        %v4353 = vld [vmem:[#allocation2 + $0x58] sm:$0xff]
        %v4354 = vld [vmem:[#allocation2 + $0x70] sm:$0xff]
        %v4355 = vld [vmem:[#allocation2 + $0x88] sm:$0xff]
        %v4356 = vld [vmem:[#allocation2 + $0xa0] sm:$0xff]
        %v4357 = vld [vmem:[#allocation2 + $0xb8] sm:$0xff]
        %v4358 = vld [vmem:[#allocation2 + $0x100] sm:$0xff]
        %v4359 = vld [vmem:[#allocation2 + $0x118] sm:$0xff]
        %v4360 = vld [vmem:[#allocation2 + $0x130] sm:$0xff]
        %v4361 = vld [vmem:[#allocation2 + $0x148] sm:$0xff]
        %v4362 = vld [vmem:[#allocation2 + $0x160] sm:$0xff]
        %v4363 = vld [vmem:[#allocation2 + $0x178] sm:$0xff]
        %v4364 = vld [vmem:[#allocation2 + $0x190] sm:$0xff]
        %v4365 = vld [vmem:[#allocation2 + $0x1a8] sm:$0xff]
        %v4366 = vlaneseq
        %v4367 = vshrl.u32 %v4366, 7
        %v4368 = vsub.s32 2, %v4367
        %v4369 = vrot.slane %v324, %v4368
        %v4370 = vmul.f32 %v3766, %v4369
        %v4371 = vmul.f32 %v4350, %v4369
        %v4372 = vmul.f32 %v3768, %v4369
        %v4373 = vmul.f32 %v4351, %v4369
        %v4374 = vmul.f32 %v3770, %v4369
        %v4375 = vmul.f32 %v4352, %v4369
        %v4376 = vmul.f32 %v3772, %v4369
        %v4377 = vmul.f32 %v4353, %v4369
        %v4378 = vmul.f32 %v3774, %v4369
        %v4379 = vmul.f32 %v4354, %v4369
        %v4380 = vmul.f32 %v3776, %v4369
        %v4381 = vmul.f32 %v4355, %v4369
        %v4382 = vmul.f32 %v3778, %v4369
        %v4383 = vmul.f32 %v4356, %v4369
        %v4384 = vmul.f32 %v3780, %v4369
        %v4385 = vmul.f32 %v4357, %v4369
        %v4386 = vmul.f32 %v3782, %v4369
        %v4387 = vmul.f32 %v4358, %v4369
        %v4388 = vmul.f32 %v3784, %v4369
        %v4389 = vmul.f32 %v4359, %v4369
        %v4390 = vmul.f32 %v3786, %v4369
        %v4391 = vmul.f32 %v4360, %v4369
        %v4392 = vmul.f32 %v3788, %v4369
        %v4393 = vmul.f32 %v4361, %v4369
        %v4394 = vmul.f32 %v3790, %v4369
        %v4395 = vmul.f32 %v4362, %v4369
        %v4396 = vmul.f32 %v3792, %v4369
        %v4397 = vmul.f32 %v4363, %v4369
        %v4398 = vmul.f32 %v3794, %v4369
        %v4399 = vmul.f32 %v4364, %v4369
        %v4400 = vmul.f32 %v3796, %v4369
        %v4401 = vmul.f32 %v4365, %v4369
        %v4402 = vadd.f32 %v4318, %v4370
        %v4403 = vadd.f32 %v4319, %v4371
        %v4404 = vadd.f32 %v4320, %v4372
        %v4405 = vadd.f32 %v4321, %v4373
        %v4406 = vadd.f32 %v4322, %v4374
        %v4407 = vadd.f32 %v4323, %v4375
        %v4408 = vadd.f32 %v4324, %v4376
        %v4409 = vadd.f32 %v4325, %v4377
        %v4410 = vadd.f32 %v4326, %v4378
        %v4411 = vadd.f32 %v4327, %v4379
        %v4412 = vadd.f32 %v4328, %v4380
        %v4413 = vadd.f32 %v4329, %v4381
        %v4414 = vadd.f32 %v4330, %v4382
        %v4415 = vadd.f32 %v4331, %v4383
        %v4416 = vadd.f32 %v4332, %v4384
        %v4417 = vadd.f32 %v4333, %v4385
        %v4418 = vadd.f32 %v4334, %v4386
        %v4419 = vadd.f32 %v4335, %v4387
        %v4420 = vadd.f32 %v4336, %v4388
        %v4421 = vadd.f32 %v4337, %v4389
        %v4422 = vadd.f32 %v4338, %v4390
        %v4423 = vadd.f32 %v4339, %v4391
        %v4424 = vadd.f32 %v4340, %v4392
        %v4425 = vadd.f32 %v4341, %v4393
        %v4426 = vadd.f32 %v4342, %v4394
        %v4427 = vadd.f32 %v4343, %v4395
        %v4428 = vadd.f32 %v4344, %v4396
        %v4429 = vadd.f32 %v4345, %v4397
        %v4430 = vadd.f32 %v4346, %v4398
        %v4431 = vadd.f32 %v4347, %v4399
        %v4432 = vadd.f32 %v4348, %v4400
        %v4433 = vadd.f32 %v4349, %v4401
        %v4434 = vld [vmem:[%s3949 + $0x10] sm:$0xff]
        %v4435 = vld [vmem:[%s3949 + $0x28] sm:$0xff]
        %v4436 = vld [vmem:[%s3949 + $0x40] sm:$0xff]
        %v4437 = vld [vmem:[%s3949 + $0x58] sm:$0xff]
        %v4438 = vld [vmem:[%s3949 + $0x70] sm:$0xff]
        %v4439 = vld [vmem:[%s3949 + $0x88] sm:$0xff]
        %v4440 = vld [vmem:[%s3949 + $0xa0] sm:$0xff]
        %v4441 = vld [vmem:[%s3949 + $0xb8] sm:$0xff]
        %v4442 = vld [vmem:[%s3949 + $0x100] sm:$0xff]
        %v4443 = vld [vmem:[%s3949 + $0x118] sm:$0xff]
        %v4444 = vld [vmem:[%s3949 + $0x130] sm:$0xff]
        %v4445 = vld [vmem:[%s3949 + $0x148] sm:$0xff]
        %v4446 = vld [vmem:[%s3949 + $0x160] sm:$0xff]
        %v4447 = vld [vmem:[%s3949 + $0x178] sm:$0xff]
        %v4448 = vld [vmem:[%s3949 + $0x190] sm:$0xff]
        %v4449 = vld [vmem:[%s3949 + $0x1a8] sm:$0xff]
        %v4450 = vlaneseq
        %v4451 = vshrl.u32 %v4450, 7
        %v4452 = vsub.s32 0, %v4451
        %v4453 = vrot.slane %v325, %v4452
        %v4454 = vmul.f32 %v3951, %v4453
        %v4455 = vmul.f32 %v4434, %v4453
        %v4456 = vmul.f32 %v3953, %v4453
        %v4457 = vmul.f32 %v4435, %v4453
        %v4458 = vmul.f32 %v3955, %v4453
        %v4459 = vmul.f32 %v4436, %v4453
        %v4460 = vmul.f32 %v3957, %v4453
        %v4461 = vmul.f32 %v4437, %v4453
        %v4462 = vmul.f32 %v3959, %v4453
        %v4463 = vmul.f32 %v4438, %v4453
        %v4464 = vmul.f32 %v3961, %v4453
        %v4465 = vmul.f32 %v4439, %v4453
        %v4466 = vmul.f32 %v3963, %v4453
        %v4467 = vmul.f32 %v4440, %v4453
        %v4468 = vmul.f32 %v3965, %v4453
        %v4469 = vmul.f32 %v4441, %v4453
        %v4470 = vmul.f32 %v3967, %v4453
        %v4471 = vmul.f32 %v4442, %v4453
        %v4472 = vmul.f32 %v3969, %v4453
        %v4473 = vmul.f32 %v4443, %v4453
        %v4474 = vmul.f32 %v3971, %v4453
        %v4475 = vmul.f32 %v4444, %v4453
        %v4476 = vmul.f32 %v3973, %v4453
        %v4477 = vmul.f32 %v4445, %v4453
        %v4478 = vmul.f32 %v3975, %v4453
        %v4479 = vmul.f32 %v4446, %v4453
        %v4480 = vmul.f32 %v3977, %v4453
        %v4481 = vmul.f32 %v4447, %v4453
        %v4482 = vmul.f32 %v3979, %v4453
        %v4483 = vmul.f32 %v4448, %v4453
        %v4484 = vmul.f32 %v3981, %v4453
        %v4485 = vmul.f32 %v4449, %v4453
        %v4486 = vadd.f32 %v4402, %v4454
        %v4487 = vadd.f32 %v4403, %v4455
        %v4488 = vadd.f32 %v4404, %v4456
        %v4489 = vadd.f32 %v4405, %v4457
        %v4490 = vadd.f32 %v4406, %v4458
        %v4491 = vadd.f32 %v4407, %v4459
        %v4492 = vadd.f32 %v4408, %v4460
        %v4493 = vadd.f32 %v4409, %v4461
        %v4494 = vadd.f32 %v4410, %v4462
        %v4495 = vadd.f32 %v4411, %v4463
        %v4496 = vadd.f32 %v4412, %v4464
        %v4497 = vadd.f32 %v4413, %v4465
        %v4498 = vadd.f32 %v4414, %v4466
        %v4499 = vadd.f32 %v4415, %v4467
        %v4500 = vadd.f32 %v4416, %v4468
        %v4501 = vadd.f32 %v4417, %v4469
        %v4502 = vadd.f32 %v4418, %v4470
        %v4503 = vadd.f32 %v4419, %v4471
        %v4504 = vadd.f32 %v4420, %v4472
        %v4505 = vadd.f32 %v4421, %v4473
        %v4506 = vadd.f32 %v4422, %v4474
        %v4507 = vadd.f32 %v4423, %v4475
        %v4508 = vadd.f32 %v4424, %v4476
        %v4509 = vadd.f32 %v4425, %v4477
        %v4510 = vadd.f32 %v4426, %v4478
        %v4511 = vadd.f32 %v4427, %v4479
        %v4512 = vadd.f32 %v4428, %v4480
        %v4513 = vadd.f32 %v4429, %v4481
        %v4514 = vadd.f32 %v4430, %v4482
        %v4515 = vadd.f32 %v4431, %v4483
        %v4516 = vadd.f32 %v4432, %v4484
        %v4517 = vadd.f32 %v4433, %v4485
        %v4518 = vlaneseq
        %v4519 = vshrl.u32 %v4518, 7
        %v4520 = vsub.s32 5, %v4519
        %v4521 = vrot.slane %v321, %v4520
        %v4522 = vmul.f32 %v4486, %v4521
        %v4523 = vmul.f32 %v4487, %v4521
        %v4524 = vmul.f32 %v4488, %v4521
        %v4525 = vmul.f32 %v4489, %v4521
        %v4526 = vmul.f32 %v4490, %v4521
        %v4527 = vmul.f32 %v4491, %v4521
        %v4528 = vmul.f32 %v4492, %v4521
        %v4529 = vmul.f32 %v4493, %v4521
        %v4530 = vmul.f32 %v4494, %v4521
        %v4531 = vmul.f32 %v4495, %v4521
        %v4532 = vmul.f32 %v4496, %v4521
        %v4533 = vmul.f32 %v4497, %v4521
        %v4534 = vmul.f32 %v4498, %v4521
        %v4535 = vmul.f32 %v4499, %v4521
        %v4536 = vmul.f32 %v4500, %v4521
        %v4537 = vmul.f32 %v4501, %v4521
        %v4538 = vmul.f32 %v4502, %v4521
        %v4539 = vmul.f32 %v4503, %v4521
        %v4540 = vmul.f32 %v4504, %v4521
        %v4541 = vmul.f32 %v4505, %v4521
        %v4542 = vmul.f32 %v4506, %v4521
        %v4543 = vmul.f32 %v4507, %v4521
        %v4544 = vmul.f32 %v4508, %v4521
        %v4545 = vmul.f32 %v4509, %v4521
        %v4546 = vmul.f32 %v4510, %v4521
        %v4547 = vmul.f32 %v4511, %v4521
        %v4548 = vmul.f32 %v4512, %v4521
        %v4549 = vmul.f32 %v4513, %v4521
        %v4550 = vmul.f32 %v4514, %v4521
        %v4551 = vmul.f32 %v4515, %v4521
        %v4552 = vmul.f32 %v4516, %v4521
        %v4553 = vmul.f32 %v4517, %v4521
        %v4554 = vlaneseq
        %v4555 = vshrl.u32 %v4554, 7
        %v4556 = vsub.s32 6, %v4555
        %v4557 = vrot.slane %v321, %v4556
        %v4558 = vadd.f32 %v4522, %v4557
        %v4559 = vadd.f32 %v4523, %v4557
        %v4560 = vadd.f32 %v4524, %v4557
        %v4561 = vadd.f32 %v4525, %v4557
        %v4562 = vadd.f32 %v4526, %v4557
        %v4563 = vadd.f32 %v4527, %v4557
        %v4564 = vadd.f32 %v4528, %v4557
        %v4565 = vadd.f32 %v4529, %v4557
        %v4566 = vadd.f32 %v4530, %v4557
        %v4567 = vadd.f32 %v4531, %v4557
        %v4568 = vadd.f32 %v4532, %v4557
        %v4569 = vadd.f32 %v4533, %v4557
        %v4570 = vadd.f32 %v4534, %v4557
        %v4571 = vadd.f32 %v4535, %v4557
        %v4572 = vadd.f32 %v4536, %v4557
        %v4573 = vadd.f32 %v4537, %v4557
        %v4574 = vadd.f32 %v4538, %v4557
        %v4575 = vadd.f32 %v4539, %v4557
        %v4576 = vadd.f32 %v4540, %v4557
        %v4577 = vadd.f32 %v4541, %v4557
        %v4578 = vadd.f32 %v4542, %v4557
        %v4579 = vadd.f32 %v4543, %v4557
        %v4580 = vadd.f32 %v4544, %v4557
        %v4581 = vadd.f32 %v4545, %v4557
        %v4582 = vadd.f32 %v4546, %v4557
        %v4583 = vadd.f32 %v4547, %v4557
        %v4584 = vadd.f32 %v4548, %v4557
        %v4585 = vadd.f32 %v4549, %v4557
        %v4586 = vadd.f32 %v4550, %v4557
        %v4587 = vadd.f32 %v4551, %v4557
        %v4588 = vadd.f32 %v4552, %v4557
        %v4589 = vadd.f32 %v4553, %v4557
        %vm4590 = vcmp.ge.f32.partialorder %v4558, 0.0
        %vm4591 = vcmp.ge.f32.partialorder %v4559, 0.0
        %vm4592 = vcmp.ge.f32.partialorder %v4560, 0.0
        %vm4593 = vcmp.ge.f32.partialorder %v4561, 0.0
        %vm4594 = vcmp.ge.f32.partialorder %v4562, 0.0
        %vm4595 = vcmp.ge.f32.partialorder %v4563, 0.0
        %vm4596 = vcmp.ge.f32.partialorder %v4564, 0.0
        %vm4597 = vcmp.ge.f32.partialorder %v4565, 0.0
        %vm4598 = vcmp.ge.f32.partialorder %v4566, 0.0
        %vm4599 = vcmp.ge.f32.partialorder %v4567, 0.0
        %vm4600 = vcmp.ge.f32.partialorder %v4568, 0.0
        %vm4601 = vcmp.ge.f32.partialorder %v4569, 0.0
        %vm4602 = vcmp.ge.f32.partialorder %v4570, 0.0
        %vm4603 = vcmp.ge.f32.partialorder %v4571, 0.0
        %vm4604 = vcmp.ge.f32.partialorder %v4572, 0.0
        %vm4605 = vcmp.ge.f32.partialorder %v4573, 0.0
        %vm4606 = vcmp.ge.f32.partialorder %v4574, 0.0
        %vm4607 = vcmp.ge.f32.partialorder %v4575, 0.0
        %vm4608 = vcmp.ge.f32.partialorder %v4576, 0.0
        %vm4609 = vcmp.ge.f32.partialorder %v4577, 0.0
        %vm4610 = vcmp.ge.f32.partialorder %v4578, 0.0
        %vm4611 = vcmp.ge.f32.partialorder %v4579, 0.0
        %vm4612 = vcmp.ge.f32.partialorder %v4580, 0.0
        %vm4613 = vcmp.ge.f32.partialorder %v4581, 0.0
        %vm4614 = vcmp.ge.f32.partialorder %v4582, 0.0
        %vm4615 = vcmp.ge.f32.partialorder %v4583, 0.0
        %vm4616 = vcmp.ge.f32.partialorder %v4584, 0.0
        %vm4617 = vcmp.ge.f32.partialorder %v4585, 0.0
        %vm4618 = vcmp.ge.f32.partialorder %v4586, 0.0
        %vm4619 = vcmp.ge.f32.partialorder %v4587, 0.0
        %vm4620 = vcmp.ge.f32.partialorder %v4588, 0.0
        %vm4621 = vcmp.ge.f32.partialorder %v4589, 0.0
        %v4622 = vlaneseq
        %v4623 = vshrl.u32 %v4622, 7
        %v4624 = vsub.s32 7, %v4623
        %v4625 = vrot.slane %v321, %v4624
        %v4626 = vmul.f32 %v4625, %v4558
        %v4627 = vmul.f32 %v4625, %v4559
        %v4628 = vmul.f32 %v4625, %v4560
        %v4629 = vmul.f32 %v4625, %v4561
        %v4630 = vmul.f32 %v4625, %v4562
        %v4631 = vmul.f32 %v4625, %v4563
        %v4632 = vmul.f32 %v4625, %v4564
        %v4633 = vmul.f32 %v4625, %v4565
        %v4634 = vmul.f32 %v4625, %v4566
        %v4635 = vmul.f32 %v4625, %v4567
        %v4636 = vmul.f32 %v4625, %v4568
        %v4637 = vmul.f32 %v4625, %v4569
        %v4638 = vmul.f32 %v4625, %v4570
        %v4639 = vmul.f32 %v4625, %v4571
        %v4640 = vmul.f32 %v4625, %v4572
        %v4641 = vmul.f32 %v4625, %v4573
        %v4642 = vmul.f32 %v4625, %v4574
        %v4643 = vmul.f32 %v4625, %v4575
        %v4644 = vmul.f32 %v4625, %v4576
        %v4645 = vmul.f32 %v4625, %v4577
        %v4646 = vmul.f32 %v4625, %v4578
        %v4647 = vmul.f32 %v4625, %v4579
        %v4648 = vmul.f32 %v4625, %v4580
        %v4649 = vmul.f32 %v4625, %v4581
        %v4650 = vmul.f32 %v4625, %v4582
        %v4651 = vmul.f32 %v4625, %v4583
        %v4652 = vmul.f32 %v4625, %v4584
        %v4653 = vmul.f32 %v4625, %v4585
        %v4654 = vmul.f32 %v4625, %v4586
        %v4655 = vmul.f32 %v4625, %v4587
        %v4656 = vmul.f32 %v4625, %v4588
        %v4657 = vmul.f32 %v4625, %v4589
        %v4658 = vsel %vm4590, %v4558, %v4626
        %v4659 = vsel %vm4591, %v4559, %v4627
        %v4660 = vsel %vm4592, %v4560, %v4628
        %v4661 = vsel %vm4593, %v4561, %v4629
        %v4662 = vsel %vm4594, %v4562, %v4630
        %v4663 = vsel %vm4595, %v4563, %v4631
        %v4664 = vsel %vm4596, %v4564, %v4632
        %v4665 = vsel %vm4597, %v4565, %v4633
        %v4666 = vsel %vm4598, %v4566, %v4634
        %v4667 = vsel %vm4599, %v4567, %v4635
        %v4668 = vsel %vm4600, %v4568, %v4636
        %v4669 = vsel %vm4601, %v4569, %v4637
        %v4670 = vsel %vm4602, %v4570, %v4638
        %v4671 = vsel %vm4603, %v4571, %v4639
        %v4672 = vsel %vm4604, %v4572, %v4640
        %v4673 = vsel %vm4605, %v4573, %v4641
        %v4674 = vsel %vm4606, %v4574, %v4642
        %v4675 = vsel %vm4607, %v4575, %v4643
        %v4676 = vsel %vm4608, %v4576, %v4644
        %v4677 = vsel %vm4609, %v4577, %v4645
        %v4678 = vsel %vm4610, %v4578, %v4646
        %v4679 = vsel %vm4611, %v4579, %v4647
        %v4680 = vsel %vm4612, %v4580, %v4648
        %v4681 = vsel %vm4613, %v4581, %v4649
        %v4682 = vsel %vm4614, %v4582, %v4650
        %v4683 = vsel %vm4615, %v4583, %v4651
        %v4684 = vsel %vm4616, %v4584, %v4652
        %v4685 = vsel %vm4617, %v4585, %v4653
        %v4686 = vsel %vm4618, %v4586, %v4654
        %v4687 = vsel %vm4619, %v4587, %v4655
        %v4688 = vsel %vm4620, %v4588, %v4656
        %v4689 = vsel %vm4621, %v4589, %v4657
        %v4690 = vpack.c.bf16 %v4659, %v4658
        %v4691 = vpack.c.bf16 %v4661, %v4660
        %v4692 = vpack.c.bf16 %v4663, %v4662
        %v4693 = vpack.c.bf16 %v4665, %v4664
        %v4694 = vpack.c.bf16 %v4667, %v4666
        %v4695 = vpack.c.bf16 %v4669, %v4668
        %v4696 = vpack.c.bf16 %v4671, %v4670
        %v4697 = vpack.c.bf16 %v4673, %v4672
        %v4698 = vpack.c.bf16 %v4675, %v4674
        %v4699 = vpack.c.bf16 %v4677, %v4676
        %v4700 = vpack.c.bf16 %v4679, %v4678
        %v4701 = vpack.c.bf16 %v4681, %v4680
        %v4702 = vpack.c.bf16 %v4683, %v4682
        %v4703 = vpack.c.bf16 %v4685, %v4684
        %v4704 = vpack.c.bf16 %v4687, %v4686
        %v4705 = vpack.c.bf16 %v4689, %v4688
        %s4706 = smul.addr %s319, 4
        %s4707 = scalar_lea.vmem %s2, %s4706
        %v4708 = vld [vmem:[%s4707] sm:$0xf]
        %v4709 = vld [vmem:[%s4707 + $0x4] sm:$0xf]
        %v4710 = vld [vmem:[%s4707 + $0x8] sm:$0xf]
        %v4711 = vld [vmem:[%s4707 + $0xc] sm:$0xf]
        %v4712 = vld [vmem:[%s4707 + $0x10] sm:$0xf]
        %v4713 = vld [vmem:[%s4707 + $0x14] sm:$0xf]
        %v4714 = vld [vmem:[%s4707 + $0x18] sm:$0xf]
        %v4715 = vld [vmem:[%s4707 + $0x1c] sm:$0xf]
        %v4716 = vld [vmem:[%s4707 + $0x20] sm:$0xf]
        %v4717 = vld [vmem:[%s4707 + $0x24] sm:$0xf]
        %v4718 = vld [vmem:[%s4707 + $0x28] sm:$0xf]
        %v4719 = vld [vmem:[%s4707 + $0x2c] sm:$0xf]
        %v4720 = vld [vmem:[%s4707 + $0x30] sm:$0xf]
        %v4721 = vld [vmem:[%s4707 + $0x34] sm:$0xf]
        %v4722 = vld [vmem:[%s4707 + $0x38] sm:$0xf]
        %v4723 = vld [vmem:[%s4707 + $0x3c] sm:$0xf]
        %v4724 = vlaneseq
        %v4725 = vshrl.u32 %v4724, 7
        %v4726 = vsub.s32 0, %v4725
        %v4727 = vrot.slane %v322, %v4726
        %v4744 = vunpack.c.l.b16 %v4708
        %v4745 = vunpack.c.l.b16 %v4709
        %v4746 = vunpack.c.l.b16 %v4710
        %v4747 = vunpack.c.l.b16 %v4711
        %v4748 = vunpack.c.l.b16 %v4712
        %v4749 = vunpack.c.l.b16 %v4713
        %v4750 = vunpack.c.l.b16 %v4714
        %v4751 = vunpack.c.l.b16 %v4715
        %v4752 = vunpack.c.l.b16 %v4716
        %v4753 = vunpack.c.l.b16 %v4717
        %v4754 = vunpack.c.l.b16 %v4718
        %v4755 = vunpack.c.l.b16 %v4719
        %v4756 = vunpack.c.l.b16 %v4720
        %v4757 = vunpack.c.l.b16 %v4721
        %v4758 = vunpack.c.l.b16 %v4722
        %v4759 = vunpack.c.l.b16 %v4723
        %v4760 = vpack.c.b16 %v4745, %v4744
        %v4761 = vpack.c.b16 %v4747, %v4746
        %v4762 = vpack.c.b16 %v4749, %v4748
        %v4763 = vpack.c.b16 %v4751, %v4750
        %v4764 = vpack.c.b16 %v4753, %v4752
        %v4765 = vpack.c.b16 %v4755, %v4754
        %v4766 = vpack.c.b16 %v4757, %v4756
        %v4767 = vpack.c.b16 %v4759, %v4758
        %4776 = vmatprep.subr.bf16.mxu0 0
        %4777 = vmatpush1.bf16.msra.mxu0 %v4760
        %4778 = vmatprep.subr.bf16.mxu0 0
        %4779 = vmatpush1.bf16.msra.mxu0 %v4761
        %4780 = vmatprep.subr.bf16.mxu0 0
        %4781 = vmatpush1.bf16.msra.mxu0 %v4762
        %4782 = vmatprep.subr.bf16.mxu0 0
        %4783 = vmatpush1.bf16.msra.mxu0 %v4763
        %4784 = vmatprep.subr.bf16.mxu0 0
        %4785 = vmatpush1.bf16.msra.mxu0 %v4764
        %4786 = vmatprep.subr.bf16.mxu0 0
        %4787 = vmatpush1.bf16.msra.mxu0 %v4765
        %4788 = vmatprep.subr.bf16.mxu0 0
        %4789 = vmatpush1.bf16.msra.mxu0 %v4766
        %4790 = vmatprep.subr.bf16.mxu0 0
        %4791 = vmatpush1.bf16.msra.mxu0 %v4767
        %4792 = vmatprep.subr.bf16.mxu0 0
        %4793 = vmatpush1.bf16.msra.mxu0 0
        %4794 = vmatprep.subr.bf16.mxu0 0
        %4795 = vmatpush1.bf16.msra.mxu0 0
        %4796 = vmatprep.subr.bf16.mxu0 0
        %4797 = vmatpush1.bf16.msra.mxu0 0
        %4798 = vmatprep.subr.bf16.mxu0 0
        %4799 = vmatpush1.bf16.msra.mxu0 0
        %4800 = vmatprep.subr.bf16.mxu0 0
        %4801 = vmatpush1.bf16.msra.mxu0 0
        %4802 = vmatprep.subr.bf16.mxu0 0
        %4803 = vmatpush1.bf16.msra.mxu0 0
        %4804 = vmatprep.subr.bf16.mxu0 0
        %4805 = vmatpush1.bf16.msra.mxu0 0
        %4806 = vmatprep.subr.bf16.mxu0 0
        %4807 = vmatpush1.bf16.msra.mxu0 0
        %4808 = vmatprep.mubr.bf16.mxu0 0
        %4809 = vmatmul.mubr.bf16.gmra.mrb[0].mxu0 %v4690
        %v4810 = vpop.f32.mrb[0].mxu0
        %v4811 = vadd.f32 %v4727, %v4810
        %v4812 = vpop.f32.mrb[0].mxu0
        %v4813 = vpop.f32.mrb[0].mxu0
        %v4814 = vadd.f32 %v4727, %v4813
        %v4815 = vpop.f32.mrb[0].mxu0
        %4816 = vmatprep.mubr.bf16.mxu0 0
        %4817 = vmatmul.mubr.bf16.gmra.mrb[0].mxu0 %v4691
        %v4818 = vpop.f32.mrb[0].mxu0
        %v4819 = vadd.f32 %v4727, %v4818
        %v4820 = vpop.f32.mrb[0].mxu0
        %v4821 = vpop.f32.mrb[0].mxu0
        %v4822 = vadd.f32 %v4727, %v4821
        %v4823 = vpop.f32.mrb[0].mxu0
        %4824 = vmatprep.mubr.bf16.mxu0 0
        %4825 = vmatmul.mubr.bf16.gmra.mrb[0].mxu0 %v4692
        %v4826 = vpop.f32.mrb[0].mxu0
        %v4827 = vadd.f32 %v4727, %v4826
        %v4828 = vpop.f32.mrb[0].mxu0
        %v4829 = vpop.f32.mrb[0].mxu0
        %v4830 = vadd.f32 %v4727, %v4829
        %v4831 = vpop.f32.mrb[0].mxu0
        %4832 = vmatprep.mubr.bf16.mxu0 0
        %4833 = vmatmul.mubr.bf16.gmra.mrb[0].mxu0 %v4693
        %v4834 = vpop.f32.mrb[0].mxu0
        %v4835 = vadd.f32 %v4727, %v4834
        %v4836 = vpop.f32.mrb[0].mxu0
        %v4837 = vpop.f32.mrb[0].mxu0
        %v4838 = vadd.f32 %v4727, %v4837
        %v4839 = vpop.f32.mrb[0].mxu0
        %4840 = vmatprep.mubr.bf16.mxu0 0
        %4841 = vmatmul.mubr.bf16.gmra.mrb[0].mxu0 %v4694
        %v4842 = vpop.f32.mrb[0].mxu0
        %v4843 = vadd.f32 %v4727, %v4842
        %v4844 = vpop.f32.mrb[0].mxu0
        %v4845 = vpop.f32.mrb[0].mxu0
        %v4846 = vadd.f32 %v4727, %v4845
        %v4847 = vpop.f32.mrb[0].mxu0
        %4848 = vmatprep.mubr.bf16.mxu0 0
        %4849 = vmatmul.mubr.bf16.gmra.mrb[0].mxu0 %v4695
        %v4850 = vpop.f32.mrb[0].mxu0
        %v4851 = vadd.f32 %v4727, %v4850
        %v4852 = vpop.f32.mrb[0].mxu0
        %v4853 = vpop.f32.mrb[0].mxu0
        %v4854 = vadd.f32 %v4727, %v4853
        %v4855 = vpop.f32.mrb[0].mxu0
        %4856 = vmatprep.mubr.bf16.mxu0 0
        %4857 = vmatmul.mubr.bf16.gmra.mrb[0].mxu0 %v4696
        %v4858 = vpop.f32.mrb[0].mxu0
        %v4859 = vadd.f32 %v4727, %v4858
        %v4860 = vpop.f32.mrb[0].mxu0
        %v4861 = vpop.f32.mrb[0].mxu0
        %v4862 = vadd.f32 %v4727, %v4861
        %v4863 = vpop.f32.mrb[0].mxu0
        %4864 = vmatprep.mubr.bf16.mxu0 0
        %4865 = vmatmul.mubr.bf16.gmra.mrb[0].mxu0 %v4697
        %v4866 = vpop.f32.mrb[0].mxu0
        %v4867 = vadd.f32 %v4727, %v4866
        %v4868 = vpop.f32.mrb[0].mxu0
        %v4869 = vpop.f32.mrb[0].mxu0
        %v4870 = vadd.f32 %v4727, %v4869
        %v4871 = vpop.f32.mrb[0].mxu0
        %4872 = vmatprep.mubr.bf16.mxu0 0
        %4873 = vmatmul.mubr.bf16.gmra.mrb[0].mxu0 %v4698
        %v4874 = vpop.f32.mrb[0].mxu0
        %v4875 = vadd.f32 %v4727, %v4874
        %v4876 = vpop.f32.mrb[0].mxu0
        %v4877 = vpop.f32.mrb[0].mxu0
        %v4878 = vadd.f32 %v4727, %v4877
        %v4879 = vpop.f32.mrb[0].mxu0
        %4880 = vmatprep.mubr.bf16.mxu0 0
        %4881 = vmatmul.mubr.bf16.gmra.mrb[0].mxu0 %v4699
        %v4882 = vpop.f32.mrb[0].mxu0
        %v4883 = vadd.f32 %v4727, %v4882
        %v4884 = vpop.f32.mrb[0].mxu0
        %v4885 = vpop.f32.mrb[0].mxu0
        %v4886 = vadd.f32 %v4727, %v4885
        %v4887 = vpop.f32.mrb[0].mxu0
        %4888 = vmatprep.mubr.bf16.mxu0 0
        %4889 = vmatmul.mubr.bf16.gmra.mrb[0].mxu0 %v4700
        %v4890 = vpop.f32.mrb[0].mxu0
        %v4891 = vadd.f32 %v4727, %v4890
        %v4892 = vpop.f32.mrb[0].mxu0
        %v4893 = vpop.f32.mrb[0].mxu0
        %v4894 = vadd.f32 %v4727, %v4893
        %v4895 = vpop.f32.mrb[0].mxu0
        %4896 = vmatprep.mubr.bf16.mxu0 0
        %4897 = vmatmul.mubr.bf16.gmra.mrb[0].mxu0 %v4701
        %v4898 = vpop.f32.mrb[0].mxu0
        %v4899 = vadd.f32 %v4727, %v4898
        %v4900 = vpop.f32.mrb[0].mxu0
        %v4901 = vpop.f32.mrb[0].mxu0
        %v4902 = vadd.f32 %v4727, %v4901
        %v4903 = vpop.f32.mrb[0].mxu0
        %4904 = vmatprep.mubr.bf16.mxu0 0
        %4905 = vmatmul.mubr.bf16.gmra.mrb[0].mxu0 %v4702
        %v4906 = vpop.f32.mrb[0].mxu0
        %v4907 = vadd.f32 %v4727, %v4906
        %v4908 = vpop.f32.mrb[0].mxu0
        %v4909 = vpop.f32.mrb[0].mxu0
        %v4910 = vadd.f32 %v4727, %v4909
        %v4911 = vpop.f32.mrb[0].mxu0
        %4912 = vmatprep.mubr.bf16.mxu0 0
        %4913 = vmatmul.mubr.bf16.gmra.mrb[0].mxu0 %v4703
        %v4914 = vpop.f32.mrb[0].mxu0
        %v4915 = vadd.f32 %v4727, %v4914
        %v4916 = vpop.f32.mrb[0].mxu0
        %v4917 = vpop.f32.mrb[0].mxu0
        %v4918 = vadd.f32 %v4727, %v4917
        %v4919 = vpop.f32.mrb[0].mxu0
        %4920 = vmatprep.mubr.bf16.mxu0 0
        %4921 = vmatmul.mubr.bf16.gmra.mrb[0].mxu0 %v4704
        %v4922 = vpop.f32.mrb[0].mxu0
        %v4923 = vadd.f32 %v4727, %v4922
        %v4924 = vpop.f32.mrb[0].mxu0
        %v4925 = vpop.f32.mrb[0].mxu0
        %v4926 = vadd.f32 %v4727, %v4925
        %v4927 = vpop.f32.mrb[0].mxu0
        %4928 = vmatprep.mubr.bf16.mxu0 0
        %4929 = vmatmul.mubr.bf16.gmra.mrb[0].mxu0 %v4705
        %v4930 = vpop.f32.mrb[0].mxu0
        %v4931 = vadd.f32 %v4727, %v4930
        %v4932 = vpop.f32.mrb[0].mxu0
        %v4933 = vpop.f32.mrb[0].mxu0
        %v4934 = vadd.f32 %v4727, %v4933
        %v4935 = vpop.f32.mrb[0].mxu0
        %4936 = vdwg.mxu0
        %v4937 = vld [vmem:[%s5] sm:$0xff]
        %v4938 = vld [vmem:[%s5 + $0x8] sm:$0xff]
        %v4939 = vld [vmem:[%s5 + $0x10] sm:$0xff]
        %v4940 = vld [vmem:[%s5 + $0x18] sm:$0xff]
        %v4941 = vld [vmem:[%s5 + $0x20] sm:$0xff]
        %v4942 = vld [vmem:[%s5 + $0x28] sm:$0xff]
        %v4943 = vld [vmem:[%s5 + $0x30] sm:$0xff]
        %v4944 = vld [vmem:[%s5 + $0x38] sm:$0xff]
        %v4945 = vld [vmem:[%s5 + $0x40] sm:$0xff]
        %v4946 = vld [vmem:[%s5 + $0x48] sm:$0xff]
        %v4947 = vld [vmem:[%s5 + $0x50] sm:$0xff]
        %v4948 = vld [vmem:[%s5 + $0x58] sm:$0xff]
        %v4949 = vld [vmem:[%s5 + $0x60] sm:$0xff]
        %v4950 = vld [vmem:[%s5 + $0x68] sm:$0xff]
        %v4951 = vld [vmem:[%s5 + $0x70] sm:$0xff]
        %v4952 = vld [vmem:[%s5 + $0x78] sm:$0xff]
        %v4953 = vld [vmem:[%s5 + $0x80] sm:$0xff]
        %v4954 = vld [vmem:[%s5 + $0x88] sm:$0xff]
        %v4955 = vld [vmem:[%s5 + $0x90] sm:$0xff]
        %v4956 = vld [vmem:[%s5 + $0x98] sm:$0xff]
        %v4957 = vld [vmem:[%s5 + $0xa0] sm:$0xff]
        %v4958 = vld [vmem:[%s5 + $0xa8] sm:$0xff]
        %v4959 = vld [vmem:[%s5 + $0xb0] sm:$0xff]
        %v4960 = vld [vmem:[%s5 + $0xb8] sm:$0xff]
        %v4961 = vld [vmem:[%s5 + $0xc0] sm:$0xff]
        %v4962 = vld [vmem:[%s5 + $0xc8] sm:$0xff]
        %v4963 = vld [vmem:[%s5 + $0xd0] sm:$0xff]
        %v4964 = vld [vmem:[%s5 + $0xd8] sm:$0xff]
        %v4965 = vld [vmem:[%s5 + $0xe0] sm:$0xff]
        %v4966 = vld [vmem:[%s5 + $0xe8] sm:$0xff]
        %v4967 = vld [vmem:[%s5 + $0xf0] sm:$0xff]
        %v4968 = vld [vmem:[%s5 + $0xf8] sm:$0xff]
        %v4969 = vadd.f32 %v4811, %v4937
        %v4970 = vadd.f32 %v4814, %v4938
        %v4971 = vadd.f32 %v4819, %v4939
        %v4972 = vadd.f32 %v4822, %v4940
        %v4973 = vadd.f32 %v4827, %v4941
        %v4974 = vadd.f32 %v4830, %v4942
        %v4975 = vadd.f32 %v4835, %v4943
        %v4976 = vadd.f32 %v4838, %v4944
        %v4977 = vadd.f32 %v4843, %v4945
        %v4978 = vadd.f32 %v4846, %v4946
        %v4979 = vadd.f32 %v4851, %v4947
        %v4980 = vadd.f32 %v4854, %v4948
        %v4981 = vadd.f32 %v4859, %v4949
        %v4982 = vadd.f32 %v4862, %v4950
        %v4983 = vadd.f32 %v4867, %v4951
        %v4984 = vadd.f32 %v4870, %v4952
        %v4985 = vadd.f32 %v4875, %v4953
        %v4986 = vadd.f32 %v4878, %v4954
        %v4987 = vadd.f32 %v4883, %v4955
        %v4988 = vadd.f32 %v4886, %v4956
        %v4989 = vadd.f32 %v4891, %v4957
        %v4990 = vadd.f32 %v4894, %v4958
        %v4991 = vadd.f32 %v4899, %v4959
        %v4992 = vadd.f32 %v4902, %v4960
        %v4993 = vadd.f32 %v4907, %v4961
        %v4994 = vadd.f32 %v4910, %v4962
        %v4995 = vadd.f32 %v4915, %v4963
        %v4996 = vadd.f32 %v4918, %v4964
        %v4997 = vadd.f32 %v4923, %v4965
        %v4998 = vadd.f32 %v4926, %v4966
        %v4999 = vadd.f32 %v4931, %v4967
        %v5000 = vadd.f32 %v4934, %v4968
        %5001 = vst [vmem:[%s5] sm:$0xff] %v4969
        %5002 = vst [vmem:[%s5 + $0x8] sm:$0xff] %v4970
        %5003 = vst [vmem:[%s5 + $0x10] sm:$0xff] %v4971
        %5004 = vst [vmem:[%s5 + $0x18] sm:$0xff] %v4972
        %5005 = vst [vmem:[%s5 + $0x20] sm:$0xff] %v4973
        %5006 = vst [vmem:[%s5 + $0x28] sm:$0xff] %v4974
        %5007 = vst [vmem:[%s5 + $0x30] sm:$0xff] %v4975
        %5008 = vst [vmem:[%s5 + $0x38] sm:$0xff] %v4976
        %5009 = vst [vmem:[%s5 + $0x40] sm:$0xff] %v4977
        %5010 = vst [vmem:[%s5 + $0x48] sm:$0xff] %v4978
        %5011 = vst [vmem:[%s5 + $0x50] sm:$0xff] %v4979
        %5012 = vst [vmem:[%s5 + $0x58] sm:$0xff] %v4980
        %5013 = vst [vmem:[%s5 + $0x60] sm:$0xff] %v4981
        %5014 = vst [vmem:[%s5 + $0x68] sm:$0xff] %v4982
        %5015 = vst [vmem:[%s5 + $0x70] sm:$0xff] %v4983
        %5016 = vst [vmem:[%s5 + $0x78] sm:$0xff] %v4984
        %5017 = vst [vmem:[%s5 + $0x80] sm:$0xff] %v4985
        %5018 = vst [vmem:[%s5 + $0x88] sm:$0xff] %v4986
        %5019 = vst [vmem:[%s5 + $0x90] sm:$0xff] %v4987
        %5020 = vst [vmem:[%s5 + $0x98] sm:$0xff] %v4988
        %5021 = vst [vmem:[%s5 + $0xa0] sm:$0xff] %v4989
        %5022 = vst [vmem:[%s5 + $0xa8] sm:$0xff] %v4990
        %5023 = vst [vmem:[%s5 + $0xb0] sm:$0xff] %v4991
        %5024 = vst [vmem:[%s5 + $0xb8] sm:$0xff] %v4992
        %5025 = vst [vmem:[%s5 + $0xc0] sm:$0xff] %v4993
        %5026 = vst [vmem:[%s5 + $0xc8] sm:$0xff] %v4994
        %5027 = vst [vmem:[%s5 + $0xd0] sm:$0xff] %v4995
        %5028 = vst [vmem:[%s5 + $0xd8] sm:$0xff] %v4996
        %5029 = vst [vmem:[%s5 + $0xe0] sm:$0xff] %v4997
        %5030 = vst [vmem:[%s5 + $0xe8] sm:$0xff] %v4998
        %5031 = vst [vmem:[%s5 + $0xf0] sm:$0xff] %v4999
        %5032 = vst [vmem:[%s5 + $0xf8] sm:$0xff] %v5000
      $region56: #{tfcm_pallas.1} parent=39 // pred_fallthru
        _
      %p5033 = scmp.eq.s32.totalorder %s16, 3
      // Predicated region
      $region57: #{tfcm_pallas.1} parent=39 // pred_check
        %p5034 = pneg %p5033
      $region58: #{tfcm_pallas.1} parent=39 // pred_check_branch
        %5036 = sbr.rel (%p5034) target = $region60
      $region59: #{tfcm_pallas.1} parent=39 // pred_region
        %v5037 = vld [vmem:[%s777 + $0x8] sm:$0xff]
        %v5038 = vld [vmem:[%s777 + $0x10] sm:$0xff]
        %v5039 = vld [vmem:[%s777 + $0x20] sm:$0xff]
        %v5040 = vld [vmem:[%s777 + $0x28] sm:$0xff]
        %v5041 = vld [vmem:[%s777 + $0x38] sm:$0xff]
        %v5042 = vld [vmem:[%s777 + $0x40] sm:$0xff]
        %v5043 = vld [vmem:[%s777 + $0x50] sm:$0xff]
        %v5044 = vld [vmem:[%s777 + $0x58] sm:$0xff]
        %v5045 = vld [vmem:[%s777 + $0x68] sm:$0xff]
        %v5046 = vld [vmem:[%s777 + $0x70] sm:$0xff]
        %v5047 = vld [vmem:[%s777 + $0x80] sm:$0xff]
        %v5048 = vld [vmem:[%s777 + $0x88] sm:$0xff]
        %v5049 = vld [vmem:[%s777 + $0x98] sm:$0xff]
        %v5050 = vld [vmem:[%s777 + $0xa0] sm:$0xff]
        %v5051 = vld [vmem:[%s777 + $0xb0] sm:$0xff]
        %v5052 = vld [vmem:[%s777 + $0xb8] sm:$0xff]
        %v5053 = vld [vmem:[%s777 + $0xf8] sm:$0xff]
        %v5054 = vld [vmem:[%s777 + $0x100] sm:$0xff]
        %v5055 = vld [vmem:[%s777 + $0x110] sm:$0xff]
        %v5056 = vld [vmem:[%s777 + $0x118] sm:$0xff]
        %v5057 = vld [vmem:[%s777 + $0x128] sm:$0xff]
        %v5058 = vld [vmem:[%s777 + $0x130] sm:$0xff]
        %v5059 = vld [vmem:[%s777 + $0x140] sm:$0xff]
        %v5060 = vld [vmem:[%s777 + $0x148] sm:$0xff]
        %v5061 = vld [vmem:[%s777 + $0x158] sm:$0xff]
        %v5062 = vld [vmem:[%s777 + $0x160] sm:$0xff]
        %v5063 = vld [vmem:[%s777 + $0x170] sm:$0xff]
        %v5064 = vld [vmem:[%s777 + $0x178] sm:$0xff]
        %v5065 = vld [vmem:[%s777 + $0x188] sm:$0xff]
        %v5066 = vld [vmem:[%s777 + $0x190] sm:$0xff]
        %v5067 = vld [vmem:[%s777 + $0x1a0] sm:$0xff]
        %v5068 = vld [vmem:[%s777 + $0x1a8] sm:$0xff]
        %v5069 = vlaneseq
        %v5070 = vshrl.u32 %v5069, 7
        %v5071 = vsub.s32 5, %v5070
        %v5072 = vrot.slane %v324, %v5071
        %v5073 = vmul.f32 %v5037, %v5072
        %v5074 = vmul.f32 %v5038, %v5072
        %v5075 = vmul.f32 %v5039, %v5072
        %v5076 = vmul.f32 %v5040, %v5072
        %v5077 = vmul.f32 %v5041, %v5072
        %v5078 = vmul.f32 %v5042, %v5072
        %v5079 = vmul.f32 %v5043, %v5072
        %v5080 = vmul.f32 %v5044, %v5072
        %v5081 = vmul.f32 %v5045, %v5072
        %v5082 = vmul.f32 %v5046, %v5072
        %v5083 = vmul.f32 %v5047, %v5072
        %v5084 = vmul.f32 %v5048, %v5072
        %v5085 = vmul.f32 %v5049, %v5072
        %v5086 = vmul.f32 %v5050, %v5072
        %v5087 = vmul.f32 %v5051, %v5072
        %v5088 = vmul.f32 %v5052, %v5072
        %v5089 = vmul.f32 %v5053, %v5072
        %v5090 = vmul.f32 %v5054, %v5072
        %v5091 = vmul.f32 %v5055, %v5072
        %v5092 = vmul.f32 %v5056, %v5072
        %v5093 = vmul.f32 %v5057, %v5072
        %v5094 = vmul.f32 %v5058, %v5072
        %v5095 = vmul.f32 %v5059, %v5072
        %v5096 = vmul.f32 %v5060, %v5072
        %v5097 = vmul.f32 %v5061, %v5072
        %v5098 = vmul.f32 %v5062, %v5072
        %v5099 = vmul.f32 %v5063, %v5072
        %v5100 = vmul.f32 %v5064, %v5072
        %v5101 = vmul.f32 %v5065, %v5072
        %v5102 = vmul.f32 %v5066, %v5072
        %v5103 = vmul.f32 %v5067, %v5072
        %v5104 = vmul.f32 %v5068, %v5072
        %v5105 = vlaneseq
        %v5106 = vshrl.u32 %v5105, 7
        %v5107 = vsub.s32 4, %v5106
        %v5108 = vrot.slane %v321, %v5107
        %v5109 = vadd.f32 %v5073, %v5108
        %v5110 = vadd.f32 %v5074, %v5108
        %v5111 = vadd.f32 %v5075, %v5108
        %v5112 = vadd.f32 %v5076, %v5108
        %v5113 = vadd.f32 %v5077, %v5108
        %v5114 = vadd.f32 %v5078, %v5108
        %v5115 = vadd.f32 %v5079, %v5108
        %v5116 = vadd.f32 %v5080, %v5108
        %v5117 = vadd.f32 %v5081, %v5108
        %v5118 = vadd.f32 %v5082, %v5108
        %v5119 = vadd.f32 %v5083, %v5108
        %v5120 = vadd.f32 %v5084, %v5108
        %v5121 = vadd.f32 %v5085, %v5108
        %v5122 = vadd.f32 %v5086, %v5108
        %v5123 = vadd.f32 %v5087, %v5108
        %v5124 = vadd.f32 %v5088, %v5108
        %v5125 = vadd.f32 %v5089, %v5108
        %v5126 = vadd.f32 %v5090, %v5108
        %v5127 = vadd.f32 %v5091, %v5108
        %v5128 = vadd.f32 %v5092, %v5108
        %v5129 = vadd.f32 %v5093, %v5108
        %v5130 = vadd.f32 %v5094, %v5108
        %v5131 = vadd.f32 %v5095, %v5108
        %v5132 = vadd.f32 %v5096, %v5108
        %v5133 = vadd.f32 %v5097, %v5108
        %v5134 = vadd.f32 %v5098, %v5108
        %v5135 = vadd.f32 %v5099, %v5108
        %v5136 = vadd.f32 %v5100, %v5108
        %v5137 = vadd.f32 %v5101, %v5108
        %v5138 = vadd.f32 %v5102, %v5108
        %v5139 = vadd.f32 %v5103, %v5108
        %v5140 = vadd.f32 %v5104, %v5108
        %v5141 = vld [vmem:[#allocation2] sm:$0xff]
        %v5142 = vld [vmem:[#allocation2 + $0x8] sm:$0xff]
        %v5143 = vld [vmem:[#allocation2 + $0x18] sm:$0xff]
        %v5144 = vld [vmem:[#allocation2 + $0x20] sm:$0xff]
        %v5145 = vld [vmem:[#allocation2 + $0x30] sm:$0xff]
        %v5146 = vld [vmem:[#allocation2 + $0x38] sm:$0xff]
        %v5147 = vld [vmem:[#allocation2 + $0x48] sm:$0xff]
        %v5148 = vld [vmem:[#allocation2 + $0x50] sm:$0xff]
        %v5149 = vld [vmem:[#allocation2 + $0x60] sm:$0xff]
        %v5150 = vld [vmem:[#allocation2 + $0x68] sm:$0xff]
        %v5151 = vld [vmem:[#allocation2 + $0x78] sm:$0xff]
        %v5152 = vld [vmem:[#allocation2 + $0x80] sm:$0xff]
        %v5153 = vld [vmem:[#allocation2 + $0x90] sm:$0xff]
        %v5154 = vld [vmem:[#allocation2 + $0x98] sm:$0xff]
        %v5155 = vld [vmem:[#allocation2 + $0xa8] sm:$0xff]
        %v5156 = vld [vmem:[#allocation2 + $0xb0] sm:$0xff]
        %v5157 = vld [vmem:[#allocation2 + $0xf0] sm:$0xff]
        %v5158 = vld [vmem:[#allocation2 + $0xf8] sm:$0xff]
        %v5159 = vld [vmem:[#allocation2 + $0x108] sm:$0xff]
        %v5160 = vld [vmem:[#allocation2 + $0x110] sm:$0xff]
        %v5161 = vld [vmem:[#allocation2 + $0x120] sm:$0xff]
        %v5162 = vld [vmem:[#allocation2 + $0x128] sm:$0xff]
        %v5163 = vld [vmem:[#allocation2 + $0x138] sm:$0xff]
        %v5164 = vld [vmem:[#allocation2 + $0x140] sm:$0xff]
        %v5165 = vld [vmem:[#allocation2 + $0x150] sm:$0xff]
        %v5166 = vld [vmem:[#allocation2 + $0x158] sm:$0xff]
        %v5167 = vld [vmem:[#allocation2 + $0x168] sm:$0xff]
        %v5168 = vld [vmem:[#allocation2 + $0x170] sm:$0xff]
        %v5169 = vld [vmem:[#allocation2 + $0x180] sm:$0xff]
        %v5170 = vld [vmem:[#allocation2 + $0x188] sm:$0xff]
        %v5171 = vld [vmem:[#allocation2 + $0x198] sm:$0xff]
        %v5172 = vld [vmem:[#allocation2 + $0x1a0] sm:$0xff]
        %v5173 = vlaneseq
        %v5174 = vshrl.u32 %v5173, 7
        %v5175 = vsub.s32 1, %v5174
        %v5176 = vrot.slane %v324, %v5175
        %v5177 = vmul.f32 %v5141, %v5176
        %v5178 = vmul.f32 %v5142, %v5176
        %v5179 = vmul.f32 %v5143, %v5176
        %v5180 = vmul.f32 %v5144, %v5176
        %v5181 = vmul.f32 %v5145, %v5176
        %v5182 = vmul.f32 %v5146, %v5176
        %v5183 = vmul.f32 %v5147, %v5176
        %v5184 = vmul.f32 %v5148, %v5176
        %v5185 = vmul.f32 %v5149, %v5176
        %v5186 = vmul.f32 %v5150, %v5176
        %v5187 = vmul.f32 %v5151, %v5176
        %v5188 = vmul.f32 %v5152, %v5176
        %v5189 = vmul.f32 %v5153, %v5176
        %v5190 = vmul.f32 %v5154, %v5176
        %v5191 = vmul.f32 %v5155, %v5176
        %v5192 = vmul.f32 %v5156, %v5176
        %v5193 = vmul.f32 %v5157, %v5176
        %v5194 = vmul.f32 %v5158, %v5176
        %v5195 = vmul.f32 %v5159, %v5176
        %v5196 = vmul.f32 %v5160, %v5176
        %v5197 = vmul.f32 %v5161, %v5176
        %v5198 = vmul.f32 %v5162, %v5176
        %v5199 = vmul.f32 %v5163, %v5176
        %v5200 = vmul.f32 %v5164, %v5176
        %v5201 = vmul.f32 %v5165, %v5176
        %v5202 = vmul.f32 %v5166, %v5176
        %v5203 = vmul.f32 %v5167, %v5176
        %v5204 = vmul.f32 %v5168, %v5176
        %v5205 = vmul.f32 %v5169, %v5176
        %v5206 = vmul.f32 %v5170, %v5176
        %v5207 = vmul.f32 %v5171, %v5176
        %v5208 = vmul.f32 %v5172, %v5176
        %v5209 = vadd.f32 %v5109, %v5177
        %v5210 = vadd.f32 %v5110, %v5178
        %v5211 = vadd.f32 %v5111, %v5179
        %v5212 = vadd.f32 %v5112, %v5180
        %v5213 = vadd.f32 %v5113, %v5181
        %v5214 = vadd.f32 %v5114, %v5182
        %v5215 = vadd.f32 %v5115, %v5183
        %v5216 = vadd.f32 %v5116, %v5184
        %v5217 = vadd.f32 %v5117, %v5185
        %v5218 = vadd.f32 %v5118, %v5186
        %v5219 = vadd.f32 %v5119, %v5187
        %v5220 = vadd.f32 %v5120, %v5188
        %v5221 = vadd.f32 %v5121, %v5189
        %v5222 = vadd.f32 %v5122, %v5190
        %v5223 = vadd.f32 %v5123, %v5191
        %v5224 = vadd.f32 %v5124, %v5192
        %v5225 = vadd.f32 %v5125, %v5193
        %v5226 = vadd.f32 %v5126, %v5194
        %v5227 = vadd.f32 %v5127, %v5195
        %v5228 = vadd.f32 %v5128, %v5196
        %v5229 = vadd.f32 %v5129, %v5197
        %v5230 = vadd.f32 %v5130, %v5198
        %v5231 = vadd.f32 %v5131, %v5199
        %v5232 = vadd.f32 %v5132, %v5200
        %v5233 = vadd.f32 %v5133, %v5201
        %v5234 = vadd.f32 %v5134, %v5202
        %v5235 = vadd.f32 %v5135, %v5203
        %v5236 = vadd.f32 %v5136, %v5204
        %v5237 = vadd.f32 %v5137, %v5205
        %v5238 = vadd.f32 %v5138, %v5206
        %v5239 = vadd.f32 %v5139, %v5207
        %v5240 = vadd.f32 %v5140, %v5208
        %v5241 = vld [vmem:[%s777] sm:$0xff]
        %v5242 = vld [vmem:[%s777 + $0x18] sm:$0xff]
        %v5243 = vld [vmem:[%s777 + $0x30] sm:$0xff]
        %v5244 = vld [vmem:[%s777 + $0x48] sm:$0xff]
        %v5245 = vld [vmem:[%s777 + $0x60] sm:$0xff]
        %v5246 = vld [vmem:[%s777 + $0x78] sm:$0xff]
        %v5247 = vld [vmem:[%s777 + $0x90] sm:$0xff]
        %v5248 = vld [vmem:[%s777 + $0xa8] sm:$0xff]
        %v5249 = vld [vmem:[%s777 + $0xf0] sm:$0xff]
        %v5250 = vld [vmem:[%s777 + $0x108] sm:$0xff]
        %v5251 = vld [vmem:[%s777 + $0x120] sm:$0xff]
        %v5252 = vld [vmem:[%s777 + $0x138] sm:$0xff]
        %v5253 = vld [vmem:[%s777 + $0x150] sm:$0xff]
        %v5254 = vld [vmem:[%s777 + $0x168] sm:$0xff]
        %v5255 = vld [vmem:[%s777 + $0x180] sm:$0xff]
        %v5256 = vld [vmem:[%s777 + $0x198] sm:$0xff]
        %v5257 = vlaneseq
        %v5258 = vshrl.u32 %v5257, 7
        %v5259 = vsub.s32 4, %v5258
        %v5260 = vrot.slane %v324, %v5259
        %v5261 = vmul.f32 %v5241, %v5260
        %v5262 = vmul.f32 %v5037, %v5260
        %v5263 = vmul.f32 %v5242, %v5260
        %v5264 = vmul.f32 %v5039, %v5260
        %v5265 = vmul.f32 %v5243, %v5260
        %v5266 = vmul.f32 %v5041, %v5260
        %v5267 = vmul.f32 %v5244, %v5260
        %v5268 = vmul.f32 %v5043, %v5260
        %v5269 = vmul.f32 %v5245, %v5260
        %v5270 = vmul.f32 %v5045, %v5260
        %v5271 = vmul.f32 %v5246, %v5260
        %v5272 = vmul.f32 %v5047, %v5260
        %v5273 = vmul.f32 %v5247, %v5260
        %v5274 = vmul.f32 %v5049, %v5260
        %v5275 = vmul.f32 %v5248, %v5260
        %v5276 = vmul.f32 %v5051, %v5260
        %v5277 = vmul.f32 %v5249, %v5260
        %v5278 = vmul.f32 %v5053, %v5260
        %v5279 = vmul.f32 %v5250, %v5260
        %v5280 = vmul.f32 %v5055, %v5260
        %v5281 = vmul.f32 %v5251, %v5260
        %v5282 = vmul.f32 %v5057, %v5260
        %v5283 = vmul.f32 %v5252, %v5260
        %v5284 = vmul.f32 %v5059, %v5260
        %v5285 = vmul.f32 %v5253, %v5260
        %v5286 = vmul.f32 %v5061, %v5260
        %v5287 = vmul.f32 %v5254, %v5260
        %v5288 = vmul.f32 %v5063, %v5260
        %v5289 = vmul.f32 %v5255, %v5260
        %v5290 = vmul.f32 %v5065, %v5260
        %v5291 = vmul.f32 %v5256, %v5260
        %v5292 = vmul.f32 %v5067, %v5260
        %v5293 = vadd.f32 %v5209, %v5261
        %v5294 = vadd.f32 %v5210, %v5262
        %v5295 = vadd.f32 %v5211, %v5263
        %v5296 = vadd.f32 %v5212, %v5264
        %v5297 = vadd.f32 %v5213, %v5265
        %v5298 = vadd.f32 %v5214, %v5266
        %v5299 = vadd.f32 %v5215, %v5267
        %v5300 = vadd.f32 %v5216, %v5268
        %v5301 = vadd.f32 %v5217, %v5269
        %v5302 = vadd.f32 %v5218, %v5270
        %v5303 = vadd.f32 %v5219, %v5271
        %v5304 = vadd.f32 %v5220, %v5272
        %v5305 = vadd.f32 %v5221, %v5273
        %v5306 = vadd.f32 %v5222, %v5274
        %v5307 = vadd.f32 %v5223, %v5275
        %v5308 = vadd.f32 %v5224, %v5276
        %v5309 = vadd.f32 %v5225, %v5277
        %v5310 = vadd.f32 %v5226, %v5278
        %v5311 = vadd.f32 %v5227, %v5279
        %v5312 = vadd.f32 %v5228, %v5280
        %v5313 = vadd.f32 %v5229, %v5281
        %v5314 = vadd.f32 %v5230, %v5282
        %v5315 = vadd.f32 %v5231, %v5283
        %v5316 = vadd.f32 %v5232, %v5284
        %v5317 = vadd.f32 %v5233, %v5285
        %v5318 = vadd.f32 %v5234, %v5286
        %v5319 = vadd.f32 %v5235, %v5287
        %v5320 = vadd.f32 %v5236, %v5288
        %v5321 = vadd.f32 %v5237, %v5289
        %v5322 = vadd.f32 %v5238, %v5290
        %v5323 = vadd.f32 %v5239, %v5291
        %v5324 = vadd.f32 %v5240, %v5292
        %s5325 = scalar_lea.vmem [#allocation2], 48
        %v5326 = vld [vmem:[%s5325] sm:$0xff]
        %v5327 = vld [vmem:[%s5325 + $0x8] sm:$0xff]
        %v5328 = vld [vmem:[%s5325 + $0x18] sm:$0xff]
        %v5329 = vld [vmem:[%s5325 + $0x20] sm:$0xff]
        %v5330 = vld [vmem:[%s5325 + $0x30] sm:$0xff]
        %v5331 = vld [vmem:[%s5325 + $0x38] sm:$0xff]
        %v5332 = vld [vmem:[%s5325 + $0x48] sm:$0xff]
        %v5333 = vld [vmem:[%s5325 + $0x50] sm:$0xff]
        %v5334 = vld [vmem:[%s5325 + $0x60] sm:$0xff]
        %v5335 = vld [vmem:[%s5325 + $0x68] sm:$0xff]
        %v5336 = vld [vmem:[%s5325 + $0x78] sm:$0xff]
        %v5337 = vld [vmem:[%s5325 + $0x80] sm:$0xff]
        %v5338 = vld [vmem:[%s5325 + $0x90] sm:$0xff]
        %v5339 = vld [vmem:[%s5325 + $0x98] sm:$0xff]
        %v5340 = vld [vmem:[%s5325 + $0xa8] sm:$0xff]
        %v5341 = vld [vmem:[%s5325 + $0xb0] sm:$0xff]
        %v5342 = vld [vmem:[%s5325 + $0xf0] sm:$0xff]
        %v5343 = vld [vmem:[%s5325 + $0xf8] sm:$0xff]
        %v5344 = vld [vmem:[%s5325 + $0x108] sm:$0xff]
        %v5345 = vld [vmem:[%s5325 + $0x110] sm:$0xff]
        %v5346 = vld [vmem:[%s5325 + $0x120] sm:$0xff]
        %v5347 = vld [vmem:[%s5325 + $0x128] sm:$0xff]
        %v5348 = vld [vmem:[%s5325 + $0x138] sm:$0xff]
        %v5349 = vld [vmem:[%s5325 + $0x140] sm:$0xff]
        %v5350 = vld [vmem:[%s5325 + $0x150] sm:$0xff]
        %v5351 = vld [vmem:[%s5325 + $0x158] sm:$0xff]
        %v5352 = vld [vmem:[%s5325 + $0x168] sm:$0xff]
        %v5353 = vld [vmem:[%s5325 + $0x170] sm:$0xff]
        %v5354 = vld [vmem:[%s5325 + $0x180] sm:$0xff]
        %v5355 = vld [vmem:[%s5325 + $0x188] sm:$0xff]
        %v5356 = vld [vmem:[%s5325 + $0x198] sm:$0xff]
        %v5357 = vld [vmem:[%s5325 + $0x1a0] sm:$0xff]
        %v5358 = vlaneseq
        %v5359 = vshrl.u32 %v5358, 7
        %v5360 = vsub.s32 7, %v5359
        %v5361 = vrot.slane %v324, %v5360
        %v5362 = vmul.f32 %v5326, %v5361
        %v5363 = vmul.f32 %v5327, %v5361
        %v5364 = vmul.f32 %v5328, %v5361
        %v5365 = vmul.f32 %v5329, %v5361
        %v5366 = vmul.f32 %v5330, %v5361
        %v5367 = vmul.f32 %v5331, %v5361
        %v5368 = vmul.f32 %v5332, %v5361
        %v5369 = vmul.f32 %v5333, %v5361
        %v5370 = vmul.f32 %v5334, %v5361
        %v5371 = vmul.f32 %v5335, %v5361
        %v5372 = vmul.f32 %v5336, %v5361
        %v5373 = vmul.f32 %v5337, %v5361
        %v5374 = vmul.f32 %v5338, %v5361
        %v5375 = vmul.f32 %v5339, %v5361
        %v5376 = vmul.f32 %v5340, %v5361
        %v5377 = vmul.f32 %v5341, %v5361
        %v5378 = vmul.f32 %v5342, %v5361
        %v5379 = vmul.f32 %v5343, %v5361
        %v5380 = vmul.f32 %v5344, %v5361
        %v5381 = vmul.f32 %v5345, %v5361
        %v5382 = vmul.f32 %v5346, %v5361
        %v5383 = vmul.f32 %v5347, %v5361
        %v5384 = vmul.f32 %v5348, %v5361
        %v5385 = vmul.f32 %v5349, %v5361
        %v5386 = vmul.f32 %v5350, %v5361
        %v5387 = vmul.f32 %v5351, %v5361
        %v5388 = vmul.f32 %v5352, %v5361
        %v5389 = vmul.f32 %v5353, %v5361
        %v5390 = vmul.f32 %v5354, %v5361
        %v5391 = vmul.f32 %v5355, %v5361
        %v5392 = vmul.f32 %v5356, %v5361
        %v5393 = vmul.f32 %v5357, %v5361
        %v5394 = vadd.f32 %v5293, %v5362
        %v5395 = vadd.f32 %v5294, %v5363
        %v5396 = vadd.f32 %v5295, %v5364
        %v5397 = vadd.f32 %v5296, %v5365
        %v5398 = vadd.f32 %v5297, %v5366
        %v5399 = vadd.f32 %v5298, %v5367
        %v5400 = vadd.f32 %v5299, %v5368
        %v5401 = vadd.f32 %v5300, %v5369
        %v5402 = vadd.f32 %v5301, %v5370
        %v5403 = vadd.f32 %v5302, %v5371
        %v5404 = vadd.f32 %v5303, %v5372
        %v5405 = vadd.f32 %v5304, %v5373
        %v5406 = vadd.f32 %v5305, %v5374
        %v5407 = vadd.f32 %v5306, %v5375
        %v5408 = vadd.f32 %v5307, %v5376
        %v5409 = vadd.f32 %v5308, %v5377
        %v5410 = vadd.f32 %v5309, %v5378
        %v5411 = vadd.f32 %v5310, %v5379
        %v5412 = vadd.f32 %v5311, %v5380
        %v5413 = vadd.f32 %v5312, %v5381
        %v5414 = vadd.f32 %v5313, %v5382
        %v5415 = vadd.f32 %v5314, %v5383
        %v5416 = vadd.f32 %v5315, %v5384
        %v5417 = vadd.f32 %v5316, %v5385
        %v5418 = vadd.f32 %v5317, %v5386
        %v5419 = vadd.f32 %v5318, %v5387
        %v5420 = vadd.f32 %v5319, %v5388
        %v5421 = vadd.f32 %v5320, %v5389
        %v5422 = vadd.f32 %v5321, %v5390
        %v5423 = vadd.f32 %v5322, %v5391
        %v5424 = vadd.f32 %v5323, %v5392
        %v5425 = vadd.f32 %v5324, %v5393
        %v5426 = vld [vmem:[#allocation2 + $0x10] sm:$0xff]
        %v5427 = vld [vmem:[#allocation2 + $0x28] sm:$0xff]
        %v5428 = vld [vmem:[#allocation2 + $0x40] sm:$0xff]
        %v5429 = vld [vmem:[#allocation2 + $0x58] sm:$0xff]
        %v5430 = vld [vmem:[#allocation2 + $0x70] sm:$0xff]
        %v5431 = vld [vmem:[#allocation2 + $0x88] sm:$0xff]
        %v5432 = vld [vmem:[#allocation2 + $0xa0] sm:$0xff]
        %v5433 = vld [vmem:[#allocation2 + $0xb8] sm:$0xff]
        %v5434 = vld [vmem:[#allocation2 + $0x100] sm:$0xff]
        %v5435 = vld [vmem:[#allocation2 + $0x118] sm:$0xff]
        %v5436 = vld [vmem:[#allocation2 + $0x130] sm:$0xff]
        %v5437 = vld [vmem:[#allocation2 + $0x148] sm:$0xff]
        %v5438 = vld [vmem:[#allocation2 + $0x160] sm:$0xff]
        %v5439 = vld [vmem:[#allocation2 + $0x178] sm:$0xff]
        %v5440 = vld [vmem:[#allocation2 + $0x190] sm:$0xff]
        %v5441 = vld [vmem:[#allocation2 + $0x1a8] sm:$0xff]
        %v5442 = vlaneseq
        %v5443 = vshrl.u32 %v5442, 7
        %v5444 = vsub.s32 2, %v5443
        %v5445 = vrot.slane %v324, %v5444
        %v5446 = vmul.f32 %v5142, %v5445
        %v5447 = vmul.f32 %v5426, %v5445
        %v5448 = vmul.f32 %v5144, %v5445
        %v5449 = vmul.f32 %v5427, %v5445
        %v5450 = vmul.f32 %v5146, %v5445
        %v5451 = vmul.f32 %v5428, %v5445
        %v5452 = vmul.f32 %v5148, %v5445
        %v5453 = vmul.f32 %v5429, %v5445
        %v5454 = vmul.f32 %v5150, %v5445
        %v5455 = vmul.f32 %v5430, %v5445
        %v5456 = vmul.f32 %v5152, %v5445
        %v5457 = vmul.f32 %v5431, %v5445
        %v5458 = vmul.f32 %v5154, %v5445
        %v5459 = vmul.f32 %v5432, %v5445
        %v5460 = vmul.f32 %v5156, %v5445
        %v5461 = vmul.f32 %v5433, %v5445
        %v5462 = vmul.f32 %v5158, %v5445
        %v5463 = vmul.f32 %v5434, %v5445
        %v5464 = vmul.f32 %v5160, %v5445
        %v5465 = vmul.f32 %v5435, %v5445
        %v5466 = vmul.f32 %v5162, %v5445
        %v5467 = vmul.f32 %v5436, %v5445
        %v5468 = vmul.f32 %v5164, %v5445
        %v5469 = vmul.f32 %v5437, %v5445
        %v5470 = vmul.f32 %v5166, %v5445
        %v5471 = vmul.f32 %v5438, %v5445
        %v5472 = vmul.f32 %v5168, %v5445
        %v5473 = vmul.f32 %v5439, %v5445
        %v5474 = vmul.f32 %v5170, %v5445
        %v5475 = vmul.f32 %v5440, %v5445
        %v5476 = vmul.f32 %v5172, %v5445
        %v5477 = vmul.f32 %v5441, %v5445
        %v5478 = vadd.f32 %v5394, %v5446
        %v5479 = vadd.f32 %v5395, %v5447
        %v5480 = vadd.f32 %v5396, %v5448
        %v5481 = vadd.f32 %v5397, %v5449
        %v5482 = vadd.f32 %v5398, %v5450
        %v5483 = vadd.f32 %v5399, %v5451
        %v5484 = vadd.f32 %v5400, %v5452
        %v5485 = vadd.f32 %v5401, %v5453
        %v5486 = vadd.f32 %v5402, %v5454
        %v5487 = vadd.f32 %v5403, %v5455
        %v5488 = vadd.f32 %v5404, %v5456
        %v5489 = vadd.f32 %v5405, %v5457
        %v5490 = vadd.f32 %v5406, %v5458
        %v5491 = vadd.f32 %v5407, %v5459
        %v5492 = vadd.f32 %v5408, %v5460
        %v5493 = vadd.f32 %v5409, %v5461
        %v5494 = vadd.f32 %v5410, %v5462
        %v5495 = vadd.f32 %v5411, %v5463
        %v5496 = vadd.f32 %v5412, %v5464
        %v5497 = vadd.f32 %v5413, %v5465
        %v5498 = vadd.f32 %v5414, %v5466
        %v5499 = vadd.f32 %v5415, %v5467
        %v5500 = vadd.f32 %v5416, %v5468
        %v5501 = vadd.f32 %v5417, %v5469
        %v5502 = vadd.f32 %v5418, %v5470
        %v5503 = vadd.f32 %v5419, %v5471
        %v5504 = vadd.f32 %v5420, %v5472
        %v5505 = vadd.f32 %v5421, %v5473
        %v5506 = vadd.f32 %v5422, %v5474
        %v5507 = vadd.f32 %v5423, %v5475
        %v5508 = vadd.f32 %v5424, %v5476
        %v5509 = vadd.f32 %v5425, %v5477
        %v5510 = vld [vmem:[%s5325 + $0x10] sm:$0xff]
        %v5511 = vld [vmem:[%s5325 + $0x28] sm:$0xff]
        %v5512 = vld [vmem:[%s5325 + $0x40] sm:$0xff]
        %v5513 = vld [vmem:[%s5325 + $0x58] sm:$0xff]
        %v5514 = vld [vmem:[%s5325 + $0x70] sm:$0xff]
        %v5515 = vld [vmem:[%s5325 + $0x88] sm:$0xff]
        %v5516 = vld [vmem:[%s5325 + $0xa0] sm:$0xff]
        %v5517 = vld [vmem:[%s5325 + $0xb8] sm:$0xff]
        %v5518 = vld [vmem:[%s5325 + $0x100] sm:$0xff]
        %v5519 = vld [vmem:[%s5325 + $0x118] sm:$0xff]
        %v5520 = vld [vmem:[%s5325 + $0x130] sm:$0xff]
        %v5521 = vld [vmem:[%s5325 + $0x148] sm:$0xff]
        %v5522 = vld [vmem:[%s5325 + $0x160] sm:$0xff]
        %v5523 = vld [vmem:[%s5325 + $0x178] sm:$0xff]
        %v5524 = vld [vmem:[%s5325 + $0x190] sm:$0xff]
        %v5525 = vld [vmem:[%s5325 + $0x1a8] sm:$0xff]
        %v5526 = vlaneseq
        %v5527 = vshrl.u32 %v5526, 7
        %v5528 = vsub.s32 0, %v5527
        %v5529 = vrot.slane %v325, %v5528
        %v5530 = vmul.f32 %v5327, %v5529
        %v5531 = vmul.f32 %v5510, %v5529
        %v5532 = vmul.f32 %v5329, %v5529
        %v5533 = vmul.f32 %v5511, %v5529
        %v5534 = vmul.f32 %v5331, %v5529
        %v5535 = vmul.f32 %v5512, %v5529
        %v5536 = vmul.f32 %v5333, %v5529
        %v5537 = vmul.f32 %v5513, %v5529
        %v5538 = vmul.f32 %v5335, %v5529
        %v5539 = vmul.f32 %v5514, %v5529
        %v5540 = vmul.f32 %v5337, %v5529
        %v5541 = vmul.f32 %v5515, %v5529
        %v5542 = vmul.f32 %v5339, %v5529
        %v5543 = vmul.f32 %v5516, %v5529
        %v5544 = vmul.f32 %v5341, %v5529
        %v5545 = vmul.f32 %v5517, %v5529
        %v5546 = vmul.f32 %v5343, %v5529
        %v5547 = vmul.f32 %v5518, %v5529
        %v5548 = vmul.f32 %v5345, %v5529
        %v5549 = vmul.f32 %v5519, %v5529
        %v5550 = vmul.f32 %v5347, %v5529
        %v5551 = vmul.f32 %v5520, %v5529
        %v5552 = vmul.f32 %v5349, %v5529
        %v5553 = vmul.f32 %v5521, %v5529
        %v5554 = vmul.f32 %v5351, %v5529
        %v5555 = vmul.f32 %v5522, %v5529
        %v5556 = vmul.f32 %v5353, %v5529
        %v5557 = vmul.f32 %v5523, %v5529
        %v5558 = vmul.f32 %v5355, %v5529
        %v5559 = vmul.f32 %v5524, %v5529
        %v5560 = vmul.f32 %v5357, %v5529
        %v5561 = vmul.f32 %v5525, %v5529
        %v5562 = vadd.f32 %v5478, %v5530
        %v5563 = vadd.f32 %v5479, %v5531
        %v5564 = vadd.f32 %v5480, %v5532
        %v5565 = vadd.f32 %v5481, %v5533
        %v5566 = vadd.f32 %v5482, %v5534
        %v5567 = vadd.f32 %v5483, %v5535
        %v5568 = vadd.f32 %v5484, %v5536
        %v5569 = vadd.f32 %v5485, %v5537
        %v5570 = vadd.f32 %v5486, %v5538
        %v5571 = vadd.f32 %v5487, %v5539
        %v5572 = vadd.f32 %v5488, %v5540
        %v5573 = vadd.f32 %v5489, %v5541
        %v5574 = vadd.f32 %v5490, %v5542
        %v5575 = vadd.f32 %v5491, %v5543
        %v5576 = vadd.f32 %v5492, %v5544
        %v5577 = vadd.f32 %v5493, %v5545
        %v5578 = vadd.f32 %v5494, %v5546
        %v5579 = vadd.f32 %v5495, %v5547
        %v5580 = vadd.f32 %v5496, %v5548
        %v5581 = vadd.f32 %v5497, %v5549
        %v5582 = vadd.f32 %v5498, %v5550
        %v5583 = vadd.f32 %v5499, %v5551
        %v5584 = vadd.f32 %v5500, %v5552
        %v5585 = vadd.f32 %v5501, %v5553
        %v5586 = vadd.f32 %v5502, %v5554
        %v5587 = vadd.f32 %v5503, %v5555
        %v5588 = vadd.f32 %v5504, %v5556
        %v5589 = vadd.f32 %v5505, %v5557
        %v5590 = vadd.f32 %v5506, %v5558
        %v5591 = vadd.f32 %v5507, %v5559
        %v5592 = vadd.f32 %v5508, %v5560
        %v5593 = vadd.f32 %v5509, %v5561
        %v5594 = vlaneseq
        %v5595 = vshrl.u32 %v5594, 7
        %v5596 = vsub.s32 5, %v5595
        %v5597 = vrot.slane %v321, %v5596
        %v5598 = vmul.f32 %v5562, %v5597
        %v5599 = vmul.f32 %v5563, %v5597
        %v5600 = vmul.f32 %v5564, %v5597
        %v5601 = vmul.f32 %v5565, %v5597
        %v5602 = vmul.f32 %v5566, %v5597
        %v5603 = vmul.f32 %v5567, %v5597
        %v5604 = vmul.f32 %v5568, %v5597
        %v5605 = vmul.f32 %v5569, %v5597
        %v5606 = vmul.f32 %v5570, %v5597
        %v5607 = vmul.f32 %v5571, %v5597
        %v5608 = vmul.f32 %v5572, %v5597
        %v5609 = vmul.f32 %v5573, %v5597
        %v5610 = vmul.f32 %v5574, %v5597
        %v5611 = vmul.f32 %v5575, %v5597
        %v5612 = vmul.f32 %v5576, %v5597
        %v5613 = vmul.f32 %v5577, %v5597
        %v5614 = vmul.f32 %v5578, %v5597
        %v5615 = vmul.f32 %v5579, %v5597
        %v5616 = vmul.f32 %v5580, %v5597
        %v5617 = vmul.f32 %v5581, %v5597
        %v5618 = vmul.f32 %v5582, %v5597
        %v5619 = vmul.f32 %v5583, %v5597
        %v5620 = vmul.f32 %v5584, %v5597
        %v5621 = vmul.f32 %v5585, %v5597
        %v5622 = vmul.f32 %v5586, %v5597
        %v5623 = vmul.f32 %v5587, %v5597
        %v5624 = vmul.f32 %v5588, %v5597
        %v5625 = vmul.f32 %v5589, %v5597
        %v5626 = vmul.f32 %v5590, %v5597
        %v5627 = vmul.f32 %v5591, %v5597
        %v5628 = vmul.f32 %v5592, %v5597
        %v5629 = vmul.f32 %v5593, %v5597
        %v5630 = vlaneseq
        %v5631 = vshrl.u32 %v5630, 7
        %v5632 = vsub.s32 6, %v5631
        %v5633 = vrot.slane %v321, %v5632
        %v5634 = vadd.f32 %v5598, %v5633
        %v5635 = vadd.f32 %v5599, %v5633
        %v5636 = vadd.f32 %v5600, %v5633
        %v5637 = vadd.f32 %v5601, %v5633
        %v5638 = vadd.f32 %v5602, %v5633
        %v5639 = vadd.f32 %v5603, %v5633
        %v5640 = vadd.f32 %v5604, %v5633
        %v5641 = vadd.f32 %v5605, %v5633
        %v5642 = vadd.f32 %v5606, %v5633
        %v5643 = vadd.f32 %v5607, %v5633
        %v5644 = vadd.f32 %v5608, %v5633
        %v5645 = vadd.f32 %v5609, %v5633
        %v5646 = vadd.f32 %v5610, %v5633
        %v5647 = vadd.f32 %v5611, %v5633
        %v5648 = vadd.f32 %v5612, %v5633
        %v5649 = vadd.f32 %v5613, %v5633
        %v5650 = vadd.f32 %v5614, %v5633
        %v5651 = vadd.f32 %v5615, %v5633
        %v5652 = vadd.f32 %v5616, %v5633
        %v5653 = vadd.f32 %v5617, %v5633
        %v5654 = vadd.f32 %v5618, %v5633
        %v5655 = vadd.f32 %v5619, %v5633
        %v5656 = vadd.f32 %v5620, %v5633
        %v5657 = vadd.f32 %v5621, %v5633
        %v5658 = vadd.f32 %v5622, %v5633
        %v5659 = vadd.f32 %v5623, %v5633
        %v5660 = vadd.f32 %v5624, %v5633
        %v5661 = vadd.f32 %v5625, %v5633
        %v5662 = vadd.f32 %v5626, %v5633
        %v5663 = vadd.f32 %v5627, %v5633
        %v5664 = vadd.f32 %v5628, %v5633
        %v5665 = vadd.f32 %v5629, %v5633
        %vm5666 = vcmp.ge.f32.partialorder %v5634, 0.0
        %vm5667 = vcmp.ge.f32.partialorder %v5635, 0.0
        %vm5668 = vcmp.ge.f32.partialorder %v5636, 0.0
        %vm5669 = vcmp.ge.f32.partialorder %v5637, 0.0
        %vm5670 = vcmp.ge.f32.partialorder %v5638, 0.0
        %vm5671 = vcmp.ge.f32.partialorder %v5639, 0.0
        %vm5672 = vcmp.ge.f32.partialorder %v5640, 0.0
        %vm5673 = vcmp.ge.f32.partialorder %v5641, 0.0
        %vm5674 = vcmp.ge.f32.partialorder %v5642, 0.0
        %vm5675 = vcmp.ge.f32.partialorder %v5643, 0.0
        %vm5676 = vcmp.ge.f32.partialorder %v5644, 0.0
        %vm5677 = vcmp.ge.f32.partialorder %v5645, 0.0
        %vm5678 = vcmp.ge.f32.partialorder %v5646, 0.0
        %vm5679 = vcmp.ge.f32.partialorder %v5647, 0.0
        %vm5680 = vcmp.ge.f32.partialorder %v5648, 0.0
        %vm5681 = vcmp.ge.f32.partialorder %v5649, 0.0
        %vm5682 = vcmp.ge.f32.partialorder %v5650, 0.0
        %vm5683 = vcmp.ge.f32.partialorder %v5651, 0.0
        %vm5684 = vcmp.ge.f32.partialorder %v5652, 0.0
        %vm5685 = vcmp.ge.f32.partialorder %v5653, 0.0
        %vm5686 = vcmp.ge.f32.partialorder %v5654, 0.0
        %vm5687 = vcmp.ge.f32.partialorder %v5655, 0.0
        %vm5688 = vcmp.ge.f32.partialorder %v5656, 0.0
        %vm5689 = vcmp.ge.f32.partialorder %v5657, 0.0
        %vm5690 = vcmp.ge.f32.partialorder %v5658, 0.0
        %vm5691 = vcmp.ge.f32.partialorder %v5659, 0.0
        %vm5692 = vcmp.ge.f32.partialorder %v5660, 0.0
        %vm5693 = vcmp.ge.f32.partialorder %v5661, 0.0
        %vm5694 = vcmp.ge.f32.partialorder %v5662, 0.0
        %vm5695 = vcmp.ge.f32.partialorder %v5663, 0.0
        %vm5696 = vcmp.ge.f32.partialorder %v5664, 0.0
        %vm5697 = vcmp.ge.f32.partialorder %v5665, 0.0
        %v5698 = vlaneseq
        %v5699 = vshrl.u32 %v5698, 7
        %v5700 = vsub.s32 7, %v5699
        %v5701 = vrot.slane %v321, %v5700
        %v5702 = vmul.f32 %v5701, %v5634
        %v5703 = vmul.f32 %v5701, %v5635
        %v5704 = vmul.f32 %v5701, %v5636
        %v5705 = vmul.f32 %v5701, %v5637
        %v5706 = vmul.f32 %v5701, %v5638
        %v5707 = vmul.f32 %v5701, %v5639
        %v5708 = vmul.f32 %v5701, %v5640
        %v5709 = vmul.f32 %v5701, %v5641
        %v5710 = vmul.f32 %v5701, %v5642
        %v5711 = vmul.f32 %v5701, %v5643
        %v5712 = vmul.f32 %v5701, %v5644
        %v5713 = vmul.f32 %v5701, %v5645
        %v5714 = vmul.f32 %v5701, %v5646
        %v5715 = vmul.f32 %v5701, %v5647
        %v5716 = vmul.f32 %v5701, %v5648
        %v5717 = vmul.f32 %v5701, %v5649
        %v5718 = vmul.f32 %v5701, %v5650
        %v5719 = vmul.f32 %v5701, %v5651
        %v5720 = vmul.f32 %v5701, %v5652
        %v5721 = vmul.f32 %v5701, %v5653
        %v5722 = vmul.f32 %v5701, %v5654
        %v5723 = vmul.f32 %v5701, %v5655
        %v5724 = vmul.f32 %v5701, %v5656
        %v5725 = vmul.f32 %v5701, %v5657
        %v5726 = vmul.f32 %v5701, %v5658
        %v5727 = vmul.f32 %v5701, %v5659
        %v5728 = vmul.f32 %v5701, %v5660
        %v5729 = vmul.f32 %v5701, %v5661
        %v5730 = vmul.f32 %v5701, %v5662
        %v5731 = vmul.f32 %v5701, %v5663
        %v5732 = vmul.f32 %v5701, %v5664
        %v5733 = vmul.f32 %v5701, %v5665
        %v5734 = vsel %vm5666, %v5634, %v5702
        %v5735 = vsel %vm5667, %v5635, %v5703
        %v5736 = vsel %vm5668, %v5636, %v5704
        %v5737 = vsel %vm5669, %v5637, %v5705
        %v5738 = vsel %vm5670, %v5638, %v5706
        %v5739 = vsel %vm5671, %v5639, %v5707
        %v5740 = vsel %vm5672, %v5640, %v5708
        %v5741 = vsel %vm5673, %v5641, %v5709
        %v5742 = vsel %vm5674, %v5642, %v5710
        %v5743 = vsel %vm5675, %v5643, %v5711
        %v5744 = vsel %vm5676, %v5644, %v5712
        %v5745 = vsel %vm5677, %v5645, %v5713
        %v5746 = vsel %vm5678, %v5646, %v5714
        %v5747 = vsel %vm5679, %v5647, %v5715
        %v5748 = vsel %vm5680, %v5648, %v5716
        %v5749 = vsel %vm5681, %v5649, %v5717
        %v5750 = vsel %vm5682, %v5650, %v5718
        %v5751 = vsel %vm5683, %v5651, %v5719
        %v5752 = vsel %vm5684, %v5652, %v5720
        %v5753 = vsel %vm5685, %v5653, %v5721
        %v5754 = vsel %vm5686, %v5654, %v5722
        %v5755 = vsel %vm5687, %v5655, %v5723
        %v5756 = vsel %vm5688, %v5656, %v5724
        %v5757 = vsel %vm5689, %v5657, %v5725
        %v5758 = vsel %vm5690, %v5658, %v5726
        %v5759 = vsel %vm5691, %v5659, %v5727
        %v5760 = vsel %vm5692, %v5660, %v5728
        %v5761 = vsel %vm5693, %v5661, %v5729
        %v5762 = vsel %vm5694, %v5662, %v5730
        %v5763 = vsel %vm5695, %v5663, %v5731
        %v5764 = vsel %vm5696, %v5664, %v5732
        %v5765 = vsel %vm5697, %v5665, %v5733
        %v5766 = vpack.c.bf16 %v5735, %v5734
        %v5767 = vpack.c.bf16 %v5737, %v5736
        %v5768 = vpack.c.bf16 %v5739, %v5738
        %v5769 = vpack.c.bf16 %v5741, %v5740
        %v5770 = vpack.c.bf16 %v5743, %v5742
        %v5771 = vpack.c.bf16 %v5745, %v5744
        %v5772 = vpack.c.bf16 %v5747, %v5746
        %v5773 = vpack.c.bf16 %v5749, %v5748
        %v5774 = vpack.c.bf16 %v5751, %v5750
        %v5775 = vpack.c.bf16 %v5753, %v5752
        %v5776 = vpack.c.bf16 %v5755, %v5754
        %v5777 = vpack.c.bf16 %v5757, %v5756
        %v5778 = vpack.c.bf16 %v5759, %v5758
        %v5779 = vpack.c.bf16 %v5761, %v5760
        %v5780 = vpack.c.bf16 %v5763, %v5762
        %v5781 = vpack.c.bf16 %v5765, %v5764
        %s5782 = smul.addr %s319, 4
        %s5783 = scalar_lea.vmem %s2, %s5782
        %v5784 = vld [vmem:[%s5783] sm:$0xf]
        %v5785 = vld [vmem:[%s5783 + $0x4] sm:$0xf]
        %v5786 = vld [vmem:[%s5783 + $0x8] sm:$0xf]
        %v5787 = vld [vmem:[%s5783 + $0xc] sm:$0xf]
        %v5788 = vld [vmem:[%s5783 + $0x10] sm:$0xf]
        %v5789 = vld [vmem:[%s5783 + $0x14] sm:$0xf]
        %v5790 = vld [vmem:[%s5783 + $0x18] sm:$0xf]
        %v5791 = vld [vmem:[%s5783 + $0x1c] sm:$0xf]
        %v5792 = vld [vmem:[%s5783 + $0x20] sm:$0xf]
        %v5793 = vld [vmem:[%s5783 + $0x24] sm:$0xf]
        %v5794 = vld [vmem:[%s5783 + $0x28] sm:$0xf]
        %v5795 = vld [vmem:[%s5783 + $0x2c] sm:$0xf]
        %v5796 = vld [vmem:[%s5783 + $0x30] sm:$0xf]
        %v5797 = vld [vmem:[%s5783 + $0x34] sm:$0xf]
        %v5798 = vld [vmem:[%s5783 + $0x38] sm:$0xf]
        %v5799 = vld [vmem:[%s5783 + $0x3c] sm:$0xf]
        %v5800 = vlaneseq
        %v5801 = vshrl.u32 %v5800, 7
        %v5802 = vsub.s32 0, %v5801
        %v5803 = vrot.slane %v322, %v5802
        %v5820 = vunpack.c.l.b16 %v5784
        %v5821 = vunpack.c.l.b16 %v5785
        %v5822 = vunpack.c.l.b16 %v5786
        %v5823 = vunpack.c.l.b16 %v5787
        %v5824 = vunpack.c.l.b16 %v5788
        %v5825 = vunpack.c.l.b16 %v5789
        %v5826 = vunpack.c.l.b16 %v5790
        %v5827 = vunpack.c.l.b16 %v5791
        %v5828 = vunpack.c.l.b16 %v5792
        %v5829 = vunpack.c.l.b16 %v5793
        %v5830 = vunpack.c.l.b16 %v5794
        %v5831 = vunpack.c.l.b16 %v5795
        %v5832 = vunpack.c.l.b16 %v5796
        %v5833 = vunpack.c.l.b16 %v5797
        %v5834 = vunpack.c.l.b16 %v5798
        %v5835 = vunpack.c.l.b16 %v5799
        %v5836 = vpack.c.b16 %v5821, %v5820
        %v5837 = vpack.c.b16 %v5823, %v5822
        %v5838 = vpack.c.b16 %v5825, %v5824
        %v5839 = vpack.c.b16 %v5827, %v5826
        %v5840 = vpack.c.b16 %v5829, %v5828
        %v5841 = vpack.c.b16 %v5831, %v5830
        %v5842 = vpack.c.b16 %v5833, %v5832
        %v5843 = vpack.c.b16 %v5835, %v5834
        %5852 = vmatprep.subr.bf16.mxu0 0
        %5853 = vmatpush1.bf16.msra.mxu0 %v5836
        %5854 = vmatprep.subr.bf16.mxu0 0
        %5855 = vmatpush1.bf16.msra.mxu0 %v5837
        %5856 = vmatprep.subr.bf16.mxu0 0
        %5857 = vmatpush1.bf16.msra.mxu0 %v5838
        %5858 = vmatprep.subr.bf16.mxu0 0
        %5859 = vmatpush1.bf16.msra.mxu0 %v5839
        %5860 = vmatprep.subr.bf16.mxu0 0
        %5861 = vmatpush1.bf16.msra.mxu0 %v5840
        %5862 = vmatprep.subr.bf16.mxu0 0
        %5863 = vmatpush1.bf16.msra.mxu0 %v5841
        %5864 = vmatprep.subr.bf16.mxu0 0
        %5865 = vmatpush1.bf16.msra.mxu0 %v5842
        %5866 = vmatprep.subr.bf16.mxu0 0
        %5867 = vmatpush1.bf16.msra.mxu0 %v5843
        %5868 = vmatprep.subr.bf16.mxu0 0
        %5869 = vmatpush1.bf16.msra.mxu0 0
        %5870 = vmatprep.subr.bf16.mxu0 0
        %5871 = vmatpush1.bf16.msra.mxu0 0
        %5872 = vmatprep.subr.bf16.mxu0 0
        %5873 = vmatpush1.bf16.msra.mxu0 0
        %5874 = vmatprep.subr.bf16.mxu0 0
        %5875 = vmatpush1.bf16.msra.mxu0 0
        %5876 = vmatprep.subr.bf16.mxu0 0
        %5877 = vmatpush1.bf16.msra.mxu0 0
        %5878 = vmatprep.subr.bf16.mxu0 0
        %5879 = vmatpush1.bf16.msra.mxu0 0
        %5880 = vmatprep.subr.bf16.mxu0 0
        %5881 = vmatpush1.bf16.msra.mxu0 0
        %5882 = vmatprep.subr.bf16.mxu0 0
        %5883 = vmatpush1.bf16.msra.mxu0 0
        %5884 = vmatprep.mubr.bf16.mxu0 0
        %5885 = vmatmul.mubr.bf16.gmra.mrb[0].mxu0 %v5766
        %v5886 = vpop.f32.mrb[0].mxu0
        %v5887 = vadd.f32 %v5803, %v5886
        %v5888 = vpop.f32.mrb[0].mxu0
        %v5889 = vpop.f32.mrb[0].mxu0
        %v5890 = vadd.f32 %v5803, %v5889
        %v5891 = vpop.f32.mrb[0].mxu0
        %5892 = vmatprep.mubr.bf16.mxu0 0
        %5893 = vmatmul.mubr.bf16.gmra.mrb[0].mxu0 %v5767
        %v5894 = vpop.f32.mrb[0].mxu0
        %v5895 = vadd.f32 %v5803, %v5894
        %v5896 = vpop.f32.mrb[0].mxu0
        %v5897 = vpop.f32.mrb[0].mxu0
        %v5898 = vadd.f32 %v5803, %v5897
        %v5899 = vpop.f32.mrb[0].mxu0
        %5900 = vmatprep.mubr.bf16.mxu0 0
        %5901 = vmatmul.mubr.bf16.gmra.mrb[0].mxu0 %v5768
        %v5902 = vpop.f32.mrb[0].mxu0
        %v5903 = vadd.f32 %v5803, %v5902
        %v5904 = vpop.f32.mrb[0].mxu0
        %v5905 = vpop.f32.mrb[0].mxu0
        %v5906 = vadd.f32 %v5803, %v5905
        %v5907 = vpop.f32.mrb[0].mxu0
        %5908 = vmatprep.mubr.bf16.mxu0 0
        %5909 = vmatmul.mubr.bf16.gmra.mrb[0].mxu0 %v5769
        %v5910 = vpop.f32.mrb[0].mxu0
        %v5911 = vadd.f32 %v5803, %v5910
        %v5912 = vpop.f32.mrb[0].mxu0
        %v5913 = vpop.f32.mrb[0].mxu0
        %v5914 = vadd.f32 %v5803, %v5913
        %v5915 = vpop.f32.mrb[0].mxu0
        %5916 = vmatprep.mubr.bf16.mxu0 0
        %5917 = vmatmul.mubr.bf16.gmra.mrb[0].mxu0 %v5770
        %v5918 = vpop.f32.mrb[0].mxu0
        %v5919 = vadd.f32 %v5803, %v5918
        %v5920 = vpop.f32.mrb[0].mxu0
        %v5921 = vpop.f32.mrb[0].mxu0
        %v5922 = vadd.f32 %v5803, %v5921
        %v5923 = vpop.f32.mrb[0].mxu0
        %5924 = vmatprep.mubr.bf16.mxu0 0
        %5925 = vmatmul.mubr.bf16.gmra.mrb[0].mxu0 %v5771
        %v5926 = vpop.f32.mrb[0].mxu0
        %v5927 = vadd.f32 %v5803, %v5926
        %v5928 = vpop.f32.mrb[0].mxu0
        %v5929 = vpop.f32.mrb[0].mxu0
        %v5930 = vadd.f32 %v5803, %v5929
        %v5931 = vpop.f32.mrb[0].mxu0
        %5932 = vmatprep.mubr.bf16.mxu0 0
        %5933 = vmatmul.mubr.bf16.gmra.mrb[0].mxu0 %v5772
        %v5934 = vpop.f32.mrb[0].mxu0
        %v5935 = vadd.f32 %v5803, %v5934
        %v5936 = vpop.f32.mrb[0].mxu0
        %v5937 = vpop.f32.mrb[0].mxu0
        %v5938 = vadd.f32 %v5803, %v5937
        %v5939 = vpop.f32.mrb[0].mxu0
        %5940 = vmatprep.mubr.bf16.mxu0 0
        %5941 = vmatmul.mubr.bf16.gmra.mrb[0].mxu0 %v5773
        %v5942 = vpop.f32.mrb[0].mxu0
        %v5943 = vadd.f32 %v5803, %v5942
        %v5944 = vpop.f32.mrb[0].mxu0
        %v5945 = vpop.f32.mrb[0].mxu0
        %v5946 = vadd.f32 %v5803, %v5945
        %v5947 = vpop.f32.mrb[0].mxu0
        %5948 = vmatprep.mubr.bf16.mxu0 0
        %5949 = vmatmul.mubr.bf16.gmra.mrb[0].mxu0 %v5774
        %v5950 = vpop.f32.mrb[0].mxu0
        %v5951 = vadd.f32 %v5803, %v5950
        %v5952 = vpop.f32.mrb[0].mxu0
        %v5953 = vpop.f32.mrb[0].mxu0
        %v5954 = vadd.f32 %v5803, %v5953
        %v5955 = vpop.f32.mrb[0].mxu0
        %5956 = vmatprep.mubr.bf16.mxu0 0
        %5957 = vmatmul.mubr.bf16.gmra.mrb[0].mxu0 %v5775
        %v5958 = vpop.f32.mrb[0].mxu0
        %v5959 = vadd.f32 %v5803, %v5958
        %v5960 = vpop.f32.mrb[0].mxu0
        %v5961 = vpop.f32.mrb[0].mxu0
        %v5962 = vadd.f32 %v5803, %v5961
        %v5963 = vpop.f32.mrb[0].mxu0
        %5964 = vmatprep.mubr.bf16.mxu0 0
        %5965 = vmatmul.mubr.bf16.gmra.mrb[0].mxu0 %v5776
        %v5966 = vpop.f32.mrb[0].mxu0
        %v5967 = vadd.f32 %v5803, %v5966
        %v5968 = vpop.f32.mrb[0].mxu0
        %v5969 = vpop.f32.mrb[0].mxu0
        %v5970 = vadd.f32 %v5803, %v5969
        %v5971 = vpop.f32.mrb[0].mxu0
        %5972 = vmatprep.mubr.bf16.mxu0 0
        %5973 = vmatmul.mubr.bf16.gmra.mrb[0].mxu0 %v5777
        %v5974 = vpop.f32.mrb[0].mxu0
        %v5975 = vadd.f32 %v5803, %v5974
        %v5976 = vpop.f32.mrb[0].mxu0
        %v5977 = vpop.f32.mrb[0].mxu0
        %v5978 = vadd.f32 %v5803, %v5977
        %v5979 = vpop.f32.mrb[0].mxu0
        %5980 = vmatprep.mubr.bf16.mxu0 0
        %5981 = vmatmul.mubr.bf16.gmra.mrb[0].mxu0 %v5778
        %v5982 = vpop.f32.mrb[0].mxu0
        %v5983 = vadd.f32 %v5803, %v5982
        %v5984 = vpop.f32.mrb[0].mxu0
        %v5985 = vpop.f32.mrb[0].mxu0
        %v5986 = vadd.f32 %v5803, %v5985
        %v5987 = vpop.f32.mrb[0].mxu0
        %5988 = vmatprep.mubr.bf16.mxu0 0
        %5989 = vmatmul.mubr.bf16.gmra.mrb[0].mxu0 %v5779
        %v5990 = vpop.f32.mrb[0].mxu0
        %v5991 = vadd.f32 %v5803, %v5990
        %v5992 = vpop.f32.mrb[0].mxu0
        %v5993 = vpop.f32.mrb[0].mxu0
        %v5994 = vadd.f32 %v5803, %v5993
        %v5995 = vpop.f32.mrb[0].mxu0
        %5996 = vmatprep.mubr.bf16.mxu0 0
        %5997 = vmatmul.mubr.bf16.gmra.mrb[0].mxu0 %v5780
        %v5998 = vpop.f32.mrb[0].mxu0
        %v5999 = vadd.f32 %v5803, %v5998
        %v6000 = vpop.f32.mrb[0].mxu0
        %v6001 = vpop.f32.mrb[0].mxu0
        %v6002 = vadd.f32 %v5803, %v6001
        %v6003 = vpop.f32.mrb[0].mxu0
        %6004 = vmatprep.mubr.bf16.mxu0 0
        %6005 = vmatmul.mubr.bf16.gmra.mrb[0].mxu0 %v5781
        %v6006 = vpop.f32.mrb[0].mxu0
        %v6007 = vadd.f32 %v5803, %v6006
        %v6008 = vpop.f32.mrb[0].mxu0
        %v6009 = vpop.f32.mrb[0].mxu0
        %v6010 = vadd.f32 %v5803, %v6009
        %v6011 = vpop.f32.mrb[0].mxu0
        %6012 = vdwg.mxu0
        %v6013 = vld [vmem:[%s5] sm:$0xff]
        %v6014 = vld [vmem:[%s5 + $0x8] sm:$0xff]
        %v6015 = vld [vmem:[%s5 + $0x10] sm:$0xff]
        %v6016 = vld [vmem:[%s5 + $0x18] sm:$0xff]
        %v6017 = vld [vmem:[%s5 + $0x20] sm:$0xff]
        %v6018 = vld [vmem:[%s5 + $0x28] sm:$0xff]
        %v6019 = vld [vmem:[%s5 + $0x30] sm:$0xff]
        %v6020 = vld [vmem:[%s5 + $0x38] sm:$0xff]
        %v6021 = vld [vmem:[%s5 + $0x40] sm:$0xff]
        %v6022 = vld [vmem:[%s5 + $0x48] sm:$0xff]
        %v6023 = vld [vmem:[%s5 + $0x50] sm:$0xff]
        %v6024 = vld [vmem:[%s5 + $0x58] sm:$0xff]
        %v6025 = vld [vmem:[%s5 + $0x60] sm:$0xff]
        %v6026 = vld [vmem:[%s5 + $0x68] sm:$0xff]
        %v6027 = vld [vmem:[%s5 + $0x70] sm:$0xff]
        %v6028 = vld [vmem:[%s5 + $0x78] sm:$0xff]
        %v6029 = vld [vmem:[%s5 + $0x80] sm:$0xff]
        %v6030 = vld [vmem:[%s5 + $0x88] sm:$0xff]
        %v6031 = vld [vmem:[%s5 + $0x90] sm:$0xff]
        %v6032 = vld [vmem:[%s5 + $0x98] sm:$0xff]
        %v6033 = vld [vmem:[%s5 + $0xa0] sm:$0xff]
        %v6034 = vld [vmem:[%s5 + $0xa8] sm:$0xff]
        %v6035 = vld [vmem:[%s5 + $0xb0] sm:$0xff]
        %v6036 = vld [vmem:[%s5 + $0xb8] sm:$0xff]
        %v6037 = vld [vmem:[%s5 + $0xc0] sm:$0xff]
        %v6038 = vld [vmem:[%s5 + $0xc8] sm:$0xff]
        %v6039 = vld [vmem:[%s5 + $0xd0] sm:$0xff]
        %v6040 = vld [vmem:[%s5 + $0xd8] sm:$0xff]
        %v6041 = vld [vmem:[%s5 + $0xe0] sm:$0xff]
        %v6042 = vld [vmem:[%s5 + $0xe8] sm:$0xff]
        %v6043 = vld [vmem:[%s5 + $0xf0] sm:$0xff]
        %v6044 = vld [vmem:[%s5 + $0xf8] sm:$0xff]
        %v6045 = vadd.f32 %v5887, %v6013
        %v6046 = vadd.f32 %v5890, %v6014
        %v6047 = vadd.f32 %v5895, %v6015
        %v6048 = vadd.f32 %v5898, %v6016
        %v6049 = vadd.f32 %v5903, %v6017
        %v6050 = vadd.f32 %v5906, %v6018
        %v6051 = vadd.f32 %v5911, %v6019
        %v6052 = vadd.f32 %v5914, %v6020
        %v6053 = vadd.f32 %v5919, %v6021
        %v6054 = vadd.f32 %v5922, %v6022
        %v6055 = vadd.f32 %v5927, %v6023
        %v6056 = vadd.f32 %v5930, %v6024
        %v6057 = vadd.f32 %v5935, %v6025
        %v6058 = vadd.f32 %v5938, %v6026
        %v6059 = vadd.f32 %v5943, %v6027
        %v6060 = vadd.f32 %v5946, %v6028
        %v6061 = vadd.f32 %v5951, %v6029
        %v6062 = vadd.f32 %v5954, %v6030
        %v6063 = vadd.f32 %v5959, %v6031
        %v6064 = vadd.f32 %v5962, %v6032
        %v6065 = vadd.f32 %v5967, %v6033
        %v6066 = vadd.f32 %v5970, %v6034
        %v6067 = vadd.f32 %v5975, %v6035
        %v6068 = vadd.f32 %v5978, %v6036
        %v6069 = vadd.f32 %v5983, %v6037
        %v6070 = vadd.f32 %v5986, %v6038
        %v6071 = vadd.f32 %v5991, %v6039
        %v6072 = vadd.f32 %v5994, %v6040
        %v6073 = vadd.f32 %v5999, %v6041
        %v6074 = vadd.f32 %v6002, %v6042
        %v6075 = vadd.f32 %v6007, %v6043
        %v6076 = vadd.f32 %v6010, %v6044
        %6077 = vst [vmem:[%s5] sm:$0xff] %v6045
        %6078 = vst [vmem:[%s5 + $0x8] sm:$0xff] %v6046
        %6079 = vst [vmem:[%s5 + $0x10] sm:$0xff] %v6047
        %6080 = vst [vmem:[%s5 + $0x18] sm:$0xff] %v6048
        %6081 = vst [vmem:[%s5 + $0x20] sm:$0xff] %v6049
        %6082 = vst [vmem:[%s5 + $0x28] sm:$0xff] %v6050
        %6083 = vst [vmem:[%s5 + $0x30] sm:$0xff] %v6051
        %6084 = vst [vmem:[%s5 + $0x38] sm:$0xff] %v6052
        %6085 = vst [vmem:[%s5 + $0x40] sm:$0xff] %v6053
        %6086 = vst [vmem:[%s5 + $0x48] sm:$0xff] %v6054
        %6087 = vst [vmem:[%s5 + $0x50] sm:$0xff] %v6055
        %6088 = vst [vmem:[%s5 + $0x58] sm:$0xff] %v6056
        %6089 = vst [vmem:[%s5 + $0x60] sm:$0xff] %v6057
        %6090 = vst [vmem:[%s5 + $0x68] sm:$0xff] %v6058
        %6091 = vst [vmem:[%s5 + $0x70] sm:$0xff] %v6059
        %6092 = vst [vmem:[%s5 + $0x78] sm:$0xff] %v6060
        %6093 = vst [vmem:[%s5 + $0x80] sm:$0xff] %v6061
        %6094 = vst [vmem:[%s5 + $0x88] sm:$0xff] %v6062
        %6095 = vst [vmem:[%s5 + $0x90] sm:$0xff] %v6063
        %6096 = vst [vmem:[%s5 + $0x98] sm:$0xff] %v6064
        %6097 = vst [vmem:[%s5 + $0xa0] sm:$0xff] %v6065
        %6098 = vst [vmem:[%s5 + $0xa8] sm:$0xff] %v6066
        %6099 = vst [vmem:[%s5 + $0xb0] sm:$0xff] %v6067
        %6100 = vst [vmem:[%s5 + $0xb8] sm:$0xff] %v6068
        %6101 = vst [vmem:[%s5 + $0xc0] sm:$0xff] %v6069
        %6102 = vst [vmem:[%s5 + $0xc8] sm:$0xff] %v6070
        %6103 = vst [vmem:[%s5 + $0xd0] sm:$0xff] %v6071
        %6104 = vst [vmem:[%s5 + $0xd8] sm:$0xff] %v6072
        %6105 = vst [vmem:[%s5 + $0xe0] sm:$0xff] %v6073
        %6106 = vst [vmem:[%s5 + $0xe8] sm:$0xff] %v6074
        %6107 = vst [vmem:[%s5 + $0xf0] sm:$0xff] %v6075
        %6108 = vst [vmem:[%s5 + $0xf8] sm:$0xff] %v6076
      $region60: #{tfcm_pallas.1} parent=39 // pred_fallthru
        _
      %p6109 = scmp.eq.s32.totalorder %s16, 4
      // Predicated region
      $region61: #{tfcm_pallas.1} parent=39 // pred_check
        %p6110 = pneg %p6109
      $region62: #{tfcm_pallas.1} parent=39 // pred_check_branch
        %6112 = sbr.rel (%p6110) target = $region64
      $region63: #{tfcm_pallas.1} parent=39 // pred_region
        %v6113 = vld [vmem:[%s777 + $0x8] sm:$0xff]
        %v6114 = vld [vmem:[%s777 + $0x10] sm:$0xff]
        %v6115 = vld [vmem:[%s777 + $0x20] sm:$0xff]
        %v6116 = vld [vmem:[%s777 + $0x28] sm:$0xff]
        %v6117 = vld [vmem:[%s777 + $0x38] sm:$0xff]
        %v6118 = vld [vmem:[%s777 + $0x40] sm:$0xff]
        %v6119 = vld [vmem:[%s777 + $0x50] sm:$0xff]
        %v6120 = vld [vmem:[%s777 + $0x58] sm:$0xff]
        %v6121 = vld [vmem:[%s777 + $0x68] sm:$0xff]
        %v6122 = vld [vmem:[%s777 + $0x70] sm:$0xff]
        %v6123 = vld [vmem:[%s777 + $0x80] sm:$0xff]
        %v6124 = vld [vmem:[%s777 + $0x88] sm:$0xff]
        %v6125 = vld [vmem:[%s777 + $0x98] sm:$0xff]
        %v6126 = vld [vmem:[%s777 + $0xa0] sm:$0xff]
        %v6127 = vld [vmem:[%s777 + $0xb0] sm:$0xff]
        %v6128 = vld [vmem:[%s777 + $0xb8] sm:$0xff]
        %v6129 = vld [vmem:[%s777 + $0xf8] sm:$0xff]
        %v6130 = vld [vmem:[%s777 + $0x100] sm:$0xff]
        %v6131 = vld [vmem:[%s777 + $0x110] sm:$0xff]
        %v6132 = vld [vmem:[%s777 + $0x118] sm:$0xff]
        %v6133 = vld [vmem:[%s777 + $0x128] sm:$0xff]
        %v6134 = vld [vmem:[%s777 + $0x130] sm:$0xff]
        %v6135 = vld [vmem:[%s777 + $0x140] sm:$0xff]
        %v6136 = vld [vmem:[%s777 + $0x148] sm:$0xff]
        %v6137 = vld [vmem:[%s777 + $0x158] sm:$0xff]
        %v6138 = vld [vmem:[%s777 + $0x160] sm:$0xff]
        %v6139 = vld [vmem:[%s777 + $0x170] sm:$0xff]
        %v6140 = vld [vmem:[%s777 + $0x178] sm:$0xff]
        %v6141 = vld [vmem:[%s777 + $0x188] sm:$0xff]
        %v6142 = vld [vmem:[%s777 + $0x190] sm:$0xff]
        %v6143 = vld [vmem:[%s777 + $0x1a0] sm:$0xff]
        %v6144 = vld [vmem:[%s777 + $0x1a8] sm:$0xff]
        %v6145 = vlaneseq
        %v6146 = vshrl.u32 %v6145, 7
        %v6147 = vsub.s32 5, %v6146
        %v6148 = vrot.slane %v324, %v6147
        %v6149 = vmul.f32 %v6113, %v6148
        %v6150 = vmul.f32 %v6114, %v6148
        %v6151 = vmul.f32 %v6115, %v6148
        %v6152 = vmul.f32 %v6116, %v6148
        %v6153 = vmul.f32 %v6117, %v6148
        %v6154 = vmul.f32 %v6118, %v6148
        %v6155 = vmul.f32 %v6119, %v6148
        %v6156 = vmul.f32 %v6120, %v6148
        %v6157 = vmul.f32 %v6121, %v6148
        %v6158 = vmul.f32 %v6122, %v6148
        %v6159 = vmul.f32 %v6123, %v6148
        %v6160 = vmul.f32 %v6124, %v6148
        %v6161 = vmul.f32 %v6125, %v6148
        %v6162 = vmul.f32 %v6126, %v6148
        %v6163 = vmul.f32 %v6127, %v6148
        %v6164 = vmul.f32 %v6128, %v6148
        %v6165 = vmul.f32 %v6129, %v6148
        %v6166 = vmul.f32 %v6130, %v6148
        %v6167 = vmul.f32 %v6131, %v6148
        %v6168 = vmul.f32 %v6132, %v6148
        %v6169 = vmul.f32 %v6133, %v6148
        %v6170 = vmul.f32 %v6134, %v6148
        %v6171 = vmul.f32 %v6135, %v6148
        %v6172 = vmul.f32 %v6136, %v6148
        %v6173 = vmul.f32 %v6137, %v6148
        %v6174 = vmul.f32 %v6138, %v6148
        %v6175 = vmul.f32 %v6139, %v6148
        %v6176 = vmul.f32 %v6140, %v6148
        %v6177 = vmul.f32 %v6141, %v6148
        %v6178 = vmul.f32 %v6142, %v6148
        %v6179 = vmul.f32 %v6143, %v6148
        %v6180 = vmul.f32 %v6144, %v6148
        %v6181 = vlaneseq
        %v6182 = vshrl.u32 %v6181, 7
        %v6183 = vsub.s32 4, %v6182
        %v6184 = vrot.slane %v321, %v6183
        %v6185 = vadd.f32 %v6149, %v6184
        %v6186 = vadd.f32 %v6150, %v6184
        %v6187 = vadd.f32 %v6151, %v6184
        %v6188 = vadd.f32 %v6152, %v6184
        %v6189 = vadd.f32 %v6153, %v6184
        %v6190 = vadd.f32 %v6154, %v6184
        %v6191 = vadd.f32 %v6155, %v6184
        %v6192 = vadd.f32 %v6156, %v6184
        %v6193 = vadd.f32 %v6157, %v6184
        %v6194 = vadd.f32 %v6158, %v6184
        %v6195 = vadd.f32 %v6159, %v6184
        %v6196 = vadd.f32 %v6160, %v6184
        %v6197 = vadd.f32 %v6161, %v6184
        %v6198 = vadd.f32 %v6162, %v6184
        %v6199 = vadd.f32 %v6163, %v6184
        %v6200 = vadd.f32 %v6164, %v6184
        %v6201 = vadd.f32 %v6165, %v6184
        %v6202 = vadd.f32 %v6166, %v6184
        %v6203 = vadd.f32 %v6167, %v6184
        %v6204 = vadd.f32 %v6168, %v6184
        %v6205 = vadd.f32 %v6169, %v6184
        %v6206 = vadd.f32 %v6170, %v6184
        %v6207 = vadd.f32 %v6171, %v6184
        %v6208 = vadd.f32 %v6172, %v6184
        %v6209 = vadd.f32 %v6173, %v6184
        %v6210 = vadd.f32 %v6174, %v6184
        %v6211 = vadd.f32 %v6175, %v6184
        %v6212 = vadd.f32 %v6176, %v6184
        %v6213 = vadd.f32 %v6177, %v6184
        %v6214 = vadd.f32 %v6178, %v6184
        %v6215 = vadd.f32 %v6179, %v6184
        %v6216 = vadd.f32 %v6180, %v6184
        %v6217 = vld [vmem:[#allocation2 + $0x8] sm:$0xff]
        %v6218 = vld [vmem:[#allocation2 + $0x10] sm:$0xff]
        %v6219 = vld [vmem:[#allocation2 + $0x20] sm:$0xff]
        %v6220 = vld [vmem:[#allocation2 + $0x28] sm:$0xff]
        %v6221 = vld [vmem:[#allocation2 + $0x38] sm:$0xff]
        %v6222 = vld [vmem:[#allocation2 + $0x40] sm:$0xff]
        %v6223 = vld [vmem:[#allocation2 + $0x50] sm:$0xff]
        %v6224 = vld [vmem:[#allocation2 + $0x58] sm:$0xff]
        %v6225 = vld [vmem:[#allocation2 + $0x68] sm:$0xff]
        %v6226 = vld [vmem:[#allocation2 + $0x70] sm:$0xff]
        %v6227 = vld [vmem:[#allocation2 + $0x80] sm:$0xff]
        %v6228 = vld [vmem:[#allocation2 + $0x88] sm:$0xff]
        %v6229 = vld [vmem:[#allocation2 + $0x98] sm:$0xff]
        %v6230 = vld [vmem:[#allocation2 + $0xa0] sm:$0xff]
        %v6231 = vld [vmem:[#allocation2 + $0xb0] sm:$0xff]
        %v6232 = vld [vmem:[#allocation2 + $0xb8] sm:$0xff]
        %v6233 = vld [vmem:[#allocation2 + $0xf8] sm:$0xff]
        %v6234 = vld [vmem:[#allocation2 + $0x100] sm:$0xff]
        %v6235 = vld [vmem:[#allocation2 + $0x110] sm:$0xff]
        %v6236 = vld [vmem:[#allocation2 + $0x118] sm:$0xff]
        %v6237 = vld [vmem:[#allocation2 + $0x128] sm:$0xff]
        %v6238 = vld [vmem:[#allocation2 + $0x130] sm:$0xff]
        %v6239 = vld [vmem:[#allocation2 + $0x140] sm:$0xff]
        %v6240 = vld [vmem:[#allocation2 + $0x148] sm:$0xff]
        %v6241 = vld [vmem:[#allocation2 + $0x158] sm:$0xff]
        %v6242 = vld [vmem:[#allocation2 + $0x160] sm:$0xff]
        %v6243 = vld [vmem:[#allocation2 + $0x170] sm:$0xff]
        %v6244 = vld [vmem:[#allocation2 + $0x178] sm:$0xff]
        %v6245 = vld [vmem:[#allocation2 + $0x188] sm:$0xff]
        %v6246 = vld [vmem:[#allocation2 + $0x190] sm:$0xff]
        %v6247 = vld [vmem:[#allocation2 + $0x1a0] sm:$0xff]
        %v6248 = vld [vmem:[#allocation2 + $0x1a8] sm:$0xff]
        %v6249 = vlaneseq
        %v6250 = vshrl.u32 %v6249, 7
        %v6251 = vsub.s32 2, %v6250
        %v6252 = vrot.slane %v324, %v6251
        %v6253 = vmul.f32 %v6217, %v6252
        %v6254 = vmul.f32 %v6218, %v6252
        %v6255 = vmul.f32 %v6219, %v6252
        %v6256 = vmul.f32 %v6220, %v6252
        %v6257 = vmul.f32 %v6221, %v6252
        %v6258 = vmul.f32 %v6222, %v6252
        %v6259 = vmul.f32 %v6223, %v6252
        %v6260 = vmul.f32 %v6224, %v6252
        %v6261 = vmul.f32 %v6225, %v6252
        %v6262 = vmul.f32 %v6226, %v6252
        %v6263 = vmul.f32 %v6227, %v6252
        %v6264 = vmul.f32 %v6228, %v6252
        %v6265 = vmul.f32 %v6229, %v6252
        %v6266 = vmul.f32 %v6230, %v6252
        %v6267 = vmul.f32 %v6231, %v6252
        %v6268 = vmul.f32 %v6232, %v6252
        %v6269 = vmul.f32 %v6233, %v6252
        %v6270 = vmul.f32 %v6234, %v6252
        %v6271 = vmul.f32 %v6235, %v6252
        %v6272 = vmul.f32 %v6236, %v6252
        %v6273 = vmul.f32 %v6237, %v6252
        %v6274 = vmul.f32 %v6238, %v6252
        %v6275 = vmul.f32 %v6239, %v6252
        %v6276 = vmul.f32 %v6240, %v6252
        %v6277 = vmul.f32 %v6241, %v6252
        %v6278 = vmul.f32 %v6242, %v6252
        %v6279 = vmul.f32 %v6243, %v6252
        %v6280 = vmul.f32 %v6244, %v6252
        %v6281 = vmul.f32 %v6245, %v6252
        %v6282 = vmul.f32 %v6246, %v6252
        %v6283 = vmul.f32 %v6247, %v6252
        %v6284 = vmul.f32 %v6248, %v6252
        %v6285 = vadd.f32 %v6185, %v6253
        %v6286 = vadd.f32 %v6186, %v6254
        %v6287 = vadd.f32 %v6187, %v6255
        %v6288 = vadd.f32 %v6188, %v6256
        %v6289 = vadd.f32 %v6189, %v6257
        %v6290 = vadd.f32 %v6190, %v6258
        %v6291 = vadd.f32 %v6191, %v6259
        %v6292 = vadd.f32 %v6192, %v6260
        %v6293 = vadd.f32 %v6193, %v6261
        %v6294 = vadd.f32 %v6194, %v6262
        %v6295 = vadd.f32 %v6195, %v6263
        %v6296 = vadd.f32 %v6196, %v6264
        %v6297 = vadd.f32 %v6197, %v6265
        %v6298 = vadd.f32 %v6198, %v6266
        %v6299 = vadd.f32 %v6199, %v6267
        %v6300 = vadd.f32 %v6200, %v6268
        %v6301 = vadd.f32 %v6201, %v6269
        %v6302 = vadd.f32 %v6202, %v6270
        %v6303 = vadd.f32 %v6203, %v6271
        %v6304 = vadd.f32 %v6204, %v6272
        %v6305 = vadd.f32 %v6205, %v6273
        %v6306 = vadd.f32 %v6206, %v6274
        %v6307 = vadd.f32 %v6207, %v6275
        %v6308 = vadd.f32 %v6208, %v6276
        %v6309 = vadd.f32 %v6209, %v6277
        %v6310 = vadd.f32 %v6210, %v6278
        %v6311 = vadd.f32 %v6211, %v6279
        %v6312 = vadd.f32 %v6212, %v6280
        %v6313 = vadd.f32 %v6213, %v6281
        %v6314 = vadd.f32 %v6214, %v6282
        %v6315 = vadd.f32 %v6215, %v6283
        %v6316 = vadd.f32 %v6216, %v6284
        %s6317 = scalar_lea.vmem [#allocation2], 48
        %v6318 = vld [vmem:[%s6317 + $0x8] sm:$0xff]
        %v6319 = vld [vmem:[%s6317 + $0x10] sm:$0xff]
        %v6320 = vld [vmem:[%s6317 + $0x20] sm:$0xff]
        %v6321 = vld [vmem:[%s6317 + $0x28] sm:$0xff]
        %v6322 = vld [vmem:[%s6317 + $0x38] sm:$0xff]
        %v6323 = vld [vmem:[%s6317 + $0x40] sm:$0xff]
        %v6324 = vld [vmem:[%s6317 + $0x50] sm:$0xff]
        %v6325 = vld [vmem:[%s6317 + $0x58] sm:$0xff]
        %v6326 = vld [vmem:[%s6317 + $0x68] sm:$0xff]
        %v6327 = vld [vmem:[%s6317 + $0x70] sm:$0xff]
        %v6328 = vld [vmem:[%s6317 + $0x80] sm:$0xff]
        %v6329 = vld [vmem:[%s6317 + $0x88] sm:$0xff]
        %v6330 = vld [vmem:[%s6317 + $0x98] sm:$0xff]
        %v6331 = vld [vmem:[%s6317 + $0xa0] sm:$0xff]
        %v6332 = vld [vmem:[%s6317 + $0xb0] sm:$0xff]
        %v6333 = vld [vmem:[%s6317 + $0xb8] sm:$0xff]
        %v6334 = vld [vmem:[%s6317 + $0xf8] sm:$0xff]
        %v6335 = vld [vmem:[%s6317 + $0x100] sm:$0xff]
        %v6336 = vld [vmem:[%s6317 + $0x110] sm:$0xff]
        %v6337 = vld [vmem:[%s6317 + $0x118] sm:$0xff]
        %v6338 = vld [vmem:[%s6317 + $0x128] sm:$0xff]
        %v6339 = vld [vmem:[%s6317 + $0x130] sm:$0xff]
        %v6340 = vld [vmem:[%s6317 + $0x140] sm:$0xff]
        %v6341 = vld [vmem:[%s6317 + $0x148] sm:$0xff]
        %v6342 = vld [vmem:[%s6317 + $0x158] sm:$0xff]
        %v6343 = vld [vmem:[%s6317 + $0x160] sm:$0xff]
        %v6344 = vld [vmem:[%s6317 + $0x170] sm:$0xff]
        %v6345 = vld [vmem:[%s6317 + $0x178] sm:$0xff]
        %v6346 = vld [vmem:[%s6317 + $0x188] sm:$0xff]
        %v6347 = vld [vmem:[%s6317 + $0x190] sm:$0xff]
        %v6348 = vld [vmem:[%s6317 + $0x1a0] sm:$0xff]
        %v6349 = vld [vmem:[%s6317 + $0x1a8] sm:$0xff]
        %v6350 = vlaneseq
        %v6351 = vshrl.u32 %v6350, 7
        %v6352 = vsub.s32 0, %v6351
        %v6353 = vrot.slane %v325, %v6352
        %v6354 = vmul.f32 %v6318, %v6353
        %v6355 = vmul.f32 %v6319, %v6353
        %v6356 = vmul.f32 %v6320, %v6353
        %v6357 = vmul.f32 %v6321, %v6353
        %v6358 = vmul.f32 %v6322, %v6353
        %v6359 = vmul.f32 %v6323, %v6353
        %v6360 = vmul.f32 %v6324, %v6353
        %v6361 = vmul.f32 %v6325, %v6353
        %v6362 = vmul.f32 %v6326, %v6353
        %v6363 = vmul.f32 %v6327, %v6353
        %v6364 = vmul.f32 %v6328, %v6353
        %v6365 = vmul.f32 %v6329, %v6353
        %v6366 = vmul.f32 %v6330, %v6353
        %v6367 = vmul.f32 %v6331, %v6353
        %v6368 = vmul.f32 %v6332, %v6353
        %v6369 = vmul.f32 %v6333, %v6353
        %v6370 = vmul.f32 %v6334, %v6353
        %v6371 = vmul.f32 %v6335, %v6353
        %v6372 = vmul.f32 %v6336, %v6353
        %v6373 = vmul.f32 %v6337, %v6353
        %v6374 = vmul.f32 %v6338, %v6353
        %v6375 = vmul.f32 %v6339, %v6353
        %v6376 = vmul.f32 %v6340, %v6353
        %v6377 = vmul.f32 %v6341, %v6353
        %v6378 = vmul.f32 %v6342, %v6353
        %v6379 = vmul.f32 %v6343, %v6353
        %v6380 = vmul.f32 %v6344, %v6353
        %v6381 = vmul.f32 %v6345, %v6353
        %v6382 = vmul.f32 %v6346, %v6353
        %v6383 = vmul.f32 %v6347, %v6353
        %v6384 = vmul.f32 %v6348, %v6353
        %v6385 = vmul.f32 %v6349, %v6353
        %v6386 = vadd.f32 %v6285, %v6354
        %v6387 = vadd.f32 %v6286, %v6355
        %v6388 = vadd.f32 %v6287, %v6356
        %v6389 = vadd.f32 %v6288, %v6357
        %v6390 = vadd.f32 %v6289, %v6358
        %v6391 = vadd.f32 %v6290, %v6359
        %v6392 = vadd.f32 %v6291, %v6360
        %v6393 = vadd.f32 %v6292, %v6361
        %v6394 = vadd.f32 %v6293, %v6362
        %v6395 = vadd.f32 %v6294, %v6363
        %v6396 = vadd.f32 %v6295, %v6364
        %v6397 = vadd.f32 %v6296, %v6365
        %v6398 = vadd.f32 %v6297, %v6366
        %v6399 = vadd.f32 %v6298, %v6367
        %v6400 = vadd.f32 %v6299, %v6368
        %v6401 = vadd.f32 %v6300, %v6369
        %v6402 = vadd.f32 %v6301, %v6370
        %v6403 = vadd.f32 %v6302, %v6371
        %v6404 = vadd.f32 %v6303, %v6372
        %v6405 = vadd.f32 %v6304, %v6373
        %v6406 = vadd.f32 %v6305, %v6374
        %v6407 = vadd.f32 %v6306, %v6375
        %v6408 = vadd.f32 %v6307, %v6376
        %v6409 = vadd.f32 %v6308, %v6377
        %v6410 = vadd.f32 %v6309, %v6378
        %v6411 = vadd.f32 %v6310, %v6379
        %v6412 = vadd.f32 %v6311, %v6380
        %v6413 = vadd.f32 %v6312, %v6381
        %v6414 = vadd.f32 %v6313, %v6382
        %v6415 = vadd.f32 %v6314, %v6383
        %v6416 = vadd.f32 %v6315, %v6384
        %v6417 = vadd.f32 %v6316, %v6385
        %v6418 = vlaneseq
        %v6419 = vshrl.u32 %v6418, 7
        %v6420 = vsub.s32 5, %v6419
        %v6421 = vrot.slane %v321, %v6420
        %v6422 = vmul.f32 %v6386, %v6421
        %v6423 = vmul.f32 %v6387, %v6421
        %v6424 = vmul.f32 %v6388, %v6421
        %v6425 = vmul.f32 %v6389, %v6421
        %v6426 = vmul.f32 %v6390, %v6421
        %v6427 = vmul.f32 %v6391, %v6421
        %v6428 = vmul.f32 %v6392, %v6421
        %v6429 = vmul.f32 %v6393, %v6421
        %v6430 = vmul.f32 %v6394, %v6421
        %v6431 = vmul.f32 %v6395, %v6421
        %v6432 = vmul.f32 %v6396, %v6421
        %v6433 = vmul.f32 %v6397, %v6421
        %v6434 = vmul.f32 %v6398, %v6421
        %v6435 = vmul.f32 %v6399, %v6421
        %v6436 = vmul.f32 %v6400, %v6421
        %v6437 = vmul.f32 %v6401, %v6421
        %v6438 = vmul.f32 %v6402, %v6421
        %v6439 = vmul.f32 %v6403, %v6421
        %v6440 = vmul.f32 %v6404, %v6421
        %v6441 = vmul.f32 %v6405, %v6421
        %v6442 = vmul.f32 %v6406, %v6421
        %v6443 = vmul.f32 %v6407, %v6421
        %v6444 = vmul.f32 %v6408, %v6421
        %v6445 = vmul.f32 %v6409, %v6421
        %v6446 = vmul.f32 %v6410, %v6421
        %v6447 = vmul.f32 %v6411, %v6421
        %v6448 = vmul.f32 %v6412, %v6421
        %v6449 = vmul.f32 %v6413, %v6421
        %v6450 = vmul.f32 %v6414, %v6421
        %v6451 = vmul.f32 %v6415, %v6421
        %v6452 = vmul.f32 %v6416, %v6421
        %v6453 = vmul.f32 %v6417, %v6421
        %v6454 = vlaneseq
        %v6455 = vshrl.u32 %v6454, 7
        %v6456 = vsub.s32 6, %v6455
        %v6457 = vrot.slane %v321, %v6456
        %v6458 = vadd.f32 %v6422, %v6457
        %v6459 = vadd.f32 %v6423, %v6457
        %v6460 = vadd.f32 %v6424, %v6457
        %v6461 = vadd.f32 %v6425, %v6457
        %v6462 = vadd.f32 %v6426, %v6457
        %v6463 = vadd.f32 %v6427, %v6457
        %v6464 = vadd.f32 %v6428, %v6457
        %v6465 = vadd.f32 %v6429, %v6457
        %v6466 = vadd.f32 %v6430, %v6457
        %v6467 = vadd.f32 %v6431, %v6457
        %v6468 = vadd.f32 %v6432, %v6457
        %v6469 = vadd.f32 %v6433, %v6457
        %v6470 = vadd.f32 %v6434, %v6457
        %v6471 = vadd.f32 %v6435, %v6457
        %v6472 = vadd.f32 %v6436, %v6457
        %v6473 = vadd.f32 %v6437, %v6457
        %v6474 = vadd.f32 %v6438, %v6457
        %v6475 = vadd.f32 %v6439, %v6457
        %v6476 = vadd.f32 %v6440, %v6457
        %v6477 = vadd.f32 %v6441, %v6457
        %v6478 = vadd.f32 %v6442, %v6457
        %v6479 = vadd.f32 %v6443, %v6457
        %v6480 = vadd.f32 %v6444, %v6457
        %v6481 = vadd.f32 %v6445, %v6457
        %v6482 = vadd.f32 %v6446, %v6457
        %v6483 = vadd.f32 %v6447, %v6457
        %v6484 = vadd.f32 %v6448, %v6457
        %v6485 = vadd.f32 %v6449, %v6457
        %v6486 = vadd.f32 %v6450, %v6457
        %v6487 = vadd.f32 %v6451, %v6457
        %v6488 = vadd.f32 %v6452, %v6457
        %v6489 = vadd.f32 %v6453, %v6457
        %vm6490 = vcmp.ge.f32.partialorder %v6458, 0.0
        %vm6491 = vcmp.ge.f32.partialorder %v6459, 0.0
        %vm6492 = vcmp.ge.f32.partialorder %v6460, 0.0
        %vm6493 = vcmp.ge.f32.partialorder %v6461, 0.0
        %vm6494 = vcmp.ge.f32.partialorder %v6462, 0.0
        %vm6495 = vcmp.ge.f32.partialorder %v6463, 0.0
        %vm6496 = vcmp.ge.f32.partialorder %v6464, 0.0
        %vm6497 = vcmp.ge.f32.partialorder %v6465, 0.0
        %vm6498 = vcmp.ge.f32.partialorder %v6466, 0.0
        %vm6499 = vcmp.ge.f32.partialorder %v6467, 0.0
        %vm6500 = vcmp.ge.f32.partialorder %v6468, 0.0
        %vm6501 = vcmp.ge.f32.partialorder %v6469, 0.0
        %vm6502 = vcmp.ge.f32.partialorder %v6470, 0.0
        %vm6503 = vcmp.ge.f32.partialorder %v6471, 0.0
        %vm6504 = vcmp.ge.f32.partialorder %v6472, 0.0
        %vm6505 = vcmp.ge.f32.partialorder %v6473, 0.0
        %vm6506 = vcmp.ge.f32.partialorder %v6474, 0.0
        %vm6507 = vcmp.ge.f32.partialorder %v6475, 0.0
        %vm6508 = vcmp.ge.f32.partialorder %v6476, 0.0
        %vm6509 = vcmp.ge.f32.partialorder %v6477, 0.0
        %vm6510 = vcmp.ge.f32.partialorder %v6478, 0.0
        %vm6511 = vcmp.ge.f32.partialorder %v6479, 0.0
        %vm6512 = vcmp.ge.f32.partialorder %v6480, 0.0
        %vm6513 = vcmp.ge.f32.partialorder %v6481, 0.0
        %vm6514 = vcmp.ge.f32.partialorder %v6482, 0.0
        %vm6515 = vcmp.ge.f32.partialorder %v6483, 0.0
        %vm6516 = vcmp.ge.f32.partialorder %v6484, 0.0
        %vm6517 = vcmp.ge.f32.partialorder %v6485, 0.0
        %vm6518 = vcmp.ge.f32.partialorder %v6486, 0.0
        %vm6519 = vcmp.ge.f32.partialorder %v6487, 0.0
        %vm6520 = vcmp.ge.f32.partialorder %v6488, 0.0
        %vm6521 = vcmp.ge.f32.partialorder %v6489, 0.0
        %v6522 = vlaneseq
        %v6523 = vshrl.u32 %v6522, 7
        %v6524 = vsub.s32 7, %v6523
        %v6525 = vrot.slane %v321, %v6524
        %v6526 = vmul.f32 %v6525, %v6458
        %v6527 = vmul.f32 %v6525, %v6459
        %v6528 = vmul.f32 %v6525, %v6460
        %v6529 = vmul.f32 %v6525, %v6461
        %v6530 = vmul.f32 %v6525, %v6462
        %v6531 = vmul.f32 %v6525, %v6463
        %v6532 = vmul.f32 %v6525, %v6464
        %v6533 = vmul.f32 %v6525, %v6465
        %v6534 = vmul.f32 %v6525, %v6466
        %v6535 = vmul.f32 %v6525, %v6467
        %v6536 = vmul.f32 %v6525, %v6468
        %v6537 = vmul.f32 %v6525, %v6469
        %v6538 = vmul.f32 %v6525, %v6470
        %v6539 = vmul.f32 %v6525, %v6471
        %v6540 = vmul.f32 %v6525, %v6472
        %v6541 = vmul.f32 %v6525, %v6473
        %v6542 = vmul.f32 %v6525, %v6474
        %v6543 = vmul.f32 %v6525, %v6475
        %v6544 = vmul.f32 %v6525, %v6476
        %v6545 = vmul.f32 %v6525, %v6477
        %v6546 = vmul.f32 %v6525, %v6478
        %v6547 = vmul.f32 %v6525, %v6479
        %v6548 = vmul.f32 %v6525, %v6480
        %v6549 = vmul.f32 %v6525, %v6481
        %v6550 = vmul.f32 %v6525, %v6482
        %v6551 = vmul.f32 %v6525, %v6483
        %v6552 = vmul.f32 %v6525, %v6484
        %v6553 = vmul.f32 %v6525, %v6485
        %v6554 = vmul.f32 %v6525, %v6486
        %v6555 = vmul.f32 %v6525, %v6487
        %v6556 = vmul.f32 %v6525, %v6488
        %v6557 = vmul.f32 %v6525, %v6489
        %v6558 = vsel %vm6490, %v6458, %v6526
        %v6559 = vsel %vm6491, %v6459, %v6527
        %v6560 = vsel %vm6492, %v6460, %v6528
        %v6561 = vsel %vm6493, %v6461, %v6529
        %v6562 = vsel %vm6494, %v6462, %v6530
        %v6563 = vsel %vm6495, %v6463, %v6531
        %v6564 = vsel %vm6496, %v6464, %v6532
        %v6565 = vsel %vm6497, %v6465, %v6533
        %v6566 = vsel %vm6498, %v6466, %v6534
        %v6567 = vsel %vm6499, %v6467, %v6535
        %v6568 = vsel %vm6500, %v6468, %v6536
        %v6569 = vsel %vm6501, %v6469, %v6537
        %v6570 = vsel %vm6502, %v6470, %v6538
        %v6571 = vsel %vm6503, %v6471, %v6539
        %v6572 = vsel %vm6504, %v6472, %v6540
        %v6573 = vsel %vm6505, %v6473, %v6541
        %v6574 = vsel %vm6506, %v6474, %v6542
        %v6575 = vsel %vm6507, %v6475, %v6543
        %v6576 = vsel %vm6508, %v6476, %v6544
        %v6577 = vsel %vm6509, %v6477, %v6545
        %v6578 = vsel %vm6510, %v6478, %v6546
        %v6579 = vsel %vm6511, %v6479, %v6547
        %v6580 = vsel %vm6512, %v6480, %v6548
        %v6581 = vsel %vm6513, %v6481, %v6549
        %v6582 = vsel %vm6514, %v6482, %v6550
        %v6583 = vsel %vm6515, %v6483, %v6551
        %v6584 = vsel %vm6516, %v6484, %v6552
        %v6585 = vsel %vm6517, %v6485, %v6553
        %v6586 = vsel %vm6518, %v6486, %v6554
        %v6587 = vsel %vm6519, %v6487, %v6555
        %v6588 = vsel %vm6520, %v6488, %v6556
        %v6589 = vsel %vm6521, %v6489, %v6557
        %v6590 = vpack.c.bf16 %v6559, %v6558
        %v6591 = vpack.c.bf16 %v6561, %v6560
        %v6592 = vpack.c.bf16 %v6563, %v6562
        %v6593 = vpack.c.bf16 %v6565, %v6564
        %v6594 = vpack.c.bf16 %v6567, %v6566
        %v6595 = vpack.c.bf16 %v6569, %v6568
        %v6596 = vpack.c.bf16 %v6571, %v6570
        %v6597 = vpack.c.bf16 %v6573, %v6572
        %v6598 = vpack.c.bf16 %v6575, %v6574
        %v6599 = vpack.c.bf16 %v6577, %v6576
        %v6600 = vpack.c.bf16 %v6579, %v6578
        %v6601 = vpack.c.bf16 %v6581, %v6580
        %v6602 = vpack.c.bf16 %v6583, %v6582
        %v6603 = vpack.c.bf16 %v6585, %v6584
        %v6604 = vpack.c.bf16 %v6587, %v6586
        %v6605 = vpack.c.bf16 %v6589, %v6588
        %s6606 = smul.addr %s319, 4
        %s6607 = scalar_lea.vmem %s2, %s6606
        %v6608 = vld [vmem:[%s6607] sm:$0xf]
        %v6609 = vld [vmem:[%s6607 + $0x4] sm:$0xf]
        %v6610 = vld [vmem:[%s6607 + $0x8] sm:$0xf]
        %v6611 = vld [vmem:[%s6607 + $0xc] sm:$0xf]
        %v6612 = vld [vmem:[%s6607 + $0x10] sm:$0xf]
        %v6613 = vld [vmem:[%s6607 + $0x14] sm:$0xf]
        %v6614 = vld [vmem:[%s6607 + $0x18] sm:$0xf]
        %v6615 = vld [vmem:[%s6607 + $0x1c] sm:$0xf]
        %v6616 = vld [vmem:[%s6607 + $0x20] sm:$0xf]
        %v6617 = vld [vmem:[%s6607 + $0x24] sm:$0xf]
        %v6618 = vld [vmem:[%s6607 + $0x28] sm:$0xf]
        %v6619 = vld [vmem:[%s6607 + $0x2c] sm:$0xf]
        %v6620 = vld [vmem:[%s6607 + $0x30] sm:$0xf]
        %v6621 = vld [vmem:[%s6607 + $0x34] sm:$0xf]
        %v6622 = vld [vmem:[%s6607 + $0x38] sm:$0xf]
        %v6623 = vld [vmem:[%s6607 + $0x3c] sm:$0xf]
        %v6624 = vlaneseq
        %v6625 = vshrl.u32 %v6624, 7
        %v6626 = vsub.s32 0, %v6625
        %v6627 = vrot.slane %v322, %v6626
        %v6644 = vunpack.c.l.b16 %v6608
        %v6645 = vunpack.c.l.b16 %v6609
        %v6646 = vunpack.c.l.b16 %v6610
        %v6647 = vunpack.c.l.b16 %v6611
        %v6648 = vunpack.c.l.b16 %v6612
        %v6649 = vunpack.c.l.b16 %v6613
        %v6650 = vunpack.c.l.b16 %v6614
        %v6651 = vunpack.c.l.b16 %v6615
        %v6652 = vunpack.c.l.b16 %v6616
        %v6653 = vunpack.c.l.b16 %v6617
        %v6654 = vunpack.c.l.b16 %v6618
        %v6655 = vunpack.c.l.b16 %v6619
        %v6656 = vunpack.c.l.b16 %v6620
        %v6657 = vunpack.c.l.b16 %v6621
        %v6658 = vunpack.c.l.b16 %v6622
        %v6659 = vunpack.c.l.b16 %v6623
        %v6660 = vpack.c.b16 %v6645, %v6644
        %v6661 = vpack.c.b16 %v6647, %v6646
        %v6662 = vpack.c.b16 %v6649, %v6648
        %v6663 = vpack.c.b16 %v6651, %v6650
        %v6664 = vpack.c.b16 %v6653, %v6652
        %v6665 = vpack.c.b16 %v6655, %v6654
        %v6666 = vpack.c.b16 %v6657, %v6656
        %v6667 = vpack.c.b16 %v6659, %v6658
        %6676 = vmatprep.subr.bf16.mxu0 0
        %6677 = vmatpush1.bf16.msra.mxu0 %v6660
        %6678 = vmatprep.subr.bf16.mxu0 0
        %6679 = vmatpush1.bf16.msra.mxu0 %v6661
        %6680 = vmatprep.subr.bf16.mxu0 0
        %6681 = vmatpush1.bf16.msra.mxu0 %v6662
        %6682 = vmatprep.subr.bf16.mxu0 0
        %6683 = vmatpush1.bf16.msra.mxu0 %v6663
        %6684 = vmatprep.subr.bf16.mxu0 0
        %6685 = vmatpush1.bf16.msra.mxu0 %v6664
        %6686 = vmatprep.subr.bf16.mxu0 0
        %6687 = vmatpush1.bf16.msra.mxu0 %v6665
        %6688 = vmatprep.subr.bf16.mxu0 0
        %6689 = vmatpush1.bf16.msra.mxu0 %v6666
        %6690 = vmatprep.subr.bf16.mxu0 0
        %6691 = vmatpush1.bf16.msra.mxu0 %v6667
        %6692 = vmatprep.subr.bf16.mxu0 0
        %6693 = vmatpush1.bf16.msra.mxu0 0
        %6694 = vmatprep.subr.bf16.mxu0 0
        %6695 = vmatpush1.bf16.msra.mxu0 0
        %6696 = vmatprep.subr.bf16.mxu0 0
        %6697 = vmatpush1.bf16.msra.mxu0 0
        %6698 = vmatprep.subr.bf16.mxu0 0
        %6699 = vmatpush1.bf16.msra.mxu0 0
        %6700 = vmatprep.subr.bf16.mxu0 0
        %6701 = vmatpush1.bf16.msra.mxu0 0
        %6702 = vmatprep.subr.bf16.mxu0 0
        %6703 = vmatpush1.bf16.msra.mxu0 0
        %6704 = vmatprep.subr.bf16.mxu0 0
        %6705 = vmatpush1.bf16.msra.mxu0 0
        %6706 = vmatprep.subr.bf16.mxu0 0
        %6707 = vmatpush1.bf16.msra.mxu0 0
        %6708 = vmatprep.mubr.bf16.mxu0 0
        %6709 = vmatmul.mubr.bf16.gmra.mrb[0].mxu0 %v6590
        %v6710 = vpop.f32.mrb[0].mxu0
        %v6711 = vadd.f32 %v6627, %v6710
        %v6712 = vpop.f32.mrb[0].mxu0
        %v6713 = vpop.f32.mrb[0].mxu0
        %v6714 = vadd.f32 %v6627, %v6713
        %v6715 = vpop.f32.mrb[0].mxu0
        %6716 = vmatprep.mubr.bf16.mxu0 0
        %6717 = vmatmul.mubr.bf16.gmra.mrb[0].mxu0 %v6591
        %v6718 = vpop.f32.mrb[0].mxu0
        %v6719 = vadd.f32 %v6627, %v6718
        %v6720 = vpop.f32.mrb[0].mxu0
        %v6721 = vpop.f32.mrb[0].mxu0
        %v6722 = vadd.f32 %v6627, %v6721
        %v6723 = vpop.f32.mrb[0].mxu0
        %6724 = vmatprep.mubr.bf16.mxu0 0
        %6725 = vmatmul.mubr.bf16.gmra.mrb[0].mxu0 %v6592
        %v6726 = vpop.f32.mrb[0].mxu0
        %v6727 = vadd.f32 %v6627, %v6726
        %v6728 = vpop.f32.mrb[0].mxu0
        %v6729 = vpop.f32.mrb[0].mxu0
        %v6730 = vadd.f32 %v6627, %v6729
        %v6731 = vpop.f32.mrb[0].mxu0
        %6732 = vmatprep.mubr.bf16.mxu0 0
        %6733 = vmatmul.mubr.bf16.gmra.mrb[0].mxu0 %v6593
        %v6734 = vpop.f32.mrb[0].mxu0
        %v6735 = vadd.f32 %v6627, %v6734
        %v6736 = vpop.f32.mrb[0].mxu0
        %v6737 = vpop.f32.mrb[0].mxu0
        %v6738 = vadd.f32 %v6627, %v6737
        %v6739 = vpop.f32.mrb[0].mxu0
        %6740 = vmatprep.mubr.bf16.mxu0 0
        %6741 = vmatmul.mubr.bf16.gmra.mrb[0].mxu0 %v6594
        %v6742 = vpop.f32.mrb[0].mxu0
        %v6743 = vadd.f32 %v6627, %v6742
        %v6744 = vpop.f32.mrb[0].mxu0
        %v6745 = vpop.f32.mrb[0].mxu0
        %v6746 = vadd.f32 %v6627, %v6745
        %v6747 = vpop.f32.mrb[0].mxu0
        %6748 = vmatprep.mubr.bf16.mxu0 0
        %6749 = vmatmul.mubr.bf16.gmra.mrb[0].mxu0 %v6595
        %v6750 = vpop.f32.mrb[0].mxu0
        %v6751 = vadd.f32 %v6627, %v6750
        %v6752 = vpop.f32.mrb[0].mxu0
        %v6753 = vpop.f32.mrb[0].mxu0
        %v6754 = vadd.f32 %v6627, %v6753
        %v6755 = vpop.f32.mrb[0].mxu0
        %6756 = vmatprep.mubr.bf16.mxu0 0
        %6757 = vmatmul.mubr.bf16.gmra.mrb[0].mxu0 %v6596
        %v6758 = vpop.f32.mrb[0].mxu0
        %v6759 = vadd.f32 %v6627, %v6758
        %v6760 = vpop.f32.mrb[0].mxu0
        %v6761 = vpop.f32.mrb[0].mxu0
        %v6762 = vadd.f32 %v6627, %v6761
        %v6763 = vpop.f32.mrb[0].mxu0
        %6764 = vmatprep.mubr.bf16.mxu0 0
        %6765 = vmatmul.mubr.bf16.gmra.mrb[0].mxu0 %v6597
        %v6766 = vpop.f32.mrb[0].mxu0
        %v6767 = vadd.f32 %v6627, %v6766
        %v6768 = vpop.f32.mrb[0].mxu0
        %v6769 = vpop.f32.mrb[0].mxu0
        %v6770 = vadd.f32 %v6627, %v6769
        %v6771 = vpop.f32.mrb[0].mxu0
        %6772 = vmatprep.mubr.bf16.mxu0 0
        %6773 = vmatmul.mubr.bf16.gmra.mrb[0].mxu0 %v6598
        %v6774 = vpop.f32.mrb[0].mxu0
        %v6775 = vadd.f32 %v6627, %v6774
        %v6776 = vpop.f32.mrb[0].mxu0
        %v6777 = vpop.f32.mrb[0].mxu0
        %v6778 = vadd.f32 %v6627, %v6777
        %v6779 = vpop.f32.mrb[0].mxu0
        %6780 = vmatprep.mubr.bf16.mxu0 0
        %6781 = vmatmul.mubr.bf16.gmra.mrb[0].mxu0 %v6599
        %v6782 = vpop.f32.mrb[0].mxu0
        %v6783 = vadd.f32 %v6627, %v6782
        %v6784 = vpop.f32.mrb[0].mxu0
        %v6785 = vpop.f32.mrb[0].mxu0
        %v6786 = vadd.f32 %v6627, %v6785
        %v6787 = vpop.f32.mrb[0].mxu0
        %6788 = vmatprep.mubr.bf16.mxu0 0
        %6789 = vmatmul.mubr.bf16.gmra.mrb[0].mxu0 %v6600
        %v6790 = vpop.f32.mrb[0].mxu0
        %v6791 = vadd.f32 %v6627, %v6790
        %v6792 = vpop.f32.mrb[0].mxu0
        %v6793 = vpop.f32.mrb[0].mxu0
        %v6794 = vadd.f32 %v6627, %v6793
        %v6795 = vpop.f32.mrb[0].mxu0
        %6796 = vmatprep.mubr.bf16.mxu0 0
        %6797 = vmatmul.mubr.bf16.gmra.mrb[0].mxu0 %v6601
        %v6798 = vpop.f32.mrb[0].mxu0
        %v6799 = vadd.f32 %v6627, %v6798
        %v6800 = vpop.f32.mrb[0].mxu0
        %v6801 = vpop.f32.mrb[0].mxu0
        %v6802 = vadd.f32 %v6627, %v6801
        %v6803 = vpop.f32.mrb[0].mxu0
        %6804 = vmatprep.mubr.bf16.mxu0 0
        %6805 = vmatmul.mubr.bf16.gmra.mrb[0].mxu0 %v6602
        %v6806 = vpop.f32.mrb[0].mxu0
        %v6807 = vadd.f32 %v6627, %v6806
        %v6808 = vpop.f32.mrb[0].mxu0
        %v6809 = vpop.f32.mrb[0].mxu0
        %v6810 = vadd.f32 %v6627, %v6809
        %v6811 = vpop.f32.mrb[0].mxu0
        %6812 = vmatprep.mubr.bf16.mxu0 0
        %6813 = vmatmul.mubr.bf16.gmra.mrb[0].mxu0 %v6603
        %v6814 = vpop.f32.mrb[0].mxu0
        %v6815 = vadd.f32 %v6627, %v6814
        %v6816 = vpop.f32.mrb[0].mxu0
        %v6817 = vpop.f32.mrb[0].mxu0
        %v6818 = vadd.f32 %v6627, %v6817
        %v6819 = vpop.f32.mrb[0].mxu0
        %6820 = vmatprep.mubr.bf16.mxu0 0
        %6821 = vmatmul.mubr.bf16.gmra.mrb[0].mxu0 %v6604
        %v6822 = vpop.f32.mrb[0].mxu0
        %v6823 = vadd.f32 %v6627, %v6822
        %v6824 = vpop.f32.mrb[0].mxu0
        %v6825 = vpop.f32.mrb[0].mxu0
        %v6826 = vadd.f32 %v6627, %v6825
        %v6827 = vpop.f32.mrb[0].mxu0
        %6828 = vmatprep.mubr.bf16.mxu0 0
        %6829 = vmatmul.mubr.bf16.gmra.mrb[0].mxu0 %v6605
        %v6830 = vpop.f32.mrb[0].mxu0
        %v6831 = vadd.f32 %v6627, %v6830
        %v6832 = vpop.f32.mrb[0].mxu0
        %v6833 = vpop.f32.mrb[0].mxu0
        %v6834 = vadd.f32 %v6627, %v6833
        %v6835 = vpop.f32.mrb[0].mxu0
        %6836 = vdwg.mxu0
        %v6837 = vld [vmem:[%s5] sm:$0xff]
        %v6838 = vld [vmem:[%s5 + $0x8] sm:$0xff]
        %v6839 = vld [vmem:[%s5 + $0x10] sm:$0xff]
        %v6840 = vld [vmem:[%s5 + $0x18] sm:$0xff]
        %v6841 = vld [vmem:[%s5 + $0x20] sm:$0xff]
        %v6842 = vld [vmem:[%s5 + $0x28] sm:$0xff]
        %v6843 = vld [vmem:[%s5 + $0x30] sm:$0xff]
        %v6844 = vld [vmem:[%s5 + $0x38] sm:$0xff]
        %v6845 = vld [vmem:[%s5 + $0x40] sm:$0xff]
        %v6846 = vld [vmem:[%s5 + $0x48] sm:$0xff]
        %v6847 = vld [vmem:[%s5 + $0x50] sm:$0xff]
        %v6848 = vld [vmem:[%s5 + $0x58] sm:$0xff]
        %v6849 = vld [vmem:[%s5 + $0x60] sm:$0xff]
        %v6850 = vld [vmem:[%s5 + $0x68] sm:$0xff]
        %v6851 = vld [vmem:[%s5 + $0x70] sm:$0xff]
        %v6852 = vld [vmem:[%s5 + $0x78] sm:$0xff]
        %v6853 = vld [vmem:[%s5 + $0x80] sm:$0xff]
        %v6854 = vld [vmem:[%s5 + $0x88] sm:$0xff]
        %v6855 = vld [vmem:[%s5 + $0x90] sm:$0xff]
        %v6856 = vld [vmem:[%s5 + $0x98] sm:$0xff]
        %v6857 = vld [vmem:[%s5 + $0xa0] sm:$0xff]
        %v6858 = vld [vmem:[%s5 + $0xa8] sm:$0xff]
        %v6859 = vld [vmem:[%s5 + $0xb0] sm:$0xff]
        %v6860 = vld [vmem:[%s5 + $0xb8] sm:$0xff]
        %v6861 = vld [vmem:[%s5 + $0xc0] sm:$0xff]
        %v6862 = vld [vmem:[%s5 + $0xc8] sm:$0xff]
        %v6863 = vld [vmem:[%s5 + $0xd0] sm:$0xff]
        %v6864 = vld [vmem:[%s5 + $0xd8] sm:$0xff]
        %v6865 = vld [vmem:[%s5 + $0xe0] sm:$0xff]
        %v6866 = vld [vmem:[%s5 + $0xe8] sm:$0xff]
        %v6867 = vld [vmem:[%s5 + $0xf0] sm:$0xff]
        %v6868 = vld [vmem:[%s5 + $0xf8] sm:$0xff]
        %v6869 = vadd.f32 %v6711, %v6837
        %v6870 = vadd.f32 %v6714, %v6838
        %v6871 = vadd.f32 %v6719, %v6839
        %v6872 = vadd.f32 %v6722, %v6840
        %v6873 = vadd.f32 %v6727, %v6841
        %v6874 = vadd.f32 %v6730, %v6842
        %v6875 = vadd.f32 %v6735, %v6843
        %v6876 = vadd.f32 %v6738, %v6844
        %v6877 = vadd.f32 %v6743, %v6845
        %v6878 = vadd.f32 %v6746, %v6846
        %v6879 = vadd.f32 %v6751, %v6847
        %v6880 = vadd.f32 %v6754, %v6848
        %v6881 = vadd.f32 %v6759, %v6849
        %v6882 = vadd.f32 %v6762, %v6850
        %v6883 = vadd.f32 %v6767, %v6851
        %v6884 = vadd.f32 %v6770, %v6852
        %v6885 = vadd.f32 %v6775, %v6853
        %v6886 = vadd.f32 %v6778, %v6854
        %v6887 = vadd.f32 %v6783, %v6855
        %v6888 = vadd.f32 %v6786, %v6856
        %v6889 = vadd.f32 %v6791, %v6857
        %v6890 = vadd.f32 %v6794, %v6858
        %v6891 = vadd.f32 %v6799, %v6859
        %v6892 = vadd.f32 %v6802, %v6860
        %v6893 = vadd.f32 %v6807, %v6861
        %v6894 = vadd.f32 %v6810, %v6862
        %v6895 = vadd.f32 %v6815, %v6863
        %v6896 = vadd.f32 %v6818, %v6864
        %v6897 = vadd.f32 %v6823, %v6865
        %v6898 = vadd.f32 %v6826, %v6866
        %v6899 = vadd.f32 %v6831, %v6867
        %v6900 = vadd.f32 %v6834, %v6868
        %6901 = vst [vmem:[%s5] sm:$0xff] %v6869
        %6902 = vst [vmem:[%s5 + $0x8] sm:$0xff] %v6870
        %6903 = vst [vmem:[%s5 + $0x10] sm:$0xff] %v6871
        %6904 = vst [vmem:[%s5 + $0x18] sm:$0xff] %v6872
        %6905 = vst [vmem:[%s5 + $0x20] sm:$0xff] %v6873
        %6906 = vst [vmem:[%s5 + $0x28] sm:$0xff] %v6874
        %6907 = vst [vmem:[%s5 + $0x30] sm:$0xff] %v6875
        %6908 = vst [vmem:[%s5 + $0x38] sm:$0xff] %v6876
        %6909 = vst [vmem:[%s5 + $0x40] sm:$0xff] %v6877
        %6910 = vst [vmem:[%s5 + $0x48] sm:$0xff] %v6878
        %6911 = vst [vmem:[%s5 + $0x50] sm:$0xff] %v6879
        %6912 = vst [vmem:[%s5 + $0x58] sm:$0xff] %v6880
        %6913 = vst [vmem:[%s5 + $0x60] sm:$0xff] %v6881
        %6914 = vst [vmem:[%s5 + $0x68] sm:$0xff] %v6882
        %6915 = vst [vmem:[%s5 + $0x70] sm:$0xff] %v6883
        %6916 = vst [vmem:[%s5 + $0x78] sm:$0xff] %v6884
        %6917 = vst [vmem:[%s5 + $0x80] sm:$0xff] %v6885
        %6918 = vst [vmem:[%s5 + $0x88] sm:$0xff] %v6886
        %6919 = vst [vmem:[%s5 + $0x90] sm:$0xff] %v6887
        %6920 = vst [vmem:[%s5 + $0x98] sm:$0xff] %v6888
        %6921 = vst [vmem:[%s5 + $0xa0] sm:$0xff] %v6889
        %6922 = vst [vmem:[%s5 + $0xa8] sm:$0xff] %v6890
        %6923 = vst [vmem:[%s5 + $0xb0] sm:$0xff] %v6891
        %6924 = vst [vmem:[%s5 + $0xb8] sm:$0xff] %v6892
        %6925 = vst [vmem:[%s5 + $0xc0] sm:$0xff] %v6893
        %6926 = vst [vmem:[%s5 + $0xc8] sm:$0xff] %v6894
        %6927 = vst [vmem:[%s5 + $0xd0] sm:$0xff] %v6895
        %6928 = vst [vmem:[%s5 + $0xd8] sm:$0xff] %v6896
        %6929 = vst [vmem:[%s5 + $0xe0] sm:$0xff] %v6897
        %6930 = vst [vmem:[%s5 + $0xe8] sm:$0xff] %v6898
        %6931 = vst [vmem:[%s5 + $0xf0] sm:$0xff] %v6899
        %6932 = vst [vmem:[%s5 + $0xf8] sm:$0xff] %v6900
      $region64: #{tfcm_pallas.1} parent=39 // pred_fallthru
        _
      %p6933 = scmp.eq.s32.totalorder %s16, 5
      // Predicated region
      $region65: #{tfcm_pallas.1} parent=39 // pred_check
        %p6934 = pneg %p6933
      $region66: #{tfcm_pallas.1} parent=39 // pred_check_branch
        %6936 = sbr.rel (%p6934) target = $region68
      $region67: #{tfcm_pallas.1} parent=39 // pred_region
        %v6937 = vld [vmem:[%s777 + $0x8] sm:$0xff]
        %v6938 = vld [vmem:[%s777 + $0x10] sm:$0xff]
        %v6939 = vld [vmem:[%s777 + $0x20] sm:$0xff]
        %v6940 = vld [vmem:[%s777 + $0x28] sm:$0xff]
        %v6941 = vld [vmem:[%s777 + $0x38] sm:$0xff]
        %v6942 = vld [vmem:[%s777 + $0x40] sm:$0xff]
        %v6943 = vld [vmem:[%s777 + $0x50] sm:$0xff]
        %v6944 = vld [vmem:[%s777 + $0x58] sm:$0xff]
        %v6945 = vld [vmem:[%s777 + $0x68] sm:$0xff]
        %v6946 = vld [vmem:[%s777 + $0x70] sm:$0xff]
        %v6947 = vld [vmem:[%s777 + $0x80] sm:$0xff]
        %v6948 = vld [vmem:[%s777 + $0x88] sm:$0xff]
        %v6949 = vld [vmem:[%s777 + $0x98] sm:$0xff]
        %v6950 = vld [vmem:[%s777 + $0xa0] sm:$0xff]
        %v6951 = vld [vmem:[%s777 + $0xb0] sm:$0xff]
        %v6952 = vld [vmem:[%s777 + $0xb8] sm:$0xff]
        %v6953 = vld [vmem:[%s777 + $0xf8] sm:$0xff]
        %v6954 = vld [vmem:[%s777 + $0x100] sm:$0xff]
        %v6955 = vld [vmem:[%s777 + $0x110] sm:$0xff]
        %v6956 = vld [vmem:[%s777 + $0x118] sm:$0xff]
        %v6957 = vld [vmem:[%s777 + $0x128] sm:$0xff]
        %v6958 = vld [vmem:[%s777 + $0x130] sm:$0xff]
        %v6959 = vld [vmem:[%s777 + $0x140] sm:$0xff]
        %v6960 = vld [vmem:[%s777 + $0x148] sm:$0xff]
        %v6961 = vld [vmem:[%s777 + $0x158] sm:$0xff]
        %v6962 = vld [vmem:[%s777 + $0x160] sm:$0xff]
        %v6963 = vld [vmem:[%s777 + $0x170] sm:$0xff]
        %v6964 = vld [vmem:[%s777 + $0x178] sm:$0xff]
        %v6965 = vld [vmem:[%s777 + $0x188] sm:$0xff]
        %v6966 = vld [vmem:[%s777 + $0x190] sm:$0xff]
        %v6967 = vld [vmem:[%s777 + $0x1a0] sm:$0xff]
        %v6968 = vld [vmem:[%s777 + $0x1a8] sm:$0xff]
        %v6969 = vlaneseq
        %v6970 = vshrl.u32 %v6969, 7
        %v6971 = vsub.s32 5, %v6970
        %v6972 = vrot.slane %v324, %v6971
        %v6973 = vmul.f32 %v6937, %v6972
        %v6974 = vmul.f32 %v6938, %v6972
        %v6975 = vmul.f32 %v6939, %v6972
        %v6976 = vmul.f32 %v6940, %v6972
        %v6977 = vmul.f32 %v6941, %v6972
        %v6978 = vmul.f32 %v6942, %v6972
        %v6979 = vmul.f32 %v6943, %v6972
        %v6980 = vmul.f32 %v6944, %v6972
        %v6981 = vmul.f32 %v6945, %v6972
        %v6982 = vmul.f32 %v6946, %v6972
        %v6983 = vmul.f32 %v6947, %v6972
        %v6984 = vmul.f32 %v6948, %v6972
        %v6985 = vmul.f32 %v6949, %v6972
        %v6986 = vmul.f32 %v6950, %v6972
        %v6987 = vmul.f32 %v6951, %v6972
        %v6988 = vmul.f32 %v6952, %v6972
        %v6989 = vmul.f32 %v6953, %v6972
        %v6990 = vmul.f32 %v6954, %v6972
        %v6991 = vmul.f32 %v6955, %v6972
        %v6992 = vmul.f32 %v6956, %v6972
        %v6993 = vmul.f32 %v6957, %v6972
        %v6994 = vmul.f32 %v6958, %v6972
        %v6995 = vmul.f32 %v6959, %v6972
        %v6996 = vmul.f32 %v6960, %v6972
        %v6997 = vmul.f32 %v6961, %v6972
        %v6998 = vmul.f32 %v6962, %v6972
        %v6999 = vmul.f32 %v6963, %v6972
        %v7000 = vmul.f32 %v6964, %v6972
        %v7001 = vmul.f32 %v6965, %v6972
        %v7002 = vmul.f32 %v6966, %v6972
        %v7003 = vmul.f32 %v6967, %v6972
        %v7004 = vmul.f32 %v6968, %v6972
        %v7005 = vlaneseq
        %v7006 = vshrl.u32 %v7005, 7
        %v7007 = vsub.s32 4, %v7006
        %v7008 = vrot.slane %v321, %v7007
        %v7009 = vadd.f32 %v6973, %v7008
        %v7010 = vadd.f32 %v6974, %v7008
        %v7011 = vadd.f32 %v6975, %v7008
        %v7012 = vadd.f32 %v6976, %v7008
        %v7013 = vadd.f32 %v6977, %v7008
        %v7014 = vadd.f32 %v6978, %v7008
        %v7015 = vadd.f32 %v6979, %v7008
        %v7016 = vadd.f32 %v6980, %v7008
        %v7017 = vadd.f32 %v6981, %v7008
        %v7018 = vadd.f32 %v6982, %v7008
        %v7019 = vadd.f32 %v6983, %v7008
        %v7020 = vadd.f32 %v6984, %v7008
        %v7021 = vadd.f32 %v6985, %v7008
        %v7022 = vadd.f32 %v6986, %v7008
        %v7023 = vadd.f32 %v6987, %v7008
        %v7024 = vadd.f32 %v6988, %v7008
        %v7025 = vadd.f32 %v6989, %v7008
        %v7026 = vadd.f32 %v6990, %v7008
        %v7027 = vadd.f32 %v6991, %v7008
        %v7028 = vadd.f32 %v6992, %v7008
        %v7029 = vadd.f32 %v6993, %v7008
        %v7030 = vadd.f32 %v6994, %v7008
        %v7031 = vadd.f32 %v6995, %v7008
        %v7032 = vadd.f32 %v6996, %v7008
        %v7033 = vadd.f32 %v6997, %v7008
        %v7034 = vadd.f32 %v6998, %v7008
        %v7035 = vadd.f32 %v6999, %v7008
        %v7036 = vadd.f32 %v7000, %v7008
        %v7037 = vadd.f32 %v7001, %v7008
        %v7038 = vadd.f32 %v7002, %v7008
        %v7039 = vadd.f32 %v7003, %v7008
        %v7040 = vadd.f32 %v7004, %v7008
        %v7041 = vld [vmem:[#allocation2 + $0x8] sm:$0xff]
        %v7042 = vld [vmem:[#allocation2 + $0x10] sm:$0xff]
        %v7043 = vld [vmem:[#allocation2 + $0x20] sm:$0xff]
        %v7044 = vld [vmem:[#allocation2 + $0x28] sm:$0xff]
        %v7045 = vld [vmem:[#allocation2 + $0x38] sm:$0xff]
        %v7046 = vld [vmem:[#allocation2 + $0x40] sm:$0xff]
        %v7047 = vld [vmem:[#allocation2 + $0x50] sm:$0xff]
        %v7048 = vld [vmem:[#allocation2 + $0x58] sm:$0xff]
        %v7049 = vld [vmem:[#allocation2 + $0x68] sm:$0xff]
        %v7050 = vld [vmem:[#allocation2 + $0x70] sm:$0xff]
        %v7051 = vld [vmem:[#allocation2 + $0x80] sm:$0xff]
        %v7052 = vld [vmem:[#allocation2 + $0x88] sm:$0xff]
        %v7053 = vld [vmem:[#allocation2 + $0x98] sm:$0xff]
        %v7054 = vld [vmem:[#allocation2 + $0xa0] sm:$0xff]
        %v7055 = vld [vmem:[#allocation2 + $0xb0] sm:$0xff]
        %v7056 = vld [vmem:[#allocation2 + $0xb8] sm:$0xff]
        %v7057 = vld [vmem:[#allocation2 + $0xf8] sm:$0xff]
        %v7058 = vld [vmem:[#allocation2 + $0x100] sm:$0xff]
        %v7059 = vld [vmem:[#allocation2 + $0x110] sm:$0xff]
        %v7060 = vld [vmem:[#allocation2 + $0x118] sm:$0xff]
        %v7061 = vld [vmem:[#allocation2 + $0x128] sm:$0xff]
        %v7062 = vld [vmem:[#allocation2 + $0x130] sm:$0xff]
        %v7063 = vld [vmem:[#allocation2 + $0x140] sm:$0xff]
        %v7064 = vld [vmem:[#allocation2 + $0x148] sm:$0xff]
        %v7065 = vld [vmem:[#allocation2 + $0x158] sm:$0xff]
        %v7066 = vld [vmem:[#allocation2 + $0x160] sm:$0xff]
        %v7067 = vld [vmem:[#allocation2 + $0x170] sm:$0xff]
        %v7068 = vld [vmem:[#allocation2 + $0x178] sm:$0xff]
        %v7069 = vld [vmem:[#allocation2 + $0x188] sm:$0xff]
        %v7070 = vld [vmem:[#allocation2 + $0x190] sm:$0xff]
        %v7071 = vld [vmem:[#allocation2 + $0x1a0] sm:$0xff]
        %v7072 = vld [vmem:[#allocation2 + $0x1a8] sm:$0xff]
        %v7073 = vlaneseq
        %v7074 = vshrl.u32 %v7073, 7
        %v7075 = vsub.s32 2, %v7074
        %v7076 = vrot.slane %v324, %v7075
        %v7077 = vmul.f32 %v7041, %v7076
        %v7078 = vmul.f32 %v7042, %v7076
        %v7079 = vmul.f32 %v7043, %v7076
        %v7080 = vmul.f32 %v7044, %v7076
        %v7081 = vmul.f32 %v7045, %v7076
        %v7082 = vmul.f32 %v7046, %v7076
        %v7083 = vmul.f32 %v7047, %v7076
        %v7084 = vmul.f32 %v7048, %v7076
        %v7085 = vmul.f32 %v7049, %v7076
        %v7086 = vmul.f32 %v7050, %v7076
        %v7087 = vmul.f32 %v7051, %v7076
        %v7088 = vmul.f32 %v7052, %v7076
        %v7089 = vmul.f32 %v7053, %v7076
        %v7090 = vmul.f32 %v7054, %v7076
        %v7091 = vmul.f32 %v7055, %v7076
        %v7092 = vmul.f32 %v7056, %v7076
        %v7093 = vmul.f32 %v7057, %v7076
        %v7094 = vmul.f32 %v7058, %v7076
        %v7095 = vmul.f32 %v7059, %v7076
        %v7096 = vmul.f32 %v7060, %v7076
        %v7097 = vmul.f32 %v7061, %v7076
        %v7098 = vmul.f32 %v7062, %v7076
        %v7099 = vmul.f32 %v7063, %v7076
        %v7100 = vmul.f32 %v7064, %v7076
        %v7101 = vmul.f32 %v7065, %v7076
        %v7102 = vmul.f32 %v7066, %v7076
        %v7103 = vmul.f32 %v7067, %v7076
        %v7104 = vmul.f32 %v7068, %v7076
        %v7105 = vmul.f32 %v7069, %v7076
        %v7106 = vmul.f32 %v7070, %v7076
        %v7107 = vmul.f32 %v7071, %v7076
        %v7108 = vmul.f32 %v7072, %v7076
        %v7109 = vadd.f32 %v7009, %v7077
        %v7110 = vadd.f32 %v7010, %v7078
        %v7111 = vadd.f32 %v7011, %v7079
        %v7112 = vadd.f32 %v7012, %v7080
        %v7113 = vadd.f32 %v7013, %v7081
        %v7114 = vadd.f32 %v7014, %v7082
        %v7115 = vadd.f32 %v7015, %v7083
        %v7116 = vadd.f32 %v7016, %v7084
        %v7117 = vadd.f32 %v7017, %v7085
        %v7118 = vadd.f32 %v7018, %v7086
        %v7119 = vadd.f32 %v7019, %v7087
        %v7120 = vadd.f32 %v7020, %v7088
        %v7121 = vadd.f32 %v7021, %v7089
        %v7122 = vadd.f32 %v7022, %v7090
        %v7123 = vadd.f32 %v7023, %v7091
        %v7124 = vadd.f32 %v7024, %v7092
        %v7125 = vadd.f32 %v7025, %v7093
        %v7126 = vadd.f32 %v7026, %v7094
        %v7127 = vadd.f32 %v7027, %v7095
        %v7128 = vadd.f32 %v7028, %v7096
        %v7129 = vadd.f32 %v7029, %v7097
        %v7130 = vadd.f32 %v7030, %v7098
        %v7131 = vadd.f32 %v7031, %v7099
        %v7132 = vadd.f32 %v7032, %v7100
        %v7133 = vadd.f32 %v7033, %v7101
        %v7134 = vadd.f32 %v7034, %v7102
        %v7135 = vadd.f32 %v7035, %v7103
        %v7136 = vadd.f32 %v7036, %v7104
        %v7137 = vadd.f32 %v7037, %v7105
        %v7138 = vadd.f32 %v7038, %v7106
        %v7139 = vadd.f32 %v7039, %v7107
        %v7140 = vadd.f32 %v7040, %v7108
        %s7141 = scalar_lea.vmem [#allocation2], 48
        %v7142 = vld [vmem:[%s7141 + $0x8] sm:$0xff]
        %v7143 = vld [vmem:[%s7141 + $0x10] sm:$0xff]
        %v7144 = vld [vmem:[%s7141 + $0x20] sm:$0xff]
        %v7145 = vld [vmem:[%s7141 + $0x28] sm:$0xff]
        %v7146 = vld [vmem:[%s7141 + $0x38] sm:$0xff]
        %v7147 = vld [vmem:[%s7141 + $0x40] sm:$0xff]
        %v7148 = vld [vmem:[%s7141 + $0x50] sm:$0xff]
        %v7149 = vld [vmem:[%s7141 + $0x58] sm:$0xff]
        %v7150 = vld [vmem:[%s7141 + $0x68] sm:$0xff]
        %v7151 = vld [vmem:[%s7141 + $0x70] sm:$0xff]
        %v7152 = vld [vmem:[%s7141 + $0x80] sm:$0xff]
        %v7153 = vld [vmem:[%s7141 + $0x88] sm:$0xff]
        %v7154 = vld [vmem:[%s7141 + $0x98] sm:$0xff]
        %v7155 = vld [vmem:[%s7141 + $0xa0] sm:$0xff]
        %v7156 = vld [vmem:[%s7141 + $0xb0] sm:$0xff]
        %v7157 = vld [vmem:[%s7141 + $0xb8] sm:$0xff]
        %v7158 = vld [vmem:[%s7141 + $0xf8] sm:$0xff]
        %v7159 = vld [vmem:[%s7141 + $0x100] sm:$0xff]
        %v7160 = vld [vmem:[%s7141 + $0x110] sm:$0xff]
        %v7161 = vld [vmem:[%s7141 + $0x118] sm:$0xff]
        %v7162 = vld [vmem:[%s7141 + $0x128] sm:$0xff]
        %v7163 = vld [vmem:[%s7141 + $0x130] sm:$0xff]
        %v7164 = vld [vmem:[%s7141 + $0x140] sm:$0xff]
        %v7165 = vld [vmem:[%s7141 + $0x148] sm:$0xff]
        %v7166 = vld [vmem:[%s7141 + $0x158] sm:$0xff]
        %v7167 = vld [vmem:[%s7141 + $0x160] sm:$0xff]
        %v7168 = vld [vmem:[%s7141 + $0x170] sm:$0xff]
        %v7169 = vld [vmem:[%s7141 + $0x178] sm:$0xff]
        %v7170 = vld [vmem:[%s7141 + $0x188] sm:$0xff]
        %v7171 = vld [vmem:[%s7141 + $0x190] sm:$0xff]
        %v7172 = vld [vmem:[%s7141 + $0x1a0] sm:$0xff]
        %v7173 = vld [vmem:[%s7141 + $0x1a8] sm:$0xff]
        %v7174 = vlaneseq
        %v7175 = vshrl.u32 %v7174, 7
        %v7176 = vsub.s32 0, %v7175
        %v7177 = vrot.slane %v325, %v7176
        %v7178 = vmul.f32 %v7142, %v7177
        %v7179 = vmul.f32 %v7143, %v7177
        %v7180 = vmul.f32 %v7144, %v7177
        %v7181 = vmul.f32 %v7145, %v7177
        %v7182 = vmul.f32 %v7146, %v7177
        %v7183 = vmul.f32 %v7147, %v7177
        %v7184 = vmul.f32 %v7148, %v7177
        %v7185 = vmul.f32 %v7149, %v7177
        %v7186 = vmul.f32 %v7150, %v7177
        %v7187 = vmul.f32 %v7151, %v7177
        %v7188 = vmul.f32 %v7152, %v7177
        %v7189 = vmul.f32 %v7153, %v7177
        %v7190 = vmul.f32 %v7154, %v7177
        %v7191 = vmul.f32 %v7155, %v7177
        %v7192 = vmul.f32 %v7156, %v7177
        %v7193 = vmul.f32 %v7157, %v7177
        %v7194 = vmul.f32 %v7158, %v7177
        %v7195 = vmul.f32 %v7159, %v7177
        %v7196 = vmul.f32 %v7160, %v7177
        %v7197 = vmul.f32 %v7161, %v7177
        %v7198 = vmul.f32 %v7162, %v7177
        %v7199 = vmul.f32 %v7163, %v7177
        %v7200 = vmul.f32 %v7164, %v7177
        %v7201 = vmul.f32 %v7165, %v7177
        %v7202 = vmul.f32 %v7166, %v7177
        %v7203 = vmul.f32 %v7167, %v7177
        %v7204 = vmul.f32 %v7168, %v7177
        %v7205 = vmul.f32 %v7169, %v7177
        %v7206 = vmul.f32 %v7170, %v7177
        %v7207 = vmul.f32 %v7171, %v7177
        %v7208 = vmul.f32 %v7172, %v7177
        %v7209 = vmul.f32 %v7173, %v7177
        %v7210 = vadd.f32 %v7109, %v7178
        %v7211 = vadd.f32 %v7110, %v7179
        %v7212 = vadd.f32 %v7111, %v7180
        %v7213 = vadd.f32 %v7112, %v7181
        %v7214 = vadd.f32 %v7113, %v7182
        %v7215 = vadd.f32 %v7114, %v7183
        %v7216 = vadd.f32 %v7115, %v7184
        %v7217 = vadd.f32 %v7116, %v7185
        %v7218 = vadd.f32 %v7117, %v7186
        %v7219 = vadd.f32 %v7118, %v7187
        %v7220 = vadd.f32 %v7119, %v7188
        %v7221 = vadd.f32 %v7120, %v7189
        %v7222 = vadd.f32 %v7121, %v7190
        %v7223 = vadd.f32 %v7122, %v7191
        %v7224 = vadd.f32 %v7123, %v7192
        %v7225 = vadd.f32 %v7124, %v7193
        %v7226 = vadd.f32 %v7125, %v7194
        %v7227 = vadd.f32 %v7126, %v7195
        %v7228 = vadd.f32 %v7127, %v7196
        %v7229 = vadd.f32 %v7128, %v7197
        %v7230 = vadd.f32 %v7129, %v7198
        %v7231 = vadd.f32 %v7130, %v7199
        %v7232 = vadd.f32 %v7131, %v7200
        %v7233 = vadd.f32 %v7132, %v7201
        %v7234 = vadd.f32 %v7133, %v7202
        %v7235 = vadd.f32 %v7134, %v7203
        %v7236 = vadd.f32 %v7135, %v7204
        %v7237 = vadd.f32 %v7136, %v7205
        %v7238 = vadd.f32 %v7137, %v7206
        %v7239 = vadd.f32 %v7138, %v7207
        %v7240 = vadd.f32 %v7139, %v7208
        %v7241 = vadd.f32 %v7140, %v7209
        %v7242 = vlaneseq
        %v7243 = vshrl.u32 %v7242, 7
        %v7244 = vsub.s32 5, %v7243
        %v7245 = vrot.slane %v321, %v7244
        %v7246 = vmul.f32 %v7210, %v7245
        %v7247 = vmul.f32 %v7211, %v7245
        %v7248 = vmul.f32 %v7212, %v7245
        %v7249 = vmul.f32 %v7213, %v7245
        %v7250 = vmul.f32 %v7214, %v7245
        %v7251 = vmul.f32 %v7215, %v7245
        %v7252 = vmul.f32 %v7216, %v7245
        %v7253 = vmul.f32 %v7217, %v7245
        %v7254 = vmul.f32 %v7218, %v7245
        %v7255 = vmul.f32 %v7219, %v7245
        %v7256 = vmul.f32 %v7220, %v7245
        %v7257 = vmul.f32 %v7221, %v7245
        %v7258 = vmul.f32 %v7222, %v7245
        %v7259 = vmul.f32 %v7223, %v7245
        %v7260 = vmul.f32 %v7224, %v7245
        %v7261 = vmul.f32 %v7225, %v7245
        %v7262 = vmul.f32 %v7226, %v7245
        %v7263 = vmul.f32 %v7227, %v7245
        %v7264 = vmul.f32 %v7228, %v7245
        %v7265 = vmul.f32 %v7229, %v7245
        %v7266 = vmul.f32 %v7230, %v7245
        %v7267 = vmul.f32 %v7231, %v7245
        %v7268 = vmul.f32 %v7232, %v7245
        %v7269 = vmul.f32 %v7233, %v7245
        %v7270 = vmul.f32 %v7234, %v7245
        %v7271 = vmul.f32 %v7235, %v7245
        %v7272 = vmul.f32 %v7236, %v7245
        %v7273 = vmul.f32 %v7237, %v7245
        %v7274 = vmul.f32 %v7238, %v7245
        %v7275 = vmul.f32 %v7239, %v7245
        %v7276 = vmul.f32 %v7240, %v7245
        %v7277 = vmul.f32 %v7241, %v7245
        %v7278 = vlaneseq
        %v7279 = vshrl.u32 %v7278, 7
        %v7280 = vsub.s32 6, %v7279
        %v7281 = vrot.slane %v321, %v7280
        %v7282 = vadd.f32 %v7246, %v7281
        %v7283 = vadd.f32 %v7247, %v7281
        %v7284 = vadd.f32 %v7248, %v7281
        %v7285 = vadd.f32 %v7249, %v7281
        %v7286 = vadd.f32 %v7250, %v7281
        %v7287 = vadd.f32 %v7251, %v7281
        %v7288 = vadd.f32 %v7252, %v7281
        %v7289 = vadd.f32 %v7253, %v7281
        %v7290 = vadd.f32 %v7254, %v7281
        %v7291 = vadd.f32 %v7255, %v7281
        %v7292 = vadd.f32 %v7256, %v7281
        %v7293 = vadd.f32 %v7257, %v7281
        %v7294 = vadd.f32 %v7258, %v7281
        %v7295 = vadd.f32 %v7259, %v7281
        %v7296 = vadd.f32 %v7260, %v7281
        %v7297 = vadd.f32 %v7261, %v7281
        %v7298 = vadd.f32 %v7262, %v7281
        %v7299 = vadd.f32 %v7263, %v7281
        %v7300 = vadd.f32 %v7264, %v7281
        %v7301 = vadd.f32 %v7265, %v7281
        %v7302 = vadd.f32 %v7266, %v7281
        %v7303 = vadd.f32 %v7267, %v7281
        %v7304 = vadd.f32 %v7268, %v7281
        %v7305 = vadd.f32 %v7269, %v7281
        %v7306 = vadd.f32 %v7270, %v7281
        %v7307 = vadd.f32 %v7271, %v7281
        %v7308 = vadd.f32 %v7272, %v7281
        %v7309 = vadd.f32 %v7273, %v7281
        %v7310 = vadd.f32 %v7274, %v7281
        %v7311 = vadd.f32 %v7275, %v7281
        %v7312 = vadd.f32 %v7276, %v7281
        %v7313 = vadd.f32 %v7277, %v7281
        %vm7314 = vcmp.ge.f32.partialorder %v7282, 0.0
        %vm7315 = vcmp.ge.f32.partialorder %v7283, 0.0
        %vm7316 = vcmp.ge.f32.partialorder %v7284, 0.0
        %vm7317 = vcmp.ge.f32.partialorder %v7285, 0.0
        %vm7318 = vcmp.ge.f32.partialorder %v7286, 0.0
        %vm7319 = vcmp.ge.f32.partialorder %v7287, 0.0
        %vm7320 = vcmp.ge.f32.partialorder %v7288, 0.0
        %vm7321 = vcmp.ge.f32.partialorder %v7289, 0.0
        %vm7322 = vcmp.ge.f32.partialorder %v7290, 0.0
        %vm7323 = vcmp.ge.f32.partialorder %v7291, 0.0
        %vm7324 = vcmp.ge.f32.partialorder %v7292, 0.0
        %vm7325 = vcmp.ge.f32.partialorder %v7293, 0.0
        %vm7326 = vcmp.ge.f32.partialorder %v7294, 0.0
        %vm7327 = vcmp.ge.f32.partialorder %v7295, 0.0
        %vm7328 = vcmp.ge.f32.partialorder %v7296, 0.0
        %vm7329 = vcmp.ge.f32.partialorder %v7297, 0.0
        %vm7330 = vcmp.ge.f32.partialorder %v7298, 0.0
        %vm7331 = vcmp.ge.f32.partialorder %v7299, 0.0
        %vm7332 = vcmp.ge.f32.partialorder %v7300, 0.0
        %vm7333 = vcmp.ge.f32.partialorder %v7301, 0.0
        %vm7334 = vcmp.ge.f32.partialorder %v7302, 0.0
        %vm7335 = vcmp.ge.f32.partialorder %v7303, 0.0
        %vm7336 = vcmp.ge.f32.partialorder %v7304, 0.0
        %vm7337 = vcmp.ge.f32.partialorder %v7305, 0.0
        %vm7338 = vcmp.ge.f32.partialorder %v7306, 0.0
        %vm7339 = vcmp.ge.f32.partialorder %v7307, 0.0
        %vm7340 = vcmp.ge.f32.partialorder %v7308, 0.0
        %vm7341 = vcmp.ge.f32.partialorder %v7309, 0.0
        %vm7342 = vcmp.ge.f32.partialorder %v7310, 0.0
        %vm7343 = vcmp.ge.f32.partialorder %v7311, 0.0
        %vm7344 = vcmp.ge.f32.partialorder %v7312, 0.0
        %vm7345 = vcmp.ge.f32.partialorder %v7313, 0.0
        %v7346 = vlaneseq
        %v7347 = vshrl.u32 %v7346, 7
        %v7348 = vsub.s32 7, %v7347
        %v7349 = vrot.slane %v321, %v7348
        %v7350 = vmul.f32 %v7349, %v7282
        %v7351 = vmul.f32 %v7349, %v7283
        %v7352 = vmul.f32 %v7349, %v7284
        %v7353 = vmul.f32 %v7349, %v7285
        %v7354 = vmul.f32 %v7349, %v7286
        %v7355 = vmul.f32 %v7349, %v7287
        %v7356 = vmul.f32 %v7349, %v7288
        %v7357 = vmul.f32 %v7349, %v7289
        %v7358 = vmul.f32 %v7349, %v7290
        %v7359 = vmul.f32 %v7349, %v7291
        %v7360 = vmul.f32 %v7349, %v7292
        %v7361 = vmul.f32 %v7349, %v7293
        %v7362 = vmul.f32 %v7349, %v7294
        %v7363 = vmul.f32 %v7349, %v7295
        %v7364 = vmul.f32 %v7349, %v7296
        %v7365 = vmul.f32 %v7349, %v7297
        %v7366 = vmul.f32 %v7349, %v7298
        %v7367 = vmul.f32 %v7349, %v7299
        %v7368 = vmul.f32 %v7349, %v7300
        %v7369 = vmul.f32 %v7349, %v7301
        %v7370 = vmul.f32 %v7349, %v7302
        %v7371 = vmul.f32 %v7349, %v7303
        %v7372 = vmul.f32 %v7349, %v7304
        %v7373 = vmul.f32 %v7349, %v7305
        %v7374 = vmul.f32 %v7349, %v7306
        %v7375 = vmul.f32 %v7349, %v7307
        %v7376 = vmul.f32 %v7349, %v7308
        %v7377 = vmul.f32 %v7349, %v7309
        %v7378 = vmul.f32 %v7349, %v7310
        %v7379 = vmul.f32 %v7349, %v7311
        %v7380 = vmul.f32 %v7349, %v7312
        %v7381 = vmul.f32 %v7349, %v7313
        %v7382 = vsel %vm7314, %v7282, %v7350
        %v7383 = vsel %vm7315, %v7283, %v7351
        %v7384 = vsel %vm7316, %v7284, %v7352
        %v7385 = vsel %vm7317, %v7285, %v7353
        %v7386 = vsel %vm7318, %v7286, %v7354
        %v7387 = vsel %vm7319, %v7287, %v7355
        %v7388 = vsel %vm7320, %v7288, %v7356
        %v7389 = vsel %vm7321, %v7289, %v7357
        %v7390 = vsel %vm7322, %v7290, %v7358
        %v7391 = vsel %vm7323, %v7291, %v7359
        %v7392 = vsel %vm7324, %v7292, %v7360
        %v7393 = vsel %vm7325, %v7293, %v7361
        %v7394 = vsel %vm7326, %v7294, %v7362
        %v7395 = vsel %vm7327, %v7295, %v7363
        %v7396 = vsel %vm7328, %v7296, %v7364
        %v7397 = vsel %vm7329, %v7297, %v7365
        %v7398 = vsel %vm7330, %v7298, %v7366
        %v7399 = vsel %vm7331, %v7299, %v7367
        %v7400 = vsel %vm7332, %v7300, %v7368
        %v7401 = vsel %vm7333, %v7301, %v7369
        %v7402 = vsel %vm7334, %v7302, %v7370
        %v7403 = vsel %vm7335, %v7303, %v7371
        %v7404 = vsel %vm7336, %v7304, %v7372
        %v7405 = vsel %vm7337, %v7305, %v7373
        %v7406 = vsel %vm7338, %v7306, %v7374
        %v7407 = vsel %vm7339, %v7307, %v7375
        %v7408 = vsel %vm7340, %v7308, %v7376
        %v7409 = vsel %vm7341, %v7309, %v7377
        %v7410 = vsel %vm7342, %v7310, %v7378
        %v7411 = vsel %vm7343, %v7311, %v7379
        %v7412 = vsel %vm7344, %v7312, %v7380
        %v7413 = vsel %vm7345, %v7313, %v7381
        %v7414 = vpack.c.bf16 %v7383, %v7382
        %v7415 = vpack.c.bf16 %v7385, %v7384
        %v7416 = vpack.c.bf16 %v7387, %v7386
        %v7417 = vpack.c.bf16 %v7389, %v7388
        %v7418 = vpack.c.bf16 %v7391, %v7390
        %v7419 = vpack.c.bf16 %v7393, %v7392
        %v7420 = vpack.c.bf16 %v7395, %v7394
        %v7421 = vpack.c.bf16 %v7397, %v7396
        %v7422 = vpack.c.bf16 %v7399, %v7398
        %v7423 = vpack.c.bf16 %v7401, %v7400
        %v7424 = vpack.c.bf16 %v7403, %v7402
        %v7425 = vpack.c.bf16 %v7405, %v7404
        %v7426 = vpack.c.bf16 %v7407, %v7406
        %v7427 = vpack.c.bf16 %v7409, %v7408
        %v7428 = vpack.c.bf16 %v7411, %v7410
        %v7429 = vpack.c.bf16 %v7413, %v7412
        %s7430 = smul.addr %s319, 4
        %s7431 = scalar_lea.vmem %s2, %s7430
        %v7432 = vld [vmem:[%s7431] sm:$0xf]
        %v7433 = vld [vmem:[%s7431 + $0x4] sm:$0xf]
        %v7434 = vld [vmem:[%s7431 + $0x8] sm:$0xf]
        %v7435 = vld [vmem:[%s7431 + $0xc] sm:$0xf]
        %v7436 = vld [vmem:[%s7431 + $0x10] sm:$0xf]
        %v7437 = vld [vmem:[%s7431 + $0x14] sm:$0xf]
        %v7438 = vld [vmem:[%s7431 + $0x18] sm:$0xf]
        %v7439 = vld [vmem:[%s7431 + $0x1c] sm:$0xf]
        %v7440 = vld [vmem:[%s7431 + $0x20] sm:$0xf]
        %v7441 = vld [vmem:[%s7431 + $0x24] sm:$0xf]
        %v7442 = vld [vmem:[%s7431 + $0x28] sm:$0xf]
        %v7443 = vld [vmem:[%s7431 + $0x2c] sm:$0xf]
        %v7444 = vld [vmem:[%s7431 + $0x30] sm:$0xf]
        %v7445 = vld [vmem:[%s7431 + $0x34] sm:$0xf]
        %v7446 = vld [vmem:[%s7431 + $0x38] sm:$0xf]
        %v7447 = vld [vmem:[%s7431 + $0x3c] sm:$0xf]
        %v7448 = vlaneseq
        %v7449 = vshrl.u32 %v7448, 7
        %v7450 = vsub.s32 0, %v7449
        %v7451 = vrot.slane %v322, %v7450
        %v7468 = vunpack.c.l.b16 %v7432
        %v7469 = vunpack.c.l.b16 %v7433
        %v7470 = vunpack.c.l.b16 %v7434
        %v7471 = vunpack.c.l.b16 %v7435
        %v7472 = vunpack.c.l.b16 %v7436
        %v7473 = vunpack.c.l.b16 %v7437
        %v7474 = vunpack.c.l.b16 %v7438
        %v7475 = vunpack.c.l.b16 %v7439
        %v7476 = vunpack.c.l.b16 %v7440
        %v7477 = vunpack.c.l.b16 %v7441
        %v7478 = vunpack.c.l.b16 %v7442
        %v7479 = vunpack.c.l.b16 %v7443
        %v7480 = vunpack.c.l.b16 %v7444
        %v7481 = vunpack.c.l.b16 %v7445
        %v7482 = vunpack.c.l.b16 %v7446
        %v7483 = vunpack.c.l.b16 %v7447
        %v7484 = vpack.c.b16 %v7469, %v7468
        %v7485 = vpack.c.b16 %v7471, %v7470
        %v7486 = vpack.c.b16 %v7473, %v7472
        %v7487 = vpack.c.b16 %v7475, %v7474
        %v7488 = vpack.c.b16 %v7477, %v7476
        %v7489 = vpack.c.b16 %v7479, %v7478
        %v7490 = vpack.c.b16 %v7481, %v7480
        %v7491 = vpack.c.b16 %v7483, %v7482
        %7500 = vmatprep.subr.bf16.mxu0 0
        %7501 = vmatpush1.bf16.msra.mxu0 %v7484
        %7502 = vmatprep.subr.bf16.mxu0 0
        %7503 = vmatpush1.bf16.msra.mxu0 %v7485
        %7504 = vmatprep.subr.bf16.mxu0 0
        %7505 = vmatpush1.bf16.msra.mxu0 %v7486
        %7506 = vmatprep.subr.bf16.mxu0 0
        %7507 = vmatpush1.bf16.msra.mxu0 %v7487
        %7508 = vmatprep.subr.bf16.mxu0 0
        %7509 = vmatpush1.bf16.msra.mxu0 %v7488
        %7510 = vmatprep.subr.bf16.mxu0 0
        %7511 = vmatpush1.bf16.msra.mxu0 %v7489
        %7512 = vmatprep.subr.bf16.mxu0 0
        %7513 = vmatpush1.bf16.msra.mxu0 %v7490
        %7514 = vmatprep.subr.bf16.mxu0 0
        %7515 = vmatpush1.bf16.msra.mxu0 %v7491
        %7516 = vmatprep.subr.bf16.mxu0 0
        %7517 = vmatpush1.bf16.msra.mxu0 0
        %7518 = vmatprep.subr.bf16.mxu0 0
        %7519 = vmatpush1.bf16.msra.mxu0 0
        %7520 = vmatprep.subr.bf16.mxu0 0
        %7521 = vmatpush1.bf16.msra.mxu0 0
        %7522 = vmatprep.subr.bf16.mxu0 0
        %7523 = vmatpush1.bf16.msra.mxu0 0
        %7524 = vmatprep.subr.bf16.mxu0 0
        %7525 = vmatpush1.bf16.msra.mxu0 0
        %7526 = vmatprep.subr.bf16.mxu0 0
        %7527 = vmatpush1.bf16.msra.mxu0 0
        %7528 = vmatprep.subr.bf16.mxu0 0
        %7529 = vmatpush1.bf16.msra.mxu0 0
        %7530 = vmatprep.subr.bf16.mxu0 0
        %7531 = vmatpush1.bf16.msra.mxu0 0
        %7532 = vmatprep.mubr.bf16.mxu0 0
        %7533 = vmatmul.mubr.bf16.gmra.mrb[0].mxu0 %v7414
        %v7534 = vpop.f32.mrb[0].mxu0
        %v7535 = vadd.f32 %v7451, %v7534
        %v7536 = vpop.f32.mrb[0].mxu0
        %v7537 = vpop.f32.mrb[0].mxu0
        %v7538 = vadd.f32 %v7451, %v7537
        %v7539 = vpop.f32.mrb[0].mxu0
        %7540 = vmatprep.mubr.bf16.mxu0 0
        %7541 = vmatmul.mubr.bf16.gmra.mrb[0].mxu0 %v7415
        %v7542 = vpop.f32.mrb[0].mxu0
        %v7543 = vadd.f32 %v7451, %v7542
        %v7544 = vpop.f32.mrb[0].mxu0
        %v7545 = vpop.f32.mrb[0].mxu0
        %v7546 = vadd.f32 %v7451, %v7545
        %v7547 = vpop.f32.mrb[0].mxu0
        %7548 = vmatprep.mubr.bf16.mxu0 0
        %7549 = vmatmul.mubr.bf16.gmra.mrb[0].mxu0 %v7416
        %v7550 = vpop.f32.mrb[0].mxu0
        %v7551 = vadd.f32 %v7451, %v7550
        %v7552 = vpop.f32.mrb[0].mxu0
        %v7553 = vpop.f32.mrb[0].mxu0
        %v7554 = vadd.f32 %v7451, %v7553
        %v7555 = vpop.f32.mrb[0].mxu0
        %7556 = vmatprep.mubr.bf16.mxu0 0
        %7557 = vmatmul.mubr.bf16.gmra.mrb[0].mxu0 %v7417
        %v7558 = vpop.f32.mrb[0].mxu0
        %v7559 = vadd.f32 %v7451, %v7558
        %v7560 = vpop.f32.mrb[0].mxu0
        %v7561 = vpop.f32.mrb[0].mxu0
        %v7562 = vadd.f32 %v7451, %v7561
        %v7563 = vpop.f32.mrb[0].mxu0
        %7564 = vmatprep.mubr.bf16.mxu0 0
        %7565 = vmatmul.mubr.bf16.gmra.mrb[0].mxu0 %v7418
        %v7566 = vpop.f32.mrb[0].mxu0
        %v7567 = vadd.f32 %v7451, %v7566
        %v7568 = vpop.f32.mrb[0].mxu0
        %v7569 = vpop.f32.mrb[0].mxu0
        %v7570 = vadd.f32 %v7451, %v7569
        %v7571 = vpop.f32.mrb[0].mxu0
        %7572 = vmatprep.mubr.bf16.mxu0 0
        %7573 = vmatmul.mubr.bf16.gmra.mrb[0].mxu0 %v7419
        %v7574 = vpop.f32.mrb[0].mxu0
        %v7575 = vadd.f32 %v7451, %v7574
        %v7576 = vpop.f32.mrb[0].mxu0
        %v7577 = vpop.f32.mrb[0].mxu0
        %v7578 = vadd.f32 %v7451, %v7577
        %v7579 = vpop.f32.mrb[0].mxu0
        %7580 = vmatprep.mubr.bf16.mxu0 0
        %7581 = vmatmul.mubr.bf16.gmra.mrb[0].mxu0 %v7420
        %v7582 = vpop.f32.mrb[0].mxu0
        %v7583 = vadd.f32 %v7451, %v7582
        %v7584 = vpop.f32.mrb[0].mxu0
        %v7585 = vpop.f32.mrb[0].mxu0
        %v7586 = vadd.f32 %v7451, %v7585
        %v7587 = vpop.f32.mrb[0].mxu0
        %7588 = vmatprep.mubr.bf16.mxu0 0
        %7589 = vmatmul.mubr.bf16.gmra.mrb[0].mxu0 %v7421
        %v7590 = vpop.f32.mrb[0].mxu0
        %v7591 = vadd.f32 %v7451, %v7590
        %v7592 = vpop.f32.mrb[0].mxu0
        %v7593 = vpop.f32.mrb[0].mxu0
        %v7594 = vadd.f32 %v7451, %v7593
        %v7595 = vpop.f32.mrb[0].mxu0
        %7596 = vmatprep.mubr.bf16.mxu0 0
        %7597 = vmatmul.mubr.bf16.gmra.mrb[0].mxu0 %v7422
        %v7598 = vpop.f32.mrb[0].mxu0
        %v7599 = vadd.f32 %v7451, %v7598
        %v7600 = vpop.f32.mrb[0].mxu0
        %v7601 = vpop.f32.mrb[0].mxu0
        %v7602 = vadd.f32 %v7451, %v7601
        %v7603 = vpop.f32.mrb[0].mxu0
        %7604 = vmatprep.mubr.bf16.mxu0 0
        %7605 = vmatmul.mubr.bf16.gmra.mrb[0].mxu0 %v7423
        %v7606 = vpop.f32.mrb[0].mxu0
        %v7607 = vadd.f32 %v7451, %v7606
        %v7608 = vpop.f32.mrb[0].mxu0
        %v7609 = vpop.f32.mrb[0].mxu0
        %v7610 = vadd.f32 %v7451, %v7609
        %v7611 = vpop.f32.mrb[0].mxu0
        %7612 = vmatprep.mubr.bf16.mxu0 0
        %7613 = vmatmul.mubr.bf16.gmra.mrb[0].mxu0 %v7424
        %v7614 = vpop.f32.mrb[0].mxu0
        %v7615 = vadd.f32 %v7451, %v7614
        %v7616 = vpop.f32.mrb[0].mxu0
        %v7617 = vpop.f32.mrb[0].mxu0
        %v7618 = vadd.f32 %v7451, %v7617
        %v7619 = vpop.f32.mrb[0].mxu0
        %7620 = vmatprep.mubr.bf16.mxu0 0
        %7621 = vmatmul.mubr.bf16.gmra.mrb[0].mxu0 %v7425
        %v7622 = vpop.f32.mrb[0].mxu0
        %v7623 = vadd.f32 %v7451, %v7622
        %v7624 = vpop.f32.mrb[0].mxu0
        %v7625 = vpop.f32.mrb[0].mxu0
        %v7626 = vadd.f32 %v7451, %v7625
        %v7627 = vpop.f32.mrb[0].mxu0
        %7628 = vmatprep.mubr.bf16.mxu0 0
        %7629 = vmatmul.mubr.bf16.gmra.mrb[0].mxu0 %v7426
        %v7630 = vpop.f32.mrb[0].mxu0
        %v7631 = vadd.f32 %v7451, %v7630
        %v7632 = vpop.f32.mrb[0].mxu0
        %v7633 = vpop.f32.mrb[0].mxu0
        %v7634 = vadd.f32 %v7451, %v7633
        %v7635 = vpop.f32.mrb[0].mxu0
        %7636 = vmatprep.mubr.bf16.mxu0 0
        %7637 = vmatmul.mubr.bf16.gmra.mrb[0].mxu0 %v7427
        %v7638 = vpop.f32.mrb[0].mxu0
        %v7639 = vadd.f32 %v7451, %v7638
        %v7640 = vpop.f32.mrb[0].mxu0
        %v7641 = vpop.f32.mrb[0].mxu0
        %v7642 = vadd.f32 %v7451, %v7641
        %v7643 = vpop.f32.mrb[0].mxu0
        %7644 = vmatprep.mubr.bf16.mxu0 0
        %7645 = vmatmul.mubr.bf16.gmra.mrb[0].mxu0 %v7428
        %v7646 = vpop.f32.mrb[0].mxu0
        %v7647 = vadd.f32 %v7451, %v7646
        %v7648 = vpop.f32.mrb[0].mxu0
        %v7649 = vpop.f32.mrb[0].mxu0
        %v7650 = vadd.f32 %v7451, %v7649
        %v7651 = vpop.f32.mrb[0].mxu0
        %7652 = vmatprep.mubr.bf16.mxu0 0
        %7653 = vmatmul.mubr.bf16.gmra.mrb[0].mxu0 %v7429
        %v7654 = vpop.f32.mrb[0].mxu0
        %v7655 = vadd.f32 %v7451, %v7654
        %v7656 = vpop.f32.mrb[0].mxu0
        %v7657 = vpop.f32.mrb[0].mxu0
        %v7658 = vadd.f32 %v7451, %v7657
        %v7659 = vpop.f32.mrb[0].mxu0
        %7660 = vdwg.mxu0
        %v7661 = vld [vmem:[%s5] sm:$0xff]
        %v7662 = vld [vmem:[%s5 + $0x8] sm:$0xff]
        %v7663 = vld [vmem:[%s5 + $0x10] sm:$0xff]
        %v7664 = vld [vmem:[%s5 + $0x18] sm:$0xff]
        %v7665 = vld [vmem:[%s5 + $0x20] sm:$0xff]
        %v7666 = vld [vmem:[%s5 + $0x28] sm:$0xff]
        %v7667 = vld [vmem:[%s5 + $0x30] sm:$0xff]
        %v7668 = vld [vmem:[%s5 + $0x38] sm:$0xff]
        %v7669 = vld [vmem:[%s5 + $0x40] sm:$0xff]
        %v7670 = vld [vmem:[%s5 + $0x48] sm:$0xff]
        %v7671 = vld [vmem:[%s5 + $0x50] sm:$0xff]
        %v7672 = vld [vmem:[%s5 + $0x58] sm:$0xff]
        %v7673 = vld [vmem:[%s5 + $0x60] sm:$0xff]
        %v7674 = vld [vmem:[%s5 + $0x68] sm:$0xff]
        %v7675 = vld [vmem:[%s5 + $0x70] sm:$0xff]
        %v7676 = vld [vmem:[%s5 + $0x78] sm:$0xff]
        %v7677 = vld [vmem:[%s5 + $0x80] sm:$0xff]
        %v7678 = vld [vmem:[%s5 + $0x88] sm:$0xff]
        %v7679 = vld [vmem:[%s5 + $0x90] sm:$0xff]
        %v7680 = vld [vmem:[%s5 + $0x98] sm:$0xff]
        %v7681 = vld [vmem:[%s5 + $0xa0] sm:$0xff]
        %v7682 = vld [vmem:[%s5 + $0xa8] sm:$0xff]
        %v7683 = vld [vmem:[%s5 + $0xb0] sm:$0xff]
        %v7684 = vld [vmem:[%s5 + $0xb8] sm:$0xff]
        %v7685 = vld [vmem:[%s5 + $0xc0] sm:$0xff]
        %v7686 = vld [vmem:[%s5 + $0xc8] sm:$0xff]
        %v7687 = vld [vmem:[%s5 + $0xd0] sm:$0xff]
        %v7688 = vld [vmem:[%s5 + $0xd8] sm:$0xff]
        %v7689 = vld [vmem:[%s5 + $0xe0] sm:$0xff]
        %v7690 = vld [vmem:[%s5 + $0xe8] sm:$0xff]
        %v7691 = vld [vmem:[%s5 + $0xf0] sm:$0xff]
        %v7692 = vld [vmem:[%s5 + $0xf8] sm:$0xff]
        %v7693 = vadd.f32 %v7535, %v7661
        %v7694 = vadd.f32 %v7538, %v7662
        %v7695 = vadd.f32 %v7543, %v7663
        %v7696 = vadd.f32 %v7546, %v7664
        %v7697 = vadd.f32 %v7551, %v7665
        %v7698 = vadd.f32 %v7554, %v7666
        %v7699 = vadd.f32 %v7559, %v7667
        %v7700 = vadd.f32 %v7562, %v7668
        %v7701 = vadd.f32 %v7567, %v7669
        %v7702 = vadd.f32 %v7570, %v7670
        %v7703 = vadd.f32 %v7575, %v7671
        %v7704 = vadd.f32 %v7578, %v7672
        %v7705 = vadd.f32 %v7583, %v7673
        %v7706 = vadd.f32 %v7586, %v7674
        %v7707 = vadd.f32 %v7591, %v7675
        %v7708 = vadd.f32 %v7594, %v7676
        %v7709 = vadd.f32 %v7599, %v7677
        %v7710 = vadd.f32 %v7602, %v7678
        %v7711 = vadd.f32 %v7607, %v7679
        %v7712 = vadd.f32 %v7610, %v7680
        %v7713 = vadd.f32 %v7615, %v7681
        %v7714 = vadd.f32 %v7618, %v7682
        %v7715 = vadd.f32 %v7623, %v7683
        %v7716 = vadd.f32 %v7626, %v7684
        %v7717 = vadd.f32 %v7631, %v7685
        %v7718 = vadd.f32 %v7634, %v7686
        %v7719 = vadd.f32 %v7639, %v7687
        %v7720 = vadd.f32 %v7642, %v7688
        %v7721 = vadd.f32 %v7647, %v7689
        %v7722 = vadd.f32 %v7650, %v7690
        %v7723 = vadd.f32 %v7655, %v7691
        %v7724 = vadd.f32 %v7658, %v7692
        %7725 = vst [vmem:[%s5] sm:$0xff] %v7693
        %7726 = vst [vmem:[%s5 + $0x8] sm:$0xff] %v7694
        %7727 = vst [vmem:[%s5 + $0x10] sm:$0xff] %v7695
        %7728 = vst [vmem:[%s5 + $0x18] sm:$0xff] %v7696
        %7729 = vst [vmem:[%s5 + $0x20] sm:$0xff] %v7697
        %7730 = vst [vmem:[%s5 + $0x28] sm:$0xff] %v7698
        %7731 = vst [vmem:[%s5 + $0x30] sm:$0xff] %v7699
        %7732 = vst [vmem:[%s5 + $0x38] sm:$0xff] %v7700
        %7733 = vst [vmem:[%s5 + $0x40] sm:$0xff] %v7701
        %7734 = vst [vmem:[%s5 + $0x48] sm:$0xff] %v7702
        %7735 = vst [vmem:[%s5 + $0x50] sm:$0xff] %v7703
        %7736 = vst [vmem:[%s5 + $0x58] sm:$0xff] %v7704
        %7737 = vst [vmem:[%s5 + $0x60] sm:$0xff] %v7705
        %7738 = vst [vmem:[%s5 + $0x68] sm:$0xff] %v7706
        %7739 = vst [vmem:[%s5 + $0x70] sm:$0xff] %v7707
        %7740 = vst [vmem:[%s5 + $0x78] sm:$0xff] %v7708
        %7741 = vst [vmem:[%s5 + $0x80] sm:$0xff] %v7709
        %7742 = vst [vmem:[%s5 + $0x88] sm:$0xff] %v7710
        %7743 = vst [vmem:[%s5 + $0x90] sm:$0xff] %v7711
        %7744 = vst [vmem:[%s5 + $0x98] sm:$0xff] %v7712
        %7745 = vst [vmem:[%s5 + $0xa0] sm:$0xff] %v7713
        %7746 = vst [vmem:[%s5 + $0xa8] sm:$0xff] %v7714
        %7747 = vst [vmem:[%s5 + $0xb0] sm:$0xff] %v7715
        %7748 = vst [vmem:[%s5 + $0xb8] sm:$0xff] %v7716
        %7749 = vst [vmem:[%s5 + $0xc0] sm:$0xff] %v7717
        %7750 = vst [vmem:[%s5 + $0xc8] sm:$0xff] %v7718
        %7751 = vst [vmem:[%s5 + $0xd0] sm:$0xff] %v7719
        %7752 = vst [vmem:[%s5 + $0xd8] sm:$0xff] %v7720
        %7753 = vst [vmem:[%s5 + $0xe0] sm:$0xff] %v7721
        %7754 = vst [vmem:[%s5 + $0xe8] sm:$0xff] %v7722
        %7755 = vst [vmem:[%s5 + $0xf0] sm:$0xff] %v7723
        %7756 = vst [vmem:[%s5 + $0xf8] sm:$0xff] %v7724
      $region68: #{tfcm_pallas.1} parent=39 // pred_fallthru
        _
      // Predicated region
      $region69: #{tfcm_pallas.1} parent=39 // pred_check
        %p7757 = pneg %p134
      $region70: #{tfcm_pallas.1} parent=39 // pred_check_branch
        %7759 = sbr.rel (%p7757) target = $region72
      $region71: #{tfcm_pallas.1} parent=39 // pred_region
        _
      $region72: #{tfcm_pallas.1} parent=39 // pred_fallthru
        _
      // Predicated region
      $region73: #{tfcm_pallas.1} parent=39 // pred_check
        %p7760 = pneg %p134
      $region74: #{tfcm_pallas.1} parent=39 // pred_check_branch
        %7762 = sbr.rel (%p7760) target = $region76
      $region75: #{tfcm_pallas.1} parent=39 // pred_region
        _
      $region76: #{tfcm_pallas.1} parent=39 // pred_fallthru
        _
    $region40: #{tfcm_pallas.1} parent=5 // pred_fallthru
      _
    %p7763 = scmp.le.s32.totalorder 2, %s11
    // Predicated region
    $region77: #{tfcm_pallas.1} parent=5 // pred_check
      %p7764 = pneg %p7763
    $region78: #{tfcm_pallas.1} parent=5 // pred_check_branch
      %7766 = sbr.rel (%p7764) target = $region80
    $region79: #{tfcm_pallas.1} parent=5 // pred_region
      %s7767 = ssub.s32 %s11, 2
    $region80: #{tfcm_pallas.1} parent=5 // pred_fallthru
      _
  $region6: #{tfcm_pallas.1} parent=0 // loop_footer
    %s15 = sadd.s32 1, %s11
  $region7: #{tfcm_pallas.1} parent=0 // loop_footer_branch
    %10 = sbr.rel target = $region3
  $region8: #{tfcm_pallas.1} parent=0 // loop_exit
    _

</llo_original>
